<compile_context>
chip_gen: v7x
topology: tpu7x:2x2x1
jax: 0.10.0
libtpu: 0.0.40
codegen_flags: <defaults>
</compile_context>

<pallas_src>
import numpy as np
import jax
import jax.numpy as jnp
from jax.experimental import pallas as pl
from jax.experimental.pallas import tpu as pltpu

# ---- model hyperparameters (match Seq2SeqContrastiveAutoregressiveDecoder) ----
OUTPUT_DIM = 2            # D
NUM_GAUSSIANS = 2         # G
HIDDEN = 19               # GRU hidden size ("input_dim = 19" hard-coded in __init__)
FEAT = 2 * HIDDEN + OUTPUT_DIM       # 40 : [input, hidden, context]
TEACHER_FORCING = 0.5

LB = 128                  # lane block (one padded segment per 128-lane block)
NB = 9                    # gi_r, gi_z, gi_n, gh_r, gh_z, gh_n, head_pi, head_mu, head_sig


# --------------------------- Pallas kernel ------------------------------------
def _decoder_kernel(tf_ref,                               # scalar prefetch (SMEM), (S,)
                    ctx1_ref, x0_ref, tgt_ref,            # activations
                    wstep_ref, wctx_ref, w2_ref,          # packed weights
                    pi_ref, mu_ref, sig_ref):             # per-step outputs (S, B, *)
    D, G, H = OUTPUT_DIM, NUM_GAUSSIANS, HIDDEN
    GD = G * D
    S = tf_ref.shape[0]

    def dot(a, w):
        return jnp.dot(a, w, preferred_element_type=jnp.float32)

    # ---- hoist constant reads / context+bias contributions out of the loop ----
    ctx1 = ctx1_ref[...]                 # (B, H+1), last lane == 1.0 (bias row)
    wstep = wstep_ref[...]               # (D+H, 9*LB)  operand: [x | h]
    w2 = w2_ref[...]                     # (H, 3*LB)    operand: h_new
    const = dot(ctx1, wctx_ref[...])     # (B, 9*LB)    ctx contributions + all biases

    h = ctx1[:, :H]                      # hidden0 = context            (B, H)
    x = x0_ref[...]                      # initial autoregressive input (B, D)

    for t in range(S):                   # S is small & static: fully unrolled
        # ---- one merged dot: GRU input gates, GRU hidden gates, head x-part ----
        a = jnp.concatenate([x, h], axis=-1)            # (B, D+H)
        g = dot(a, wstep) + const                       # (B, 9*LB)

        gi_r = g[:, 0 * LB:1 * LB]
        gi_z = g[:, 1 * LB:2 * LB]
        gi_n = g[:, 2 * LB:3 * LB]
        gh_r = g[:, 3 * LB:4 * LB]
        gh_z = g[:, 4 * LB:5 * LB]
        gh_n = g[:, 5 * LB:6 * LB]

        # ---- GRU cell, PyTorch gate order (r, z, n) ----
        r = jax.nn.sigmoid(gi_r + gh_r)
        z = jax.nn.sigmoid(gi_z + gh_z)
        n = jnp.tanh(gi_n + r * gh_n)
        h = (1.0 - z[:, :H]) * n[:, :H] + z[:, :H] * h  # (B, H)

        # ---- heads on [x, h_new, ctx]: x+ctx+bias parts already in `g`/`const` ----
        head = g[:, 6 * LB:] + dot(h, w2)               # (B, 3*LB)
        pi_logits = head[:, 0:G]                        # (B, G)   lane offset 0
        mu_blk = head[:, LB:2 * LB]                     # mu block, values at lanes 0:GD
        sig_blk = head[:, 2 * LB:3 * LB]                # sigma block

        m = jnp.max(pi_logits, axis=-1, keepdims=True)
        e = jnp.exp(pi_logits - m)
        pi = e / jnp.sum(e, axis=-1, keepdims=True)     # exact division (G == 2)

        # per-step direct stores (off the recurrence dependence chain)
        pi_ref[t] = pi
        mu_ref[t] = mu_blk[:, :GD]
        sig_ref[t] = jnp.exp(sig_blk[:, :GD]) + 1e-15   # ELU(exp(x)) == exp(x) (>= 0)

        # ---- next autoregressive input: teacher forcing vs argmax-mode mu ----
        # argmax over gaussians with first-max-wins ties (matches torch.argmax);
        # argmax of softmax == argmax of logits, so use the logits directly.
        best = pi_logits[:, 0:1]
        idx = jnp.zeros((pi_logits.shape[0], 1), jnp.int32)
        for gg in range(1, G):
            c = pi_logits[:, gg:gg + 1] > best
            best = jnp.where(c, pi_logits[:, gg:gg + 1], best)
            idx = jnp.where(c, gg, idx)
        mu_sel = mu_blk[:, 0:D]
        for gg in range(1, G):
            mu_sel = jnp.where(idx == gg, mu_blk[:, gg * D:(gg + 1) * D], mu_sel)

        tf = tf_ref[t]                                   # per-step coin (SMEM scalar)
        x = jnp.where(tf > 0, tgt_ref[t], mu_sel)        # (B, D)


# ---------------------- parameter packing (wrapper-side) ----------------------
def _pack_params_for_kernel(p):
    """Pack all weights/biases into three block-structured arrays:
         Wstep (D+H, 9*128): operand [x | h]   -> gi_r,gi_z,gi_n, gh_r,gh_z,gh_n,
                                                   head_pi_x, head_mu_x, head_sig_x
         Wctx  (H+1, 9*128): operand [ctx | 1] -> ctx contributions + ALL biases
         W2    (H,   3*128): operand h_new     -> head_pi_h, head_mu_h, head_sig_h
       Each gate / head segment occupies its own 128-lane block starting at
       lane 0, so in-kernel slices never need lane rotates."""
    H, D, G = HIDDEN, OUTPUT_DIM, NUM_GAUSSIANS
    GD = G * D
    DH = D + H

    w_ih = np.asarray(p["w_ih"])     # (3H, D+H)   input = cat(x, context)
    w_hh = np.asarray(p["w_hh"])     # (3H, H)
    b_ih = np.asarray(p["b_ih"])     # (3H,)
    b_hh = np.asarray(p["b_hh"])     # (3H,)

    Wstep = np.zeros((DH, NB * LB), np.float32)
    Wctx = np.zeros((H + 1, NB * LB), np.float32)
    W2 = np.zeros((H, 3 * LB), np.float32)

    for gate in range(3):            # PyTorch gate order: r, z, n
        rows = slice(gate * H, (gate + 1) * H)
        # gi blocks 0..2 : x part + ctx part + b_ih
        blk = gate
        Wstep[0:D, blk * LB:blk * LB + H] = w_ih[rows, 0:D].T
        Wctx[0:H, blk * LB:blk * LB + H] = w_ih[rows, D:D + H].T
        Wctx[H, blk * LB:blk * LB + H] = b_ih[rows]
        # gh blocks 3..5 : h part + b_hh
        blk = 3 + gate
        Wstep[D:DH, blk * LB:blk * LB + H] = w_hh[rows, :].T
        Wctx[H, blk * LB:blk * LB + H] = b_hh[rows]

    heads = [(np.asarray(p["w_pi"]), np.asarray(p["b_pi"]), G),
             (np.asarray(p["w_mu"]), np.asarray(p["b_mu"]), GD),
             (np.asarray(p["w_sig"]), np.asarray(p["b_sig"]), GD)]
    for j, (w, b, n_out) in enumerate(heads):   # features = [x(D), h(H), ctx(H)]
        blk = 6 + j
        Wstep[0:D, blk * LB:blk * LB + n_out] = w[:, 0:D].T
        W2[:, j * LB:j * LB + n_out] = w[:, D:D + H].T
        Wctx[0:H, blk * LB:blk * LB + n_out] = w[:, D + H:].T
        Wctx[H, blk * LB:blk * LB + n_out] = b

    return jnp.asarray(Wstep), jnp.asarray(Wctx), jnp.asarray(W2)


# ------------------------------ wrapper ---------------------------------------
def run_decoder(params, context, input0, target, tf_mask):
    B, S, D = target.shape
    G, H = NUM_GAUSSIANS, HIDDEN
    GD = G * D

    ctx1 = jnp.concatenate([context, jnp.ones((B, 1), jnp.float32)], axis=-1)  # (B, H+1)
    tgt_sbd = jnp.transpose(target, (1, 0, 2))                                 # (S, B, D)
    wstep, wctx, w2 = _pack_params_for_kernel(params)

    def full(shape):
        return pl.BlockSpec(shape, lambda i, tf, shape=shape: tuple(0 for _ in shape))

    in_specs = [
        full((B, H + 1)),            # ctx1 = [context | 1]
        full((B, D)),                # input0
        full((S, B, D)),             # target, time-major
        full((D + H, NB * LB)),      # Wstep
        full((H + 1, NB * LB)),      # Wctx
        full((H, 3 * LB)),           # W2
    ]
    out_specs = [
        full((S, B, G)),             # pi
        full((S, B, GD)),            # mu (flattened G*D)
        full((S, B, GD)),            # sigma
    ]
    out_shape = [
        jax.ShapeDtypeStruct((S, B, G), jnp.float32),
        jax.ShapeDtypeStruct((S, B, GD), jnp.float32),
        jax.ShapeDtypeStruct((S, B, GD), jnp.float32),
    ]

    grid_spec = pltpu.PrefetchScalarGridSpec(
        num_scalar_prefetch=1,
        grid=(1,),                   # single invocation: the S-loop lives in the kernel
        in_specs=in_specs,
        out_specs=out_specs,
    )

    pi, mu, sig = pl.pallas_call(
        _decoder_kernel,
        grid_spec=grid_spec,
        out_shape=out_shape,
        compiler_params=pltpu.CompilerParams(
            dimension_semantics=("arbitrary",)),
    )(tf_mask, ctx1, input0, tgt_sbd, wstep, wctx, w2)

    # back to PyTorch layout: (B, S, G), (B, S, G, D), (B, S, G, D)
    pi = jnp.transpose(pi, (1, 0, 2))
    mu = jnp.transpose(mu, (1, 0, 2)).reshape(B, S, G, D)
    sig = jnp.transpose(sig, (1, 0, 2)).reshape(B, S, G, D)
    return pi, mu, sig


# ---------------------- deterministic parameter init --------------------------
def init_params(key):
    H, D, G = HIDDEN, OUTPUT_DIM, NUM_GAUSSIANS
    gru_in = D + H
    kih, khh, kbih, kbhh, kpi, kmu, ksig = jax.random.split(key, 7)
    bound = 1.0 / np.sqrt(H)
    w_ih = jax.random.uniform(kih, (3 * H, gru_in), jnp.float32, -bound, bound)
    w_hh = jax.random.uniform(khh, (3 * H, H), jnp.float32, -bound, bound)
    b_ih = jax.random.uniform(kbih, (3 * H,), jnp.float32, -bound, bound)
    b_hh = jax.random.uniform(kbhh, (3 * H,), jnp.float32, -bound, bound)
    # pi: xavier_uniform, zero bias
    a = np.sqrt(6.0 / (FEAT + G))
    w_pi = jax.random.uniform(kpi, (G, FEAT), jnp.float32, -a, a)
    b_pi = jnp.zeros((G,), jnp.float32)
    # mu / sigma: xavier_normal, zero bias
    std = np.sqrt(2.0 / (FEAT + G * D))
    w_mu = std * jax.random.normal(kmu, (G * D, FEAT), jnp.float32)
    b_mu = jnp.zeros((G * D,), jnp.float32)
    w_sig = std * jax.random.normal(ksig, (G * D, FEAT), jnp.float32)
    b_sig = jnp.zeros((G * D,), jnp.float32)
    return dict(w_ih=w_ih, w_hh=w_hh, b_ih=b_ih, b_hh=b_hh,
                w_pi=w_pi, b_pi=b_pi, w_mu=w_mu, b_mu=b_mu,
                w_sig=w_sig, b_sig=b_sig)


# --------------------------- pure-JAX reference --------------------------------
def reference_forward(p, context, input0, target, tf_mask):
    H, D, G = HIDDEN, OUTPUT_DIM, NUM_GAUSSIANS
    B, S, _ = target.shape
    h, x = context, input0
    pis, mus, sigs = [], [], []
    for t in range(S):
        x_con = jnp.concatenate([x, context], axis=1)
        gi = x_con @ p["w_ih"].T + p["b_ih"]
        gh = h @ p["w_hh"].T + p["b_hh"]
        r = jax.nn.sigmoid(gi[:, :H] + gh[:, :H])
        z = jax.nn.sigmoid(gi[:, H:2 * H] + gh[:, H:2 * H])
        n = jnp.tanh(gi[:, 2 * H:] + r * gh[:, 2 * H:])
        h = (1.0 - z) * n + z * h
        out = jnp.concatenate([x, h, context], axis=1)
        pi = jax.nn.softmax(out @ p["w_pi"].T + p["b_pi"], axis=-1)
        mu = (out @ p["w_mu"].T + p["b_mu"]).reshape(B, G, D)
        sig = jnp.exp(out @ p["w_sig"].T + p["b_sig"]).reshape(B, G, D)
        sig = jax.nn.elu(sig) + 1e-15
        pis.append(pi); mus.append(mu); sigs.append(sig)
        idx = jnp.argmax(pi, axis=-1)
        mu_sel = mu[jnp.arange(B), idx]
        x = jnp.where(tf_mask[t] > 0, target[:, t], mu_sel)
    return jnp.stack(pis, 1), jnp.stack(mus, 1), jnp.stack(sigs, 1)


# ----------------------------------- main --------------------------------------
if __name__ == "__main__":
    key = jax.random.PRNGKey(0)
    kp, kc, ki, kt, ktf = jax.random.split(key, 5)

    B, S = 8, 8
    params = init_params(kp)
    context = jax.random.normal(kc, (B, HIDDEN), jnp.float32)        # encoder output / GRU h0
    input0 = jax.random.normal(ki, (B, OUTPUT_DIM), jnp.float32)     # first decoder input
    target = jax.random.normal(kt, (B, S, OUTPUT_DIM), jnp.float32)  # ground-truth sequence
    # TODO(synk): torch draws a fresh host-side torch.rand(1) coin per step; here the
    # per-step teacher-forcing coins are drawn once with a fixed JAX key and passed
    # to the kernel via scalar prefetch.
    tf_mask = (jax.random.uniform(ktf, (S,)) < TEACHER_FORCING).astype(jnp.int32)

    pi, mu, sigma = run_decoder(params, context, input0, target, tf_mask)
    jax.block_until_ready((pi, mu, sigma))

    pi_r, mu_r, sig_r = reference_forward(params, context, input0, target, tf_mask)
    assert pi.shape == (B, S, NUM_GAUSSIANS)
    assert mu.shape == (B, S, NUM_GAUSSIANS, OUTPUT_DIM)
    assert sigma.shape == (B, S, NUM_GAUSSIANS, OUTPUT_DIM)
    assert np.allclose(np.asarray(pi), np.asarray(pi_r), atol=2e-3, rtol=2e-3)
    assert np.allclose(np.asarray(mu), np.asarray(mu_r), atol=2e-3, rtol=2e-3)
    assert np.allclose(np.asarray(sigma), np.asarray(sig_r), atol=2e-3, rtol=2e-3)

    print("KERNEL_OK")
</pallas_src>

<mosaic_0001>
module attributes {stable_mosaic.version = 11 : i64} {
  func.func @_decoder_kernel(%arg0: i32, %arg1: memref<8xi32, #tpu.memory_space<smem>>, %arg2: memref<8x20xf32, #tpu.memory_space<vmem>>, %arg3: memref<8x2xf32, #tpu.memory_space<vmem>>, %arg4: memref<8x8x2xf32, #tpu.memory_space<vmem>>, %arg5: memref<21x1152xf32, #tpu.memory_space<vmem>>, %arg6: memref<20x1152xf32, #tpu.memory_space<vmem>>, %arg7: memref<19x384xf32, #tpu.memory_space<vmem>>, %arg8: memref<8x8x2xf32, #tpu.memory_space<vmem>>, %arg9: memref<8x8x4xf32, #tpu.memory_space<vmem>>, %arg10: memref<8x8x4xf32, #tpu.memory_space<vmem>>) attributes {dimension_semantics = [#tpu.dimension_semantics<arbitrary>], iteration_bounds = array<i64: 1>, scalar_prefetch = 1 : i64, scratch_operands = 0 : i64, tpu.core_type = #tpu.core_type<tc>, window_params = [{pipeline_mode = #tpu.pipeline_mode<synchronous>, transform_indices = @transform_0, window_bounds = array<i64: 8, 20>}, {pipeline_mode = #tpu.pipeline_mode<synchronous>, transform_indices = @transform_1, window_bounds = array<i64: 8, 2>}, {pipeline_mode = #tpu.pipeline_mode<synchronous>, transform_indices = @transform_2, window_bounds = array<i64: 8, 8, 2>}, {pipeline_mode = #tpu.pipeline_mode<synchronous>, transform_indices = @transform_3, window_bounds = array<i64: 21, 1152>}, {pipeline_mode = #tpu.pipeline_mode<synchronous>, transform_indices = @transform_4, window_bounds = array<i64: 20, 1152>}, {pipeline_mode = #tpu.pipeline_mode<synchronous>, transform_indices = @transform_5, window_bounds = array<i64: 19, 384>}, {pipeline_mode = #tpu.pipeline_mode<synchronous>, transform_indices = @transform_6, window_bounds = array<i64: 8, 8, 2>}, {pipeline_mode = #tpu.pipeline_mode<synchronous>, transform_indices = @transform_7, window_bounds = array<i64: 8, 8, 4>}, {pipeline_mode = #tpu.pipeline_mode<synchronous>, transform_indices = @transform_8, window_bounds = array<i64: 8, 8, 4>}]} {
    %c0 = arith.constant 0 : index
    %c0_0 = arith.constant 0 : index
    %0 = vector.load %arg2[%c0, %c0_0] : memref<8x20xf32, #tpu.memory_space<vmem>>, vector<8x20xf32>
    %c0_1 = arith.constant 0 : index
    %c0_2 = arith.constant 0 : index
    %1 = vector.load %arg5[%c0_1, %c0_2] : memref<21x1152xf32, #tpu.memory_space<vmem>>, vector<21x1152xf32>
    %c0_3 = arith.constant 0 : index
    %c0_4 = arith.constant 0 : index
    %2 = vector.load %arg7[%c0_3, %c0_4] : memref<19x384xf32, #tpu.memory_space<vmem>>, vector<19x384xf32>
    %c0_5 = arith.constant 0 : index
    %c0_6 = arith.constant 0 : index
    %3 = vector.load %arg6[%c0_5, %c0_6] : memref<20x1152xf32, #tpu.memory_space<vmem>>, vector<20x1152xf32>
    %cst = arith.constant dense<0.000000e+00> : vector<8x1152xf32>
    %4 = tpu.matmul %0, %3, %cst {dimension_numbers = #tpu.dot_dimension_numbers<[1], [0], [0], [1], [0, 0, 1, 1], [], []>} : vector<8x20xf32>, vector<20x1152xf32>, vector<8x1152xf32> -> vector<8x1152xf32>
    %5 = vector.extract_strided_slice %0 {offsets = [0, 0], sizes = [8, 19], strides = [1, 1]} : vector<8x20xf32> to vector<8x19xf32>
    %c0_7 = arith.constant 0 : index
    %c0_8 = arith.constant 0 : index
    %6 = vector.load %arg3[%c0_7, %c0_8] : memref<8x2xf32, #tpu.memory_space<vmem>>, vector<8x2xf32>
    %7 = tpu.concatenate %6, %5 in 1 : vector<8x2xf32>, vector<8x19xf32> -> vector<8x21xf32>
    %cst_9 = arith.constant dense<0.000000e+00> : vector<8x1152xf32>
    %8 = tpu.matmul %7, %1, %cst_9 {dimension_numbers = #tpu.dot_dimension_numbers<[1], [0], [0], [1], [0, 0, 1, 1], [], []>} : vector<8x21xf32>, vector<21x1152xf32>, vector<8x1152xf32> -> vector<8x1152xf32>
    %9 = arith.addf %8, %4 : vector<8x1152xf32>
    %10 = vector.extract_strided_slice %9 {offsets = [0, 0], sizes = [8, 128], strides = [1, 1]} : vector<8x1152xf32> to vector<8x128xf32>
    %11 = vector.extract_strided_slice %9 {offsets = [0, 128], sizes = [8, 128], strides = [1, 1]} : vector<8x1152xf32> to vector<8x128xf32>
    %12 = vector.extract_strided_slice %9 {offsets = [0, 256], sizes = [8, 128], strides = [1, 1]} : vector<8x1152xf32> to vector<8x128xf32>
    %13 = vector.extract_strided_slice %9 {offsets = [0, 384], sizes = [8, 128], strides = [1, 1]} : vector<8x1152xf32> to vector<8x128xf32>
    %14 = vector.extract_strided_slice %9 {offsets = [0, 512], sizes = [8, 128], strides = [1, 1]} : vector<8x1152xf32> to vector<8x128xf32>
    %15 = vector.extract_strided_slice %9 {offsets = [0, 640], sizes = [8, 128], strides = [1, 1]} : vector<8x1152xf32> to vector<8x128xf32>
    %16 = arith.addf %10, %13 : vector<8x128xf32>
    %17 = arith.negf %16 : vector<8x128xf32>
    %18 = math.exp %17 : vector<8x128xf32>
    %cst_10 = arith.constant 1.000000e+00 : f32
    %19 = vector.broadcast %cst_10 : f32 to vector<8x128xf32>
    %20 = arith.addf %19, %18 : vector<8x128xf32>
    %21 = arith.divf %19, %20 : vector<8x128xf32>
    %22 = arith.addf %11, %14 : vector<8x128xf32>
    %23 = arith.negf %22 : vector<8x128xf32>
    %24 = math.exp %23 : vector<8x128xf32>
    %cst_11 = arith.constant 1.000000e+00 : f32
    %25 = vector.broadcast %cst_11 : f32 to vector<8x128xf32>
    %26 = arith.addf %25, %24 : vector<8x128xf32>
    %27 = arith.divf %25, %26 : vector<8x128xf32>
    %28 = arith.mulf %21, %15 : vector<8x128xf32>
    %29 = arith.addf %12, %28 : vector<8x128xf32>
    %30 = math.tanh %29 : vector<8x128xf32>
    %31 = vector.extract_strided_slice %27 {offsets = [0, 0], sizes = [8, 19], strides = [1, 1]} : vector<8x128xf32> to vector<8x19xf32>
    %cst_12 = arith.constant 1.000000e+00 : f32
    %32 = vector.broadcast %cst_12 : f32 to vector<8x19xf32>
    %33 = arith.subf %32, %31 : vector<8x19xf32>
    %34 = vector.extract_strided_slice %30 {offsets = [0, 0], sizes = [8, 19], strides = [1, 1]} : vector<8x128xf32> to vector<8x19xf32>
    %35 = arith.mulf %33, %34 : vector<8x19xf32>
    %36 = vector.extract_strided_slice %27 {offsets = [0, 0], sizes = [8, 19], strides = [1, 1]} : vector<8x128xf32> to vector<8x19xf32>
    %37 = arith.mulf %36, %5 : vector<8x19xf32>
    %38 = arith.addf %35, %37 : vector<8x19xf32>
    %39 = vector.extract_strided_slice %9 {offsets = [0, 768], sizes = [8, 384], strides = [1, 1]} : vector<8x1152xf32> to vector<8x384xf32>
    %cst_13 = arith.constant dense<0.000000e+00> : vector<8x384xf32>
    %40 = tpu.matmul %38, %2, %cst_13 {dimension_numbers = #tpu.dot_dimension_numbers<[1], [0], [0], [1], [0, 0, 1, 1], [], []>} : vector<8x19xf32>, vector<19x384xf32>, vector<8x384xf32> -> vector<8x384xf32>
    %41 = arith.addf %39, %40 : vector<8x384xf32>
    %42 = vector.extract_strided_slice %41 {offsets = [0, 0], sizes = [8, 2], strides = [1, 1]} : vector<8x384xf32> to vector<8x2xf32>
    %43 = vector.extract_strided_slice %41 {offsets = [0, 128], sizes = [8, 128], strides = [1, 1]} : vector<8x384xf32> to vector<8x128xf32>
    %44 = vector.extract_strided_slice %41 {offsets = [0, 256], sizes = [8, 128], strides = [1, 1]} : vector<8x384xf32> to vector<8x128xf32>
    %cst_14 = arith.constant dense<0xFF800000> : vector<8xf32>
    %45 = vector.multi_reduction <maximumf>, %42, %cst_14 [1] : vector<8x2xf32> to vector<8xf32>
    %46 = vector.shape_cast %45 : vector<8xf32> to vector<8x1xf32>
    %47 = vector.broadcast %46 : vector<8x1xf32> to vector<8x2xf32>
    %48 = arith.subf %42, %47 : vector<8x2xf32>
    %49 = math.exp %48 : vector<8x2xf32>
    %cst_15 = arith.constant dense<0.000000e+00> : vector<8xf32>
    %50 = vector.multi_reduction <add>, %49, %cst_15 [1] : vector<8x2xf32> to vector<8xf32>
    %51 = vector.shape_cast %50 : vector<8xf32> to vector<8x1xf32>
    %52 = vector.broadcast %51 : vector<8x1xf32> to vector<8x2xf32>
    %53 = arith.divf %49, %52 : vector<8x2xf32>
    %c0_16 = arith.constant 0 : index
    %c0_17 = arith.constant 0 : index
    %c0_18 = arith.constant 0 : index
    %54 = vector.load %arg8[%c0_16, %c0_17, %c0_18] : memref<8x8x2xf32, #tpu.memory_space<vmem>>, vector<1x8x2xf32>
    %55 = vector.shape_cast %54 : vector<1x8x2xf32> to vector<8x2xf32>
    %56 = vector.shape_cast %53 : vector<8x2xf32> to vector<1x8x2xf32>
    tpu.vector_store %arg8[%c0_16, %c0_17, %c0_18], %56 {strides = array<i32>} : memref<8x8x2xf32, #tpu.memory_space<vmem>>, vector<1x8x2xf32>,
    %57 = vector.extract_strided_slice %43 {offsets = [0, 0], sizes = [8, 4], strides = [1, 1]} : vector<8x128xf32> to vector<8x4xf32>
    %c0_19 = arith.constant 0 : index
    %c0_20 = arith.constant 0 : index
    %c0_21 = arith.constant 0 : index
    %58 = vector.load %arg9[%c0_19, %c0_20, %c0_21] : memref<8x8x4xf32, #tpu.memory_space<vmem>>, vector<1x8x4xf32>
    %59 = vector.shape_cast %58 : vector<1x8x4xf32> to vector<8x4xf32>
    %60 = vector.shape_cast %57 : vector<8x4xf32> to vector<1x8x4xf32>
    tpu.vector_store %arg9[%c0_19, %c0_20, %c0_21], %60 {strides = array<i32>} : memref<8x8x4xf32, #tpu.memory_space<vmem>>, vector<1x8x4xf32>,
    %61 = vector.extract_strided_slice %44 {offsets = [0, 0], sizes = [8, 4], strides = [1, 1]} : vector<8x128xf32> to vector<8x4xf32>
    %62 = math.exp %61 : vector<8x4xf32>
    %cst_22 = arith.constant 1.000000e-15 : f32
    %63 = vector.broadcast %cst_22 : f32 to vector<8x4xf32>
    %64 = arith.addf %62, %63 : vector<8x4xf32>
    %c0_23 = arith.constant 0 : index
    %c0_24 = arith.constant 0 : index
    %c0_25 = arith.constant 0 : index
    %65 = vector.load %arg10[%c0_23, %c0_24, %c0_25] : memref<8x8x4xf32, #tpu.memory_space<vmem>>, vector<1x8x4xf32>
    %66 = vector.shape_cast %65 : vector<1x8x4xf32> to vector<8x4xf32>
    %67 = vector.shape_cast %64 : vector<8x4xf32> to vector<1x8x4xf32>
    tpu.vector_store %arg10[%c0_23, %c0_24, %c0_25], %67 {strides = array<i32>} : memref<8x8x4xf32, #tpu.memory_space<vmem>>, vector<1x8x4xf32>,
    %68 = vector.extract_strided_slice %42 {offsets = [0, 0], sizes = [8, 1], strides = [1, 1]} : vector<8x2xf32> to vector<8x1xf32>
    %c0_i32 = arith.constant 0 : i32
    %69 = vector.broadcast %c0_i32 : i32 to vector<8x1xi32>
    %70 = vector.extract_strided_slice %42 {offsets = [0, 1], sizes = [8, 1], strides = [1, 1]} : vector<8x2xf32> to vector<8x1xf32>
    %71 = arith.cmpf ogt, %70, %68 : vector<8x1xf32>
    %c1_i32 = arith.constant 1 : i32
    %72 = vector.broadcast %c1_i32 : i32 to vector<8x1xi32>
    %73 = arith.select %71, %72, %69 : vector<8x1xi1>, vector<8x1xi32>
    %74 = vector.extract_strided_slice %43 {offsets = [0, 0], sizes = [8, 2], strides = [1, 1]} : vector<8x128xf32> to vector<8x2xf32>
    %c1_i32_26 = arith.constant 1 : i32
    %75 = vector.broadcast %c1_i32_26 : i32 to vector<8x1xi32>
    %76 = arith.cmpi eq, %73, %75 : vector<8x1xi32>
    %77 = vector.extract_strided_slice %43 {offsets = [0, 2], sizes = [8, 2], strides = [1, 1]} : vector<8x128xf32> to vector<8x2xf32>
    %78 = vector.shape_cast %76 : vector<8x1xi1> to vector<8x1xi1>
    %79 = vector.broadcast %78 : vector<8x1xi1> to vector<8x2xi1>
    %80 = arith.select %79, %77, %74 : vector<8x2xi1>, vector<8x2xf32>
    %c0_27 = arith.constant 0 : index
    %81 = memref.load %arg1[%c0_27] : memref<8xi32, #tpu.memory_space<smem>>
    %c0_i32_28 = arith.constant 0 : i32
    %82 = arith.cmpi sgt, %81, %c0_i32_28 : i32
    %c0_29 = arith.constant 0 : index
    %c0_30 = arith.constant 0 : index
    %c0_31 = arith.constant 0 : index
    %83 = vector.load %arg4[%c0_29, %c0_30, %c0_31] : memref<8x8x2xf32, #tpu.memory_space<vmem>>, vector<1x8x2xf32>
    %84 = vector.shape_cast %83 : vector<1x8x2xf32> to vector<8x2xf32>
    %85 = arith.select %82, %84, %80 : vector<8x2xf32>
    %86 = tpu.concatenate %85, %38 in 1 : vector<8x2xf32>, vector<8x19xf32> -> vector<8x21xf32>
    %cst_32 = arith.constant dense<0.000000e+00> : vector<8x1152xf32>
    %87 = tpu.matmul %86, %1, %cst_32 {dimension_numbers = #tpu.dot_dimension_numbers<[1], [0], [0], [1], [0, 0, 1, 1], [], []>} : vector<8x21xf32>, vector<21x1152xf32>, vector<8x1152xf32> -> vector<8x1152xf32>
    %88 = arith.addf %87, %4 : vector<8x1152xf32>
    %89 = vector.extract_strided_slice %88 {offsets = [0, 0], sizes = [8, 128], strides = [1, 1]} : vector<8x1152xf32> to vector<8x128xf32>
    %90 = vector.extract_strided_slice %88 {offsets = [0, 128], sizes = [8, 128], strides = [1, 1]} : vector<8x1152xf32> to vector<8x128xf32>
    %91 = vector.extract_strided_slice %88 {offsets = [0, 256], sizes = [8, 128], strides = [1, 1]} : vector<8x1152xf32> to vector<8x128xf32>
    %92 = vector.extract_strided_slice %88 {offsets = [0, 384], sizes = [8, 128], strides = [1, 1]} : vector<8x1152xf32> to vector<8x128xf32>
    %93 = vector.extract_strided_slice %88 {offsets = [0, 512], sizes = [8, 128], strides = [1, 1]} : vector<8x1152xf32> to vector<8x128xf32>
    %94 = vector.extract_strided_slice %88 {offsets = [0, 640], sizes = [8, 128], strides = [1, 1]} : vector<8x1152xf32> to vector<8x128xf32>
    %95 = arith.addf %89, %92 : vector<8x128xf32>
    %96 = arith.negf %95 : vector<8x128xf32>
    %97 = math.exp %96 : vector<8x128xf32>
    %cst_33 = arith.constant 1.000000e+00 : f32
    %98 = vector.broadcast %cst_33 : f32 to vector<8x128xf32>
    %99 = arith.addf %98, %97 : vector<8x128xf32>
    %100 = arith.divf %98, %99 : vector<8x128xf32>
    %101 = arith.addf %90, %93 : vector<8x128xf32>
    %102 = arith.negf %101 : vector<8x128xf32>
    %103 = math.exp %102 : vector<8x128xf32>
    %cst_34 = arith.constant 1.000000e+00 : f32
    %104 = vector.broadcast %cst_34 : f32 to vector<8x128xf32>
    %105 = arith.addf %104, %103 : vector<8x128xf32>
    %106 = arith.divf %104, %105 : vector<8x128xf32>
    %107 = arith.mulf %100, %94 : vector<8x128xf32>
    %108 = arith.addf %91, %107 : vector<8x128xf32>
    %109 = math.tanh %108 : vector<8x128xf32>
    %110 = vector.extract_strided_slice %106 {offsets = [0, 0], sizes = [8, 19], strides = [1, 1]} : vector<8x128xf32> to vector<8x19xf32>
    %cst_35 = arith.constant 1.000000e+00 : f32
    %111 = vector.broadcast %cst_35 : f32 to vector<8x19xf32>
    %112 = arith.subf %111, %110 : vector<8x19xf32>
    %113 = vector.extract_strided_slice %109 {offsets = [0, 0], sizes = [8, 19], strides = [1, 1]} : vector<8x128xf32> to vector<8x19xf32>
    %114 = arith.mulf %112, %113 : vector<8x19xf32>
    %115 = vector.extract_strided_slice %106 {offsets = [0, 0], sizes = [8, 19], strides = [1, 1]} : vector<8x128xf32> to vector<8x19xf32>
    %116 = arith.mulf %115, %38 : vector<8x19xf32>
    %117 = arith.addf %114, %116 : vector<8x19xf32>
    %118 = vector.extract_strided_slice %88 {offsets = [0, 768], sizes = [8, 384], strides = [1, 1]} : vector<8x1152xf32> to vector<8x384xf32>
    %cst_36 = arith.constant dense<0.000000e+00> : vector<8x384xf32>
    %119 = tpu.matmul %117, %2, %cst_36 {dimension_numbers = #tpu.dot_dimension_numbers<[1], [0], [0], [1], [0, 0, 1, 1], [], []>} : vector<8x19xf32>, vector<19x384xf32>, vector<8x384xf32> -> vector<8x384xf32>
    %120 = arith.addf %118, %119 : vector<8x384xf32>
    %121 = vector.extract_strided_slice %120 {offsets = [0, 0], sizes = [8, 2], strides = [1, 1]} : vector<8x384xf32> to vector<8x2xf32>
    %122 = vector.extract_strided_slice %120 {offsets = [0, 128], sizes = [8, 128], strides = [1, 1]} : vector<8x384xf32> to vector<8x128xf32>
    %123 = vector.extract_strided_slice %120 {offsets = [0, 256], sizes = [8, 128], strides = [1, 1]} : vector<8x384xf32> to vector<8x128xf32>
    %cst_37 = arith.constant dense<0xFF800000> : vector<8xf32>
    %124 = vector.multi_reduction <maximumf>, %121, %cst_37 [1] : vector<8x2xf32> to vector<8xf32>
    %125 = vector.shape_cast %124 : vector<8xf32> to vector<8x1xf32>
    %126 = vector.broadcast %125 : vector<8x1xf32> to vector<8x2xf32>
    %127 = arith.subf %121, %126 : vector<8x2xf32>
    %128 = math.exp %127 : vector<8x2xf32>
    %cst_38 = arith.constant dense<0.000000e+00> : vector<8xf32>
    %129 = vector.multi_reduction <add>, %128, %cst_38 [1] : vector<8x2xf32> to vector<8xf32>
    %130 = vector.shape_cast %129 : vector<8xf32> to vector<8x1xf32>
    %131 = vector.broadcast %130 : vector<8x1xf32> to vector<8x2xf32>
    %132 = arith.divf %128, %131 : vector<8x2xf32>
    %c1 = arith.constant 1 : index
    %c0_39 = arith.constant 0 : index
    %c0_40 = arith.constant 0 : index
    %133 = vector.load %arg8[%c1, %c0_39, %c0_40] : memref<8x8x2xf32, #tpu.memory_space<vmem>>, vector<1x8x2xf32>
    %134 = vector.shape_cast %133 : vector<1x8x2xf32> to vector<8x2xf32>
    %135 = vector.shape_cast %132 : vector<8x2xf32> to vector<1x8x2xf32>
    tpu.vector_store %arg8[%c1, %c0_39, %c0_40], %135 {strides = array<i32>} : memref<8x8x2xf32, #tpu.memory_space<vmem>>, vector<1x8x2xf32>,
    %136 = vector.extract_strided_slice %122 {offsets = [0, 0], sizes = [8, 4], strides = [1, 1]} : vector<8x128xf32> to vector<8x4xf32>
    %c1_41 = arith.constant 1 : index
    %c0_42 = arith.constant 0 : index
    %c0_43 = arith.constant 0 : index
    %137 = vector.load %arg9[%c1_41, %c0_42, %c0_43] : memref<8x8x4xf32, #tpu.memory_space<vmem>>, vector<1x8x4xf32>
    %138 = vector.shape_cast %137 : vector<1x8x4xf32> to vector<8x4xf32>
    %139 = vector.shape_cast %136 : vector<8x4xf32> to vector<1x8x4xf32>
    tpu.vector_store %arg9[%c1_41, %c0_42, %c0_43], %139 {strides = array<i32>} : memref<8x8x4xf32, #tpu.memory_space<vmem>>, vector<1x8x4xf32>,
    %140 = vector.extract_strided_slice %123 {offsets = [0, 0], sizes = [8, 4], strides = [1, 1]} : vector<8x128xf32> to vector<8x4xf32>
    %141 = math.exp %140 : vector<8x4xf32>
    %cst_44 = arith.constant 1.000000e-15 : f32
    %142 = vector.broadcast %cst_44 : f32 to vector<8x4xf32>
    %143 = arith.addf %141, %142 : vector<8x4xf32>
    %c1_45 = arith.constant 1 : index
    %c0_46 = arith.constant 0 : index
    %c0_47 = arith.constant 0 : index
    %144 = vector.load %arg10[%c1_45, %c0_46, %c0_47] : memref<8x8x4xf32, #tpu.memory_space<vmem>>, vector<1x8x4xf32>
    %145 = vector.shape_cast %144 : vector<1x8x4xf32> to vector<8x4xf32>
    %146 = vector.shape_cast %143 : vector<8x4xf32> to vector<1x8x4xf32>
    tpu.vector_store %arg10[%c1_45, %c0_46, %c0_47], %146 {strides = array<i32>} : memref<8x8x4xf32, #tpu.memory_space<vmem>>, vector<1x8x4xf32>,
    %147 = vector.extract_strided_slice %121 {offsets = [0, 0], sizes = [8, 1], strides = [1, 1]} : vector<8x2xf32> to vector<8x1xf32>
    %c0_i32_48 = arith.constant 0 : i32
    %148 = vector.broadcast %c0_i32_48 : i32 to vector<8x1xi32>
    %149 = vector.extract_strided_slice %121 {offsets = [0, 1], sizes = [8, 1], strides = [1, 1]} : vector<8x2xf32> to vector<8x1xf32>
    %150 = arith.cmpf ogt, %149, %147 : vector<8x1xf32>
    %c1_i32_49 = arith.constant 1 : i32
    %151 = vector.broadcast %c1_i32_49 : i32 to vector<8x1xi32>
    %152 = arith.select %150, %151, %148 : vector<8x1xi1>, vector<8x1xi32>
    %153 = vector.extract_strided_slice %122 {offsets = [0, 0], sizes = [8, 2], strides = [1, 1]} : vector<8x128xf32> to vector<8x2xf32>
    %c1_i32_50 = arith.constant 1 : i32
    %154 = vector.broadcast %c1_i32_50 : i32 to vector<8x1xi32>
    %155 = arith.cmpi eq, %152, %154 : vector<8x1xi32>
    %156 = vector.extract_strided_slice %122 {offsets = [0, 2], sizes = [8, 2], strides = [1, 1]} : vector<8x128xf32> to vector<8x2xf32>
    %157 = vector.shape_cast %155 : vector<8x1xi1> to vector<8x1xi1>
    %158 = vector.broadcast %157 : vector<8x1xi1> to vector<8x2xi1>
    %159 = arith.select %158, %156, %153 : vector<8x2xi1>, vector<8x2xf32>
    %c1_51 = arith.constant 1 : index
    %160 = memref.load %arg1[%c1_51] : memref<8xi32, #tpu.memory_space<smem>>
    %c0_i32_52 = arith.constant 0 : i32
    %161 = arith.cmpi sgt, %160, %c0_i32_52 : i32
    %c1_53 = arith.constant 1 : index
    %c0_54 = arith.constant 0 : index
    %c0_55 = arith.constant 0 : index
    %162 = vector.load %arg4[%c1_53, %c0_54, %c0_55] : memref<8x8x2xf32, #tpu.memory_space<vmem>>, vector<1x8x2xf32>
    %163 = vector.shape_cast %162 : vector<1x8x2xf32> to vector<8x2xf32>
    %164 = arith.select %161, %163, %159 : vector<8x2xf32>
    %165 = tpu.concatenate %164, %117 in 1 : vector<8x2xf32>, vector<8x19xf32> -> vector<8x21xf32>
    %cst_56 = arith.constant dense<0.000000e+00> : vector<8x1152xf32>
    %166 = tpu.matmul %165, %1, %cst_56 {dimension_numbers = #tpu.dot_dimension_numbers<[1], [0], [0], [1], [0, 0, 1, 1], [], []>} : vector<8x21xf32>, vector<21x1152xf32>, vector<8x1152xf32> -> vector<8x1152xf32>
    %167 = arith.addf %166, %4 : vector<8x1152xf32>
    %168 = vector.extract_strided_slice %167 {offsets = [0, 0], sizes = [8, 128], strides = [1, 1]} : vector<8x1152xf32> to vector<8x128xf32>
    %169 = vector.extract_strided_slice %167 {offsets = [0, 128], sizes = [8, 128], strides = [1, 1]} : vector<8x1152xf32> to vector<8x128xf32>
    %170 = vector.extract_strided_slice %167 {offsets = [0, 256], sizes = [8, 128], strides = [1, 1]} : vector<8x1152xf32> to vector<8x128xf32>
    %171 = vector.extract_strided_slice %167 {offsets = [0, 384], sizes = [8, 128], strides = [1, 1]} : vector<8x1152xf32> to vector<8x128xf32>
    %172 = vector.extract_strided_slice %167 {offsets = [0, 512], sizes = [8, 128], strides = [1, 1]} : vector<8x1152xf32> to vector<8x128xf32>
    %173 = vector.extract_strided_slice %167 {offsets = [0, 640], sizes = [8, 128], strides = [1, 1]} : vector<8x1152xf32> to vector<8x128xf32>
    %174 = arith.addf %168, %171 : vector<8x128xf32>
    %175 = arith.negf %174 : vector<8x128xf32>
    %176 = math.exp %175 : vector<8x128xf32>
    %cst_57 = arith.constant 1.000000e+00 : f32
    %177 = vector.broadcast %cst_57 : f32 to vector<8x128xf32>
    %178 = arith.addf %177, %176 : vector<8x128xf32>
    %179 = arith.divf %177, %178 : vector<8x128xf32>
    %180 = arith.addf %169, %172 : vector<8x128xf32>
    %181 = arith.negf %180 : vector<8x128xf32>
    %182 = math.exp %181 : vector<8x128xf32>
    %cst_58 = arith.constant 1.000000e+00 : f32
    %183 = vector.broadcast %cst_58 : f32 to vector<8x128xf32>
    %184 = arith.addf %183, %182 : vector<8x128xf32>
    %185 = arith.divf %183, %184 : vector<8x128xf32>
    %186 = arith.mulf %179, %173 : vector<8x128xf32>
    %187 = arith.addf %170, %186 : vector<8x128xf32>
    %188 = math.tanh %187 : vector<8x128xf32>
    %189 = vector.extract_strided_slice %185 {offsets = [0, 0], sizes = [8, 19], strides = [1, 1]} : vector<8x128xf32> to vector<8x19xf32>
    %cst_59 = arith.constant 1.000000e+00 : f32
    %190 = vector.broadcast %cst_59 : f32 to vector<8x19xf32>
    %191 = arith.subf %190, %189 : vector<8x19xf32>
    %192 = vector.extract_strided_slice %188 {offsets = [0, 0], sizes = [8, 19], strides = [1, 1]} : vector<8x128xf32> to vector<8x19xf32>
    %193 = arith.mulf %191, %192 : vector<8x19xf32>
    %194 = vector.extract_strided_slice %185 {offsets = [0, 0], sizes = [8, 19], strides = [1, 1]} : vector<8x128xf32> to vector<8x19xf32>
    %195 = arith.mulf %194, %117 : vector<8x19xf32>
    %196 = arith.addf %193, %195 : vector<8x19xf32>
    %197 = vector.extract_strided_slice %167 {offsets = [0, 768], sizes = [8, 384], strides = [1, 1]} : vector<8x1152xf32> to vector<8x384xf32>
    %cst_60 = arith.constant dense<0.000000e+00> : vector<8x384xf32>
    %198 = tpu.matmul %196, %2, %cst_60 {dimension_numbers = #tpu.dot_dimension_numbers<[1], [0], [0], [1], [0, 0, 1, 1], [], []>} : vector<8x19xf32>, vector<19x384xf32>, vector<8x384xf32> -> vector<8x384xf32>
    %199 = arith.addf %197, %198 : vector<8x384xf32>
    %200 = vector.extract_strided_slice %199 {offsets = [0, 0], sizes = [8, 2], strides = [1, 1]} : vector<8x384xf32> to vector<8x2xf32>
    %201 = vector.extract_strided_slice %199 {offsets = [0, 128], sizes = [8, 128], strides = [1, 1]} : vector<8x384xf32> to vector<8x128xf32>
    %202 = vector.extract_strided_slice %199 {offsets = [0, 256], sizes = [8, 128], strides = [1, 1]} : vector<8x384xf32> to vector<8x128xf32>
    %cst_61 = arith.constant dense<0xFF800000> : vector<8xf32>
    %203 = vector.multi_reduction <maximumf>, %200, %cst_61 [1] : vector<8x2xf32> to vector<8xf32>
    %204 = vector.shape_cast %203 : vector<8xf32> to vector<8x1xf32>
    %205 = vector.broadcast %204 : vector<8x1xf32> to vector<8x2xf32>
    %206 = arith.subf %200, %205 : vector<8x2xf32>
    %207 = math.exp %206 : vector<8x2xf32>
    %cst_62 = arith.constant dense<0.000000e+00> : vector<8xf32>
    %208 = vector.multi_reduction <add>, %207, %cst_62 [1] : vector<8x2xf32> to vector<8xf32>
    %209 = vector.shape_cast %208 : vector<8xf32> to vector<8x1xf32>
    %210 = vector.broadcast %209 : vector<8x1xf32> to vector<8x2xf32>
    %211 = arith.divf %207, %210 : vector<8x2xf32>
    %c2 = arith.constant 2 : index
    %c0_63 = arith.constant 0 : index
    %c0_64 = arith.constant 0 : index
    %212 = vector.load %arg8[%c2, %c0_63, %c0_64] : memref<8x8x2xf32, #tpu.memory_space<vmem>>, vector<1x8x2xf32>
    %213 = vector.shape_cast %212 : vector<1x8x2xf32> to vector<8x2xf32>
    %214 = vector.shape_cast %211 : vector<8x2xf32> to vector<1x8x2xf32>
    tpu.vector_store %arg8[%c2, %c0_63, %c0_64], %214 {strides = array<i32>} : memref<8x8x2xf32, #tpu.memory_space<vmem>>, vector<1x8x2xf32>,
    %215 = vector.extract_strided_slice %201 {offsets = [0, 0], sizes = [8, 4], strides = [1, 1]} : vector<8x128xf32> to vector<8x4xf32>
    %c2_65 = arith.constant 2 : index
    %c0_66 = arith.constant 0 : index
    %c0_67 = arith.constant 0 : index
    %216 = vector.load %arg9[%c2_65, %c0_66, %c0_67] : memref<8x8x4xf32, #tpu.memory_space<vmem>>, vector<1x8x4xf32>
    %217 = vector.shape_cast %216 : vector<1x8x4xf32> to vector<8x4xf32>
    %218 = vector.shape_cast %215 : vector<8x4xf32> to vector<1x8x4xf32>
    tpu.vector_store %arg9[%c2_65, %c0_66, %c0_67], %218 {strides = array<i32>} : memref<8x8x4xf32, #tpu.memory_space<vmem>>, vector<1x8x4xf32>,
    %219 = vector.extract_strided_slice %202 {offsets = [0, 0], sizes = [8, 4], strides = [1, 1]} : vector<8x128xf32> to vector<8x4xf32>
    %220 = math.exp %219 : vector<8x4xf32>
    %cst_68 = arith.constant 1.000000e-15 : f32
    %221 = vector.broadcast %cst_68 : f32 to vector<8x4xf32>
    %222 = arith.addf %220, %221 : vector<8x4xf32>
    %c2_69 = arith.constant 2 : index
    %c0_70 = arith.constant 0 : index
    %c0_71 = arith.constant 0 : index
    %223 = vector.load %arg10[%c2_69, %c0_70, %c0_71] : memref<8x8x4xf32, #tpu.memory_space<vmem>>, vector<1x8x4xf32>
    %224 = vector.shape_cast %223 : vector<1x8x4xf32> to vector<8x4xf32>
    %225 = vector.shape_cast %222 : vector<8x4xf32> to vector<1x8x4xf32>
    tpu.vector_store %arg10[%c2_69, %c0_70, %c0_71], %225 {strides = array<i32>} : memref<8x8x4xf32, #tpu.memory_space<vmem>>, vector<1x8x4xf32>,
    %226 = vector.extract_strided_slice %200 {offsets = [0, 0], sizes = [8, 1], strides = [1, 1]} : vector<8x2xf32> to vector<8x1xf32>
    %c0_i32_72 = arith.constant 0 : i32
    %227 = vector.broadcast %c0_i32_72 : i32 to vector<8x1xi32>
    %228 = vector.extract_strided_slice %200 {offsets = [0, 1], sizes = [8, 1], strides = [1, 1]} : vector<8x2xf32> to vector<8x1xf32>
    %229 = arith.cmpf ogt, %228, %226 : vector<8x1xf32>
    %c1_i32_73 = arith.constant 1 : i32
    %230 = vector.broadcast %c1_i32_73 : i32 to vector<8x1xi32>
    %231 = arith.select %229, %230, %227 : vector<8x1xi1>, vector<8x1xi32>
    %232 = vector.extract_strided_slice %201 {offsets = [0, 0], sizes = [8, 2], strides = [1, 1]} : vector<8x128xf32> to vector<8x2xf32>
    %c1_i32_74 = arith.constant 1 : i32
    %233 = vector.broadcast %c1_i32_74 : i32 to vector<8x1xi32>
    %234 = arith.cmpi eq, %231, %233 : vector<8x1xi32>
    %235 = vector.extract_strided_slice %201 {offsets = [0, 2], sizes = [8, 2], strides = [1, 1]} : vector<8x128xf32> to vector<8x2xf32>
    %236 = vector.shape_cast %234 : vector<8x1xi1> to vector<8x1xi1>
    %237 = vector.broadcast %236 : vector<8x1xi1> to vector<8x2xi1>
    %238 = arith.select %237, %235, %232 : vector<8x2xi1>, vector<8x2xf32>
    %c2_75 = arith.constant 2 : index
    %239 = memref.load %arg1[%c2_75] : memref<8xi32, #tpu.memory_space<smem>>
    %c0_i32_76 = arith.constant 0 : i32
    %240 = arith.cmpi sgt, %239, %c0_i32_76 : i32
    %c2_77 = arith.constant 2 : index
    %c0_78 = arith.constant 0 : index
    %c0_79 = arith.constant 0 : index
    %241 = vector.load %arg4[%c2_77, %c0_78, %c0_79] : memref<8x8x2xf32, #tpu.memory_space<vmem>>, vector<1x8x2xf32>
    %242 = vector.shape_cast %241 : vector<1x8x2xf32> to vector<8x2xf32>
    %243 = arith.select %240, %242, %238 : vector<8x2xf32>
    %244 = tpu.concatenate %243, %196 in 1 : vector<8x2xf32>, vector<8x19xf32> -> vector<8x21xf32>
    %cst_80 = arith.constant dense<0.000000e+00> : vector<8x1152xf32>
    %245 = tpu.matmul %244, %1, %cst_80 {dimension_numbers = #tpu.dot_dimension_numbers<[1], [0], [0], [1], [0, 0, 1, 1], [], []>} : vector<8x21xf32>, vector<21x1152xf32>, vector<8x1152xf32> -> vector<8x1152xf32>
    %246 = arith.addf %245, %4 : vector<8x1152xf32>
    %247 = vector.extract_strided_slice %246 {offsets = [0, 0], sizes = [8, 128], strides = [1, 1]} : vector<8x1152xf32> to vector<8x128xf32>
    %248 = vector.extract_strided_slice %246 {offsets = [0, 128], sizes = [8, 128], strides = [1, 1]} : vector<8x1152xf32> to vector<8x128xf32>
    %249 = vector.extract_strided_slice %246 {offsets = [0, 256], sizes = [8, 128], strides = [1, 1]} : vector<8x1152xf32> to vector<8x128xf32>
    %250 = vector.extract_strided_slice %246 {offsets = [0, 384], sizes = [8, 128], strides = [1, 1]} : vector<8x1152xf32> to vector<8x128xf32>
    %251 = vector.extract_strided_slice %246 {offsets = [0, 512], sizes = [8, 128], strides = [1, 1]} : vector<8x1152xf32> to vector<8x128xf32>
    %252 = vector.extract_strided_slice %246 {offsets = [0, 640], sizes = [8, 128], strides = [1, 1]} : vector<8x1152xf32> to vector<8x128xf32>
    %253 = arith.addf %247, %250 : vector<8x128xf32>
    %254 = arith.negf %253 : vector<8x128xf32>
    %255 = math.exp %254 : vector<8x128xf32>
    %cst_81 = arith.constant 1.000000e+00 : f32
    %256 = vector.broadcast %cst_81 : f32 to vector<8x128xf32>
    %257 = arith.addf %256, %255 : vector<8x128xf32>
    %258 = arith.divf %256, %257 : vector<8x128xf32>
    %259 = arith.addf %248, %251 : vector<8x128xf32>
    %260 = arith.negf %259 : vector<8x128xf32>
    %261 = math.exp %260 : vector<8x128xf32>
    %cst_82 = arith.constant 1.000000e+00 : f32
    %262 = vector.broadcast %cst_82 : f32 to vector<8x128xf32>
    %263 = arith.addf %262, %261 : vector<8x128xf32>
    %264 = arith.divf %262, %263 : vector<8x128xf32>
    %265 = arith.mulf %258, %252 : vector<8x128xf32>
    %266 = arith.addf %249, %265 : vector<8x128xf32>
    %267 = math.tanh %266 : vector<8x128xf32>
    %268 = vector.extract_strided_slice %264 {offsets = [0, 0], sizes = [8, 19], strides = [1, 1]} : vector<8x128xf32> to vector<8x19xf32>
    %cst_83 = arith.constant 1.000000e+00 : f32
    %269 = vector.broadcast %cst_83 : f32 to vector<8x19xf32>
    %270 = arith.subf %269, %268 : vector<8x19xf32>
    %271 = vector.extract_strided_slice %267 {offsets = [0, 0], sizes = [8, 19], strides = [1, 1]} : vector<8x128xf32> to vector<8x19xf32>
    %272 = arith.mulf %270, %271 : vector<8x19xf32>
    %273 = vector.extract_strided_slice %264 {offsets = [0, 0], sizes = [8, 19], strides = [1, 1]} : vector<8x128xf32> to vector<8x19xf32>
    %274 = arith.mulf %273, %196 : vector<8x19xf32>
    %275 = arith.addf %272, %274 : vector<8x19xf32>
    %276 = vector.extract_strided_slice %246 {offsets = [0, 768], sizes = [8, 384], strides = [1, 1]} : vector<8x1152xf32> to vector<8x384xf32>
    %cst_84 = arith.constant dense<0.000000e+00> : vector<8x384xf32>
    %277 = tpu.matmul %275, %2, %cst_84 {dimension_numbers = #tpu.dot_dimension_numbers<[1], [0], [0], [1], [0, 0, 1, 1], [], []>} : vector<8x19xf32>, vector<19x384xf32>, vector<8x384xf32> -> vector<8x384xf32>
    %278 = arith.addf %276, %277 : vector<8x384xf32>
    %279 = vector.extract_strided_slice %278 {offsets = [0, 0], sizes = [8, 2], strides = [1, 1]} : vector<8x384xf32> to vector<8x2xf32>
    %280 = vector.extract_strided_slice %278 {offsets = [0, 128], sizes = [8, 128], strides = [1, 1]} : vector<8x384xf32> to vector<8x128xf32>
    %281 = vector.extract_strided_slice %278 {offsets = [0, 256], sizes = [8, 128], strides = [1, 1]} : vector<8x384xf32> to vector<8x128xf32>
    %cst_85 = arith.constant dense<0xFF800000> : vector<8xf32>
    %282 = vector.multi_reduction <maximumf>, %279, %cst_85 [1] : vector<8x2xf32> to vector<8xf32>
    %283 = vector.shape_cast %282 : vector<8xf32> to vector<8x1xf32>
    %284 = vector.broadcast %283 : vector<8x1xf32> to vector<8x2xf32>
    %285 = arith.subf %279, %284 : vector<8x2xf32>
    %286 = math.exp %285 : vector<8x2xf32>
    %cst_86 = arith.constant dense<0.000000e+00> : vector<8xf32>
    %287 = vector.multi_reduction <add>, %286, %cst_86 [1] : vector<8x2xf32> to vector<8xf32>
    %288 = vector.shape_cast %287 : vector<8xf32> to vector<8x1xf32>
    %289 = vector.broadcast %288 : vector<8x1xf32> to vector<8x2xf32>
    %290 = arith.divf %286, %289 : vector<8x2xf32>
    %c3 = arith.constant 3 : index
    %c0_87 = arith.constant 0 : index
    %c0_88 = arith.constant 0 : index
    %291 = vector.load %arg8[%c3, %c0_87, %c0_88] : memref<8x8x2xf32, #tpu.memory_space<vmem>>, vector<1x8x2xf32>
    %292 = vector.shape_cast %291 : vector<1x8x2xf32> to vector<8x2xf32>
    %293 = vector.shape_cast %290 : vector<8x2xf32> to vector<1x8x2xf32>
    tpu.vector_store %arg8[%c3, %c0_87, %c0_88], %293 {strides = array<i32>} : memref<8x8x2xf32, #tpu.memory_space<vmem>>, vector<1x8x2xf32>,
    %294 = vector.extract_strided_slice %280 {offsets = [0, 0], sizes = [8, 4], strides = [1, 1]} : vector<8x128xf32> to vector<8x4xf32>
    %c3_89 = arith.constant 3 : index
    %c0_90 = arith.constant 0 : index
    %c0_91 = arith.constant 0 : index
    %295 = vector.load %arg9[%c3_89, %c0_90, %c0_91] : memref<8x8x4xf32, #tpu.memory_space<vmem>>, vector<1x8x4xf32>
    %296 = vector.shape_cast %295 : vector<1x8x4xf32> to vector<8x4xf32>
    %297 = vector.shape_cast %294 : vector<8x4xf32> to vector<1x8x4xf32>
    tpu.vector_store %arg9[%c3_89, %c0_90, %c0_91], %297 {strides = array<i32>} : memref<8x8x4xf32, #tpu.memory_space<vmem>>, vector<1x8x4xf32>,
    %298 = vector.extract_strided_slice %281 {offsets = [0, 0], sizes = [8, 4], strides = [1, 1]} : vector<8x128xf32> to vector<8x4xf32>
    %299 = math.exp %298 : vector<8x4xf32>
    %cst_92 = arith.constant 1.000000e-15 : f32
    %300 = vector.broadcast %cst_92 : f32 to vector<8x4xf32>
    %301 = arith.addf %299, %300 : vector<8x4xf32>
    %c3_93 = arith.constant 3 : index
    %c0_94 = arith.constant 0 : index
    %c0_95 = arith.constant 0 : index
    %302 = vector.load %arg10[%c3_93, %c0_94, %c0_95] : memref<8x8x4xf32, #tpu.memory_space<vmem>>, vector<1x8x4xf32>
    %303 = vector.shape_cast %302 : vector<1x8x4xf32> to vector<8x4xf32>
    %304 = vector.shape_cast %301 : vector<8x4xf32> to vector<1x8x4xf32>
    tpu.vector_store %arg10[%c3_93, %c0_94, %c0_95], %304 {strides = array<i32>} : memref<8x8x4xf32, #tpu.memory_space<vmem>>, vector<1x8x4xf32>,
    %305 = vector.extract_strided_slice %279 {offsets = [0, 0], sizes = [8, 1], strides = [1, 1]} : vector<8x2xf32> to vector<8x1xf32>
    %c0_i32_96 = arith.constant 0 : i32
    %306 = vector.broadcast %c0_i32_96 : i32 to vector<8x1xi32>
    %307 = vector.extract_strided_slice %279 {offsets = [0, 1], sizes = [8, 1], strides = [1, 1]} : vector<8x2xf32> to vector<8x1xf32>
    %308 = arith.cmpf ogt, %307, %305 : vector<8x1xf32>
    %c1_i32_97 = arith.constant 1 : i32
    %309 = vector.broadcast %c1_i32_97 : i32 to vector<8x1xi32>
    %310 = arith.select %308, %309, %306 : vector<8x1xi1>, vector<8x1xi32>
    %311 = vector.extract_strided_slice %280 {offsets = [0, 0], sizes = [8, 2], strides = [1, 1]} : vector<8x128xf32> to vector<8x2xf32>
    %c1_i32_98 = arith.constant 1 : i32
    %312 = vector.broadcast %c1_i32_98 : i32 to vector<8x1xi32>
    %313 = arith.cmpi eq, %310, %312 : vector<8x1xi32>
    %314 = vector.extract_strided_slice %280 {offsets = [0, 2], sizes = [8, 2], strides = [1, 1]} : vector<8x128xf32> to vector<8x2xf32>
    %315 = vector.shape_cast %313 : vector<8x1xi1> to vector<8x1xi1>
    %316 = vector.broadcast %315 : vector<8x1xi1> to vector<8x2xi1>
    %317 = arith.select %316, %314, %311 : vector<8x2xi1>, vector<8x2xf32>
    %c3_99 = arith.constant 3 : index
    %318 = memref.load %arg1[%c3_99] : memref<8xi32, #tpu.memory_space<smem>>
    %c0_i32_100 = arith.constant 0 : i32
    %319 = arith.cmpi sgt, %318, %c0_i32_100 : i32
    %c3_101 = arith.constant 3 : index
    %c0_102 = arith.constant 0 : index
    %c0_103 = arith.constant 0 : index
    %320 = vector.load %arg4[%c3_101, %c0_102, %c0_103] : memref<8x8x2xf32, #tpu.memory_space<vmem>>, vector<1x8x2xf32>
    %321 = vector.shape_cast %320 : vector<1x8x2xf32> to vector<8x2xf32>
    %322 = arith.select %319, %321, %317 : vector<8x2xf32>
    %323 = tpu.concatenate %322, %275 in 1 : vector<8x2xf32>, vector<8x19xf32> -> vector<8x21xf32>
    %cst_104 = arith.constant dense<0.000000e+00> : vector<8x1152xf32>
    %324 = tpu.matmul %323, %1, %cst_104 {dimension_numbers = #tpu.dot_dimension_numbers<[1], [0], [0], [1], [0, 0, 1, 1], [], []>} : vector<8x21xf32>, vector<21x1152xf32>, vector<8x1152xf32> -> vector<8x1152xf32>
    %325 = arith.addf %324, %4 : vector<8x1152xf32>
    %326 = vector.extract_strided_slice %325 {offsets = [0, 0], sizes = [8, 128], strides = [1, 1]} : vector<8x1152xf32> to vector<8x128xf32>
    %327 = vector.extract_strided_slice %325 {offsets = [0, 128], sizes = [8, 128], strides = [1, 1]} : vector<8x1152xf32> to vector<8x128xf32>
    %328 = vector.extract_strided_slice %325 {offsets = [0, 256], sizes = [8, 128], strides = [1, 1]} : vector<8x1152xf32> to vector<8x128xf32>
    %329 = vector.extract_strided_slice %325 {offsets = [0, 384], sizes = [8, 128], strides = [1, 1]} : vector<8x1152xf32> to vector<8x128xf32>
    %330 = vector.extract_strided_slice %325 {offsets = [0, 512], sizes = [8, 128], strides = [1, 1]} : vector<8x1152xf32> to vector<8x128xf32>
    %331 = vector.extract_strided_slice %325 {offsets = [0, 640], sizes = [8, 128], strides = [1, 1]} : vector<8x1152xf32> to vector<8x128xf32>
    %332 = arith.addf %326, %329 : vector<8x128xf32>
    %333 = arith.negf %332 : vector<8x128xf32>
    %334 = math.exp %333 : vector<8x128xf32>
    %cst_105 = arith.constant 1.000000e+00 : f32
    %335 = vector.broadcast %cst_105 : f32 to vector<8x128xf32>
    %336 = arith.addf %335, %334 : vector<8x128xf32>
    %337 = arith.divf %335, %336 : vector<8x128xf32>
    %338 = arith.addf %327, %330 : vector<8x128xf32>
    %339 = arith.negf %338 : vector<8x128xf32>
    %340 = math.exp %339 : vector<8x128xf32>
    %cst_106 = arith.constant 1.000000e+00 : f32
    %341 = vector.broadcast %cst_106 : f32 to vector<8x128xf32>
    %342 = arith.addf %341, %340 : vector<8x128xf32>
    %343 = arith.divf %341, %342 : vector<8x128xf32>
    %344 = arith.mulf %337, %331 : vector<8x128xf32>
    %345 = arith.addf %328, %344 : vector<8x128xf32>
    %346 = math.tanh %345 : vector<8x128xf32>
    %347 = vector.extract_strided_slice %343 {offsets = [0, 0], sizes = [8, 19], strides = [1, 1]} : vector<8x128xf32> to vector<8x19xf32>
    %cst_107 = arith.constant 1.000000e+00 : f32
    %348 = vector.broadcast %cst_107 : f32 to vector<8x19xf32>
    %349 = arith.subf %348, %347 : vector<8x19xf32>
    %350 = vector.extract_strided_slice %346 {offsets = [0, 0], sizes = [8, 19], strides = [1, 1]} : vector<8x128xf32> to vector<8x19xf32>
    %351 = arith.mulf %349, %350 : vector<8x19xf32>
    %352 = vector.extract_strided_slice %343 {offsets = [0, 0], sizes = [8, 19], strides = [1, 1]} : vector<8x128xf32> to vector<8x19xf32>
    %353 = arith.mulf %352, %275 : vector<8x19xf32>
    %354 = arith.addf %351, %353 : vector<8x19xf32>
    %355 = vector.extract_strided_slice %325 {offsets = [0, 768], sizes = [8, 384], strides = [1, 1]} : vector<8x1152xf32> to vector<8x384xf32>
    %cst_108 = arith.constant dense<0.000000e+00> : vector<8x384xf32>
    %356 = tpu.matmul %354, %2, %cst_108 {dimension_numbers = #tpu.dot_dimension_numbers<[1], [0], [0], [1], [0, 0, 1, 1], [], []>} : vector<8x19xf32>, vector<19x384xf32>, vector<8x384xf32> -> vector<8x384xf32>
    %357 = arith.addf %355, %356 : vector<8x384xf32>
    %358 = vector.extract_strided_slice %357 {offsets = [0, 0], sizes = [8, 2], strides = [1, 1]} : vector<8x384xf32> to vector<8x2xf32>
    %359 = vector.extract_strided_slice %357 {offsets = [0, 128], sizes = [8, 128], strides = [1, 1]} : vector<8x384xf32> to vector<8x128xf32>
    %360 = vector.extract_strided_slice %357 {offsets = [0, 256], sizes = [8, 128], strides = [1, 1]} : vector<8x384xf32> to vector<8x128xf32>
    %cst_109 = arith.constant dense<0xFF800000> : vector<8xf32>
    %361 = vector.multi_reduction <maximumf>, %358, %cst_109 [1] : vector<8x2xf32> to vector<8xf32>
    %362 = vector.shape_cast %361 : vector<8xf32> to vector<8x1xf32>
    %363 = vector.broadcast %362 : vector<8x1xf32> to vector<8x2xf32>
    %364 = arith.subf %358, %363 : vector<8x2xf32>
    %365 = math.exp %364 : vector<8x2xf32>
    %cst_110 = arith.constant dense<0.000000e+00> : vector<8xf32>
    %366 = vector.multi_reduction <add>, %365, %cst_110 [1] : vector<8x2xf32> to vector<8xf32>
    %367 = vector.shape_cast %366 : vector<8xf32> to vector<8x1xf32>
    %368 = vector.broadcast %367 : vector<8x1xf32> to vector<8x2xf32>
    %369 = arith.divf %365, %368 : vector<8x2xf32>
    %c4 = arith.constant 4 : index
    %c0_111 = arith.constant 0 : index
    %c0_112 = arith.constant 0 : index
    %370 = vector.load %arg8[%c4, %c0_111, %c0_112] : memref<8x8x2xf32, #tpu.memory_space<vmem>>, vector<1x8x2xf32>
    %371 = vector.shape_cast %370 : vector<1x8x2xf32> to vector<8x2xf32>
    %372 = vector.shape_cast %369 : vector<8x2xf32> to vector<1x8x2xf32>
    tpu.vector_store %arg8[%c4, %c0_111, %c0_112], %372 {strides = array<i32>} : memref<8x8x2xf32, #tpu.memory_space<vmem>>, vector<1x8x2xf32>,
    %373 = vector.extract_strided_slice %359 {offsets = [0, 0], sizes = [8, 4], strides = [1, 1]} : vector<8x128xf32> to vector<8x4xf32>
    %c4_113 = arith.constant 4 : index
    %c0_114 = arith.constant 0 : index
    %c0_115 = arith.constant 0 : index
    %374 = vector.load %arg9[%c4_113, %c0_114, %c0_115] : memref<8x8x4xf32, #tpu.memory_space<vmem>>, vector<1x8x4xf32>
    %375 = vector.shape_cast %374 : vector<1x8x4xf32> to vector<8x4xf32>
    %376 = vector.shape_cast %373 : vector<8x4xf32> to vector<1x8x4xf32>
    tpu.vector_store %arg9[%c4_113, %c0_114, %c0_115], %376 {strides = array<i32>} : memref<8x8x4xf32, #tpu.memory_space<vmem>>, vector<1x8x4xf32>,
    %377 = vector.extract_strided_slice %360 {offsets = [0, 0], sizes = [8, 4], strides = [1, 1]} : vector<8x128xf32> to vector<8x4xf32>
    %378 = math.exp %377 : vector<8x4xf32>
    %cst_116 = arith.constant 1.000000e-15 : f32
    %379 = vector.broadcast %cst_116 : f32 to vector<8x4xf32>
    %380 = arith.addf %378, %379 : vector<8x4xf32>
    %c4_117 = arith.constant 4 : index
    %c0_118 = arith.constant 0 : index
    %c0_119 = arith.constant 0 : index
    %381 = vector.load %arg10[%c4_117, %c0_118, %c0_119] : memref<8x8x4xf32, #tpu.memory_space<vmem>>, vector<1x8x4xf32>
    %382 = vector.shape_cast %381 : vector<1x8x4xf32> to vector<8x4xf32>
    %383 = vector.shape_cast %380 : vector<8x4xf32> to vector<1x8x4xf32>
    tpu.vector_store %arg10[%c4_117, %c0_118, %c0_119], %383 {strides = array<i32>} : memref<8x8x4xf32, #tpu.memory_space<vmem>>, vector<1x8x4xf32>,
    %384 = vector.extract_strided_slice %358 {offsets = [0, 0], sizes = [8, 1], strides = [1, 1]} : vector<8x2xf32> to vector<8x1xf32>
    %c0_i32_120 = arith.constant 0 : i32
    %385 = vector.broadcast %c0_i32_120 : i32 to vector<8x1xi32>
    %386 = vector.extract_strided_slice %358 {offsets = [0, 1], sizes = [8, 1], strides = [1, 1]} : vector<8x2xf32> to vector<8x1xf32>
    %387 = arith.cmpf ogt, %386, %384 : vector<8x1xf32>
    %c1_i32_121 = arith.constant 1 : i32
    %388 = vector.broadcast %c1_i32_121 : i32 to vector<8x1xi32>
    %389 = arith.select %387, %388, %385 : vector<8x1xi1>, vector<8x1xi32>
    %390 = vector.extract_strided_slice %359 {offsets = [0, 0], sizes = [8, 2], strides = [1, 1]} : vector<8x128xf32> to vector<8x2xf32>
    %c1_i32_122 = arith.constant 1 : i32
    %391 = vector.broadcast %c1_i32_122 : i32 to vector<8x1xi32>
    %392 = arith.cmpi eq, %389, %391 : vector<8x1xi32>
    %393 = vector.extract_strided_slice %359 {offsets = [0, 2], sizes = [8, 2], strides = [1, 1]} : vector<8x128xf32> to vector<8x2xf32>
    %394 = vector.shape_cast %392 : vector<8x1xi1> to vector<8x1xi1>
    %395 = vector.broadcast %394 : vector<8x1xi1> to vector<8x2xi1>
    %396 = arith.select %395, %393, %390 : vector<8x2xi1>, vector<8x2xf32>
    %c4_123 = arith.constant 4 : index
    %397 = memref.load %arg1[%c4_123] : memref<8xi32, #tpu.memory_space<smem>>
    %c0_i32_124 = arith.constant 0 : i32
    %398 = arith.cmpi sgt, %397, %c0_i32_124 : i32
    %c4_125 = arith.constant 4 : index
    %c0_126 = arith.constant 0 : index
    %c0_127 = arith.constant 0 : index
    %399 = vector.load %arg4[%c4_125, %c0_126, %c0_127] : memref<8x8x2xf32, #tpu.memory_space<vmem>>, vector<1x8x2xf32>
    %400 = vector.shape_cast %399 : vector<1x8x2xf32> to vector<8x2xf32>
    %401 = arith.select %398, %400, %396 : vector<8x2xf32>
    %402 = tpu.concatenate %401, %354 in 1 : vector<8x2xf32>, vector<8x19xf32> -> vector<8x21xf32>
    %cst_128 = arith.constant dense<0.000000e+00> : vector<8x1152xf32>
    %403 = tpu.matmul %402, %1, %cst_128 {dimension_numbers = #tpu.dot_dimension_numbers<[1], [0], [0], [1], [0, 0, 1, 1], [], []>} : vector<8x21xf32>, vector<21x1152xf32>, vector<8x1152xf32> -> vector<8x1152xf32>
    %404 = arith.addf %403, %4 : vector<8x1152xf32>
    %405 = vector.extract_strided_slice %404 {offsets = [0, 0], sizes = [8, 128], strides = [1, 1]} : vector<8x1152xf32> to vector<8x128xf32>
    %406 = vector.extract_strided_slice %404 {offsets = [0, 128], sizes = [8, 128], strides = [1, 1]} : vector<8x1152xf32> to vector<8x128xf32>
    %407 = vector.extract_strided_slice %404 {offsets = [0, 256], sizes = [8, 128], strides = [1, 1]} : vector<8x1152xf32> to vector<8x128xf32>
    %408 = vector.extract_strided_slice %404 {offsets = [0, 384], sizes = [8, 128], strides = [1, 1]} : vector<8x1152xf32> to vector<8x128xf32>
    %409 = vector.extract_strided_slice %404 {offsets = [0, 512], sizes = [8, 128], strides = [1, 1]} : vector<8x1152xf32> to vector<8x128xf32>
    %410 = vector.extract_strided_slice %404 {offsets = [0, 640], sizes = [8, 128], strides = [1, 1]} : vector<8x1152xf32> to vector<8x128xf32>
    %411 = arith.addf %405, %408 : vector<8x128xf32>
    %412 = arith.negf %411 : vector<8x128xf32>
    %413 = math.exp %412 : vector<8x128xf32>
    %cst_129 = arith.constant 1.000000e+00 : f32
    %414 = vector.broadcast %cst_129 : f32 to vector<8x128xf32>
    %415 = arith.addf %414, %413 : vector<8x128xf32>
    %416 = arith.divf %414, %415 : vector<8x128xf32>
    %417 = arith.addf %406, %409 : vector<8x128xf32>
    %418 = arith.negf %417 : vector<8x128xf32>
    %419 = math.exp %418 : vector<8x128xf32>
    %cst_130 = arith.constant 1.000000e+00 : f32
    %420 = vector.broadcast %cst_130 : f32 to vector<8x128xf32>
    %421 = arith.addf %420, %419 : vector<8x128xf32>
    %422 = arith.divf %420, %421 : vector<8x128xf32>
    %423 = arith.mulf %416, %410 : vector<8x128xf32>
    %424 = arith.addf %407, %423 : vector<8x128xf32>
    %425 = math.tanh %424 : vector<8x128xf32>
    %426 = vector.extract_strided_slice %422 {offsets = [0, 0], sizes = [8, 19], strides = [1, 1]} : vector<8x128xf32> to vector<8x19xf32>
    %cst_131 = arith.constant 1.000000e+00 : f32
    %427 = vector.broadcast %cst_131 : f32 to vector<8x19xf32>
    %428 = arith.subf %427, %426 : vector<8x19xf32>
    %429 = vector.extract_strided_slice %425 {offsets = [0, 0], sizes = [8, 19], strides = [1, 1]} : vector<8x128xf32> to vector<8x19xf32>
    %430 = arith.mulf %428, %429 : vector<8x19xf32>
    %431 = vector.extract_strided_slice %422 {offsets = [0, 0], sizes = [8, 19], strides = [1, 1]} : vector<8x128xf32> to vector<8x19xf32>
    %432 = arith.mulf %431, %354 : vector<8x19xf32>
    %433 = arith.addf %430, %432 : vector<8x19xf32>
    %434 = vector.extract_strided_slice %404 {offsets = [0, 768], sizes = [8, 384], strides = [1, 1]} : vector<8x1152xf32> to vector<8x384xf32>
    %cst_132 = arith.constant dense<0.000000e+00> : vector<8x384xf32>
    %435 = tpu.matmul %433, %2, %cst_132 {dimension_numbers = #tpu.dot_dimension_numbers<[1], [0], [0], [1], [0, 0, 1, 1], [], []>} : vector<8x19xf32>, vector<19x384xf32>, vector<8x384xf32> -> vector<8x384xf32>
    %436 = arith.addf %434, %435 : vector<8x384xf32>
    %437 = vector.extract_strided_slice %436 {offsets = [0, 0], sizes = [8, 2], strides = [1, 1]} : vector<8x384xf32> to vector<8x2xf32>
    %438 = vector.extract_strided_slice %436 {offsets = [0, 128], sizes = [8, 128], strides = [1, 1]} : vector<8x384xf32> to vector<8x128xf32>
    %439 = vector.extract_strided_slice %436 {offsets = [0, 256], sizes = [8, 128], strides = [1, 1]} : vector<8x384xf32> to vector<8x128xf32>
    %cst_133 = arith.constant dense<0xFF800000> : vector<8xf32>
    %440 = vector.multi_reduction <maximumf>, %437, %cst_133 [1] : vector<8x2xf32> to vector<8xf32>
    %441 = vector.shape_cast %440 : vector<8xf32> to vector<8x1xf32>
    %442 = vector.broadcast %441 : vector<8x1xf32> to vector<8x2xf32>
    %443 = arith.subf %437, %442 : vector<8x2xf32>
    %444 = math.exp %443 : vector<8x2xf32>
    %cst_134 = arith.constant dense<0.000000e+00> : vector<8xf32>
    %445 = vector.multi_reduction <add>, %444, %cst_134 [1] : vector<8x2xf32> to vector<8xf32>
    %446 = vector.shape_cast %445 : vector<8xf32> to vector<8x1xf32>
    %447 = vector.broadcast %446 : vector<8x1xf32> to vector<8x2xf32>
    %448 = arith.divf %444, %447 : vector<8x2xf32>
    %c5 = arith.constant 5 : index
    %c0_135 = arith.constant 0 : index
    %c0_136 = arith.constant 0 : index
    %449 = vector.load %arg8[%c5, %c0_135, %c0_136] : memref<8x8x2xf32, #tpu.memory_space<vmem>>, vector<1x8x2xf32>
    %450 = vector.shape_cast %449 : vector<1x8x2xf32> to vector<8x2xf32>
    %451 = vector.shape_cast %448 : vector<8x2xf32> to vector<1x8x2xf32>
    tpu.vector_store %arg8[%c5, %c0_135, %c0_136], %451 {strides = array<i32>} : memref<8x8x2xf32, #tpu.memory_space<vmem>>, vector<1x8x2xf32>,
    %452 = vector.extract_strided_slice %438 {offsets = [0, 0], sizes = [8, 4], strides = [1, 1]} : vector<8x128xf32> to vector<8x4xf32>
    %c5_137 = arith.constant 5 : index
    %c0_138 = arith.constant 0 : index
    %c0_139 = arith.constant 0 : index
    %453 = vector.load %arg9[%c5_137, %c0_138, %c0_139] : memref<8x8x4xf32, #tpu.memory_space<vmem>>, vector<1x8x4xf32>
    %454 = vector.shape_cast %453 : vector<1x8x4xf32> to vector<8x4xf32>
    %455 = vector.shape_cast %452 : vector<8x4xf32> to vector<1x8x4xf32>
    tpu.vector_store %arg9[%c5_137, %c0_138, %c0_139], %455 {strides = array<i32>} : memref<8x8x4xf32, #tpu.memory_space<vmem>>, vector<1x8x4xf32>,
    %456 = vector.extract_strided_slice %439 {offsets = [0, 0], sizes = [8, 4], strides = [1, 1]} : vector<8x128xf32> to vector<8x4xf32>
    %457 = math.exp %456 : vector<8x4xf32>
    %cst_140 = arith.constant 1.000000e-15 : f32
    %458 = vector.broadcast %cst_140 : f32 to vector<8x4xf32>
    %459 = arith.addf %457, %458 : vector<8x4xf32>
    %c5_141 = arith.constant 5 : index
    %c0_142 = arith.constant 0 : index
    %c0_143 = arith.constant 0 : index
    %460 = vector.load %arg10[%c5_141, %c0_142, %c0_143] : memref<8x8x4xf32, #tpu.memory_space<vmem>>, vector<1x8x4xf32>
    %461 = vector.shape_cast %460 : vector<1x8x4xf32> to vector<8x4xf32>
    %462 = vector.shape_cast %459 : vector<8x4xf32> to vector<1x8x4xf32>
    tpu.vector_store %arg10[%c5_141, %c0_142, %c0_143], %462 {strides = array<i32>} : memref<8x8x4xf32, #tpu.memory_space<vmem>>, vector<1x8x4xf32>,
    %463 = vector.extract_strided_slice %437 {offsets = [0, 0], sizes = [8, 1], strides = [1, 1]} : vector<8x2xf32> to vector<8x1xf32>
    %c0_i32_144 = arith.constant 0 : i32
    %464 = vector.broadcast %c0_i32_144 : i32 to vector<8x1xi32>
    %465 = vector.extract_strided_slice %437 {offsets = [0, 1], sizes = [8, 1], strides = [1, 1]} : vector<8x2xf32> to vector<8x1xf32>
    %466 = arith.cmpf ogt, %465, %463 : vector<8x1xf32>
    %c1_i32_145 = arith.constant 1 : i32
    %467 = vector.broadcast %c1_i32_145 : i32 to vector<8x1xi32>
    %468 = arith.select %466, %467, %464 : vector<8x1xi1>, vector<8x1xi32>
    %469 = vector.extract_strided_slice %438 {offsets = [0, 0], sizes = [8, 2], strides = [1, 1]} : vector<8x128xf32> to vector<8x2xf32>
    %c1_i32_146 = arith.constant 1 : i32
    %470 = vector.broadcast %c1_i32_146 : i32 to vector<8x1xi32>
    %471 = arith.cmpi eq, %468, %470 : vector<8x1xi32>
    %472 = vector.extract_strided_slice %438 {offsets = [0, 2], sizes = [8, 2], strides = [1, 1]} : vector<8x128xf32> to vector<8x2xf32>
    %473 = vector.shape_cast %471 : vector<8x1xi1> to vector<8x1xi1>
    %474 = vector.broadcast %473 : vector<8x1xi1> to vector<8x2xi1>
    %475 = arith.select %474, %472, %469 : vector<8x2xi1>, vector<8x2xf32>
    %c5_147 = arith.constant 5 : index
    %476 = memref.load %arg1[%c5_147] : memref<8xi32, #tpu.memory_space<smem>>
    %c0_i32_148 = arith.constant 0 : i32
    %477 = arith.cmpi sgt, %476, %c0_i32_148 : i32
    %c5_149 = arith.constant 5 : index
    %c0_150 = arith.constant 0 : index
    %c0_151 = arith.constant 0 : index
    %478 = vector.load %arg4[%c5_149, %c0_150, %c0_151] : memref<8x8x2xf32, #tpu.memory_space<vmem>>, vector<1x8x2xf32>
    %479 = vector.shape_cast %478 : vector<1x8x2xf32> to vector<8x2xf32>
    %480 = arith.select %477, %479, %475 : vector<8x2xf32>
    %481 = tpu.concatenate %480, %433 in 1 : vector<8x2xf32>, vector<8x19xf32> -> vector<8x21xf32>
    %cst_152 = arith.constant dense<0.000000e+00> : vector<8x1152xf32>
    %482 = tpu.matmul %481, %1, %cst_152 {dimension_numbers = #tpu.dot_dimension_numbers<[1], [0], [0], [1], [0, 0, 1, 1], [], []>} : vector<8x21xf32>, vector<21x1152xf32>, vector<8x1152xf32> -> vector<8x1152xf32>
    %483 = arith.addf %482, %4 : vector<8x1152xf32>
    %484 = vector.extract_strided_slice %483 {offsets = [0, 0], sizes = [8, 128], strides = [1, 1]} : vector<8x1152xf32> to vector<8x128xf32>
    %485 = vector.extract_strided_slice %483 {offsets = [0, 128], sizes = [8, 128], strides = [1, 1]} : vector<8x1152xf32> to vector<8x128xf32>
    %486 = vector.extract_strided_slice %483 {offsets = [0, 256], sizes = [8, 128], strides = [1, 1]} : vector<8x1152xf32> to vector<8x128xf32>
    %487 = vector.extract_strided_slice %483 {offsets = [0, 384], sizes = [8, 128], strides = [1, 1]} : vector<8x1152xf32> to vector<8x128xf32>
    %488 = vector.extract_strided_slice %483 {offsets = [0, 512], sizes = [8, 128], strides = [1, 1]} : vector<8x1152xf32> to vector<8x128xf32>
    %489 = vector.extract_strided_slice %483 {offsets = [0, 640], sizes = [8, 128], strides = [1, 1]} : vector<8x1152xf32> to vector<8x128xf32>
    %490 = arith.addf %484, %487 : vector<8x128xf32>
    %491 = arith.negf %490 : vector<8x128xf32>
    %492 = math.exp %491 : vector<8x128xf32>
    %cst_153 = arith.constant 1.000000e+00 : f32
    %493 = vector.broadcast %cst_153 : f32 to vector<8x128xf32>
    %494 = arith.addf %493, %492 : vector<8x128xf32>
    %495 = arith.divf %493, %494 : vector<8x128xf32>
    %496 = arith.addf %485, %488 : vector<8x128xf32>
    %497 = arith.negf %496 : vector<8x128xf32>
    %498 = math.exp %497 : vector<8x128xf32>
    %cst_154 = arith.constant 1.000000e+00 : f32
    %499 = vector.broadcast %cst_154 : f32 to vector<8x128xf32>
    %500 = arith.addf %499, %498 : vector<8x128xf32>
    %501 = arith.divf %499, %500 : vector<8x128xf32>
    %502 = arith.mulf %495, %489 : vector<8x128xf32>
    %503 = arith.addf %486, %502 : vector<8x128xf32>
    %504 = math.tanh %503 : vector<8x128xf32>
    %505 = vector.extract_strided_slice %501 {offsets = [0, 0], sizes = [8, 19], strides = [1, 1]} : vector<8x128xf32> to vector<8x19xf32>
    %cst_155 = arith.constant 1.000000e+00 : f32
    %506 = vector.broadcast %cst_155 : f32 to vector<8x19xf32>
    %507 = arith.subf %506, %505 : vector<8x19xf32>
    %508 = vector.extract_strided_slice %504 {offsets = [0, 0], sizes = [8, 19], strides = [1, 1]} : vector<8x128xf32> to vector<8x19xf32>
    %509 = arith.mulf %507, %508 : vector<8x19xf32>
    %510 = vector.extract_strided_slice %501 {offsets = [0, 0], sizes = [8, 19], strides = [1, 1]} : vector<8x128xf32> to vector<8x19xf32>
    %511 = arith.mulf %510, %433 : vector<8x19xf32>
    %512 = arith.addf %509, %511 : vector<8x19xf32>
    %513 = vector.extract_strided_slice %483 {offsets = [0, 768], sizes = [8, 384], strides = [1, 1]} : vector<8x1152xf32> to vector<8x384xf32>
    %cst_156 = arith.constant dense<0.000000e+00> : vector<8x384xf32>
    %514 = tpu.matmul %512, %2, %cst_156 {dimension_numbers = #tpu.dot_dimension_numbers<[1], [0], [0], [1], [0, 0, 1, 1], [], []>} : vector<8x19xf32>, vector<19x384xf32>, vector<8x384xf32> -> vector<8x384xf32>
    %515 = arith.addf %513, %514 : vector<8x384xf32>
    %516 = vector.extract_strided_slice %515 {offsets = [0, 0], sizes = [8, 2], strides = [1, 1]} : vector<8x384xf32> to vector<8x2xf32>
    %517 = vector.extract_strided_slice %515 {offsets = [0, 128], sizes = [8, 128], strides = [1, 1]} : vector<8x384xf32> to vector<8x128xf32>
    %518 = vector.extract_strided_slice %515 {offsets = [0, 256], sizes = [8, 128], strides = [1, 1]} : vector<8x384xf32> to vector<8x128xf32>
    %cst_157 = arith.constant dense<0xFF800000> : vector<8xf32>
    %519 = vector.multi_reduction <maximumf>, %516, %cst_157 [1] : vector<8x2xf32> to vector<8xf32>
    %520 = vector.shape_cast %519 : vector<8xf32> to vector<8x1xf32>
    %521 = vector.broadcast %520 : vector<8x1xf32> to vector<8x2xf32>
    %522 = arith.subf %516, %521 : vector<8x2xf32>
    %523 = math.exp %522 : vector<8x2xf32>
    %cst_158 = arith.constant dense<0.000000e+00> : vector<8xf32>
    %524 = vector.multi_reduction <add>, %523, %cst_158 [1] : vector<8x2xf32> to vector<8xf32>
    %525 = vector.shape_cast %524 : vector<8xf32> to vector<8x1xf32>
    %526 = vector.broadcast %525 : vector<8x1xf32> to vector<8x2xf32>
    %527 = arith.divf %523, %526 : vector<8x2xf32>
    %c6 = arith.constant 6 : index
    %c0_159 = arith.constant 0 : index
    %c0_160 = arith.constant 0 : index
    %528 = vector.load %arg8[%c6, %c0_159, %c0_160] : memref<8x8x2xf32, #tpu.memory_space<vmem>>, vector<1x8x2xf32>
    %529 = vector.shape_cast %528 : vector<1x8x2xf32> to vector<8x2xf32>
    %530 = vector.shape_cast %527 : vector<8x2xf32> to vector<1x8x2xf32>
    tpu.vector_store %arg8[%c6, %c0_159, %c0_160], %530 {strides = array<i32>} : memref<8x8x2xf32, #tpu.memory_space<vmem>>, vector<1x8x2xf32>,
    %531 = vector.extract_strided_slice %517 {offsets = [0, 0], sizes = [8, 4], strides = [1, 1]} : vector<8x128xf32> to vector<8x4xf32>
    %c6_161 = arith.constant 6 : index
    %c0_162 = arith.constant 0 : index
    %c0_163 = arith.constant 0 : index
    %532 = vector.load %arg9[%c6_161, %c0_162, %c0_163] : memref<8x8x4xf32, #tpu.memory_space<vmem>>, vector<1x8x4xf32>
    %533 = vector.shape_cast %532 : vector<1x8x4xf32> to vector<8x4xf32>
    %534 = vector.shape_cast %531 : vector<8x4xf32> to vector<1x8x4xf32>
    tpu.vector_store %arg9[%c6_161, %c0_162, %c0_163], %534 {strides = array<i32>} : memref<8x8x4xf32, #tpu.memory_space<vmem>>, vector<1x8x4xf32>,
    %535 = vector.extract_strided_slice %518 {offsets = [0, 0], sizes = [8, 4], strides = [1, 1]} : vector<8x128xf32> to vector<8x4xf32>
    %536 = math.exp %535 : vector<8x4xf32>
    %cst_164 = arith.constant 1.000000e-15 : f32
    %537 = vector.broadcast %cst_164 : f32 to vector<8x4xf32>
    %538 = arith.addf %536, %537 : vector<8x4xf32>
    %c6_165 = arith.constant 6 : index
    %c0_166 = arith.constant 0 : index
    %c0_167 = arith.constant 0 : index
    %539 = vector.load %arg10[%c6_165, %c0_166, %c0_167] : memref<8x8x4xf32, #tpu.memory_space<vmem>>, vector<1x8x4xf32>
    %540 = vector.shape_cast %539 : vector<1x8x4xf32> to vector<8x4xf32>
    %541 = vector.shape_cast %538 : vector<8x4xf32> to vector<1x8x4xf32>
    tpu.vector_store %arg10[%c6_165, %c0_166, %c0_167], %541 {strides = array<i32>} : memref<8x8x4xf32, #tpu.memory_space<vmem>>, vector<1x8x4xf32>,
    %542 = vector.extract_strided_slice %516 {offsets = [0, 0], sizes = [8, 1], strides = [1, 1]} : vector<8x2xf32> to vector<8x1xf32>
    %c0_i32_168 = arith.constant 0 : i32
    %543 = vector.broadcast %c0_i32_168 : i32 to vector<8x1xi32>
    %544 = vector.extract_strided_slice %516 {offsets = [0, 1], sizes = [8, 1], strides = [1, 1]} : vector<8x2xf32> to vector<8x1xf32>
    %545 = arith.cmpf ogt, %544, %542 : vector<8x1xf32>
    %c1_i32_169 = arith.constant 1 : i32
    %546 = vector.broadcast %c1_i32_169 : i32 to vector<8x1xi32>
    %547 = arith.select %545, %546, %543 : vector<8x1xi1>, vector<8x1xi32>
    %548 = vector.extract_strided_slice %517 {offsets = [0, 0], sizes = [8, 2], strides = [1, 1]} : vector<8x128xf32> to vector<8x2xf32>
    %c1_i32_170 = arith.constant 1 : i32
    %549 = vector.broadcast %c1_i32_170 : i32 to vector<8x1xi32>
    %550 = arith.cmpi eq, %547, %549 : vector<8x1xi32>
    %551 = vector.extract_strided_slice %517 {offsets = [0, 2], sizes = [8, 2], strides = [1, 1]} : vector<8x128xf32> to vector<8x2xf32>
    %552 = vector.shape_cast %550 : vector<8x1xi1> to vector<8x1xi1>
    %553 = vector.broadcast %552 : vector<8x1xi1> to vector<8x2xi1>
    %554 = arith.select %553, %551, %548 : vector<8x2xi1>, vector<8x2xf32>
    %c6_171 = arith.constant 6 : index
    %555 = memref.load %arg1[%c6_171] : memref<8xi32, #tpu.memory_space<smem>>
    %c0_i32_172 = arith.constant 0 : i32
    %556 = arith.cmpi sgt, %555, %c0_i32_172 : i32
    %c6_173 = arith.constant 6 : index
    %c0_174 = arith.constant 0 : index
    %c0_175 = arith.constant 0 : index
    %557 = vector.load %arg4[%c6_173, %c0_174, %c0_175] : memref<8x8x2xf32, #tpu.memory_space<vmem>>, vector<1x8x2xf32>
    %558 = vector.shape_cast %557 : vector<1x8x2xf32> to vector<8x2xf32>
    %559 = arith.select %556, %558, %554 : vector<8x2xf32>
    %560 = tpu.concatenate %559, %512 in 1 : vector<8x2xf32>, vector<8x19xf32> -> vector<8x21xf32>
    %cst_176 = arith.constant dense<0.000000e+00> : vector<8x1152xf32>
    %561 = tpu.matmul %560, %1, %cst_176 {dimension_numbers = #tpu.dot_dimension_numbers<[1], [0], [0], [1], [0, 0, 1, 1], [], []>} : vector<8x21xf32>, vector<21x1152xf32>, vector<8x1152xf32> -> vector<8x1152xf32>
    %562 = arith.addf %561, %4 : vector<8x1152xf32>
    %563 = vector.extract_strided_slice %562 {offsets = [0, 0], sizes = [8, 128], strides = [1, 1]} : vector<8x1152xf32> to vector<8x128xf32>
    %564 = vector.extract_strided_slice %562 {offsets = [0, 128], sizes = [8, 128], strides = [1, 1]} : vector<8x1152xf32> to vector<8x128xf32>
    %565 = vector.extract_strided_slice %562 {offsets = [0, 256], sizes = [8, 128], strides = [1, 1]} : vector<8x1152xf32> to vector<8x128xf32>
    %566 = vector.extract_strided_slice %562 {offsets = [0, 384], sizes = [8, 128], strides = [1, 1]} : vector<8x1152xf32> to vector<8x128xf32>
    %567 = vector.extract_strided_slice %562 {offsets = [0, 512], sizes = [8, 128], strides = [1, 1]} : vector<8x1152xf32> to vector<8x128xf32>
    %568 = vector.extract_strided_slice %562 {offsets = [0, 640], sizes = [8, 128], strides = [1, 1]} : vector<8x1152xf32> to vector<8x128xf32>
    %569 = arith.addf %563, %566 : vector<8x128xf32>
    %570 = arith.negf %569 : vector<8x128xf32>
    %571 = math.exp %570 : vector<8x128xf32>
    %cst_177 = arith.constant 1.000000e+00 : f32
    %572 = vector.broadcast %cst_177 : f32 to vector<8x128xf32>
    %573 = arith.addf %572, %571 : vector<8x128xf32>
    %574 = arith.divf %572, %573 : vector<8x128xf32>
    %575 = arith.addf %564, %567 : vector<8x128xf32>
    %576 = arith.negf %575 : vector<8x128xf32>
    %577 = math.exp %576 : vector<8x128xf32>
    %cst_178 = arith.constant 1.000000e+00 : f32
    %578 = vector.broadcast %cst_178 : f32 to vector<8x128xf32>
    %579 = arith.addf %578, %577 : vector<8x128xf32>
    %580 = arith.divf %578, %579 : vector<8x128xf32>
    %581 = arith.mulf %574, %568 : vector<8x128xf32>
    %582 = arith.addf %565, %581 : vector<8x128xf32>
    %583 = math.tanh %582 : vector<8x128xf32>
    %584 = vector.extract_strided_slice %580 {offsets = [0, 0], sizes = [8, 19], strides = [1, 1]} : vector<8x128xf32> to vector<8x19xf32>
    %cst_179 = arith.constant 1.000000e+00 : f32
    %585 = vector.broadcast %cst_179 : f32 to vector<8x19xf32>
    %586 = arith.subf %585, %584 : vector<8x19xf32>
    %587 = vector.extract_strided_slice %583 {offsets = [0, 0], sizes = [8, 19], strides = [1, 1]} : vector<8x128xf32> to vector<8x19xf32>
    %588 = arith.mulf %586, %587 : vector<8x19xf32>
    %589 = vector.extract_strided_slice %580 {offsets = [0, 0], sizes = [8, 19], strides = [1, 1]} : vector<8x128xf32> to vector<8x19xf32>
    %590 = arith.mulf %589, %512 : vector<8x19xf32>
    %591 = arith.addf %588, %590 : vector<8x19xf32>
    %592 = vector.extract_strided_slice %562 {offsets = [0, 768], sizes = [8, 384], strides = [1, 1]} : vector<8x1152xf32> to vector<8x384xf32>
    %cst_180 = arith.constant dense<0.000000e+00> : vector<8x384xf32>
    %593 = tpu.matmul %591, %2, %cst_180 {dimension_numbers = #tpu.dot_dimension_numbers<[1], [0], [0], [1], [0, 0, 1, 1], [], []>} : vector<8x19xf32>, vector<19x384xf32>, vector<8x384xf32> -> vector<8x384xf32>
    %594 = arith.addf %592, %593 : vector<8x384xf32>
    %595 = vector.extract_strided_slice %594 {offsets = [0, 0], sizes = [8, 2], strides = [1, 1]} : vector<8x384xf32> to vector<8x2xf32>
    %596 = vector.extract_strided_slice %594 {offsets = [0, 128], sizes = [8, 128], strides = [1, 1]} : vector<8x384xf32> to vector<8x128xf32>
    %597 = vector.extract_strided_slice %594 {offsets = [0, 256], sizes = [8, 128], strides = [1, 1]} : vector<8x384xf32> to vector<8x128xf32>
    %cst_181 = arith.constant dense<0xFF800000> : vector<8xf32>
    %598 = vector.multi_reduction <maximumf>, %595, %cst_181 [1] : vector<8x2xf32> to vector<8xf32>
    %599 = vector.shape_cast %598 : vector<8xf32> to vector<8x1xf32>
    %600 = vector.broadcast %599 : vector<8x1xf32> to vector<8x2xf32>
    %601 = arith.subf %595, %600 : vector<8x2xf32>
    %602 = math.exp %601 : vector<8x2xf32>
    %cst_182 = arith.constant dense<0.000000e+00> : vector<8xf32>
    %603 = vector.multi_reduction <add>, %602, %cst_182 [1] : vector<8x2xf32> to vector<8xf32>
    %604 = vector.shape_cast %603 : vector<8xf32> to vector<8x1xf32>
    %605 = vector.broadcast %604 : vector<8x1xf32> to vector<8x2xf32>
    %606 = arith.divf %602, %605 : vector<8x2xf32>
    %c7 = arith.constant 7 : index
    %c0_183 = arith.constant 0 : index
    %c0_184 = arith.constant 0 : index
    %607 = vector.load %arg8[%c7, %c0_183, %c0_184] : memref<8x8x2xf32, #tpu.memory_space<vmem>>, vector<1x8x2xf32>
    %608 = vector.shape_cast %607 : vector<1x8x2xf32> to vector<8x2xf32>
    %609 = vector.shape_cast %606 : vector<8x2xf32> to vector<1x8x2xf32>
    tpu.vector_store %arg8[%c7, %c0_183, %c0_184], %609 {strides = array<i32>} : memref<8x8x2xf32, #tpu.memory_space<vmem>>, vector<1x8x2xf32>,
    %610 = vector.extract_strided_slice %596 {offsets = [0, 0], sizes = [8, 4], strides = [1, 1]} : vector<8x128xf32> to vector<8x4xf32>
    %c7_185 = arith.constant 7 : index
    %c0_186 = arith.constant 0 : index
    %c0_187 = arith.constant 0 : index
    %611 = vector.load %arg9[%c7_185, %c0_186, %c0_187] : memref<8x8x4xf32, #tpu.memory_space<vmem>>, vector<1x8x4xf32>
    %612 = vector.shape_cast %611 : vector<1x8x4xf32> to vector<8x4xf32>
    %613 = vector.shape_cast %610 : vector<8x4xf32> to vector<1x8x4xf32>
    tpu.vector_store %arg9[%c7_185, %c0_186, %c0_187], %613 {strides = array<i32>} : memref<8x8x4xf32, #tpu.memory_space<vmem>>, vector<1x8x4xf32>,
    %614 = vector.extract_strided_slice %597 {offsets = [0, 0], sizes = [8, 4], strides = [1, 1]} : vector<8x128xf32> to vector<8x4xf32>
    %615 = math.exp %614 : vector<8x4xf32>
    %cst_188 = arith.constant 1.000000e-15 : f32
    %616 = vector.broadcast %cst_188 : f32 to vector<8x4xf32>
    %617 = arith.addf %615, %616 : vector<8x4xf32>
    %c7_189 = arith.constant 7 : index
    %c0_190 = arith.constant 0 : index
    %c0_191 = arith.constant 0 : index
    %618 = vector.load %arg10[%c7_189, %c0_190, %c0_191] : memref<8x8x4xf32, #tpu.memory_space<vmem>>, vector<1x8x4xf32>
    %619 = vector.shape_cast %618 : vector<1x8x4xf32> to vector<8x4xf32>
    %620 = vector.shape_cast %617 : vector<8x4xf32> to vector<1x8x4xf32>
    tpu.vector_store %arg10[%c7_189, %c0_190, %c0_191], %620 {strides = array<i32>} : memref<8x8x4xf32, #tpu.memory_space<vmem>>, vector<1x8x4xf32>,
    return
  }
  func.func @transform_0(%arg0: i32, %arg1: memref<8xi32, #tpu.memory_space<smem>>) -> (i32, i32) {
    %c0_i32 = arith.constant 0 : i32
    %c0_i32_0 = arith.constant 0 : i32
    %c0_i32_1 = arith.constant 0 : i32
    return %c0_i32, %c0_i32_0 : i32, i32
  }
  func.func @transform_1(%arg0: i32, %arg1: memref<8xi32, #tpu.memory_space<smem>>) -> (i32, i32) {
    %c0_i32 = arith.constant 0 : i32
    %c0_i32_0 = arith.constant 0 : i32
    %c0_i32_1 = arith.constant 0 : i32
    return %c0_i32, %c0_i32_0 : i32, i32
  }
  func.func @transform_2(%arg0: i32, %arg1: memref<8xi32, #tpu.memory_space<smem>>) -> (i32, i32, i32) {
    %c0_i32 = arith.constant 0 : i32
    %c0_i32_0 = arith.constant 0 : i32
    %c0_i32_1 = arith.constant 0 : i32
    %c0_i32_2 = arith.constant 0 : i32
    return %c0_i32, %c0_i32_0, %c0_i32_1 : i32, i32, i32
  }
  func.func @transform_3(%arg0: i32, %arg1: memref<8xi32, #tpu.memory_space<smem>>) -> (i32, i32) {
    %c0_i32 = arith.constant 0 : i32
    %c0_i32_0 = arith.constant 0 : i32
    %c0_i32_1 = arith.constant 0 : i32
    return %c0_i32, %c0_i32_0 : i32, i32
  }
  func.func @transform_4(%arg0: i32, %arg1: memref<8xi32, #tpu.memory_space<smem>>) -> (i32, i32) {
    %c0_i32 = arith.constant 0 : i32
    %c0_i32_0 = arith.constant 0 : i32
    %c0_i32_1 = arith.constant 0 : i32
    return %c0_i32, %c0_i32_0 : i32, i32
  }
  func.func @transform_5(%arg0: i32, %arg1: memref<8xi32, #tpu.memory_space<smem>>) -> (i32, i32) {
    %c0_i32 = arith.constant 0 : i32
    %c0_i32_0 = arith.constant 0 : i32
    %c0_i32_1 = arith.constant 0 : i32
    return %c0_i32, %c0_i32_0 : i32, i32
  }
  func.func @transform_6(%arg0: i32, %arg1: memref<8xi32, #tpu.memory_space<smem>>) -> (i32, i32, i32) {
    %c0_i32 = arith.constant 0 : i32
    %c0_i32_0 = arith.constant 0 : i32
    %c0_i32_1 = arith.constant 0 : i32
    %c0_i32_2 = arith.constant 0 : i32
    return %c0_i32, %c0_i32_0, %c0_i32_1 : i32, i32, i32
  }
  func.func @transform_7(%arg0: i32, %arg1: memref<8xi32, #tpu.memory_space<smem>>) -> (i32, i32, i32) {
    %c0_i32 = arith.constant 0 : i32
    %c0_i32_0 = arith.constant 0 : i32
    %c0_i32_1 = arith.constant 0 : i32
    %c0_i32_2 = arith.constant 0 : i32
    return %c0_i32, %c0_i32_0, %c0_i32_1 : i32, i32, i32
  }
  func.func @transform_8(%arg0: i32, %arg1: memref<8xi32, #tpu.memory_space<smem>>) -> (i32, i32, i32) {
    %c0_i32 = arith.constant 0 : i32
    %c0_i32_0 = arith.constant 0 : i32
    %c0_i32_1 = arith.constant 0 : i32
    %c0_i32_2 = arith.constant 0 : i32
    return %c0_i32, %c0_i32_0, %c0_i32_1 : i32, i32, i32
  }
}

</mosaic_0001>

<llo_original>
// kernel: tpu_custom_call.1
$region0: #{tpu_custom_call.1}
  #allocation0 [shape = 'u32[]', space=smem, size = 0x4, offset = 0x4, fixed_abs, tag = 'smem constant byte address 0x4 - core index']
  #allocation1 [shape = 'u32[144,128]{1,0:T(1,128)}', space=vmem, size = 0x12000, scoped, tag = 'internal scratch']
  #allocation2 [shape = 's32[1]{0}', space=sflag, size = 0x4, scoped, tag = 'scoped memory for tpu_custom_call.1']
  #allocation3 [shape = 'u8[512]{0}', space=smem, size = 0x200, scoped, tag = 'prefetched SMEM operand 0']
  %s0 = inlined_call_operand.vmem [shape: s32[8], index: 0, kind: input, shape index: {}]
  %s1 = inlined_call_operand.vmem [shape: f32[8,20], index: 1, kind: input, shape index: {}]
  %s2 = inlined_call_operand.vmem [shape: f32[8,2], index: 2, kind: input, shape index: {}]
  %s3 = inlined_call_operand.vmem [shape: f32[8,8,2], index: 3, kind: input, shape index: {}]
  %s4 = inlined_call_operand.hbm [shape: f32[21,1152], index: 4, kind: input, shape index: {}]
  %s5 = inlined_call_operand.hbm [shape: f32[20,1152], index: 5, kind: input, shape index: {}]
  %s6 = inlined_call_operand.vmem [shape: f32[19,384], index: 6, kind: input, shape index: {}]
  %s7 = inlined_call_operand.vmem [shape: f32[8,8,2], index: 7, kind: output, shape index: {0}]
  %s8 = inlined_call_operand.vmem [shape: f32[8,8,4], index: 8, kind: output, shape index: {1}]
  %s9 = inlined_call_operand.vmem [shape: f32[8,8,4], index: 9, kind: output, shape index: {2}]
  %10 = xla_tuple %s7, %s8, %s9
  %s11 = sld [smem:[#allocation0]]
  $region58: #{tpu_custom_call.1} parent=0
    _
  %s13 = ssub.s32 1, %s11
  %s14 = scalar_select 0, %s13, %s11
  %s15 = sshll.u32 %s0, 4
  %s16 = int_to_ptr.vmem [resolvable:$true] %s15
  %18 = dma.vmem_to_smem %s16, 16, [#allocation3], [#allocation2]
  %19 = dma.done [#allocation2], 16
  %20 = sfence
  $region1: #{tpu_custom_call.1} parent=0
    #allocation4 [shape = 'u8[110592]{0}', space=vmem, size = 0x1b000, scoped, tag = 'input window, operand 4, single buffered']
    #allocation5 [shape = 's32[1]{0}', space=sflag, size = 0x4, scoped, tag = 'scoped memory for tpu_custom_call.1']
    #allocation6 [shape = 'u8[110592]{0}', space=vmem, size = 0x1b000, scoped, tag = 'input window, operand 5, single buffered']
    #allocation7 [shape = 's32[1]{0}', space=sflag, size = 0x4, scoped, tag = 'scoped memory for tpu_custom_call.1']
    %21 = vsyncpa [#allocation5], 0
    %22 = vsyncpa [#allocation7], 0
    // Predicated region
    $region2: #{tpu_custom_call.1} parent=1 // pred_check
      _
    $region3: #{tpu_custom_call.1} parent=1 // pred_check_branch
      %24 = sbr.rel (0) target = $region5
    $region4: #{tpu_custom_call.1} parent=1 // pred_region
      _
    $region5: #{tpu_custom_call.1} parent=1 // pred_fallthru
      _
    // Predicated region
    $region6: #{tpu_custom_call.1} parent=1 // pred_check
      _
    $region7: #{tpu_custom_call.1} parent=1 // pred_check_branch
      %26 = sbr.rel (0) target = $region9
    $region8: #{tpu_custom_call.1} parent=1 // pred_region
      _
    $region9: #{tpu_custom_call.1} parent=1 // pred_fallthru
      _
    // Predicated region
    $region10: #{tpu_custom_call.1} parent=1 // pred_check
      _
    $region11: #{tpu_custom_call.1} parent=1 // pred_check_branch
      %28 = sbr.rel (0) target = $region13
    $region12: #{tpu_custom_call.1} parent=1 // pred_region
      _
    $region13: #{tpu_custom_call.1} parent=1 // pred_fallthru
      _
    // Predicated region
    $region14: #{tpu_custom_call.1} parent=1 // pred_check
      _
    $region15: #{tpu_custom_call.1} parent=1 // pred_check_branch
      %30 = sbr.rel (0) target = $region17
    $region16: #{tpu_custom_call.1} parent=1 // pred_region
      %s32 = ssub.s32 3456, 3456
      %33 = vsyncadd [#allocation5], %s32
      %s34 = sshll.u32 [#allocation4], 4
      %s35 = int_to_ptr.vmem [resolvable:$true] %s34
      %40 = dma.hbm_to_vmem [thread:$0]  %s4, 3456, %s35, [#allocation5], 1152, 1152, 72
    $region17: #{tpu_custom_call.1} parent=1 // pred_fallthru
      _
    // Predicated region
    $region18: #{tpu_custom_call.1} parent=1 // pred_check
      _
    $region19: #{tpu_custom_call.1} parent=1 // pred_check_branch
      %42 = sbr.rel (0) target = $region21
    $region20: #{tpu_custom_call.1} parent=1 // pred_region
      %s44 = ssub.s32 3456, 3456
      %45 = vsyncadd [#allocation7], %s44
      %s46 = sshll.u32 [#allocation6], 4
      %s47 = int_to_ptr.vmem [resolvable:$true] %s46
      %52 = dma.hbm_to_vmem [thread:$0]  %s5, 3456, %s47, [#allocation7], 1152, 1152, 72
    $region21: #{tpu_custom_call.1} parent=1 // pred_fallthru
      _
    // Predicated region
    $region22: #{tpu_custom_call.1} parent=1 // pred_check
      _
    $region23: #{tpu_custom_call.1} parent=1 // pred_check_branch
      %54 = sbr.rel (0) target = $region25
    $region24: #{tpu_custom_call.1} parent=1 // pred_region
      _
    $region25: #{tpu_custom_call.1} parent=1 // pred_fallthru
      _
    // Predicated region
    $region26: #{tpu_custom_call.1} parent=1 // pred_check
      _
    $region27: #{tpu_custom_call.1} parent=1 // pred_check_branch
      %56 = sbr.rel (0) target = $region29
    $region28: #{tpu_custom_call.1} parent=1 // pred_region
      %57 = dma.done [#allocation5], 3456
    $region29: #{tpu_custom_call.1} parent=1 // pred_fallthru
      _
    // Predicated region
    $region30: #{tpu_custom_call.1} parent=1 // pred_check
      _
    $region31: #{tpu_custom_call.1} parent=1 // pred_check_branch
      %59 = sbr.rel (0) target = $region33
    $region32: #{tpu_custom_call.1} parent=1 // pred_region
      %60 = dma.done [#allocation7], 3456
    $region33: #{tpu_custom_call.1} parent=1 // pred_fallthru
      _
    %v61 = vld [vmem:[%s1] sm:$0xff]
    %v62 = vld [vmem:[#allocation4] sm:$0xff]
    %v63 = vld [vmem:[#allocation4 + $0x8] sm:$0xff]
    %v64 = vld [vmem:[#allocation4 + $0x10] sm:$0xff]
    %v65 = vld [vmem:[#allocation4 + $0x18] sm:$0xff]
    %v66 = vld [vmem:[#allocation4 + $0x20] sm:$0xff]
    %v67 = vld [vmem:[#allocation4 + $0x28] sm:$0xff]
    %v68 = vld [vmem:[#allocation4 + $0x30] sm:$0xff]
    %v69 = vld [vmem:[#allocation4 + $0x38] sm:$0xff]
    %v70 = vld [vmem:[#allocation4 + $0x40] sm:$0xff]
    %v71 = vld [vmem:[#allocation4 + $0x48] sm:$0xff]
    %v72 = vld [vmem:[#allocation4 + $0x50] sm:$0xff]
    %v73 = vld [vmem:[#allocation4 + $0x58] sm:$0xff]
    %v74 = vld [vmem:[#allocation4 + $0x60] sm:$0xff]
    %v75 = vld [vmem:[#allocation4 + $0x68] sm:$0xff]
    %v76 = vld [vmem:[#allocation4 + $0x70] sm:$0xff]
    %v77 = vld [vmem:[#allocation4 + $0x78] sm:$0xff]
    %v78 = vld [vmem:[#allocation4 + $0x80] sm:$0xff]
    %v79 = vld [vmem:[#allocation4 + $0x88] sm:$0xff]
    %v80 = vld [vmem:[#allocation4 + $0x90] sm:$0x1f]
    %v81 = vld [vmem:[#allocation4 + $0x98] sm:$0x1f]
    %v82 = vld [vmem:[#allocation4 + $0xa0] sm:$0x1f]
    %v83 = vld [vmem:[#allocation4 + $0xa8] sm:$0x1f]
    %v84 = vld [vmem:[#allocation4 + $0xb0] sm:$0x1f]
    %v85 = vld [vmem:[#allocation4 + $0xb8] sm:$0x1f]
    %v86 = vld [vmem:[#allocation4 + $0xc0] sm:$0x1f]
    %v87 = vld [vmem:[#allocation4 + $0xc8] sm:$0x1f]
    %v88 = vld [vmem:[#allocation4 + $0xd0] sm:$0x1f]
    %v89 = vld [vmem:[%s6] sm:$0xff]
    %v90 = vld [vmem:[%s6 + $0x8] sm:$0xff]
    %v91 = vld [vmem:[%s6 + $0x10] sm:$0xff]
    %v92 = vld [vmem:[%s6 + $0x18] sm:$0xff]
    %v93 = vld [vmem:[%s6 + $0x20] sm:$0xff]
    %v94 = vld [vmem:[%s6 + $0x28] sm:$0xff]
    %v95 = vld [vmem:[%s6 + $0x30] sm:$0x7]
    %v96 = vld [vmem:[%s6 + $0x38] sm:$0x7]
    %v97 = vld [vmem:[%s6 + $0x40] sm:$0x7]
    %v98 = vld [vmem:[#allocation6] sm:$0xff]
    %v99 = vld [vmem:[#allocation6 + $0x8] sm:$0xff]
    %v100 = vld [vmem:[#allocation6 + $0x10] sm:$0xff]
    %v101 = vld [vmem:[#allocation6 + $0x18] sm:$0xff]
    %v102 = vld [vmem:[#allocation6 + $0x20] sm:$0xff]
    %v103 = vld [vmem:[#allocation6 + $0x28] sm:$0xff]
    %v104 = vld [vmem:[#allocation6 + $0x30] sm:$0xff]
    %v105 = vld [vmem:[#allocation6 + $0x38] sm:$0xff]
    %v106 = vld [vmem:[#allocation6 + $0x40] sm:$0xff]
    %v107 = vld [vmem:[#allocation6 + $0x48] sm:$0xff]
    %v108 = vld [vmem:[#allocation6 + $0x50] sm:$0xff]
    %v109 = vld [vmem:[#allocation6 + $0x58] sm:$0xff]
    %v110 = vld [vmem:[#allocation6 + $0x60] sm:$0xff]
    %v111 = vld [vmem:[#allocation6 + $0x68] sm:$0xff]
    %v112 = vld [vmem:[#allocation6 + $0x70] sm:$0xff]
    %v113 = vld [vmem:[#allocation6 + $0x78] sm:$0xff]
    %v114 = vld [vmem:[#allocation6 + $0x80] sm:$0xff]
    %v115 = vld [vmem:[#allocation6 + $0x88] sm:$0xff]
    %v116 = vld [vmem:[#allocation6 + $0x90] sm:$0xf]
    %v117 = vld [vmem:[#allocation6 + $0x98] sm:$0xf]
    %v118 = vld [vmem:[#allocation6 + $0xa0] sm:$0xf]
    %v119 = vld [vmem:[#allocation6 + $0xa8] sm:$0xf]
    %v120 = vld [vmem:[#allocation6 + $0xb0] sm:$0xf]
    %v121 = vld [vmem:[#allocation6 + $0xb8] sm:$0xf]
    %v122 = vld [vmem:[#allocation6 + $0xc0] sm:$0xf]
    %v123 = vld [vmem:[#allocation6 + $0xc8] sm:$0xf]
    %v124 = vld [vmem:[#allocation6 + $0xd0] sm:$0xf]
    %vm125 = vcmask 162816
    %v127 = vsel %vm125, %v61, 0
    %vm129 = vcmask 1043456
    %v131 = vsel %vm129, %v116, 0
    %v134 = vsel %vm129, %v117, 0
    %v137 = vsel %vm129, %v118, 0
    %v140 = vsel %vm129, %v119, 0
    %v143 = vsel %vm129, %v120, 0
    %v146 = vsel %vm129, %v121, 0
    %v149 = vsel %vm129, %v122, 0
    %v152 = vsel %vm129, %v123, 0
    %v155 = vsel %vm129, %v124, 0
    %157 = vmatprep.subr.mxu0 %v99
    %158 = vmatpush1.msra.mxu0 %v98
    %159 = vmatprep.subr.mxu0 %v108
    %160 = vmatpush1.msra.mxu0 %v107
    %161 = vmatprep.subr.mxu0 %v134
    %162 = vmatpush1.msra.mxu0 %v131
    %163 = vmatprep.subr.mxu0 0.0
    %164 = vmatpush1.msra.mxu0 0.0
    %165 = vmatprep.subr.mxu0 0.0
    %166 = vmatpush1.msra.mxu0 0.0
    %167 = vmatprep.subr.mxu0 0.0
    %168 = vmatpush1.msra.mxu0 0.0
    %169 = vmatprep.subr.mxu0 0.0
    %170 = vmatpush1.msra.mxu0 0.0
    %171 = vmatprep.subr.mxu0 0.0
    %172 = vmatpush1.msra.mxu0 0.0
    %173 = vmatprep.subr.mxu0 0.0
    %174 = vmatpush1.msra.mxu0 0.0
    %175 = vmatprep.subr.mxu0 0.0
    %176 = vmatpush1.msra.mxu0 0.0
    %177 = vmatprep.subr.mxu0 0.0
    %178 = vmatpush1.msra.mxu0 0.0
    %179 = vmatprep.subr.mxu0 0.0
    %180 = vmatpush1.msra.mxu0 0.0
    %181 = vmatprep.subr.mxu0 0.0
    %182 = vmatpush1.msra.mxu0 0.0
    %183 = vmatprep.subr.mxu0 0.0
    %184 = vmatpush1.msra.mxu0 0.0
    %185 = vmatprep.subr.mxu0 0.0
    %186 = vmatpush1.msra.mxu0 0.0
    %187 = vmatprep.subr.mxu0 0.0
    %188 = vmatpush1.msra.mxu0 0.0
    %189 = vmatprep.subr.mxu0 0.0
    %190 = vmatpush1.msra.mxu0 0.0
    %191 = vmatprep.subr.mxu0 0.0
    %192 = vmatpush1.msra.mxu0 0.0
    %193 = vmatprep.subr.mxu0 0.0
    %194 = vmatpush1.msra.mxu0 0.0
    %195 = vmatprep.subr.mxu0 0.0
    %196 = vmatpush1.msra.mxu0 0.0
    %197 = vmatprep.subr.mxu0 0.0
    %198 = vmatpush1.msra.mxu0 0.0
    %199 = vmatprep.subr.mxu0 0.0
    %200 = vmatpush1.msra.mxu0 0.0
    %201 = vmatprep.subr.mxu0 0.0
    %202 = vmatpush1.msra.mxu0 0.0
    %203 = vmatprep.subr.mxu0 0.0
    %204 = vmatpush1.msra.mxu0 0.0
    %205 = vmatprep.subr.mxu0 0.0
    %206 = vmatpush1.msra.mxu0 0.0
    %207 = vmatprep.subr.mxu0 0.0
    %208 = vmatpush1.msra.mxu0 0.0
    %209 = vmatprep.subr.mxu0 0.0
    %210 = vmatpush1.msra.mxu0 0.0
    %211 = vmatprep.subr.mxu0 0.0
    %212 = vmatpush1.msra.mxu0 0.0
    %213 = vmatprep.subr.mxu0 0.0
    %214 = vmatpush1.msra.mxu0 0.0
    %215 = vmatprep.subr.mxu0 0.0
    %216 = vmatpush1.msra.mxu0 0.0
    %217 = vmatprep.subr.mxu0 0.0
    %218 = vmatpush1.msra.mxu0 0.0
    %219 = vmatprep.subr.mxu0 0.0
    %220 = vmatpush1.msra.mxu0 0.0
    %221 = vmatprep.mubr.f32.mxu0 0.0
    %222 = vmatmul.mubr.f32.gmra.mrb[0].mxu0 %v127
    %v223 = vpop.f32.mrb[0].mxu0
    %v224 = vadd.f32 0.0, %v223
    %v225 = vpop.f32.mrb[0].mxu0
    %v226 = vadd.f32 0.0, %v225
    %227 = vdwg.mxu0
    %228 = vmatprep.subr.mxu0 %v101
    %229 = vmatpush1.msra.mxu0 %v100
    %230 = vmatprep.subr.mxu0 %v110
    %231 = vmatpush1.msra.mxu0 %v109
    %232 = vmatprep.subr.mxu0 %v140
    %233 = vmatpush1.msra.mxu0 %v137
    %234 = vmatprep.subr.mxu0 0.0
    %235 = vmatpush1.msra.mxu0 0.0
    %236 = vmatprep.subr.mxu0 0.0
    %237 = vmatpush1.msra.mxu0 0.0
    %238 = vmatprep.subr.mxu0 0.0
    %239 = vmatpush1.msra.mxu0 0.0
    %240 = vmatprep.subr.mxu0 0.0
    %241 = vmatpush1.msra.mxu0 0.0
    %242 = vmatprep.subr.mxu0 0.0
    %243 = vmatpush1.msra.mxu0 0.0
    %244 = vmatprep.subr.mxu0 0.0
    %245 = vmatpush1.msra.mxu0 0.0
    %246 = vmatprep.subr.mxu0 0.0
    %247 = vmatpush1.msra.mxu0 0.0
    %248 = vmatprep.subr.mxu0 0.0
    %249 = vmatpush1.msra.mxu0 0.0
    %250 = vmatprep.subr.mxu0 0.0
    %251 = vmatpush1.msra.mxu0 0.0
    %252 = vmatprep.subr.mxu0 0.0
    %253 = vmatpush1.msra.mxu0 0.0
    %254 = vmatprep.subr.mxu0 0.0
    %255 = vmatpush1.msra.mxu0 0.0
    %256 = vmatprep.subr.mxu0 0.0
    %257 = vmatpush1.msra.mxu0 0.0
    %258 = vmatprep.subr.mxu0 0.0
    %259 = vmatpush1.msra.mxu0 0.0
    %260 = vmatprep.subr.mxu0 0.0
    %261 = vmatpush1.msra.mxu0 0.0
    %262 = vmatprep.subr.mxu0 0.0
    %263 = vmatpush1.msra.mxu0 0.0
    %264 = vmatprep.subr.mxu0 0.0
    %265 = vmatpush1.msra.mxu0 0.0
    %266 = vmatprep.subr.mxu0 0.0
    %267 = vmatpush1.msra.mxu0 0.0
    %268 = vmatprep.subr.mxu0 0.0
    %269 = vmatpush1.msra.mxu0 0.0
    %270 = vmatprep.subr.mxu0 0.0
    %271 = vmatpush1.msra.mxu0 0.0
    %272 = vmatprep.subr.mxu0 0.0
    %273 = vmatpush1.msra.mxu0 0.0
    %274 = vmatprep.subr.mxu0 0.0
    %275 = vmatpush1.msra.mxu0 0.0
    %276 = vmatprep.subr.mxu0 0.0
    %277 = vmatpush1.msra.mxu0 0.0
    %278 = vmatprep.subr.mxu0 0.0
    %279 = vmatpush1.msra.mxu0 0.0
    %280 = vmatprep.subr.mxu0 0.0
    %281 = vmatpush1.msra.mxu0 0.0
    %282 = vmatprep.subr.mxu0 0.0
    %283 = vmatpush1.msra.mxu0 0.0
    %284 = vmatprep.subr.mxu0 0.0
    %285 = vmatpush1.msra.mxu0 0.0
    %286 = vmatprep.subr.mxu0 0.0
    %287 = vmatpush1.msra.mxu0 0.0
    %288 = vmatprep.subr.mxu0 0.0
    %289 = vmatpush1.msra.mxu0 0.0
    %290 = vmatprep.subr.mxu0 0.0
    %291 = vmatpush1.msra.mxu0 0.0
    %292 = vmatprep.mubr.f32.mxu0 0.0
    %293 = vmatmul.mubr.f32.gmra.mrb[0].mxu0 %v127
    %v294 = vpop.f32.mrb[0].mxu0
    %v295 = vadd.f32 0.0, %v294
    %v296 = vpop.f32.mrb[0].mxu0
    %v297 = vadd.f32 0.0, %v296
    %298 = vdwg.mxu0
    %299 = vmatprep.subr.mxu0 %v103
    %300 = vmatpush1.msra.mxu0 %v102
    %301 = vmatprep.subr.mxu0 %v112
    %302 = vmatpush1.msra.mxu0 %v111
    %303 = vmatprep.subr.mxu0 %v146
    %304 = vmatpush1.msra.mxu0 %v143
    %305 = vmatprep.subr.mxu0 0.0
    %306 = vmatpush1.msra.mxu0 0.0
    %307 = vmatprep.subr.mxu0 0.0
    %308 = vmatpush1.msra.mxu0 0.0
    %309 = vmatprep.subr.mxu0 0.0
    %310 = vmatpush1.msra.mxu0 0.0
    %311 = vmatprep.subr.mxu0 0.0
    %312 = vmatpush1.msra.mxu0 0.0
    %313 = vmatprep.subr.mxu0 0.0
    %314 = vmatpush1.msra.mxu0 0.0
    %315 = vmatprep.subr.mxu0 0.0
    %316 = vmatpush1.msra.mxu0 0.0
    %317 = vmatprep.subr.mxu0 0.0
    %318 = vmatpush1.msra.mxu0 0.0
    %319 = vmatprep.subr.mxu0 0.0
    %320 = vmatpush1.msra.mxu0 0.0
    %321 = vmatprep.subr.mxu0 0.0
    %322 = vmatpush1.msra.mxu0 0.0
    %323 = vmatprep.subr.mxu0 0.0
    %324 = vmatpush1.msra.mxu0 0.0
    %325 = vmatprep.subr.mxu0 0.0
    %326 = vmatpush1.msra.mxu0 0.0
    %327 = vmatprep.subr.mxu0 0.0
    %328 = vmatpush1.msra.mxu0 0.0
    %329 = vmatprep.subr.mxu0 0.0
    %330 = vmatpush1.msra.mxu0 0.0
    %331 = vmatprep.subr.mxu0 0.0
    %332 = vmatpush1.msra.mxu0 0.0
    %333 = vmatprep.subr.mxu0 0.0
    %334 = vmatpush1.msra.mxu0 0.0
    %335 = vmatprep.subr.mxu0 0.0
    %336 = vmatpush1.msra.mxu0 0.0
    %337 = vmatprep.subr.mxu0 0.0
    %338 = vmatpush1.msra.mxu0 0.0
    %339 = vmatprep.subr.mxu0 0.0
    %340 = vmatpush1.msra.mxu0 0.0
    %341 = vmatprep.subr.mxu0 0.0
    %342 = vmatpush1.msra.mxu0 0.0
    %343 = vmatprep.subr.mxu0 0.0
    %344 = vmatpush1.msra.mxu0 0.0
    %345 = vmatprep.subr.mxu0 0.0
    %346 = vmatpush1.msra.mxu0 0.0
    %347 = vmatprep.subr.mxu0 0.0
    %348 = vmatpush1.msra.mxu0 0.0
    %349 = vmatprep.subr.mxu0 0.0
    %350 = vmatpush1.msra.mxu0 0.0
    %351 = vmatprep.subr.mxu0 0.0
    %352 = vmatpush1.msra.mxu0 0.0
    %353 = vmatprep.subr.mxu0 0.0
    %354 = vmatpush1.msra.mxu0 0.0
    %355 = vmatprep.subr.mxu0 0.0
    %356 = vmatpush1.msra.mxu0 0.0
    %357 = vmatprep.subr.mxu0 0.0
    %358 = vmatpush1.msra.mxu0 0.0
    %359 = vmatprep.subr.mxu0 0.0
    %360 = vmatpush1.msra.mxu0 0.0
    %361 = vmatprep.subr.mxu0 0.0
    %362 = vmatpush1.msra.mxu0 0.0
    %363 = vmatprep.mubr.f32.mxu0 0.0
    %364 = vmatmul.mubr.f32.gmra.mrb[0].mxu0 %v127
    %v365 = vpop.f32.mrb[0].mxu0
    %v366 = vadd.f32 0.0, %v365
    %v367 = vpop.f32.mrb[0].mxu0
    %v368 = vadd.f32 0.0, %v367
    %369 = vdwg.mxu0
    %370 = vmatprep.subr.mxu0 %v105
    %371 = vmatpush1.msra.mxu0 %v104
    %372 = vmatprep.subr.mxu0 %v114
    %373 = vmatpush1.msra.mxu0 %v113
    %374 = vmatprep.subr.mxu0 %v152
    %375 = vmatpush1.msra.mxu0 %v149
    %376 = vmatprep.subr.mxu0 0.0
    %377 = vmatpush1.msra.mxu0 0.0
    %378 = vmatprep.subr.mxu0 0.0
    %379 = vmatpush1.msra.mxu0 0.0
    %380 = vmatprep.subr.mxu0 0.0
    %381 = vmatpush1.msra.mxu0 0.0
    %382 = vmatprep.subr.mxu0 0.0
    %383 = vmatpush1.msra.mxu0 0.0
    %384 = vmatprep.subr.mxu0 0.0
    %385 = vmatpush1.msra.mxu0 0.0
    %386 = vmatprep.subr.mxu0 0.0
    %387 = vmatpush1.msra.mxu0 0.0
    %388 = vmatprep.subr.mxu0 0.0
    %389 = vmatpush1.msra.mxu0 0.0
    %390 = vmatprep.subr.mxu0 0.0
    %391 = vmatpush1.msra.mxu0 0.0
    %392 = vmatprep.subr.mxu0 0.0
    %393 = vmatpush1.msra.mxu0 0.0
    %394 = vmatprep.subr.mxu0 0.0
    %395 = vmatpush1.msra.mxu0 0.0
    %396 = vmatprep.subr.mxu0 0.0
    %397 = vmatpush1.msra.mxu0 0.0
    %398 = vmatprep.subr.mxu0 0.0
    %399 = vmatpush1.msra.mxu0 0.0
    %400 = vmatprep.subr.mxu0 0.0
    %401 = vmatpush1.msra.mxu0 0.0
    %402 = vmatprep.subr.mxu0 0.0
    %403 = vmatpush1.msra.mxu0 0.0
    %404 = vmatprep.subr.mxu0 0.0
    %405 = vmatpush1.msra.mxu0 0.0
    %406 = vmatprep.subr.mxu0 0.0
    %407 = vmatpush1.msra.mxu0 0.0
    %408 = vmatprep.subr.mxu0 0.0
    %409 = vmatpush1.msra.mxu0 0.0
    %410 = vmatprep.subr.mxu0 0.0
    %411 = vmatpush1.msra.mxu0 0.0
    %412 = vmatprep.subr.mxu0 0.0
    %413 = vmatpush1.msra.mxu0 0.0
    %414 = vmatprep.subr.mxu0 0.0
    %415 = vmatpush1.msra.mxu0 0.0
    %416 = vmatprep.subr.mxu0 0.0
    %417 = vmatpush1.msra.mxu0 0.0
    %418 = vmatprep.subr.mxu0 0.0
    %419 = vmatpush1.msra.mxu0 0.0
    %420 = vmatprep.subr.mxu0 0.0
    %421 = vmatpush1.msra.mxu0 0.0
    %422 = vmatprep.subr.mxu0 0.0
    %423 = vmatpush1.msra.mxu0 0.0
    %424 = vmatprep.subr.mxu0 0.0
    %425 = vmatpush1.msra.mxu0 0.0
    %426 = vmatprep.subr.mxu0 0.0
    %427 = vmatpush1.msra.mxu0 0.0
    %428 = vmatprep.subr.mxu0 0.0
    %429 = vmatpush1.msra.mxu0 0.0
    %430 = vmatprep.subr.mxu0 0.0
    %431 = vmatpush1.msra.mxu0 0.0
    %432 = vmatprep.subr.mxu0 0.0
    %433 = vmatpush1.msra.mxu0 0.0
    %434 = vmatprep.mubr.f32.mxu0 0.0
    %435 = vmatmul.mubr.f32.gmra.mrb[0].mxu0 %v127
    %v436 = vpop.f32.mrb[0].mxu0
    %v437 = vadd.f32 0.0, %v436
    %v438 = vpop.f32.mrb[0].mxu0
    %v439 = vadd.f32 0.0, %v438
    %440 = vdwg.mxu0
    %441 = vmatprep.subr.mxu0 0.0
    %442 = vmatpush1.msra.mxu0 %v106
    %443 = vmatprep.subr.mxu0 0.0
    %444 = vmatpush1.msra.mxu0 %v115
    %445 = vmatprep.subr.mxu0 0.0
    %446 = vmatpush1.msra.mxu0 %v155
    %447 = vmatprep.subr.mxu0 0.0
    %448 = vmatpush1.msra.mxu0 0.0
    %449 = vmatprep.subr.mxu0 0.0
    %450 = vmatpush1.msra.mxu0 0.0
    %451 = vmatprep.subr.mxu0 0.0
    %452 = vmatpush1.msra.mxu0 0.0
    %453 = vmatprep.subr.mxu0 0.0
    %454 = vmatpush1.msra.mxu0 0.0
    %455 = vmatprep.subr.mxu0 0.0
    %456 = vmatpush1.msra.mxu0 0.0
    %457 = vmatprep.subr.mxu0 0.0
    %458 = vmatpush1.msra.mxu0 0.0
    %459 = vmatprep.subr.mxu0 0.0
    %460 = vmatpush1.msra.mxu0 0.0
    %461 = vmatprep.subr.mxu0 0.0
    %462 = vmatpush1.msra.mxu0 0.0
    %463 = vmatprep.subr.mxu0 0.0
    %464 = vmatpush1.msra.mxu0 0.0
    %465 = vmatprep.subr.mxu0 0.0
    %466 = vmatpush1.msra.mxu0 0.0
    %467 = vmatprep.subr.mxu0 0.0
    %468 = vmatpush1.msra.mxu0 0.0
    %469 = vmatprep.subr.mxu0 0.0
    %470 = vmatpush1.msra.mxu0 0.0
    %471 = vmatprep.subr.mxu0 0.0
    %472 = vmatpush1.msra.mxu0 0.0
    %473 = vmatprep.subr.mxu0 0.0
    %474 = vmatpush1.msra.mxu0 0.0
    %475 = vmatprep.subr.mxu0 0.0
    %476 = vmatpush1.msra.mxu0 0.0
    %477 = vmatprep.subr.mxu0 0.0
    %478 = vmatpush1.msra.mxu0 0.0
    %479 = vmatprep.subr.mxu0 0.0
    %480 = vmatpush1.msra.mxu0 0.0
    %481 = vmatprep.subr.mxu0 0.0
    %482 = vmatpush1.msra.mxu0 0.0
    %483 = vmatprep.subr.mxu0 0.0
    %484 = vmatpush1.msra.mxu0 0.0
    %485 = vmatprep.subr.mxu0 0.0
    %486 = vmatpush1.msra.mxu0 0.0
    %487 = vmatprep.subr.mxu0 0.0
    %488 = vmatpush1.msra.mxu0 0.0
    %489 = vmatprep.subr.mxu0 0.0
    %490 = vmatpush1.msra.mxu0 0.0
    %491 = vmatprep.subr.mxu0 0.0
    %492 = vmatpush1.msra.mxu0 0.0
    %493 = vmatprep.subr.mxu0 0.0
    %494 = vmatpush1.msra.mxu0 0.0
    %495 = vmatprep.subr.mxu0 0.0
    %496 = vmatpush1.msra.mxu0 0.0
    %497 = vmatprep.subr.mxu0 0.0
    %498 = vmatpush1.msra.mxu0 0.0
    %499 = vmatprep.subr.mxu0 0.0
    %500 = vmatpush1.msra.mxu0 0.0
    %501 = vmatprep.subr.mxu0 0.0
    %502 = vmatpush1.msra.mxu0 0.0
    %503 = vmatprep.subr.mxu0 0.0
    %504 = vmatpush1.msra.mxu0 0.0
    %505 = vmatprep.mubr.f32.mxu0 0.0
    %506 = vmatmul.mubr.f32.gmra.mrb[0].mxu0 %v127
    %v507 = vpop.f32.mrb[0].mxu0
    %v508 = vadd.f32 0.0, %v507
    %v509 = vpop.f32.mrb[0].mxu0
    %510 = vdwg.mxu0
    %v511 = vld [vmem:[%s2] sm:$0xff]
    %512 = vrot.lane.b32.xlu0 %v61, 2
    %v513 = vpop.permute.xlu0 %512
    %vm515 = vcmask 15360
    %v516 = vsel %vm515, %v511, %v513
    %vm517 = vcmask 171008
    %v519 = vsel %vm517, %v516, 0
    %vm521 = vcmask 1044480
    %v523 = vsel %vm521, %v80, 0
    %v526 = vsel %vm521, %v81, 0
    %v529 = vsel %vm521, %v82, 0
    %v532 = vsel %vm521, %v83, 0
    %v535 = vsel %vm521, %v84, 0
    %v538 = vsel %vm521, %v85, 0
    %v541 = vsel %vm521, %v86, 0
    %v544 = vsel %vm521, %v87, 0
    %v547 = vsel %vm521, %v88, 0
    %549 = vmatprep.subr.mxu0 %v63
    %550 = vmatpush1.msra.mxu0 %v62
    %551 = vmatprep.subr.mxu0 %v72
    %552 = vmatpush1.msra.mxu0 %v71
    %553 = vmatprep.subr.mxu0 %v526
    %554 = vmatpush1.msra.mxu0 %v523
    %555 = vmatprep.subr.mxu0 0.0
    %556 = vmatpush1.msra.mxu0 0.0
    %557 = vmatprep.subr.mxu0 0.0
    %558 = vmatpush1.msra.mxu0 0.0
    %559 = vmatprep.subr.mxu0 0.0
    %560 = vmatpush1.msra.mxu0 0.0
    %561 = vmatprep.subr.mxu0 0.0
    %562 = vmatpush1.msra.mxu0 0.0
    %563 = vmatprep.subr.mxu0 0.0
    %564 = vmatpush1.msra.mxu0 0.0
    %565 = vmatprep.subr.mxu0 0.0
    %566 = vmatpush1.msra.mxu0 0.0
    %567 = vmatprep.subr.mxu0 0.0
    %568 = vmatpush1.msra.mxu0 0.0
    %569 = vmatprep.subr.mxu0 0.0
    %570 = vmatpush1.msra.mxu0 0.0
    %571 = vmatprep.subr.mxu0 0.0
    %572 = vmatpush1.msra.mxu0 0.0
    %573 = vmatprep.subr.mxu0 0.0
    %574 = vmatpush1.msra.mxu0 0.0
    %575 = vmatprep.subr.mxu0 0.0
    %576 = vmatpush1.msra.mxu0 0.0
    %577 = vmatprep.subr.mxu0 0.0
    %578 = vmatpush1.msra.mxu0 0.0
    %579 = vmatprep.subr.mxu0 0.0
    %580 = vmatpush1.msra.mxu0 0.0
    %581 = vmatprep.subr.mxu0 0.0
    %582 = vmatpush1.msra.mxu0 0.0
    %583 = vmatprep.subr.mxu0 0.0
    %584 = vmatpush1.msra.mxu0 0.0
    %585 = vmatprep.subr.mxu0 0.0
    %586 = vmatpush1.msra.mxu0 0.0
    %587 = vmatprep.subr.mxu0 0.0
    %588 = vmatpush1.msra.mxu0 0.0
    %589 = vmatprep.subr.mxu0 0.0
    %590 = vmatpush1.msra.mxu0 0.0
    %591 = vmatprep.subr.mxu0 0.0
    %592 = vmatpush1.msra.mxu0 0.0
    %593 = vmatprep.subr.mxu0 0.0
    %594 = vmatpush1.msra.mxu0 0.0
    %595 = vmatprep.subr.mxu0 0.0
    %596 = vmatpush1.msra.mxu0 0.0
    %597 = vmatprep.subr.mxu0 0.0
    %598 = vmatpush1.msra.mxu0 0.0
    %599 = vmatprep.subr.mxu0 0.0
    %600 = vmatpush1.msra.mxu0 0.0
    %601 = vmatprep.subr.mxu0 0.0
    %602 = vmatpush1.msra.mxu0 0.0
    %603 = vmatprep.subr.mxu0 0.0
    %604 = vmatpush1.msra.mxu0 0.0
    %605 = vmatprep.subr.mxu0 0.0
    %606 = vmatpush1.msra.mxu0 0.0
    %607 = vmatprep.subr.mxu0 0.0
    %608 = vmatpush1.msra.mxu0 0.0
    %609 = vmatprep.subr.mxu0 0.0
    %610 = vmatpush1.msra.mxu0 0.0
    %611 = vmatprep.subr.mxu0 0.0
    %612 = vmatpush1.msra.mxu0 0.0
    %613 = vmatprep.mubr.f32.mxu0 0.0
    %614 = vmatmul.mubr.f32.gmra.mrb[0].mxu0 %v519
    %v615 = vpop.f32.mrb[0].mxu0
    %v616 = vadd.f32 %v224, %v615
    %v617 = vpop.f32.mrb[0].mxu0
    %v618 = vadd.f32 %v226, %v617
    %619 = vdwg.mxu0
    %620 = vmatprep.subr.mxu0 %v65
    %621 = vmatpush1.msra.mxu0 %v64
    %622 = vmatprep.subr.mxu0 %v74
    %623 = vmatpush1.msra.mxu0 %v73
    %624 = vmatprep.subr.mxu0 %v532
    %625 = vmatpush1.msra.mxu0 %v529
    %626 = vmatprep.subr.mxu0 0.0
    %627 = vmatpush1.msra.mxu0 0.0
    %628 = vmatprep.subr.mxu0 0.0
    %629 = vmatpush1.msra.mxu0 0.0
    %630 = vmatprep.subr.mxu0 0.0
    %631 = vmatpush1.msra.mxu0 0.0
    %632 = vmatprep.subr.mxu0 0.0
    %633 = vmatpush1.msra.mxu0 0.0
    %634 = vmatprep.subr.mxu0 0.0
    %635 = vmatpush1.msra.mxu0 0.0
    %636 = vmatprep.subr.mxu0 0.0
    %637 = vmatpush1.msra.mxu0 0.0
    %638 = vmatprep.subr.mxu0 0.0
    %639 = vmatpush1.msra.mxu0 0.0
    %640 = vmatprep.subr.mxu0 0.0
    %641 = vmatpush1.msra.mxu0 0.0
    %642 = vmatprep.subr.mxu0 0.0
    %643 = vmatpush1.msra.mxu0 0.0
    %644 = vmatprep.subr.mxu0 0.0
    %645 = vmatpush1.msra.mxu0 0.0
    %646 = vmatprep.subr.mxu0 0.0
    %647 = vmatpush1.msra.mxu0 0.0
    %648 = vmatprep.subr.mxu0 0.0
    %649 = vmatpush1.msra.mxu0 0.0
    %650 = vmatprep.subr.mxu0 0.0
    %651 = vmatpush1.msra.mxu0 0.0
    %652 = vmatprep.subr.mxu0 0.0
    %653 = vmatpush1.msra.mxu0 0.0
    %654 = vmatprep.subr.mxu0 0.0
    %655 = vmatpush1.msra.mxu0 0.0
    %656 = vmatprep.subr.mxu0 0.0
    %657 = vmatpush1.msra.mxu0 0.0
    %658 = vmatprep.subr.mxu0 0.0
    %659 = vmatpush1.msra.mxu0 0.0
    %660 = vmatprep.subr.mxu0 0.0
    %661 = vmatpush1.msra.mxu0 0.0
    %662 = vmatprep.subr.mxu0 0.0
    %663 = vmatpush1.msra.mxu0 0.0
    %664 = vmatprep.subr.mxu0 0.0
    %665 = vmatpush1.msra.mxu0 0.0
    %666 = vmatprep.subr.mxu0 0.0
    %667 = vmatpush1.msra.mxu0 0.0
    %668 = vmatprep.subr.mxu0 0.0
    %669 = vmatpush1.msra.mxu0 0.0
    %670 = vmatprep.subr.mxu0 0.0
    %671 = vmatpush1.msra.mxu0 0.0
    %672 = vmatprep.subr.mxu0 0.0
    %673 = vmatpush1.msra.mxu0 0.0
    %674 = vmatprep.subr.mxu0 0.0
    %675 = vmatpush1.msra.mxu0 0.0
    %676 = vmatprep.subr.mxu0 0.0
    %677 = vmatpush1.msra.mxu0 0.0
    %678 = vmatprep.subr.mxu0 0.0
    %679 = vmatpush1.msra.mxu0 0.0
    %680 = vmatprep.subr.mxu0 0.0
    %681 = vmatpush1.msra.mxu0 0.0
    %682 = vmatprep.subr.mxu0 0.0
    %683 = vmatpush1.msra.mxu0 0.0
    %684 = vmatprep.mubr.f32.mxu0 0.0
    %685 = vmatmul.mubr.f32.gmra.mrb[0].mxu0 %v519
    %v686 = vpop.f32.mrb[0].mxu0
    %v687 = vadd.f32 %v295, %v686
    %v688 = vpop.f32.mrb[0].mxu0
    %v689 = vadd.f32 %v297, %v688
    %690 = vdwg.mxu0
    %691 = vmatprep.subr.mxu0 %v67
    %692 = vmatpush1.msra.mxu0 %v66
    %693 = vmatprep.subr.mxu0 %v76
    %694 = vmatpush1.msra.mxu0 %v75
    %695 = vmatprep.subr.mxu0 %v538
    %696 = vmatpush1.msra.mxu0 %v535
    %697 = vmatprep.subr.mxu0 0.0
    %698 = vmatpush1.msra.mxu0 0.0
    %699 = vmatprep.subr.mxu0 0.0
    %700 = vmatpush1.msra.mxu0 0.0
    %701 = vmatprep.subr.mxu0 0.0
    %702 = vmatpush1.msra.mxu0 0.0
    %703 = vmatprep.subr.mxu0 0.0
    %704 = vmatpush1.msra.mxu0 0.0
    %705 = vmatprep.subr.mxu0 0.0
    %706 = vmatpush1.msra.mxu0 0.0
    %707 = vmatprep.subr.mxu0 0.0
    %708 = vmatpush1.msra.mxu0 0.0
    %709 = vmatprep.subr.mxu0 0.0
    %710 = vmatpush1.msra.mxu0 0.0
    %711 = vmatprep.subr.mxu0 0.0
    %712 = vmatpush1.msra.mxu0 0.0
    %713 = vmatprep.subr.mxu0 0.0
    %714 = vmatpush1.msra.mxu0 0.0
    %715 = vmatprep.subr.mxu0 0.0
    %716 = vmatpush1.msra.mxu0 0.0
    %717 = vmatprep.subr.mxu0 0.0
    %718 = vmatpush1.msra.mxu0 0.0
    %719 = vmatprep.subr.mxu0 0.0
    %720 = vmatpush1.msra.mxu0 0.0
    %721 = vmatprep.subr.mxu0 0.0
    %722 = vmatpush1.msra.mxu0 0.0
    %723 = vmatprep.subr.mxu0 0.0
    %724 = vmatpush1.msra.mxu0 0.0
    %725 = vmatprep.subr.mxu0 0.0
    %726 = vmatpush1.msra.mxu0 0.0
    %727 = vmatprep.subr.mxu0 0.0
    %728 = vmatpush1.msra.mxu0 0.0
    %729 = vmatprep.subr.mxu0 0.0
    %730 = vmatpush1.msra.mxu0 0.0
    %731 = vmatprep.subr.mxu0 0.0
    %732 = vmatpush1.msra.mxu0 0.0
    %733 = vmatprep.subr.mxu0 0.0
    %734 = vmatpush1.msra.mxu0 0.0
    %735 = vmatprep.subr.mxu0 0.0
    %736 = vmatpush1.msra.mxu0 0.0
    %737 = vmatprep.subr.mxu0 0.0
    %738 = vmatpush1.msra.mxu0 0.0
    %739 = vmatprep.subr.mxu0 0.0
    %740 = vmatpush1.msra.mxu0 0.0
    %741 = vmatprep.subr.mxu0 0.0
    %742 = vmatpush1.msra.mxu0 0.0
    %743 = vmatprep.subr.mxu0 0.0
    %744 = vmatpush1.msra.mxu0 0.0
    %745 = vmatprep.subr.mxu0 0.0
    %746 = vmatpush1.msra.mxu0 0.0
    %747 = vmatprep.subr.mxu0 0.0
    %748 = vmatpush1.msra.mxu0 0.0
    %749 = vmatprep.subr.mxu0 0.0
    %750 = vmatpush1.msra.mxu0 0.0
    %751 = vmatprep.subr.mxu0 0.0
    %752 = vmatpush1.msra.mxu0 0.0
    %753 = vmatprep.subr.mxu0 0.0
    %754 = vmatpush1.msra.mxu0 0.0
    %755 = vmatprep.mubr.f32.mxu0 0.0
    %756 = vmatmul.mubr.f32.gmra.mrb[0].mxu0 %v519
    %v757 = vpop.f32.mrb[0].mxu0
    %v758 = vadd.f32 %v366, %v757
    %v759 = vpop.f32.mrb[0].mxu0
    %v760 = vadd.f32 %v368, %v759
    %761 = vdwg.mxu0
    %762 = vmatprep.subr.mxu0 %v69
    %763 = vmatpush1.msra.mxu0 %v68
    %764 = vmatprep.subr.mxu0 %v78
    %765 = vmatpush1.msra.mxu0 %v77
    %766 = vmatprep.subr.mxu0 %v544
    %767 = vmatpush1.msra.mxu0 %v541
    %768 = vmatprep.subr.mxu0 0.0
    %769 = vmatpush1.msra.mxu0 0.0
    %770 = vmatprep.subr.mxu0 0.0
    %771 = vmatpush1.msra.mxu0 0.0
    %772 = vmatprep.subr.mxu0 0.0
    %773 = vmatpush1.msra.mxu0 0.0
    %774 = vmatprep.subr.mxu0 0.0
    %775 = vmatpush1.msra.mxu0 0.0
    %776 = vmatprep.subr.mxu0 0.0
    %777 = vmatpush1.msra.mxu0 0.0
    %778 = vmatprep.subr.mxu0 0.0
    %779 = vmatpush1.msra.mxu0 0.0
    %780 = vmatprep.subr.mxu0 0.0
    %781 = vmatpush1.msra.mxu0 0.0
    %782 = vmatprep.subr.mxu0 0.0
    %783 = vmatpush1.msra.mxu0 0.0
    %784 = vmatprep.subr.mxu0 0.0
    %785 = vmatpush1.msra.mxu0 0.0
    %786 = vmatprep.subr.mxu0 0.0
    %787 = vmatpush1.msra.mxu0 0.0
    %788 = vmatprep.subr.mxu0 0.0
    %789 = vmatpush1.msra.mxu0 0.0
    %790 = vmatprep.subr.mxu0 0.0
    %791 = vmatpush1.msra.mxu0 0.0
    %792 = vmatprep.subr.mxu0 0.0
    %793 = vmatpush1.msra.mxu0 0.0
    %794 = vmatprep.subr.mxu0 0.0
    %795 = vmatpush1.msra.mxu0 0.0
    %796 = vmatprep.subr.mxu0 0.0
    %797 = vmatpush1.msra.mxu0 0.0
    %798 = vmatprep.subr.mxu0 0.0
    %799 = vmatpush1.msra.mxu0 0.0
    %800 = vmatprep.subr.mxu0 0.0
    %801 = vmatpush1.msra.mxu0 0.0
    %802 = vmatprep.subr.mxu0 0.0
    %803 = vmatpush1.msra.mxu0 0.0
    %804 = vmatprep.subr.mxu0 0.0
    %805 = vmatpush1.msra.mxu0 0.0
    %806 = vmatprep.subr.mxu0 0.0
    %807 = vmatpush1.msra.mxu0 0.0
    %808 = vmatprep.subr.mxu0 0.0
    %809 = vmatpush1.msra.mxu0 0.0
    %810 = vmatprep.subr.mxu0 0.0
    %811 = vmatpush1.msra.mxu0 0.0
    %812 = vmatprep.subr.mxu0 0.0
    %813 = vmatpush1.msra.mxu0 0.0
    %814 = vmatprep.subr.mxu0 0.0
    %815 = vmatpush1.msra.mxu0 0.0
    %816 = vmatprep.subr.mxu0 0.0
    %817 = vmatpush1.msra.mxu0 0.0
    %818 = vmatprep.subr.mxu0 0.0
    %819 = vmatpush1.msra.mxu0 0.0
    %820 = vmatprep.subr.mxu0 0.0
    %821 = vmatpush1.msra.mxu0 0.0
    %822 = vmatprep.subr.mxu0 0.0
    %823 = vmatpush1.msra.mxu0 0.0
    %824 = vmatprep.subr.mxu0 0.0
    %825 = vmatpush1.msra.mxu0 0.0
    %826 = vmatprep.mubr.f32.mxu0 0.0
    %827 = vmatmul.mubr.f32.gmra.mrb[0].mxu0 %v519
    %v828 = vpop.f32.mrb[0].mxu0
    %v829 = vadd.f32 %v437, %v828
    %v830 = vpop.f32.mrb[0].mxu0
    %v831 = vadd.f32 %v439, %v830
    %832 = vdwg.mxu0
    %833 = vmatprep.subr.mxu0 0.0
    %834 = vmatpush1.msra.mxu0 %v70
    %835 = vmatprep.subr.mxu0 0.0
    %836 = vmatpush1.msra.mxu0 %v79
    %837 = vmatprep.subr.mxu0 0.0
    %838 = vmatpush1.msra.mxu0 %v547
    %839 = vmatprep.subr.mxu0 0.0
    %840 = vmatpush1.msra.mxu0 0.0
    %841 = vmatprep.subr.mxu0 0.0
    %842 = vmatpush1.msra.mxu0 0.0
    %843 = vmatprep.subr.mxu0 0.0
    %844 = vmatpush1.msra.mxu0 0.0
    %845 = vmatprep.subr.mxu0 0.0
    %846 = vmatpush1.msra.mxu0 0.0
    %847 = vmatprep.subr.mxu0 0.0
    %848 = vmatpush1.msra.mxu0 0.0
    %849 = vmatprep.subr.mxu0 0.0
    %850 = vmatpush1.msra.mxu0 0.0
    %851 = vmatprep.subr.mxu0 0.0
    %852 = vmatpush1.msra.mxu0 0.0
    %853 = vmatprep.subr.mxu0 0.0
    %854 = vmatpush1.msra.mxu0 0.0
    %855 = vmatprep.subr.mxu0 0.0
    %856 = vmatpush1.msra.mxu0 0.0
    %857 = vmatprep.subr.mxu0 0.0
    %858 = vmatpush1.msra.mxu0 0.0
    %859 = vmatprep.subr.mxu0 0.0
    %860 = vmatpush1.msra.mxu0 0.0
    %861 = vmatprep.subr.mxu0 0.0
    %862 = vmatpush1.msra.mxu0 0.0
    %863 = vmatprep.subr.mxu0 0.0
    %864 = vmatpush1.msra.mxu0 0.0
    %865 = vmatprep.subr.mxu0 0.0
    %866 = vmatpush1.msra.mxu0 0.0
    %867 = vmatprep.subr.mxu0 0.0
    %868 = vmatpush1.msra.mxu0 0.0
    %869 = vmatprep.subr.mxu0 0.0
    %870 = vmatpush1.msra.mxu0 0.0
    %871 = vmatprep.subr.mxu0 0.0
    %872 = vmatpush1.msra.mxu0 0.0
    %873 = vmatprep.subr.mxu0 0.0
    %874 = vmatpush1.msra.mxu0 0.0
    %875 = vmatprep.subr.mxu0 0.0
    %876 = vmatpush1.msra.mxu0 0.0
    %877 = vmatprep.subr.mxu0 0.0
    %878 = vmatpush1.msra.mxu0 0.0
    %879 = vmatprep.subr.mxu0 0.0
    %880 = vmatpush1.msra.mxu0 0.0
    %881 = vmatprep.subr.mxu0 0.0
    %882 = vmatpush1.msra.mxu0 0.0
    %883 = vmatprep.subr.mxu0 0.0
    %884 = vmatpush1.msra.mxu0 0.0
    %885 = vmatprep.subr.mxu0 0.0
    %886 = vmatpush1.msra.mxu0 0.0
    %887 = vmatprep.subr.mxu0 0.0
    %888 = vmatpush1.msra.mxu0 0.0
    %889 = vmatprep.subr.mxu0 0.0
    %890 = vmatpush1.msra.mxu0 0.0
    %891 = vmatprep.subr.mxu0 0.0
    %892 = vmatpush1.msra.mxu0 0.0
    %893 = vmatprep.subr.mxu0 0.0
    %894 = vmatpush1.msra.mxu0 0.0
    %895 = vmatprep.subr.mxu0 0.0
    %896 = vmatpush1.msra.mxu0 0.0
    %897 = vmatprep.mubr.f32.mxu0 0.0
    %898 = vmatmul.mubr.f32.gmra.mrb[0].mxu0 %v519
    %v899 = vpop.f32.mrb[0].mxu0
    %v900 = vadd.f32 %v508, %v899
    %v901 = vpop.f32.mrb[0].mxu0
    %902 = vdwg.mxu0
    %v903 = vadd.f32 %v616, %v689
    %v904 = vxor.u32 %v903, 2147483648
    %v905 = vmul.f32 %v904, 1.442695
    %v906 = vpow.pop %v905
    %v907 = vadd.f32 %v906, 1.0
    %v908 = vrcp.pop %v907
    %v909 = vmul.f32 1.0, %v908
    %v910 = vadd.f32 %v618, %v758
    %v911 = vxor.u32 %v910, 2147483648
    %v912 = vmul.f32 %v911, 1.442695
    %v913 = vpow.pop %v912
    %v914 = vadd.f32 %v913, 1.0
    %v915 = vrcp.pop %v914
    %v916 = vmul.f32 1.0, %v915
    %v917 = vmul.f32 %v909, %v760
    %v918 = vadd.f32 %v687, %v917
    %v919 = vtanh.pop %v918
    %v920 = vsub.f32 1.0, %v916
    %v921 = vmul.f32 %v920, %v919
    %v922 = vmul.f32 %v916, %v61
    %v923 = vadd.f32 %v921, %v922
    %vm924 = vcmask 154624
    %v926 = vsel %vm924, %v923, 0
    %vm928 = vcmask 1042432
    %v930 = vsel %vm928, %v95, 0
    %v933 = vsel %vm928, %v96, 0
    %v936 = vsel %vm928, %v97, 0
    %938 = vmatprep.subr.mxu0 %v90
    %939 = vmatpush1.msra.mxu0 %v89
    %940 = vmatprep.subr.mxu0 %v93
    %941 = vmatpush1.msra.mxu0 %v92
    %942 = vmatprep.subr.mxu0 %v933
    %943 = vmatpush1.msra.mxu0 %v930
    %944 = vmatprep.subr.mxu0 0.0
    %945 = vmatpush1.msra.mxu0 0.0
    %946 = vmatprep.subr.mxu0 0.0
    %947 = vmatpush1.msra.mxu0 0.0
    %948 = vmatprep.subr.mxu0 0.0
    %949 = vmatpush1.msra.mxu0 0.0
    %950 = vmatprep.subr.mxu0 0.0
    %951 = vmatpush1.msra.mxu0 0.0
    %952 = vmatprep.subr.mxu0 0.0
    %953 = vmatpush1.msra.mxu0 0.0
    %954 = vmatprep.subr.mxu0 0.0
    %955 = vmatpush1.msra.mxu0 0.0
    %956 = vmatprep.subr.mxu0 0.0
    %957 = vmatpush1.msra.mxu0 0.0
    %958 = vmatprep.subr.mxu0 0.0
    %959 = vmatpush1.msra.mxu0 0.0
    %960 = vmatprep.subr.mxu0 0.0
    %961 = vmatpush1.msra.mxu0 0.0
    %962 = vmatprep.subr.mxu0 0.0
    %963 = vmatpush1.msra.mxu0 0.0
    %964 = vmatprep.subr.mxu0 0.0
    %965 = vmatpush1.msra.mxu0 0.0
    %966 = vmatprep.subr.mxu0 0.0
    %967 = vmatpush1.msra.mxu0 0.0
    %968 = vmatprep.subr.mxu0 0.0
    %969 = vmatpush1.msra.mxu0 0.0
    %970 = vmatprep.subr.mxu0 0.0
    %971 = vmatpush1.msra.mxu0 0.0
    %972 = vmatprep.subr.mxu0 0.0
    %973 = vmatpush1.msra.mxu0 0.0
    %974 = vmatprep.subr.mxu0 0.0
    %975 = vmatpush1.msra.mxu0 0.0
    %976 = vmatprep.subr.mxu0 0.0
    %977 = vmatpush1.msra.mxu0 0.0
    %978 = vmatprep.subr.mxu0 0.0
    %979 = vmatpush1.msra.mxu0 0.0
    %980 = vmatprep.subr.mxu0 0.0
    %981 = vmatpush1.msra.mxu0 0.0
    %982 = vmatprep.subr.mxu0 0.0
    %983 = vmatpush1.msra.mxu0 0.0
    %984 = vmatprep.subr.mxu0 0.0
    %985 = vmatpush1.msra.mxu0 0.0
    %986 = vmatprep.subr.mxu0 0.0
    %987 = vmatpush1.msra.mxu0 0.0
    %988 = vmatprep.subr.mxu0 0.0
    %989 = vmatpush1.msra.mxu0 0.0
    %990 = vmatprep.subr.mxu0 0.0
    %991 = vmatpush1.msra.mxu0 0.0
    %992 = vmatprep.subr.mxu0 0.0
    %993 = vmatpush1.msra.mxu0 0.0
    %994 = vmatprep.subr.mxu0 0.0
    %995 = vmatpush1.msra.mxu0 0.0
    %996 = vmatprep.subr.mxu0 0.0
    %997 = vmatpush1.msra.mxu0 0.0
    %998 = vmatprep.subr.mxu0 0.0
    %999 = vmatpush1.msra.mxu0 0.0
    %1000 = vmatprep.subr.mxu0 0.0
    %1001 = vmatpush1.msra.mxu0 0.0
    %1002 = vmatprep.mubr.f32.mxu0 0.0
    %1003 = vmatmul.mubr.f32.gmra.mrb[0].mxu0 %v926
    %v1004 = vpop.f32.mrb[0].mxu0
    %v1005 = vadd.f32 0.0, %v1004
    %v1006 = vpop.f32.mrb[0].mxu0
    %v1007 = vadd.f32 0.0, %v1006
    %1008 = vdwg.mxu0
    %1009 = vmatprep.subr.mxu0 0.0
    %1010 = vmatpush1.msra.mxu0 %v91
    %1011 = vmatprep.subr.mxu0 0.0
    %1012 = vmatpush1.msra.mxu0 %v94
    %1013 = vmatprep.subr.mxu0 0.0
    %1014 = vmatpush1.msra.mxu0 %v936
    %1015 = vmatprep.subr.mxu0 0.0
    %1016 = vmatpush1.msra.mxu0 0.0
    %1017 = vmatprep.subr.mxu0 0.0
    %1018 = vmatpush1.msra.mxu0 0.0
    %1019 = vmatprep.subr.mxu0 0.0
    %1020 = vmatpush1.msra.mxu0 0.0
    %1021 = vmatprep.subr.mxu0 0.0
    %1022 = vmatpush1.msra.mxu0 0.0
    %1023 = vmatprep.subr.mxu0 0.0
    %1024 = vmatpush1.msra.mxu0 0.0
    %1025 = vmatprep.subr.mxu0 0.0
    %1026 = vmatpush1.msra.mxu0 0.0
    %1027 = vmatprep.subr.mxu0 0.0
    %1028 = vmatpush1.msra.mxu0 0.0
    %1029 = vmatprep.subr.mxu0 0.0
    %1030 = vmatpush1.msra.mxu0 0.0
    %1031 = vmatprep.subr.mxu0 0.0
    %1032 = vmatpush1.msra.mxu0 0.0
    %1033 = vmatprep.subr.mxu0 0.0
    %1034 = vmatpush1.msra.mxu0 0.0
    %1035 = vmatprep.subr.mxu0 0.0
    %1036 = vmatpush1.msra.mxu0 0.0
    %1037 = vmatprep.subr.mxu0 0.0
    %1038 = vmatpush1.msra.mxu0 0.0
    %1039 = vmatprep.subr.mxu0 0.0
    %1040 = vmatpush1.msra.mxu0 0.0
    %1041 = vmatprep.subr.mxu0 0.0
    %1042 = vmatpush1.msra.mxu0 0.0
    %1043 = vmatprep.subr.mxu0 0.0
    %1044 = vmatpush1.msra.mxu0 0.0
    %1045 = vmatprep.subr.mxu0 0.0
    %1046 = vmatpush1.msra.mxu0 0.0
    %1047 = vmatprep.subr.mxu0 0.0
    %1048 = vmatpush1.msra.mxu0 0.0
    %1049 = vmatprep.subr.mxu0 0.0
    %1050 = vmatpush1.msra.mxu0 0.0
    %1051 = vmatprep.subr.mxu0 0.0
    %1052 = vmatpush1.msra.mxu0 0.0
    %1053 = vmatprep.subr.mxu0 0.0
    %1054 = vmatpush1.msra.mxu0 0.0
    %1055 = vmatprep.subr.mxu0 0.0
    %1056 = vmatpush1.msra.mxu0 0.0
    %1057 = vmatprep.subr.mxu0 0.0
    %1058 = vmatpush1.msra.mxu0 0.0
    %1059 = vmatprep.subr.mxu0 0.0
    %1060 = vmatpush1.msra.mxu0 0.0
    %1061 = vmatprep.subr.mxu0 0.0
    %1062 = vmatpush1.msra.mxu0 0.0
    %1063 = vmatprep.subr.mxu0 0.0
    %1064 = vmatpush1.msra.mxu0 0.0
    %1065 = vmatprep.subr.mxu0 0.0
    %1066 = vmatpush1.msra.mxu0 0.0
    %1067 = vmatprep.subr.mxu0 0.0
    %1068 = vmatpush1.msra.mxu0 0.0
    %1069 = vmatprep.subr.mxu0 0.0
    %1070 = vmatpush1.msra.mxu0 0.0
    %1071 = vmatprep.subr.mxu0 0.0
    %1072 = vmatpush1.msra.mxu0 0.0
    %1073 = vmatprep.mubr.f32.mxu0 0.0
    %1074 = vmatmul.mubr.f32.gmra.mrb[0].mxu0 %v926
    %v1075 = vpop.f32.mrb[0].mxu0
    %v1076 = vadd.f32 0.0, %v1075
    %v1077 = vpop.f32.mrb[0].mxu0
    %1078 = vdwg.mxu0
    %v1079 = vadd.f32 %v829, %v1005
    %v1080 = vadd.f32 %v831, %v1007
    %v1081 = vadd.f32 %v900, %v1076
    %v1082 = vsel %vm515, %v1079, -inf
    %1083 = vmax.xlane.f32.xlu0 %v1082
    %v1084 = vpop.xlane.xlu0 %1083
    %v1085 = vsub.f32 %v1079, %v1084
    %v1086 = vmul.f32 %v1085, 1.442695
    %v1087 = vpow.pop %v1086
    %v1088 = vsel %vm515, %v1087, 0.0
    %1089 = vadd.xlane.f32.xlu0 %v1088
    %v1090 = vpop.xlane.xlu0 %1089
    %v1091 = vrcp.pop %v1090
    %v1092 = vmul.f32 %v1087, %v1091
    %1093 = vst.msk [vmem:[%s7] sm:$0xff] %vm515, %v1092
    %vm1094 = vcmask 31744
    %1095 = vst.msk [vmem:[%s8] sm:$0xff] %vm1094, %v1080
    %v1096 = vmul.f32 %v1081, 1.442695
    %v1097 = vpow.pop %v1096
    %v1098 = vadd.f32 %v1097, 1e-15
    %1099 = vst.msk [vmem:[%s9] sm:$0xff] %vm1094, %v1098
    %1101 = vrot.lane.b32.xlu0 %v1079, 1
    %v1102 = vpop.permute.xlu0 %1101
    %vm1104 = vcmp.gt.f32.partialorder %v1079, %v1102
    %v1105 = vsel %vm1104, 1, 0
    %vm1106 = vcmp.eq.s32.totalorder %v1105, 1
    %v1107 = vsel %vm1106, 1, 0
    %1108 = vset.pattern.permute.xlu0 1
    %1109 = vperm.xlu0 %1108, %v1107
    %v1110 = vpop.permute.xlu0 %1109
    %vm1111 = vcmp.eq.s32.totalorder %v1110, 1
    %1113 = vrot.lane.b32.xlu0 %v1080, 2
    %v1114 = vpop.permute.xlu0 %1113
    %v1116 = vsel %vm1111, %v1080, %v1114
    %s1117 = sld [smem:[#allocation3]]
    %p1118 = scmp.gt.s32.totalorder %s1117, 0
    %v1119 = vld [vmem:[%s3] sm:$0xff]
    %s1120 = scalar_select %p1118, 1, 0
    %v1121 = vstv %s1120
    %vm1122 = vcmp.eq.s32.totalorder %v1121, 1
    %1124 = vrot.lane.b32.xlu0 %v1116, 126
    %v1125 = vpop.permute.xlu0 %1124
    %v1127 = vsel %vm1122, %v1119, %v1125
    %1128 = vrot.lane.b32.xlu0 %v923, 2
    %v1129 = vpop.permute.xlu0 %1128
    %v1131 = vsel %vm515, %v1127, %v1129
    %v1133 = vsel %vm517, %v1131, 0
    %1135 = vmatprep.subr.mxu0 %v63
    %1136 = vmatpush1.msra.mxu0 %v62
    %1137 = vmatprep.subr.mxu0 %v72
    %1138 = vmatpush1.msra.mxu0 %v71
    %1139 = vmatprep.subr.mxu0 %v526
    %1140 = vmatpush1.msra.mxu0 %v523
    %1141 = vmatprep.subr.mxu0 0.0
    %1142 = vmatpush1.msra.mxu0 0.0
    %1143 = vmatprep.subr.mxu0 0.0
    %1144 = vmatpush1.msra.mxu0 0.0
    %1145 = vmatprep.subr.mxu0 0.0
    %1146 = vmatpush1.msra.mxu0 0.0
    %1147 = vmatprep.subr.mxu0 0.0
    %1148 = vmatpush1.msra.mxu0 0.0
    %1149 = vmatprep.subr.mxu0 0.0
    %1150 = vmatpush1.msra.mxu0 0.0
    %1151 = vmatprep.subr.mxu0 0.0
    %1152 = vmatpush1.msra.mxu0 0.0
    %1153 = vmatprep.subr.mxu0 0.0
    %1154 = vmatpush1.msra.mxu0 0.0
    %1155 = vmatprep.subr.mxu0 0.0
    %1156 = vmatpush1.msra.mxu0 0.0
    %1157 = vmatprep.subr.mxu0 0.0
    %1158 = vmatpush1.msra.mxu0 0.0
    %1159 = vmatprep.subr.mxu0 0.0
    %1160 = vmatpush1.msra.mxu0 0.0
    %1161 = vmatprep.subr.mxu0 0.0
    %1162 = vmatpush1.msra.mxu0 0.0
    %1163 = vmatprep.subr.mxu0 0.0
    %1164 = vmatpush1.msra.mxu0 0.0
    %1165 = vmatprep.subr.mxu0 0.0
    %1166 = vmatpush1.msra.mxu0 0.0
    %1167 = vmatprep.subr.mxu0 0.0
    %1168 = vmatpush1.msra.mxu0 0.0
    %1169 = vmatprep.subr.mxu0 0.0
    %1170 = vmatpush1.msra.mxu0 0.0
    %1171 = vmatprep.subr.mxu0 0.0
    %1172 = vmatpush1.msra.mxu0 0.0
    %1173 = vmatprep.subr.mxu0 0.0
    %1174 = vmatpush1.msra.mxu0 0.0
    %1175 = vmatprep.subr.mxu0 0.0
    %1176 = vmatpush1.msra.mxu0 0.0
    %1177 = vmatprep.subr.mxu0 0.0
    %1178 = vmatpush1.msra.mxu0 0.0
    %1179 = vmatprep.subr.mxu0 0.0
    %1180 = vmatpush1.msra.mxu0 0.0
    %1181 = vmatprep.subr.mxu0 0.0
    %1182 = vmatpush1.msra.mxu0 0.0
    %1183 = vmatprep.subr.mxu0 0.0
    %1184 = vmatpush1.msra.mxu0 0.0
    %1185 = vmatprep.subr.mxu0 0.0
    %1186 = vmatpush1.msra.mxu0 0.0
    %1187 = vmatprep.subr.mxu0 0.0
    %1188 = vmatpush1.msra.mxu0 0.0
    %1189 = vmatprep.subr.mxu0 0.0
    %1190 = vmatpush1.msra.mxu0 0.0
    %1191 = vmatprep.subr.mxu0 0.0
    %1192 = vmatpush1.msra.mxu0 0.0
    %1193 = vmatprep.subr.mxu0 0.0
    %1194 = vmatpush1.msra.mxu0 0.0
    %1195 = vmatprep.subr.mxu0 0.0
    %1196 = vmatpush1.msra.mxu0 0.0
    %1197 = vmatprep.subr.mxu0 0.0
    %1198 = vmatpush1.msra.mxu0 0.0
    %1199 = vmatprep.mubr.f32.mxu0 0.0
    %1200 = vmatmul.mubr.f32.gmra.mrb[0].mxu0 %v1133
    %v1201 = vpop.f32.mrb[0].mxu0
    %v1202 = vadd.f32 %v224, %v1201
    %v1203 = vpop.f32.mrb[0].mxu0
    %v1204 = vadd.f32 %v226, %v1203
    %1205 = vdwg.mxu0
    %1206 = vmatprep.subr.mxu0 %v65
    %1207 = vmatpush1.msra.mxu0 %v64
    %1208 = vmatprep.subr.mxu0 %v74
    %1209 = vmatpush1.msra.mxu0 %v73
    %1210 = vmatprep.subr.mxu0 %v532
    %1211 = vmatpush1.msra.mxu0 %v529
    %1212 = vmatprep.subr.mxu0 0.0
    %1213 = vmatpush1.msra.mxu0 0.0
    %1214 = vmatprep.subr.mxu0 0.0
    %1215 = vmatpush1.msra.mxu0 0.0
    %1216 = vmatprep.subr.mxu0 0.0
    %1217 = vmatpush1.msra.mxu0 0.0
    %1218 = vmatprep.subr.mxu0 0.0
    %1219 = vmatpush1.msra.mxu0 0.0
    %1220 = vmatprep.subr.mxu0 0.0
    %1221 = vmatpush1.msra.mxu0 0.0
    %1222 = vmatprep.subr.mxu0 0.0
    %1223 = vmatpush1.msra.mxu0 0.0
    %1224 = vmatprep.subr.mxu0 0.0
    %1225 = vmatpush1.msra.mxu0 0.0
    %1226 = vmatprep.subr.mxu0 0.0
    %1227 = vmatpush1.msra.mxu0 0.0
    %1228 = vmatprep.subr.mxu0 0.0
    %1229 = vmatpush1.msra.mxu0 0.0
    %1230 = vmatprep.subr.mxu0 0.0
    %1231 = vmatpush1.msra.mxu0 0.0
    %1232 = vmatprep.subr.mxu0 0.0
    %1233 = vmatpush1.msra.mxu0 0.0
    %1234 = vmatprep.subr.mxu0 0.0
    %1235 = vmatpush1.msra.mxu0 0.0
    %1236 = vmatprep.subr.mxu0 0.0
    %1237 = vmatpush1.msra.mxu0 0.0
    %1238 = vmatprep.subr.mxu0 0.0
    %1239 = vmatpush1.msra.mxu0 0.0
    %1240 = vmatprep.subr.mxu0 0.0
    %1241 = vmatpush1.msra.mxu0 0.0
    %1242 = vmatprep.subr.mxu0 0.0
    %1243 = vmatpush1.msra.mxu0 0.0
    %1244 = vmatprep.subr.mxu0 0.0
    %1245 = vmatpush1.msra.mxu0 0.0
    %1246 = vmatprep.subr.mxu0 0.0
    %1247 = vmatpush1.msra.mxu0 0.0
    %1248 = vmatprep.subr.mxu0 0.0
    %1249 = vmatpush1.msra.mxu0 0.0
    %1250 = vmatprep.subr.mxu0 0.0
    %1251 = vmatpush1.msra.mxu0 0.0
    %1252 = vmatprep.subr.mxu0 0.0
    %1253 = vmatpush1.msra.mxu0 0.0
    %1254 = vmatprep.subr.mxu0 0.0
    %1255 = vmatpush1.msra.mxu0 0.0
    %1256 = vmatprep.subr.mxu0 0.0
    %1257 = vmatpush1.msra.mxu0 0.0
    %1258 = vmatprep.subr.mxu0 0.0
    %1259 = vmatpush1.msra.mxu0 0.0
    %1260 = vmatprep.subr.mxu0 0.0
    %1261 = vmatpush1.msra.mxu0 0.0
    %1262 = vmatprep.subr.mxu0 0.0
    %1263 = vmatpush1.msra.mxu0 0.0
    %1264 = vmatprep.subr.mxu0 0.0
    %1265 = vmatpush1.msra.mxu0 0.0
    %1266 = vmatprep.subr.mxu0 0.0
    %1267 = vmatpush1.msra.mxu0 0.0
    %1268 = vmatprep.subr.mxu0 0.0
    %1269 = vmatpush1.msra.mxu0 0.0
    %1270 = vmatprep.mubr.f32.mxu0 0.0
    %1271 = vmatmul.mubr.f32.gmra.mrb[0].mxu0 %v1133
    %v1272 = vpop.f32.mrb[0].mxu0
    %v1273 = vadd.f32 %v295, %v1272
    %v1274 = vpop.f32.mrb[0].mxu0
    %v1275 = vadd.f32 %v297, %v1274
    %1276 = vdwg.mxu0
    %1277 = vmatprep.subr.mxu0 %v67
    %1278 = vmatpush1.msra.mxu0 %v66
    %1279 = vmatprep.subr.mxu0 %v76
    %1280 = vmatpush1.msra.mxu0 %v75
    %1281 = vmatprep.subr.mxu0 %v538
    %1282 = vmatpush1.msra.mxu0 %v535
    %1283 = vmatprep.subr.mxu0 0.0
    %1284 = vmatpush1.msra.mxu0 0.0
    %1285 = vmatprep.subr.mxu0 0.0
    %1286 = vmatpush1.msra.mxu0 0.0
    %1287 = vmatprep.subr.mxu0 0.0
    %1288 = vmatpush1.msra.mxu0 0.0
    %1289 = vmatprep.subr.mxu0 0.0
    %1290 = vmatpush1.msra.mxu0 0.0
    %1291 = vmatprep.subr.mxu0 0.0
    %1292 = vmatpush1.msra.mxu0 0.0
    %1293 = vmatprep.subr.mxu0 0.0
    %1294 = vmatpush1.msra.mxu0 0.0
    %1295 = vmatprep.subr.mxu0 0.0
    %1296 = vmatpush1.msra.mxu0 0.0
    %1297 = vmatprep.subr.mxu0 0.0
    %1298 = vmatpush1.msra.mxu0 0.0
    %1299 = vmatprep.subr.mxu0 0.0
    %1300 = vmatpush1.msra.mxu0 0.0
    %1301 = vmatprep.subr.mxu0 0.0
    %1302 = vmatpush1.msra.mxu0 0.0
    %1303 = vmatprep.subr.mxu0 0.0
    %1304 = vmatpush1.msra.mxu0 0.0
    %1305 = vmatprep.subr.mxu0 0.0
    %1306 = vmatpush1.msra.mxu0 0.0
    %1307 = vmatprep.subr.mxu0 0.0
    %1308 = vmatpush1.msra.mxu0 0.0
    %1309 = vmatprep.subr.mxu0 0.0
    %1310 = vmatpush1.msra.mxu0 0.0
    %1311 = vmatprep.subr.mxu0 0.0
    %1312 = vmatpush1.msra.mxu0 0.0
    %1313 = vmatprep.subr.mxu0 0.0
    %1314 = vmatpush1.msra.mxu0 0.0
    %1315 = vmatprep.subr.mxu0 0.0
    %1316 = vmatpush1.msra.mxu0 0.0
    %1317 = vmatprep.subr.mxu0 0.0
    %1318 = vmatpush1.msra.mxu0 0.0
    %1319 = vmatprep.subr.mxu0 0.0
    %1320 = vmatpush1.msra.mxu0 0.0
    %1321 = vmatprep.subr.mxu0 0.0
    %1322 = vmatpush1.msra.mxu0 0.0
    %1323 = vmatprep.subr.mxu0 0.0
    %1324 = vmatpush1.msra.mxu0 0.0
    %1325 = vmatprep.subr.mxu0 0.0
    %1326 = vmatpush1.msra.mxu0 0.0
    %1327 = vmatprep.subr.mxu0 0.0
    %1328 = vmatpush1.msra.mxu0 0.0
    %1329 = vmatprep.subr.mxu0 0.0
    %1330 = vmatpush1.msra.mxu0 0.0
    %1331 = vmatprep.subr.mxu0 0.0
    %1332 = vmatpush1.msra.mxu0 0.0
    %1333 = vmatprep.subr.mxu0 0.0
    %1334 = vmatpush1.msra.mxu0 0.0
    %1335 = vmatprep.subr.mxu0 0.0
    %1336 = vmatpush1.msra.mxu0 0.0
    %1337 = vmatprep.subr.mxu0 0.0
    %1338 = vmatpush1.msra.mxu0 0.0
    %1339 = vmatprep.subr.mxu0 0.0
    %1340 = vmatpush1.msra.mxu0 0.0
    %1341 = vmatprep.mubr.f32.mxu0 0.0
    %1342 = vmatmul.mubr.f32.gmra.mrb[0].mxu0 %v1133
    %v1343 = vpop.f32.mrb[0].mxu0
    %v1344 = vadd.f32 %v366, %v1343
    %v1345 = vpop.f32.mrb[0].mxu0
    %v1346 = vadd.f32 %v368, %v1345
    %1347 = vdwg.mxu0
    %1348 = vmatprep.subr.mxu0 %v69
    %1349 = vmatpush1.msra.mxu0 %v68
    %1350 = vmatprep.subr.mxu0 %v78
    %1351 = vmatpush1.msra.mxu0 %v77
    %1352 = vmatprep.subr.mxu0 %v544
    %1353 = vmatpush1.msra.mxu0 %v541
    %1354 = vmatprep.subr.mxu0 0.0
    %1355 = vmatpush1.msra.mxu0 0.0
    %1356 = vmatprep.subr.mxu0 0.0
    %1357 = vmatpush1.msra.mxu0 0.0
    %1358 = vmatprep.subr.mxu0 0.0
    %1359 = vmatpush1.msra.mxu0 0.0
    %1360 = vmatprep.subr.mxu0 0.0
    %1361 = vmatpush1.msra.mxu0 0.0
    %1362 = vmatprep.subr.mxu0 0.0
    %1363 = vmatpush1.msra.mxu0 0.0
    %1364 = vmatprep.subr.mxu0 0.0
    %1365 = vmatpush1.msra.mxu0 0.0
    %1366 = vmatprep.subr.mxu0 0.0
    %1367 = vmatpush1.msra.mxu0 0.0
    %1368 = vmatprep.subr.mxu0 0.0
    %1369 = vmatpush1.msra.mxu0 0.0
    %1370 = vmatprep.subr.mxu0 0.0
    %1371 = vmatpush1.msra.mxu0 0.0
    %1372 = vmatprep.subr.mxu0 0.0
    %1373 = vmatpush1.msra.mxu0 0.0
    %1374 = vmatprep.subr.mxu0 0.0
    %1375 = vmatpush1.msra.mxu0 0.0
    %1376 = vmatprep.subr.mxu0 0.0
    %1377 = vmatpush1.msra.mxu0 0.0
    %1378 = vmatprep.subr.mxu0 0.0
    %1379 = vmatpush1.msra.mxu0 0.0
    %1380 = vmatprep.subr.mxu0 0.0
    %1381 = vmatpush1.msra.mxu0 0.0
    %1382 = vmatprep.subr.mxu0 0.0
    %1383 = vmatpush1.msra.mxu0 0.0
    %1384 = vmatprep.subr.mxu0 0.0
    %1385 = vmatpush1.msra.mxu0 0.0
    %1386 = vmatprep.subr.mxu0 0.0
    %1387 = vmatpush1.msra.mxu0 0.0
    %1388 = vmatprep.subr.mxu0 0.0
    %1389 = vmatpush1.msra.mxu0 0.0
    %1390 = vmatprep.subr.mxu0 0.0
    %1391 = vmatpush1.msra.mxu0 0.0
    %1392 = vmatprep.subr.mxu0 0.0
    %1393 = vmatpush1.msra.mxu0 0.0
    %1394 = vmatprep.subr.mxu0 0.0
    %1395 = vmatpush1.msra.mxu0 0.0
    %1396 = vmatprep.subr.mxu0 0.0
    %1397 = vmatpush1.msra.mxu0 0.0
    %1398 = vmatprep.subr.mxu0 0.0
    %1399 = vmatpush1.msra.mxu0 0.0
    %1400 = vmatprep.subr.mxu0 0.0
    %1401 = vmatpush1.msra.mxu0 0.0
    %1402 = vmatprep.subr.mxu0 0.0
    %1403 = vmatpush1.msra.mxu0 0.0
    %1404 = vmatprep.subr.mxu0 0.0
    %1405 = vmatpush1.msra.mxu0 0.0
    %1406 = vmatprep.subr.mxu0 0.0
    %1407 = vmatpush1.msra.mxu0 0.0
    %1408 = vmatprep.subr.mxu0 0.0
    %1409 = vmatpush1.msra.mxu0 0.0
    %1410 = vmatprep.subr.mxu0 0.0
    %1411 = vmatpush1.msra.mxu0 0.0
    %1412 = vmatprep.mubr.f32.mxu0 0.0
    %1413 = vmatmul.mubr.f32.gmra.mrb[0].mxu0 %v1133
    %v1414 = vpop.f32.mrb[0].mxu0
    %v1415 = vadd.f32 %v437, %v1414
    %v1416 = vpop.f32.mrb[0].mxu0
    %v1417 = vadd.f32 %v439, %v1416
    %1418 = vdwg.mxu0
    %1419 = vmatprep.subr.mxu0 0.0
    %1420 = vmatpush1.msra.mxu0 %v70
    %1421 = vmatprep.subr.mxu0 0.0
    %1422 = vmatpush1.msra.mxu0 %v79
    %1423 = vmatprep.subr.mxu0 0.0
    %1424 = vmatpush1.msra.mxu0 %v547
    %1425 = vmatprep.subr.mxu0 0.0
    %1426 = vmatpush1.msra.mxu0 0.0
    %1427 = vmatprep.subr.mxu0 0.0
    %1428 = vmatpush1.msra.mxu0 0.0
    %1429 = vmatprep.subr.mxu0 0.0
    %1430 = vmatpush1.msra.mxu0 0.0
    %1431 = vmatprep.subr.mxu0 0.0
    %1432 = vmatpush1.msra.mxu0 0.0
    %1433 = vmatprep.subr.mxu0 0.0
    %1434 = vmatpush1.msra.mxu0 0.0
    %1435 = vmatprep.subr.mxu0 0.0
    %1436 = vmatpush1.msra.mxu0 0.0
    %1437 = vmatprep.subr.mxu0 0.0
    %1438 = vmatpush1.msra.mxu0 0.0
    %1439 = vmatprep.subr.mxu0 0.0
    %1440 = vmatpush1.msra.mxu0 0.0
    %1441 = vmatprep.subr.mxu0 0.0
    %1442 = vmatpush1.msra.mxu0 0.0
    %1443 = vmatprep.subr.mxu0 0.0
    %1444 = vmatpush1.msra.mxu0 0.0
    %1445 = vmatprep.subr.mxu0 0.0
    %1446 = vmatpush1.msra.mxu0 0.0
    %1447 = vmatprep.subr.mxu0 0.0
    %1448 = vmatpush1.msra.mxu0 0.0
    %1449 = vmatprep.subr.mxu0 0.0
    %1450 = vmatpush1.msra.mxu0 0.0
    %1451 = vmatprep.subr.mxu0 0.0
    %1452 = vmatpush1.msra.mxu0 0.0
    %1453 = vmatprep.subr.mxu0 0.0
    %1454 = vmatpush1.msra.mxu0 0.0
    %1455 = vmatprep.subr.mxu0 0.0
    %1456 = vmatpush1.msra.mxu0 0.0
    %1457 = vmatprep.subr.mxu0 0.0
    %1458 = vmatpush1.msra.mxu0 0.0
    %1459 = vmatprep.subr.mxu0 0.0
    %1460 = vmatpush1.msra.mxu0 0.0
    %1461 = vmatprep.subr.mxu0 0.0
    %1462 = vmatpush1.msra.mxu0 0.0
    %1463 = vmatprep.subr.mxu0 0.0
    %1464 = vmatpush1.msra.mxu0 0.0
    %1465 = vmatprep.subr.mxu0 0.0
    %1466 = vmatpush1.msra.mxu0 0.0
    %1467 = vmatprep.subr.mxu0 0.0
    %1468 = vmatpush1.msra.mxu0 0.0
    %1469 = vmatprep.subr.mxu0 0.0
    %1470 = vmatpush1.msra.mxu0 0.0
    %1471 = vmatprep.subr.mxu0 0.0
    %1472 = vmatpush1.msra.mxu0 0.0
    %1473 = vmatprep.subr.mxu0 0.0
    %1474 = vmatpush1.msra.mxu0 0.0
    %1475 = vmatprep.subr.mxu0 0.0
    %1476 = vmatpush1.msra.mxu0 0.0
    %1477 = vmatprep.subr.mxu0 0.0
    %1478 = vmatpush1.msra.mxu0 0.0
    %1479 = vmatprep.subr.mxu0 0.0
    %1480 = vmatpush1.msra.mxu0 0.0
    %1481 = vmatprep.subr.mxu0 0.0
    %1482 = vmatpush1.msra.mxu0 0.0
    %1483 = vmatprep.mubr.f32.mxu0 0.0
    %1484 = vmatmul.mubr.f32.gmra.mrb[0].mxu0 %v1133
    %v1485 = vpop.f32.mrb[0].mxu0
    %v1486 = vadd.f32 %v508, %v1485
    %v1487 = vpop.f32.mrb[0].mxu0
    %1488 = vdwg.mxu0
    %v1489 = vadd.f32 %v1202, %v1275
    %v1490 = vxor.u32 %v1489, 2147483648
    %v1491 = vmul.f32 %v1490, 1.442695
    %v1492 = vpow.pop %v1491
    %v1493 = vadd.f32 %v1492, 1.0
    %v1494 = vrcp.pop %v1493
    %v1495 = vmul.f32 1.0, %v1494
    %v1496 = vadd.f32 %v1204, %v1344
    %v1497 = vxor.u32 %v1496, 2147483648
    %v1498 = vmul.f32 %v1497, 1.442695
    %v1499 = vpow.pop %v1498
    %v1500 = vadd.f32 %v1499, 1.0
    %v1501 = vrcp.pop %v1500
    %v1502 = vmul.f32 1.0, %v1501
    %v1503 = vmul.f32 %v1495, %v1346
    %v1504 = vadd.f32 %v1273, %v1503
    %v1505 = vtanh.pop %v1504
    %v1506 = vsub.f32 1.0, %v1502
    %v1507 = vmul.f32 %v1506, %v1505
    %v1508 = vmul.f32 %v1502, %v923
    %v1509 = vadd.f32 %v1507, %v1508
    %v1511 = vsel %vm924, %v1509, 0
    %1513 = vmatprep.subr.mxu0 %v90
    %1514 = vmatpush1.msra.mxu0 %v89
    %1515 = vmatprep.subr.mxu0 %v93
    %1516 = vmatpush1.msra.mxu0 %v92
    %1517 = vmatprep.subr.mxu0 %v933
    %1518 = vmatpush1.msra.mxu0 %v930
    %1519 = vmatprep.subr.mxu0 0.0
    %1520 = vmatpush1.msra.mxu0 0.0
    %1521 = vmatprep.subr.mxu0 0.0
    %1522 = vmatpush1.msra.mxu0 0.0
    %1523 = vmatprep.subr.mxu0 0.0
    %1524 = vmatpush1.msra.mxu0 0.0
    %1525 = vmatprep.subr.mxu0 0.0
    %1526 = vmatpush1.msra.mxu0 0.0
    %1527 = vmatprep.subr.mxu0 0.0
    %1528 = vmatpush1.msra.mxu0 0.0
    %1529 = vmatprep.subr.mxu0 0.0
    %1530 = vmatpush1.msra.mxu0 0.0
    %1531 = vmatprep.subr.mxu0 0.0
    %1532 = vmatpush1.msra.mxu0 0.0
    %1533 = vmatprep.subr.mxu0 0.0
    %1534 = vmatpush1.msra.mxu0 0.0
    %1535 = vmatprep.subr.mxu0 0.0
    %1536 = vmatpush1.msra.mxu0 0.0
    %1537 = vmatprep.subr.mxu0 0.0
    %1538 = vmatpush1.msra.mxu0 0.0
    %1539 = vmatprep.subr.mxu0 0.0
    %1540 = vmatpush1.msra.mxu0 0.0
    %1541 = vmatprep.subr.mxu0 0.0
    %1542 = vmatpush1.msra.mxu0 0.0
    %1543 = vmatprep.subr.mxu0 0.0
    %1544 = vmatpush1.msra.mxu0 0.0
    %1545 = vmatprep.subr.mxu0 0.0
    %1546 = vmatpush1.msra.mxu0 0.0
    %1547 = vmatprep.subr.mxu0 0.0
    %1548 = vmatpush1.msra.mxu0 0.0
    %1549 = vmatprep.subr.mxu0 0.0
    %1550 = vmatpush1.msra.mxu0 0.0
    %1551 = vmatprep.subr.mxu0 0.0
    %1552 = vmatpush1.msra.mxu0 0.0
    %1553 = vmatprep.subr.mxu0 0.0
    %1554 = vmatpush1.msra.mxu0 0.0
    %1555 = vmatprep.subr.mxu0 0.0
    %1556 = vmatpush1.msra.mxu0 0.0
    %1557 = vmatprep.subr.mxu0 0.0
    %1558 = vmatpush1.msra.mxu0 0.0
    %1559 = vmatprep.subr.mxu0 0.0
    %1560 = vmatpush1.msra.mxu0 0.0
    %1561 = vmatprep.subr.mxu0 0.0
    %1562 = vmatpush1.msra.mxu0 0.0
    %1563 = vmatprep.subr.mxu0 0.0
    %1564 = vmatpush1.msra.mxu0 0.0
    %1565 = vmatprep.subr.mxu0 0.0
    %1566 = vmatpush1.msra.mxu0 0.0
    %1567 = vmatprep.subr.mxu0 0.0
    %1568 = vmatpush1.msra.mxu0 0.0
    %1569 = vmatprep.subr.mxu0 0.0
    %1570 = vmatpush1.msra.mxu0 0.0
    %1571 = vmatprep.subr.mxu0 0.0
    %1572 = vmatpush1.msra.mxu0 0.0
    %1573 = vmatprep.subr.mxu0 0.0
    %1574 = vmatpush1.msra.mxu0 0.0
    %1575 = vmatprep.subr.mxu0 0.0
    %1576 = vmatpush1.msra.mxu0 0.0
    %1577 = vmatprep.mubr.f32.mxu0 0.0
    %1578 = vmatmul.mubr.f32.gmra.mrb[0].mxu0 %v1511
    %v1579 = vpop.f32.mrb[0].mxu0
    %v1580 = vadd.f32 0.0, %v1579
    %v1581 = vpop.f32.mrb[0].mxu0
    %v1582 = vadd.f32 0.0, %v1581
    %1583 = vdwg.mxu0
    %1584 = vmatprep.subr.mxu0 0.0
    %1585 = vmatpush1.msra.mxu0 %v91
    %1586 = vmatprep.subr.mxu0 0.0
    %1587 = vmatpush1.msra.mxu0 %v94
    %1588 = vmatprep.subr.mxu0 0.0
    %1589 = vmatpush1.msra.mxu0 %v936
    %1590 = vmatprep.subr.mxu0 0.0
    %1591 = vmatpush1.msra.mxu0 0.0
    %1592 = vmatprep.subr.mxu0 0.0
    %1593 = vmatpush1.msra.mxu0 0.0
    %1594 = vmatprep.subr.mxu0 0.0
    %1595 = vmatpush1.msra.mxu0 0.0
    %1596 = vmatprep.subr.mxu0 0.0
    %1597 = vmatpush1.msra.mxu0 0.0
    %1598 = vmatprep.subr.mxu0 0.0
    %1599 = vmatpush1.msra.mxu0 0.0
    %1600 = vmatprep.subr.mxu0 0.0
    %1601 = vmatpush1.msra.mxu0 0.0
    %1602 = vmatprep.subr.mxu0 0.0
    %1603 = vmatpush1.msra.mxu0 0.0
    %1604 = vmatprep.subr.mxu0 0.0
    %1605 = vmatpush1.msra.mxu0 0.0
    %1606 = vmatprep.subr.mxu0 0.0
    %1607 = vmatpush1.msra.mxu0 0.0
    %1608 = vmatprep.subr.mxu0 0.0
    %1609 = vmatpush1.msra.mxu0 0.0
    %1610 = vmatprep.subr.mxu0 0.0
    %1611 = vmatpush1.msra.mxu0 0.0
    %1612 = vmatprep.subr.mxu0 0.0
    %1613 = vmatpush1.msra.mxu0 0.0
    %1614 = vmatprep.subr.mxu0 0.0
    %1615 = vmatpush1.msra.mxu0 0.0
    %1616 = vmatprep.subr.mxu0 0.0
    %1617 = vmatpush1.msra.mxu0 0.0
    %1618 = vmatprep.subr.mxu0 0.0
    %1619 = vmatpush1.msra.mxu0 0.0
    %1620 = vmatprep.subr.mxu0 0.0
    %1621 = vmatpush1.msra.mxu0 0.0
    %1622 = vmatprep.subr.mxu0 0.0
    %1623 = vmatpush1.msra.mxu0 0.0
    %1624 = vmatprep.subr.mxu0 0.0
    %1625 = vmatpush1.msra.mxu0 0.0
    %1626 = vmatprep.subr.mxu0 0.0
    %1627 = vmatpush1.msra.mxu0 0.0
    %1628 = vmatprep.subr.mxu0 0.0
    %1629 = vmatpush1.msra.mxu0 0.0
    %1630 = vmatprep.subr.mxu0 0.0
    %1631 = vmatpush1.msra.mxu0 0.0
    %1632 = vmatprep.subr.mxu0 0.0
    %1633 = vmatpush1.msra.mxu0 0.0
    %1634 = vmatprep.subr.mxu0 0.0
    %1635 = vmatpush1.msra.mxu0 0.0
    %1636 = vmatprep.subr.mxu0 0.0
    %1637 = vmatpush1.msra.mxu0 0.0
    %1638 = vmatprep.subr.mxu0 0.0
    %1639 = vmatpush1.msra.mxu0 0.0
    %1640 = vmatprep.subr.mxu0 0.0
    %1641 = vmatpush1.msra.mxu0 0.0
    %1642 = vmatprep.subr.mxu0 0.0
    %1643 = vmatpush1.msra.mxu0 0.0
    %1644 = vmatprep.subr.mxu0 0.0
    %1645 = vmatpush1.msra.mxu0 0.0
    %1646 = vmatprep.subr.mxu0 0.0
    %1647 = vmatpush1.msra.mxu0 0.0
    %1648 = vmatprep.mubr.f32.mxu0 0.0
    %1649 = vmatmul.mubr.f32.gmra.mrb[0].mxu0 %v1511
    %v1650 = vpop.f32.mrb[0].mxu0
    %v1651 = vadd.f32 0.0, %v1650
    %v1652 = vpop.f32.mrb[0].mxu0
    %1653 = vdwg.mxu0
    %v1654 = vadd.f32 %v1415, %v1580
    %v1655 = vadd.f32 %v1417, %v1582
    %v1656 = vadd.f32 %v1486, %v1651
    %v1657 = vsel %vm515, %v1654, -inf
    %1658 = vmax.xlane.f32.xlu0 %v1657
    %v1659 = vpop.xlane.xlu0 %1658
    %v1660 = vsub.f32 %v1654, %v1659
    %v1661 = vmul.f32 %v1660, 1.442695
    %v1662 = vpow.pop %v1661
    %v1663 = vsel %vm515, %v1662, 0.0
    %1664 = vadd.xlane.f32.xlu0 %v1663
    %v1665 = vpop.xlane.xlu0 %1664
    %v1666 = vrcp.pop %v1665
    %v1667 = vmul.f32 %v1662, %v1666
    %s1668 = scalar_lea.vmem %s7, 8
    %1669 = vst.msk [vmem:[%s1668] sm:$0xff] %vm515, %v1667
    %s1670 = scalar_lea.vmem %s8, 8
    %1671 = vst.msk [vmem:[%s1670] sm:$0xff] %vm1094, %v1655
    %v1672 = vmul.f32 %v1656, 1.442695
    %v1673 = vpow.pop %v1672
    %v1674 = vadd.f32 %v1673, 1e-15
    %s1675 = scalar_lea.vmem %s9, 8
    %1676 = vst.msk [vmem:[%s1675] sm:$0xff] %vm1094, %v1674
    %1678 = vrot.lane.b32.xlu0 %v1654, 1
    %v1679 = vpop.permute.xlu0 %1678
    %vm1681 = vcmp.gt.f32.partialorder %v1654, %v1679
    %v1682 = vsel %vm1681, 1, 0
    %vm1683 = vcmp.eq.s32.totalorder %v1682, 1
    %v1684 = vsel %vm1683, 1, 0
    %1685 = vset.pattern.permute.xlu0 1
    %1686 = vperm.xlu0 %1685, %v1684
    %v1687 = vpop.permute.xlu0 %1686
    %vm1688 = vcmp.eq.s32.totalorder %v1687, 1
    %1690 = vrot.lane.b32.xlu0 %v1655, 2
    %v1691 = vpop.permute.xlu0 %1690
    %v1693 = vsel %vm1688, %v1655, %v1691
    %s1694 = sld [smem:[#allocation3 + $0x1]]
    %p1695 = scmp.gt.s32.totalorder %s1694, 0
    %s1696 = scalar_lea.vmem %s3, 8
    %v1697 = vld [vmem:[%s1696] sm:$0xff]
    %s1698 = scalar_select %p1695, 1, 0
    %v1699 = vstv %s1698
    %vm1700 = vcmp.eq.s32.totalorder %v1699, 1
    %1702 = vrot.lane.b32.xlu0 %v1693, 126
    %v1703 = vpop.permute.xlu0 %1702
    %v1705 = vsel %vm1700, %v1697, %v1703
    %1706 = vrot.lane.b32.xlu0 %v1509, 2
    %v1707 = vpop.permute.xlu0 %1706
    %v1709 = vsel %vm515, %v1705, %v1707
    %v1711 = vsel %vm517, %v1709, 0
    %1713 = vmatprep.subr.mxu0 %v63
    %1714 = vmatpush1.msra.mxu0 %v62
    %1715 = vmatprep.subr.mxu0 %v72
    %1716 = vmatpush1.msra.mxu0 %v71
    %1717 = vmatprep.subr.mxu0 %v526
    %1718 = vmatpush1.msra.mxu0 %v523
    %1719 = vmatprep.subr.mxu0 0.0
    %1720 = vmatpush1.msra.mxu0 0.0
    %1721 = vmatprep.subr.mxu0 0.0
    %1722 = vmatpush1.msra.mxu0 0.0
    %1723 = vmatprep.subr.mxu0 0.0
    %1724 = vmatpush1.msra.mxu0 0.0
    %1725 = vmatprep.subr.mxu0 0.0
    %1726 = vmatpush1.msra.mxu0 0.0
    %1727 = vmatprep.subr.mxu0 0.0
    %1728 = vmatpush1.msra.mxu0 0.0
    %1729 = vmatprep.subr.mxu0 0.0
    %1730 = vmatpush1.msra.mxu0 0.0
    %1731 = vmatprep.subr.mxu0 0.0
    %1732 = vmatpush1.msra.mxu0 0.0
    %1733 = vmatprep.subr.mxu0 0.0
    %1734 = vmatpush1.msra.mxu0 0.0
    %1735 = vmatprep.subr.mxu0 0.0
    %1736 = vmatpush1.msra.mxu0 0.0
    %1737 = vmatprep.subr.mxu0 0.0
    %1738 = vmatpush1.msra.mxu0 0.0
    %1739 = vmatprep.subr.mxu0 0.0
    %1740 = vmatpush1.msra.mxu0 0.0
    %1741 = vmatprep.subr.mxu0 0.0
    %1742 = vmatpush1.msra.mxu0 0.0
    %1743 = vmatprep.subr.mxu0 0.0
    %1744 = vmatpush1.msra.mxu0 0.0
    %1745 = vmatprep.subr.mxu0 0.0
    %1746 = vmatpush1.msra.mxu0 0.0
    %1747 = vmatprep.subr.mxu0 0.0
    %1748 = vmatpush1.msra.mxu0 0.0
    %1749 = vmatprep.subr.mxu0 0.0
    %1750 = vmatpush1.msra.mxu0 0.0
    %1751 = vmatprep.subr.mxu0 0.0
    %1752 = vmatpush1.msra.mxu0 0.0
    %1753 = vmatprep.subr.mxu0 0.0
    %1754 = vmatpush1.msra.mxu0 0.0
    %1755 = vmatprep.subr.mxu0 0.0
    %1756 = vmatpush1.msra.mxu0 0.0
    %1757 = vmatprep.subr.mxu0 0.0
    %1758 = vmatpush1.msra.mxu0 0.0
    %1759 = vmatprep.subr.mxu0 0.0
    %1760 = vmatpush1.msra.mxu0 0.0
    %1761 = vmatprep.subr.mxu0 0.0
    %1762 = vmatpush1.msra.mxu0 0.0
    %1763 = vmatprep.subr.mxu0 0.0
    %1764 = vmatpush1.msra.mxu0 0.0
    %1765 = vmatprep.subr.mxu0 0.0
    %1766 = vmatpush1.msra.mxu0 0.0
    %1767 = vmatprep.subr.mxu0 0.0
    %1768 = vmatpush1.msra.mxu0 0.0
    %1769 = vmatprep.subr.mxu0 0.0
    %1770 = vmatpush1.msra.mxu0 0.0
    %1771 = vmatprep.subr.mxu0 0.0
    %1772 = vmatpush1.msra.mxu0 0.0
    %1773 = vmatprep.subr.mxu0 0.0
    %1774 = vmatpush1.msra.mxu0 0.0
    %1775 = vmatprep.subr.mxu0 0.0
    %1776 = vmatpush1.msra.mxu0 0.0
    %1777 = vmatprep.mubr.f32.mxu0 0.0
    %1778 = vmatmul.mubr.f32.gmra.mrb[0].mxu0 %v1711
    %v1779 = vpop.f32.mrb[0].mxu0
    %v1780 = vadd.f32 %v224, %v1779
    %v1781 = vpop.f32.mrb[0].mxu0
    %v1782 = vadd.f32 %v226, %v1781
    %1783 = vdwg.mxu0
    %1784 = vmatprep.subr.mxu0 %v65
    %1785 = vmatpush1.msra.mxu0 %v64
    %1786 = vmatprep.subr.mxu0 %v74
    %1787 = vmatpush1.msra.mxu0 %v73
    %1788 = vmatprep.subr.mxu0 %v532
    %1789 = vmatpush1.msra.mxu0 %v529
    %1790 = vmatprep.subr.mxu0 0.0
    %1791 = vmatpush1.msra.mxu0 0.0
    %1792 = vmatprep.subr.mxu0 0.0
    %1793 = vmatpush1.msra.mxu0 0.0
    %1794 = vmatprep.subr.mxu0 0.0
    %1795 = vmatpush1.msra.mxu0 0.0
    %1796 = vmatprep.subr.mxu0 0.0
    %1797 = vmatpush1.msra.mxu0 0.0
    %1798 = vmatprep.subr.mxu0 0.0
    %1799 = vmatpush1.msra.mxu0 0.0
    %1800 = vmatprep.subr.mxu0 0.0
    %1801 = vmatpush1.msra.mxu0 0.0
    %1802 = vmatprep.subr.mxu0 0.0
    %1803 = vmatpush1.msra.mxu0 0.0
    %1804 = vmatprep.subr.mxu0 0.0
    %1805 = vmatpush1.msra.mxu0 0.0
    %1806 = vmatprep.subr.mxu0 0.0
    %1807 = vmatpush1.msra.mxu0 0.0
    %1808 = vmatprep.subr.mxu0 0.0
    %1809 = vmatpush1.msra.mxu0 0.0
    %1810 = vmatprep.subr.mxu0 0.0
    %1811 = vmatpush1.msra.mxu0 0.0
    %1812 = vmatprep.subr.mxu0 0.0
    %1813 = vmatpush1.msra.mxu0 0.0
    %1814 = vmatprep.subr.mxu0 0.0
    %1815 = vmatpush1.msra.mxu0 0.0
    %1816 = vmatprep.subr.mxu0 0.0
    %1817 = vmatpush1.msra.mxu0 0.0
    %1818 = vmatprep.subr.mxu0 0.0
    %1819 = vmatpush1.msra.mxu0 0.0
    %1820 = vmatprep.subr.mxu0 0.0
    %1821 = vmatpush1.msra.mxu0 0.0
    %1822 = vmatprep.subr.mxu0 0.0
    %1823 = vmatpush1.msra.mxu0 0.0
    %1824 = vmatprep.subr.mxu0 0.0
    %1825 = vmatpush1.msra.mxu0 0.0
    %1826 = vmatprep.subr.mxu0 0.0
    %1827 = vmatpush1.msra.mxu0 0.0
    %1828 = vmatprep.subr.mxu0 0.0
    %1829 = vmatpush1.msra.mxu0 0.0
    %1830 = vmatprep.subr.mxu0 0.0
    %1831 = vmatpush1.msra.mxu0 0.0
    %1832 = vmatprep.subr.mxu0 0.0
    %1833 = vmatpush1.msra.mxu0 0.0
    %1834 = vmatprep.subr.mxu0 0.0
    %1835 = vmatpush1.msra.mxu0 0.0
    %1836 = vmatprep.subr.mxu0 0.0
    %1837 = vmatpush1.msra.mxu0 0.0
    %1838 = vmatprep.subr.mxu0 0.0
    %1839 = vmatpush1.msra.mxu0 0.0
    %1840 = vmatprep.subr.mxu0 0.0
    %1841 = vmatpush1.msra.mxu0 0.0
    %1842 = vmatprep.subr.mxu0 0.0
    %1843 = vmatpush1.msra.mxu0 0.0
    %1844 = vmatprep.subr.mxu0 0.0
    %1845 = vmatpush1.msra.mxu0 0.0
    %1846 = vmatprep.subr.mxu0 0.0
    %1847 = vmatpush1.msra.mxu0 0.0
    %1848 = vmatprep.mubr.f32.mxu0 0.0
    %1849 = vmatmul.mubr.f32.gmra.mrb[0].mxu0 %v1711
    %v1850 = vpop.f32.mrb[0].mxu0
    %v1851 = vadd.f32 %v295, %v1850
    %v1852 = vpop.f32.mrb[0].mxu0
    %v1853 = vadd.f32 %v297, %v1852
    %1854 = vdwg.mxu0
    %1855 = vmatprep.subr.mxu0 %v67
    %1856 = vmatpush1.msra.mxu0 %v66
    %1857 = vmatprep.subr.mxu0 %v76
    %1858 = vmatpush1.msra.mxu0 %v75
    %1859 = vmatprep.subr.mxu0 %v538
    %1860 = vmatpush1.msra.mxu0 %v535
    %1861 = vmatprep.subr.mxu0 0.0
    %1862 = vmatpush1.msra.mxu0 0.0
    %1863 = vmatprep.subr.mxu0 0.0
    %1864 = vmatpush1.msra.mxu0 0.0
    %1865 = vmatprep.subr.mxu0 0.0
    %1866 = vmatpush1.msra.mxu0 0.0
    %1867 = vmatprep.subr.mxu0 0.0
    %1868 = vmatpush1.msra.mxu0 0.0
    %1869 = vmatprep.subr.mxu0 0.0
    %1870 = vmatpush1.msra.mxu0 0.0
    %1871 = vmatprep.subr.mxu0 0.0
    %1872 = vmatpush1.msra.mxu0 0.0
    %1873 = vmatprep.subr.mxu0 0.0
    %1874 = vmatpush1.msra.mxu0 0.0
    %1875 = vmatprep.subr.mxu0 0.0
    %1876 = vmatpush1.msra.mxu0 0.0
    %1877 = vmatprep.subr.mxu0 0.0
    %1878 = vmatpush1.msra.mxu0 0.0
    %1879 = vmatprep.subr.mxu0 0.0
    %1880 = vmatpush1.msra.mxu0 0.0
    %1881 = vmatprep.subr.mxu0 0.0
    %1882 = vmatpush1.msra.mxu0 0.0
    %1883 = vmatprep.subr.mxu0 0.0
    %1884 = vmatpush1.msra.mxu0 0.0
    %1885 = vmatprep.subr.mxu0 0.0
    %1886 = vmatpush1.msra.mxu0 0.0
    %1887 = vmatprep.subr.mxu0 0.0
    %1888 = vmatpush1.msra.mxu0 0.0
    %1889 = vmatprep.subr.mxu0 0.0
    %1890 = vmatpush1.msra.mxu0 0.0
    %1891 = vmatprep.subr.mxu0 0.0
    %1892 = vmatpush1.msra.mxu0 0.0
    %1893 = vmatprep.subr.mxu0 0.0
    %1894 = vmatpush1.msra.mxu0 0.0
    %1895 = vmatprep.subr.mxu0 0.0
    %1896 = vmatpush1.msra.mxu0 0.0
    %1897 = vmatprep.subr.mxu0 0.0
    %1898 = vmatpush1.msra.mxu0 0.0
    %1899 = vmatprep.subr.mxu0 0.0
    %1900 = vmatpush1.msra.mxu0 0.0
    %1901 = vmatprep.subr.mxu0 0.0
    %1902 = vmatpush1.msra.mxu0 0.0
    %1903 = vmatprep.subr.mxu0 0.0
    %1904 = vmatpush1.msra.mxu0 0.0
    %1905 = vmatprep.subr.mxu0 0.0
    %1906 = vmatpush1.msra.mxu0 0.0
    %1907 = vmatprep.subr.mxu0 0.0
    %1908 = vmatpush1.msra.mxu0 0.0
    %1909 = vmatprep.subr.mxu0 0.0
    %1910 = vmatpush1.msra.mxu0 0.0
    %1911 = vmatprep.subr.mxu0 0.0
    %1912 = vmatpush1.msra.mxu0 0.0
    %1913 = vmatprep.subr.mxu0 0.0
    %1914 = vmatpush1.msra.mxu0 0.0
    %1915 = vmatprep.subr.mxu0 0.0
    %1916 = vmatpush1.msra.mxu0 0.0
    %1917 = vmatprep.subr.mxu0 0.0
    %1918 = vmatpush1.msra.mxu0 0.0
    %1919 = vmatprep.mubr.f32.mxu0 0.0
    %1920 = vmatmul.mubr.f32.gmra.mrb[0].mxu0 %v1711
    %v1921 = vpop.f32.mrb[0].mxu0
    %v1922 = vadd.f32 %v366, %v1921
    %v1923 = vpop.f32.mrb[0].mxu0
    %v1924 = vadd.f32 %v368, %v1923
    %1925 = vdwg.mxu0
    %1926 = vmatprep.subr.mxu0 %v69
    %1927 = vmatpush1.msra.mxu0 %v68
    %1928 = vmatprep.subr.mxu0 %v78
    %1929 = vmatpush1.msra.mxu0 %v77
    %1930 = vmatprep.subr.mxu0 %v544
    %1931 = vmatpush1.msra.mxu0 %v541
    %1932 = vmatprep.subr.mxu0 0.0
    %1933 = vmatpush1.msra.mxu0 0.0
    %1934 = vmatprep.subr.mxu0 0.0
    %1935 = vmatpush1.msra.mxu0 0.0
    %1936 = vmatprep.subr.mxu0 0.0
    %1937 = vmatpush1.msra.mxu0 0.0
    %1938 = vmatprep.subr.mxu0 0.0
    %1939 = vmatpush1.msra.mxu0 0.0
    %1940 = vmatprep.subr.mxu0 0.0
    %1941 = vmatpush1.msra.mxu0 0.0
    %1942 = vmatprep.subr.mxu0 0.0
    %1943 = vmatpush1.msra.mxu0 0.0
    %1944 = vmatprep.subr.mxu0 0.0
    %1945 = vmatpush1.msra.mxu0 0.0
    %1946 = vmatprep.subr.mxu0 0.0
    %1947 = vmatpush1.msra.mxu0 0.0
    %1948 = vmatprep.subr.mxu0 0.0
    %1949 = vmatpush1.msra.mxu0 0.0
    %1950 = vmatprep.subr.mxu0 0.0
    %1951 = vmatpush1.msra.mxu0 0.0
    %1952 = vmatprep.subr.mxu0 0.0
    %1953 = vmatpush1.msra.mxu0 0.0
    %1954 = vmatprep.subr.mxu0 0.0
    %1955 = vmatpush1.msra.mxu0 0.0
    %1956 = vmatprep.subr.mxu0 0.0
    %1957 = vmatpush1.msra.mxu0 0.0
    %1958 = vmatprep.subr.mxu0 0.0
    %1959 = vmatpush1.msra.mxu0 0.0
    %1960 = vmatprep.subr.mxu0 0.0
    %1961 = vmatpush1.msra.mxu0 0.0
    %1962 = vmatprep.subr.mxu0 0.0
    %1963 = vmatpush1.msra.mxu0 0.0
    %1964 = vmatprep.subr.mxu0 0.0
    %1965 = vmatpush1.msra.mxu0 0.0
    %1966 = vmatprep.subr.mxu0 0.0
    %1967 = vmatpush1.msra.mxu0 0.0
    %1968 = vmatprep.subr.mxu0 0.0
    %1969 = vmatpush1.msra.mxu0 0.0
    %1970 = vmatprep.subr.mxu0 0.0
    %1971 = vmatpush1.msra.mxu0 0.0
    %1972 = vmatprep.subr.mxu0 0.0
    %1973 = vmatpush1.msra.mxu0 0.0
    %1974 = vmatprep.subr.mxu0 0.0
    %1975 = vmatpush1.msra.mxu0 0.0
    %1976 = vmatprep.subr.mxu0 0.0
    %1977 = vmatpush1.msra.mxu0 0.0
    %1978 = vmatprep.subr.mxu0 0.0
    %1979 = vmatpush1.msra.mxu0 0.0
    %1980 = vmatprep.subr.mxu0 0.0
    %1981 = vmatpush1.msra.mxu0 0.0
    %1982 = vmatprep.subr.mxu0 0.0
    %1983 = vmatpush1.msra.mxu0 0.0
    %1984 = vmatprep.subr.mxu0 0.0
    %1985 = vmatpush1.msra.mxu0 0.0
    %1986 = vmatprep.subr.mxu0 0.0
    %1987 = vmatpush1.msra.mxu0 0.0
    %1988 = vmatprep.subr.mxu0 0.0
    %1989 = vmatpush1.msra.mxu0 0.0
    %1990 = vmatprep.mubr.f32.mxu0 0.0
    %1991 = vmatmul.mubr.f32.gmra.mrb[0].mxu0 %v1711
    %v1992 = vpop.f32.mrb[0].mxu0
    %v1993 = vadd.f32 %v437, %v1992
    %v1994 = vpop.f32.mrb[0].mxu0
    %v1995 = vadd.f32 %v439, %v1994
    %1996 = vdwg.mxu0
    %1997 = vmatprep.subr.mxu0 0.0
    %1998 = vmatpush1.msra.mxu0 %v70
    %1999 = vmatprep.subr.mxu0 0.0
    %2000 = vmatpush1.msra.mxu0 %v79
    %2001 = vmatprep.subr.mxu0 0.0
    %2002 = vmatpush1.msra.mxu0 %v547
    %2003 = vmatprep.subr.mxu0 0.0
    %2004 = vmatpush1.msra.mxu0 0.0
    %2005 = vmatprep.subr.mxu0 0.0
    %2006 = vmatpush1.msra.mxu0 0.0
    %2007 = vmatprep.subr.mxu0 0.0
    %2008 = vmatpush1.msra.mxu0 0.0
    %2009 = vmatprep.subr.mxu0 0.0
    %2010 = vmatpush1.msra.mxu0 0.0
    %2011 = vmatprep.subr.mxu0 0.0
    %2012 = vmatpush1.msra.mxu0 0.0
    %2013 = vmatprep.subr.mxu0 0.0
    %2014 = vmatpush1.msra.mxu0 0.0
    %2015 = vmatprep.subr.mxu0 0.0
    %2016 = vmatpush1.msra.mxu0 0.0
    %2017 = vmatprep.subr.mxu0 0.0
    %2018 = vmatpush1.msra.mxu0 0.0
    %2019 = vmatprep.subr.mxu0 0.0
    %2020 = vmatpush1.msra.mxu0 0.0
    %2021 = vmatprep.subr.mxu0 0.0
    %2022 = vmatpush1.msra.mxu0 0.0
    %2023 = vmatprep.subr.mxu0 0.0
    %2024 = vmatpush1.msra.mxu0 0.0
    %2025 = vmatprep.subr.mxu0 0.0
    %2026 = vmatpush1.msra.mxu0 0.0
    %2027 = vmatprep.subr.mxu0 0.0
    %2028 = vmatpush1.msra.mxu0 0.0
    %2029 = vmatprep.subr.mxu0 0.0
    %2030 = vmatpush1.msra.mxu0 0.0
    %2031 = vmatprep.subr.mxu0 0.0
    %2032 = vmatpush1.msra.mxu0 0.0
    %2033 = vmatprep.subr.mxu0 0.0
    %2034 = vmatpush1.msra.mxu0 0.0
    %2035 = vmatprep.subr.mxu0 0.0
    %2036 = vmatpush1.msra.mxu0 0.0
    %2037 = vmatprep.subr.mxu0 0.0
    %2038 = vmatpush1.msra.mxu0 0.0
    %2039 = vmatprep.subr.mxu0 0.0
    %2040 = vmatpush1.msra.mxu0 0.0
    %2041 = vmatprep.subr.mxu0 0.0
    %2042 = vmatpush1.msra.mxu0 0.0
    %2043 = vmatprep.subr.mxu0 0.0
    %2044 = vmatpush1.msra.mxu0 0.0
    %2045 = vmatprep.subr.mxu0 0.0
    %2046 = vmatpush1.msra.mxu0 0.0
    %2047 = vmatprep.subr.mxu0 0.0
    %2048 = vmatpush1.msra.mxu0 0.0
    %2049 = vmatprep.subr.mxu0 0.0
    %2050 = vmatpush1.msra.mxu0 0.0
    %2051 = vmatprep.subr.mxu0 0.0
    %2052 = vmatpush1.msra.mxu0 0.0
    %2053 = vmatprep.subr.mxu0 0.0
    %2054 = vmatpush1.msra.mxu0 0.0
    %2055 = vmatprep.subr.mxu0 0.0
    %2056 = vmatpush1.msra.mxu0 0.0
    %2057 = vmatprep.subr.mxu0 0.0
    %2058 = vmatpush1.msra.mxu0 0.0
    %2059 = vmatprep.subr.mxu0 0.0
    %2060 = vmatpush1.msra.mxu0 0.0
    %2061 = vmatprep.mubr.f32.mxu0 0.0
    %2062 = vmatmul.mubr.f32.gmra.mrb[0].mxu0 %v1711
    %v2063 = vpop.f32.mrb[0].mxu0
    %v2064 = vadd.f32 %v508, %v2063
    %v2065 = vpop.f32.mrb[0].mxu0
    %2066 = vdwg.mxu0
    %v2067 = vadd.f32 %v1780, %v1853
    %v2068 = vxor.u32 %v2067, 2147483648
    %v2069 = vmul.f32 %v2068, 1.442695
    %v2070 = vpow.pop %v2069
    %v2071 = vadd.f32 %v2070, 1.0
    %v2072 = vrcp.pop %v2071
    %v2073 = vmul.f32 1.0, %v2072
    %v2074 = vadd.f32 %v1782, %v1922
    %v2075 = vxor.u32 %v2074, 2147483648
    %v2076 = vmul.f32 %v2075, 1.442695
    %v2077 = vpow.pop %v2076
    %v2078 = vadd.f32 %v2077, 1.0
    %v2079 = vrcp.pop %v2078
    %v2080 = vmul.f32 1.0, %v2079
    %v2081 = vmul.f32 %v2073, %v1924
    %v2082 = vadd.f32 %v1851, %v2081
    %v2083 = vtanh.pop %v2082
    %v2084 = vsub.f32 1.0, %v2080
    %v2085 = vmul.f32 %v2084, %v2083
    %v2086 = vmul.f32 %v2080, %v1509
    %v2087 = vadd.f32 %v2085, %v2086
    %v2089 = vsel %vm924, %v2087, 0
    %2091 = vmatprep.subr.mxu0 %v90
    %2092 = vmatpush1.msra.mxu0 %v89
    %2093 = vmatprep.subr.mxu0 %v93
    %2094 = vmatpush1.msra.mxu0 %v92
    %2095 = vmatprep.subr.mxu0 %v933
    %2096 = vmatpush1.msra.mxu0 %v930
    %2097 = vmatprep.subr.mxu0 0.0
    %2098 = vmatpush1.msra.mxu0 0.0
    %2099 = vmatprep.subr.mxu0 0.0
    %2100 = vmatpush1.msra.mxu0 0.0
    %2101 = vmatprep.subr.mxu0 0.0
    %2102 = vmatpush1.msra.mxu0 0.0
    %2103 = vmatprep.subr.mxu0 0.0
    %2104 = vmatpush1.msra.mxu0 0.0
    %2105 = vmatprep.subr.mxu0 0.0
    %2106 = vmatpush1.msra.mxu0 0.0
    %2107 = vmatprep.subr.mxu0 0.0
    %2108 = vmatpush1.msra.mxu0 0.0
    %2109 = vmatprep.subr.mxu0 0.0
    %2110 = vmatpush1.msra.mxu0 0.0
    %2111 = vmatprep.subr.mxu0 0.0
    %2112 = vmatpush1.msra.mxu0 0.0
    %2113 = vmatprep.subr.mxu0 0.0
    %2114 = vmatpush1.msra.mxu0 0.0
    %2115 = vmatprep.subr.mxu0 0.0
    %2116 = vmatpush1.msra.mxu0 0.0
    %2117 = vmatprep.subr.mxu0 0.0
    %2118 = vmatpush1.msra.mxu0 0.0
    %2119 = vmatprep.subr.mxu0 0.0
    %2120 = vmatpush1.msra.mxu0 0.0
    %2121 = vmatprep.subr.mxu0 0.0
    %2122 = vmatpush1.msra.mxu0 0.0
    %2123 = vmatprep.subr.mxu0 0.0
    %2124 = vmatpush1.msra.mxu0 0.0
    %2125 = vmatprep.subr.mxu0 0.0
    %2126 = vmatpush1.msra.mxu0 0.0
    %2127 = vmatprep.subr.mxu0 0.0
    %2128 = vmatpush1.msra.mxu0 0.0
    %2129 = vmatprep.subr.mxu0 0.0
    %2130 = vmatpush1.msra.mxu0 0.0
    %2131 = vmatprep.subr.mxu0 0.0
    %2132 = vmatpush1.msra.mxu0 0.0
    %2133 = vmatprep.subr.mxu0 0.0
    %2134 = vmatpush1.msra.mxu0 0.0
    %2135 = vmatprep.subr.mxu0 0.0
    %2136 = vmatpush1.msra.mxu0 0.0
    %2137 = vmatprep.subr.mxu0 0.0
    %2138 = vmatpush1.msra.mxu0 0.0
    %2139 = vmatprep.subr.mxu0 0.0
    %2140 = vmatpush1.msra.mxu0 0.0
    %2141 = vmatprep.subr.mxu0 0.0
    %2142 = vmatpush1.msra.mxu0 0.0
    %2143 = vmatprep.subr.mxu0 0.0
    %2144 = vmatpush1.msra.mxu0 0.0
    %2145 = vmatprep.subr.mxu0 0.0
    %2146 = vmatpush1.msra.mxu0 0.0
    %2147 = vmatprep.subr.mxu0 0.0
    %2148 = vmatpush1.msra.mxu0 0.0
    %2149 = vmatprep.subr.mxu0 0.0
    %2150 = vmatpush1.msra.mxu0 0.0
    %2151 = vmatprep.subr.mxu0 0.0
    %2152 = vmatpush1.msra.mxu0 0.0
    %2153 = vmatprep.subr.mxu0 0.0
    %2154 = vmatpush1.msra.mxu0 0.0
    %2155 = vmatprep.mubr.f32.mxu0 0.0
    %2156 = vmatmul.mubr.f32.gmra.mrb[0].mxu0 %v2089
    %v2157 = vpop.f32.mrb[0].mxu0
    %v2158 = vadd.f32 0.0, %v2157
    %v2159 = vpop.f32.mrb[0].mxu0
    %v2160 = vadd.f32 0.0, %v2159
    %2161 = vdwg.mxu0
    %2162 = vmatprep.subr.mxu0 0.0
    %2163 = vmatpush1.msra.mxu0 %v91
    %2164 = vmatprep.subr.mxu0 0.0
    %2165 = vmatpush1.msra.mxu0 %v94
    %2166 = vmatprep.subr.mxu0 0.0
    %2167 = vmatpush1.msra.mxu0 %v936
    %2168 = vmatprep.subr.mxu0 0.0
    %2169 = vmatpush1.msra.mxu0 0.0
    %2170 = vmatprep.subr.mxu0 0.0
    %2171 = vmatpush1.msra.mxu0 0.0
    %2172 = vmatprep.subr.mxu0 0.0
    %2173 = vmatpush1.msra.mxu0 0.0
    %2174 = vmatprep.subr.mxu0 0.0
    %2175 = vmatpush1.msra.mxu0 0.0
    %2176 = vmatprep.subr.mxu0 0.0
    %2177 = vmatpush1.msra.mxu0 0.0
    %2178 = vmatprep.subr.mxu0 0.0
    %2179 = vmatpush1.msra.mxu0 0.0
    %2180 = vmatprep.subr.mxu0 0.0
    %2181 = vmatpush1.msra.mxu0 0.0
    %2182 = vmatprep.subr.mxu0 0.0
    %2183 = vmatpush1.msra.mxu0 0.0
    %2184 = vmatprep.subr.mxu0 0.0
    %2185 = vmatpush1.msra.mxu0 0.0
    %2186 = vmatprep.subr.mxu0 0.0
    %2187 = vmatpush1.msra.mxu0 0.0
    %2188 = vmatprep.subr.mxu0 0.0
    %2189 = vmatpush1.msra.mxu0 0.0
    %2190 = vmatprep.subr.mxu0 0.0
    %2191 = vmatpush1.msra.mxu0 0.0
    %2192 = vmatprep.subr.mxu0 0.0
    %2193 = vmatpush1.msra.mxu0 0.0
    %2194 = vmatprep.subr.mxu0 0.0
    %2195 = vmatpush1.msra.mxu0 0.0
    %2196 = vmatprep.subr.mxu0 0.0
    %2197 = vmatpush1.msra.mxu0 0.0
    %2198 = vmatprep.subr.mxu0 0.0
    %2199 = vmatpush1.msra.mxu0 0.0
    %2200 = vmatprep.subr.mxu0 0.0
    %2201 = vmatpush1.msra.mxu0 0.0
    %2202 = vmatprep.subr.mxu0 0.0
    %2203 = vmatpush1.msra.mxu0 0.0
    %2204 = vmatprep.subr.mxu0 0.0
    %2205 = vmatpush1.msra.mxu0 0.0
    %2206 = vmatprep.subr.mxu0 0.0
    %2207 = vmatpush1.msra.mxu0 0.0
    %2208 = vmatprep.subr.mxu0 0.0
    %2209 = vmatpush1.msra.mxu0 0.0
    %2210 = vmatprep.subr.mxu0 0.0
    %2211 = vmatpush1.msra.mxu0 0.0
    %2212 = vmatprep.subr.mxu0 0.0
    %2213 = vmatpush1.msra.mxu0 0.0
    %2214 = vmatprep.subr.mxu0 0.0
    %2215 = vmatpush1.msra.mxu0 0.0
    %2216 = vmatprep.subr.mxu0 0.0
    %2217 = vmatpush1.msra.mxu0 0.0
    %2218 = vmatprep.subr.mxu0 0.0
    %2219 = vmatpush1.msra.mxu0 0.0
    %2220 = vmatprep.subr.mxu0 0.0
    %2221 = vmatpush1.msra.mxu0 0.0
    %2222 = vmatprep.subr.mxu0 0.0
    %2223 = vmatpush1.msra.mxu0 0.0
    %2224 = vmatprep.subr.mxu0 0.0
    %2225 = vmatpush1.msra.mxu0 0.0
    %2226 = vmatprep.mubr.f32.mxu0 0.0
    %2227 = vmatmul.mubr.f32.gmra.mrb[0].mxu0 %v2089
    %v2228 = vpop.f32.mrb[0].mxu0
    %v2229 = vadd.f32 0.0, %v2228
    %v2230 = vpop.f32.mrb[0].mxu0
    %2231 = vdwg.mxu0
    %v2232 = vadd.f32 %v1993, %v2158
    %v2233 = vadd.f32 %v1995, %v2160
    %v2234 = vadd.f32 %v2064, %v2229
    %v2235 = vsel %vm515, %v2232, -inf
    %2236 = vmax.xlane.f32.xlu0 %v2235
    %v2237 = vpop.xlane.xlu0 %2236
    %v2238 = vsub.f32 %v2232, %v2237
    %v2239 = vmul.f32 %v2238, 1.442695
    %v2240 = vpow.pop %v2239
    %v2241 = vsel %vm515, %v2240, 0.0
    %2242 = vadd.xlane.f32.xlu0 %v2241
    %v2243 = vpop.xlane.xlu0 %2242
    %v2244 = vrcp.pop %v2243
    %v2245 = vmul.f32 %v2240, %v2244
    %s2246 = scalar_lea.vmem %s7, 16
    %2247 = vst.msk [vmem:[%s2246] sm:$0xff] %vm515, %v2245
    %s2248 = scalar_lea.vmem %s8, 16
    %2249 = vst.msk [vmem:[%s2248] sm:$0xff] %vm1094, %v2233
    %v2250 = vmul.f32 %v2234, 1.442695
    %v2251 = vpow.pop %v2250
    %v2252 = vadd.f32 %v2251, 1e-15
    %s2253 = scalar_lea.vmem %s9, 16
    %2254 = vst.msk [vmem:[%s2253] sm:$0xff] %vm1094, %v2252
    %2256 = vrot.lane.b32.xlu0 %v2232, 1
    %v2257 = vpop.permute.xlu0 %2256
    %vm2259 = vcmp.gt.f32.partialorder %v2232, %v2257
    %v2260 = vsel %vm2259, 1, 0
    %vm2261 = vcmp.eq.s32.totalorder %v2260, 1
    %v2262 = vsel %vm2261, 1, 0
    %2263 = vset.pattern.permute.xlu0 1
    %2264 = vperm.xlu0 %2263, %v2262
    %v2265 = vpop.permute.xlu0 %2264
    %vm2266 = vcmp.eq.s32.totalorder %v2265, 1
    %2268 = vrot.lane.b32.xlu0 %v2233, 2
    %v2269 = vpop.permute.xlu0 %2268
    %v2271 = vsel %vm2266, %v2233, %v2269
    %s2272 = sld [smem:[#allocation3 + $0x2]]
    %p2273 = scmp.gt.s32.totalorder %s2272, 0
    %s2274 = scalar_lea.vmem %s3, 16
    %v2275 = vld [vmem:[%s2274] sm:$0xff]
    %s2276 = scalar_select %p2273, 1, 0
    %v2277 = vstv %s2276
    %vm2278 = vcmp.eq.s32.totalorder %v2277, 1
    %2280 = vrot.lane.b32.xlu0 %v2271, 126
    %v2281 = vpop.permute.xlu0 %2280
    %v2283 = vsel %vm2278, %v2275, %v2281
    %2284 = vrot.lane.b32.xlu0 %v2087, 2
    %v2285 = vpop.permute.xlu0 %2284
    %v2287 = vsel %vm515, %v2283, %v2285
    %v2289 = vsel %vm517, %v2287, 0
    %2291 = vmatprep.subr.mxu0 %v63
    %2292 = vmatpush1.msra.mxu0 %v62
    %2293 = vmatprep.subr.mxu0 %v72
    %2294 = vmatpush1.msra.mxu0 %v71
    %2295 = vmatprep.subr.mxu0 %v526
    %2296 = vmatpush1.msra.mxu0 %v523
    %2297 = vmatprep.subr.mxu0 0.0
    %2298 = vmatpush1.msra.mxu0 0.0
    %2299 = vmatprep.subr.mxu0 0.0
    %2300 = vmatpush1.msra.mxu0 0.0
    %2301 = vmatprep.subr.mxu0 0.0
    %2302 = vmatpush1.msra.mxu0 0.0
    %2303 = vmatprep.subr.mxu0 0.0
    %2304 = vmatpush1.msra.mxu0 0.0
    %2305 = vmatprep.subr.mxu0 0.0
    %2306 = vmatpush1.msra.mxu0 0.0
    %2307 = vmatprep.subr.mxu0 0.0
    %2308 = vmatpush1.msra.mxu0 0.0
    %2309 = vmatprep.subr.mxu0 0.0
    %2310 = vmatpush1.msra.mxu0 0.0
    %2311 = vmatprep.subr.mxu0 0.0
    %2312 = vmatpush1.msra.mxu0 0.0
    %2313 = vmatprep.subr.mxu0 0.0
    %2314 = vmatpush1.msra.mxu0 0.0
    %2315 = vmatprep.subr.mxu0 0.0
    %2316 = vmatpush1.msra.mxu0 0.0
    %2317 = vmatprep.subr.mxu0 0.0
    %2318 = vmatpush1.msra.mxu0 0.0
    %2319 = vmatprep.subr.mxu0 0.0
    %2320 = vmatpush1.msra.mxu0 0.0
    %2321 = vmatprep.subr.mxu0 0.0
    %2322 = vmatpush1.msra.mxu0 0.0
    %2323 = vmatprep.subr.mxu0 0.0
    %2324 = vmatpush1.msra.mxu0 0.0
    %2325 = vmatprep.subr.mxu0 0.0
    %2326 = vmatpush1.msra.mxu0 0.0
    %2327 = vmatprep.subr.mxu0 0.0
    %2328 = vmatpush1.msra.mxu0 0.0
    %2329 = vmatprep.subr.mxu0 0.0
    %2330 = vmatpush1.msra.mxu0 0.0
    %2331 = vmatprep.subr.mxu0 0.0
    %2332 = vmatpush1.msra.mxu0 0.0
    %2333 = vmatprep.subr.mxu0 0.0
    %2334 = vmatpush1.msra.mxu0 0.0
    %2335 = vmatprep.subr.mxu0 0.0
    %2336 = vmatpush1.msra.mxu0 0.0
    %2337 = vmatprep.subr.mxu0 0.0
    %2338 = vmatpush1.msra.mxu0 0.0
    %2339 = vmatprep.subr.mxu0 0.0
    %2340 = vmatpush1.msra.mxu0 0.0
    %2341 = vmatprep.subr.mxu0 0.0
    %2342 = vmatpush1.msra.mxu0 0.0
    %2343 = vmatprep.subr.mxu0 0.0
    %2344 = vmatpush1.msra.mxu0 0.0
    %2345 = vmatprep.subr.mxu0 0.0
    %2346 = vmatpush1.msra.mxu0 0.0
    %2347 = vmatprep.subr.mxu0 0.0
    %2348 = vmatpush1.msra.mxu0 0.0
    %2349 = vmatprep.subr.mxu0 0.0
    %2350 = vmatpush1.msra.mxu0 0.0
    %2351 = vmatprep.subr.mxu0 0.0
    %2352 = vmatpush1.msra.mxu0 0.0
    %2353 = vmatprep.subr.mxu0 0.0
    %2354 = vmatpush1.msra.mxu0 0.0
    %2355 = vmatprep.mubr.f32.mxu0 0.0
    %2356 = vmatmul.mubr.f32.gmra.mrb[0].mxu0 %v2289
    %v2357 = vpop.f32.mrb[0].mxu0
    %v2358 = vadd.f32 %v224, %v2357
    %v2359 = vpop.f32.mrb[0].mxu0
    %v2360 = vadd.f32 %v226, %v2359
    %2361 = vdwg.mxu0
    %2362 = vmatprep.subr.mxu0 %v65
    %2363 = vmatpush1.msra.mxu0 %v64
    %2364 = vmatprep.subr.mxu0 %v74
    %2365 = vmatpush1.msra.mxu0 %v73
    %2366 = vmatprep.subr.mxu0 %v532
    %2367 = vmatpush1.msra.mxu0 %v529
    %2368 = vmatprep.subr.mxu0 0.0
    %2369 = vmatpush1.msra.mxu0 0.0
    %2370 = vmatprep.subr.mxu0 0.0
    %2371 = vmatpush1.msra.mxu0 0.0
    %2372 = vmatprep.subr.mxu0 0.0
    %2373 = vmatpush1.msra.mxu0 0.0
    %2374 = vmatprep.subr.mxu0 0.0
    %2375 = vmatpush1.msra.mxu0 0.0
    %2376 = vmatprep.subr.mxu0 0.0
    %2377 = vmatpush1.msra.mxu0 0.0
    %2378 = vmatprep.subr.mxu0 0.0
    %2379 = vmatpush1.msra.mxu0 0.0
    %2380 = vmatprep.subr.mxu0 0.0
    %2381 = vmatpush1.msra.mxu0 0.0
    %2382 = vmatprep.subr.mxu0 0.0
    %2383 = vmatpush1.msra.mxu0 0.0
    %2384 = vmatprep.subr.mxu0 0.0
    %2385 = vmatpush1.msra.mxu0 0.0
    %2386 = vmatprep.subr.mxu0 0.0
    %2387 = vmatpush1.msra.mxu0 0.0
    %2388 = vmatprep.subr.mxu0 0.0
    %2389 = vmatpush1.msra.mxu0 0.0
    %2390 = vmatprep.subr.mxu0 0.0
    %2391 = vmatpush1.msra.mxu0 0.0
    %2392 = vmatprep.subr.mxu0 0.0
    %2393 = vmatpush1.msra.mxu0 0.0
    %2394 = vmatprep.subr.mxu0 0.0
    %2395 = vmatpush1.msra.mxu0 0.0
    %2396 = vmatprep.subr.mxu0 0.0
    %2397 = vmatpush1.msra.mxu0 0.0
    %2398 = vmatprep.subr.mxu0 0.0
    %2399 = vmatpush1.msra.mxu0 0.0
    %2400 = vmatprep.subr.mxu0 0.0
    %2401 = vmatpush1.msra.mxu0 0.0
    %2402 = vmatprep.subr.mxu0 0.0
    %2403 = vmatpush1.msra.mxu0 0.0
    %2404 = vmatprep.subr.mxu0 0.0
    %2405 = vmatpush1.msra.mxu0 0.0
    %2406 = vmatprep.subr.mxu0 0.0
    %2407 = vmatpush1.msra.mxu0 0.0
    %2408 = vmatprep.subr.mxu0 0.0
    %2409 = vmatpush1.msra.mxu0 0.0
    %2410 = vmatprep.subr.mxu0 0.0
    %2411 = vmatpush1.msra.mxu0 0.0
    %2412 = vmatprep.subr.mxu0 0.0
    %2413 = vmatpush1.msra.mxu0 0.0
    %2414 = vmatprep.subr.mxu0 0.0
    %2415 = vmatpush1.msra.mxu0 0.0
    %2416 = vmatprep.subr.mxu0 0.0
    %2417 = vmatpush1.msra.mxu0 0.0
    %2418 = vmatprep.subr.mxu0 0.0
    %2419 = vmatpush1.msra.mxu0 0.0
    %2420 = vmatprep.subr.mxu0 0.0
    %2421 = vmatpush1.msra.mxu0 0.0
    %2422 = vmatprep.subr.mxu0 0.0
    %2423 = vmatpush1.msra.mxu0 0.0
    %2424 = vmatprep.subr.mxu0 0.0
    %2425 = vmatpush1.msra.mxu0 0.0
    %2426 = vmatprep.mubr.f32.mxu0 0.0
    %2427 = vmatmul.mubr.f32.gmra.mrb[0].mxu0 %v2289
    %v2428 = vpop.f32.mrb[0].mxu0
    %v2429 = vadd.f32 %v295, %v2428
    %v2430 = vpop.f32.mrb[0].mxu0
    %v2431 = vadd.f32 %v297, %v2430
    %2432 = vdwg.mxu0
    %2433 = vmatprep.subr.mxu0 %v67
    %2434 = vmatpush1.msra.mxu0 %v66
    %2435 = vmatprep.subr.mxu0 %v76
    %2436 = vmatpush1.msra.mxu0 %v75
    %2437 = vmatprep.subr.mxu0 %v538
    %2438 = vmatpush1.msra.mxu0 %v535
    %2439 = vmatprep.subr.mxu0 0.0
    %2440 = vmatpush1.msra.mxu0 0.0
    %2441 = vmatprep.subr.mxu0 0.0
    %2442 = vmatpush1.msra.mxu0 0.0
    %2443 = vmatprep.subr.mxu0 0.0
    %2444 = vmatpush1.msra.mxu0 0.0
    %2445 = vmatprep.subr.mxu0 0.0
    %2446 = vmatpush1.msra.mxu0 0.0
    %2447 = vmatprep.subr.mxu0 0.0
    %2448 = vmatpush1.msra.mxu0 0.0
    %2449 = vmatprep.subr.mxu0 0.0
    %2450 = vmatpush1.msra.mxu0 0.0
    %2451 = vmatprep.subr.mxu0 0.0
    %2452 = vmatpush1.msra.mxu0 0.0
    %2453 = vmatprep.subr.mxu0 0.0
    %2454 = vmatpush1.msra.mxu0 0.0
    %2455 = vmatprep.subr.mxu0 0.0
    %2456 = vmatpush1.msra.mxu0 0.0
    %2457 = vmatprep.subr.mxu0 0.0
    %2458 = vmatpush1.msra.mxu0 0.0
    %2459 = vmatprep.subr.mxu0 0.0
    %2460 = vmatpush1.msra.mxu0 0.0
    %2461 = vmatprep.subr.mxu0 0.0
    %2462 = vmatpush1.msra.mxu0 0.0
    %2463 = vmatprep.subr.mxu0 0.0
    %2464 = vmatpush1.msra.mxu0 0.0
    %2465 = vmatprep.subr.mxu0 0.0
    %2466 = vmatpush1.msra.mxu0 0.0
    %2467 = vmatprep.subr.mxu0 0.0
    %2468 = vmatpush1.msra.mxu0 0.0
    %2469 = vmatprep.subr.mxu0 0.0
    %2470 = vmatpush1.msra.mxu0 0.0
    %2471 = vmatprep.subr.mxu0 0.0
    %2472 = vmatpush1.msra.mxu0 0.0
    %2473 = vmatprep.subr.mxu0 0.0
    %2474 = vmatpush1.msra.mxu0 0.0
    %2475 = vmatprep.subr.mxu0 0.0
    %2476 = vmatpush1.msra.mxu0 0.0
    %2477 = vmatprep.subr.mxu0 0.0
    %2478 = vmatpush1.msra.mxu0 0.0
    %2479 = vmatprep.subr.mxu0 0.0
    %2480 = vmatpush1.msra.mxu0 0.0
    %2481 = vmatprep.subr.mxu0 0.0
    %2482 = vmatpush1.msra.mxu0 0.0
    %2483 = vmatprep.subr.mxu0 0.0
    %2484 = vmatpush1.msra.mxu0 0.0
    %2485 = vmatprep.subr.mxu0 0.0
    %2486 = vmatpush1.msra.mxu0 0.0
    %2487 = vmatprep.subr.mxu0 0.0
    %2488 = vmatpush1.msra.mxu0 0.0
    %2489 = vmatprep.subr.mxu0 0.0
    %2490 = vmatpush1.msra.mxu0 0.0
    %2491 = vmatprep.subr.mxu0 0.0
    %2492 = vmatpush1.msra.mxu0 0.0
    %2493 = vmatprep.subr.mxu0 0.0
    %2494 = vmatpush1.msra.mxu0 0.0
    %2495 = vmatprep.subr.mxu0 0.0
    %2496 = vmatpush1.msra.mxu0 0.0
    %2497 = vmatprep.mubr.f32.mxu0 0.0
    %2498 = vmatmul.mubr.f32.gmra.mrb[0].mxu0 %v2289
    %v2499 = vpop.f32.mrb[0].mxu0
    %v2500 = vadd.f32 %v366, %v2499
    %v2501 = vpop.f32.mrb[0].mxu0
    %v2502 = vadd.f32 %v368, %v2501
    %2503 = vdwg.mxu0
    %2504 = vmatprep.subr.mxu0 %v69
    %2505 = vmatpush1.msra.mxu0 %v68
    %2506 = vmatprep.subr.mxu0 %v78
    %2507 = vmatpush1.msra.mxu0 %v77
    %2508 = vmatprep.subr.mxu0 %v544
    %2509 = vmatpush1.msra.mxu0 %v541
    %2510 = vmatprep.subr.mxu0 0.0
    %2511 = vmatpush1.msra.mxu0 0.0
    %2512 = vmatprep.subr.mxu0 0.0
    %2513 = vmatpush1.msra.mxu0 0.0
    %2514 = vmatprep.subr.mxu0 0.0
    %2515 = vmatpush1.msra.mxu0 0.0
    %2516 = vmatprep.subr.mxu0 0.0
    %2517 = vmatpush1.msra.mxu0 0.0
    %2518 = vmatprep.subr.mxu0 0.0
    %2519 = vmatpush1.msra.mxu0 0.0
    %2520 = vmatprep.subr.mxu0 0.0
    %2521 = vmatpush1.msra.mxu0 0.0
    %2522 = vmatprep.subr.mxu0 0.0
    %2523 = vmatpush1.msra.mxu0 0.0
    %2524 = vmatprep.subr.mxu0 0.0
    %2525 = vmatpush1.msra.mxu0 0.0
    %2526 = vmatprep.subr.mxu0 0.0
    %2527 = vmatpush1.msra.mxu0 0.0
    %2528 = vmatprep.subr.mxu0 0.0
    %2529 = vmatpush1.msra.mxu0 0.0
    %2530 = vmatprep.subr.mxu0 0.0
    %2531 = vmatpush1.msra.mxu0 0.0
    %2532 = vmatprep.subr.mxu0 0.0
    %2533 = vmatpush1.msra.mxu0 0.0
    %2534 = vmatprep.subr.mxu0 0.0
    %2535 = vmatpush1.msra.mxu0 0.0
    %2536 = vmatprep.subr.mxu0 0.0
    %2537 = vmatpush1.msra.mxu0 0.0
    %2538 = vmatprep.subr.mxu0 0.0
    %2539 = vmatpush1.msra.mxu0 0.0
    %2540 = vmatprep.subr.mxu0 0.0
    %2541 = vmatpush1.msra.mxu0 0.0
    %2542 = vmatprep.subr.mxu0 0.0
    %2543 = vmatpush1.msra.mxu0 0.0
    %2544 = vmatprep.subr.mxu0 0.0
    %2545 = vmatpush1.msra.mxu0 0.0
    %2546 = vmatprep.subr.mxu0 0.0
    %2547 = vmatpush1.msra.mxu0 0.0
    %2548 = vmatprep.subr.mxu0 0.0
    %2549 = vmatpush1.msra.mxu0 0.0
    %2550 = vmatprep.subr.mxu0 0.0
    %2551 = vmatpush1.msra.mxu0 0.0
    %2552 = vmatprep.subr.mxu0 0.0
    %2553 = vmatpush1.msra.mxu0 0.0
    %2554 = vmatprep.subr.mxu0 0.0
    %2555 = vmatpush1.msra.mxu0 0.0
    %2556 = vmatprep.subr.mxu0 0.0
    %2557 = vmatpush1.msra.mxu0 0.0
    %2558 = vmatprep.subr.mxu0 0.0
    %2559 = vmatpush1.msra.mxu0 0.0
    %2560 = vmatprep.subr.mxu0 0.0
    %2561 = vmatpush1.msra.mxu0 0.0
    %2562 = vmatprep.subr.mxu0 0.0
    %2563 = vmatpush1.msra.mxu0 0.0
    %2564 = vmatprep.subr.mxu0 0.0
    %2565 = vmatpush1.msra.mxu0 0.0
    %2566 = vmatprep.subr.mxu0 0.0
    %2567 = vmatpush1.msra.mxu0 0.0
    %2568 = vmatprep.mubr.f32.mxu0 0.0
    %2569 = vmatmul.mubr.f32.gmra.mrb[0].mxu0 %v2289
    %v2570 = vpop.f32.mrb[0].mxu0
    %v2571 = vadd.f32 %v437, %v2570
    %v2572 = vpop.f32.mrb[0].mxu0
    %v2573 = vadd.f32 %v439, %v2572
    %2574 = vdwg.mxu0
    %2575 = vmatprep.subr.mxu0 0.0
    %2576 = vmatpush1.msra.mxu0 %v70
    %2577 = vmatprep.subr.mxu0 0.0
    %2578 = vmatpush1.msra.mxu0 %v79
    %2579 = vmatprep.subr.mxu0 0.0
    %2580 = vmatpush1.msra.mxu0 %v547
    %2581 = vmatprep.subr.mxu0 0.0
    %2582 = vmatpush1.msra.mxu0 0.0
    %2583 = vmatprep.subr.mxu0 0.0
    %2584 = vmatpush1.msra.mxu0 0.0
    %2585 = vmatprep.subr.mxu0 0.0
    %2586 = vmatpush1.msra.mxu0 0.0
    %2587 = vmatprep.subr.mxu0 0.0
    %2588 = vmatpush1.msra.mxu0 0.0
    %2589 = vmatprep.subr.mxu0 0.0
    %2590 = vmatpush1.msra.mxu0 0.0
    %2591 = vmatprep.subr.mxu0 0.0
    %2592 = vmatpush1.msra.mxu0 0.0
    %2593 = vmatprep.subr.mxu0 0.0
    %2594 = vmatpush1.msra.mxu0 0.0
    %2595 = vmatprep.subr.mxu0 0.0
    %2596 = vmatpush1.msra.mxu0 0.0
    %2597 = vmatprep.subr.mxu0 0.0
    %2598 = vmatpush1.msra.mxu0 0.0
    %2599 = vmatprep.subr.mxu0 0.0
    %2600 = vmatpush1.msra.mxu0 0.0
    %2601 = vmatprep.subr.mxu0 0.0
    %2602 = vmatpush1.msra.mxu0 0.0
    %2603 = vmatprep.subr.mxu0 0.0
    %2604 = vmatpush1.msra.mxu0 0.0
    %2605 = vmatprep.subr.mxu0 0.0
    %2606 = vmatpush1.msra.mxu0 0.0
    %2607 = vmatprep.subr.mxu0 0.0
    %2608 = vmatpush1.msra.mxu0 0.0
    %2609 = vmatprep.subr.mxu0 0.0
    %2610 = vmatpush1.msra.mxu0 0.0
    %2611 = vmatprep.subr.mxu0 0.0
    %2612 = vmatpush1.msra.mxu0 0.0
    %2613 = vmatprep.subr.mxu0 0.0
    %2614 = vmatpush1.msra.mxu0 0.0
    %2615 = vmatprep.subr.mxu0 0.0
    %2616 = vmatpush1.msra.mxu0 0.0
    %2617 = vmatprep.subr.mxu0 0.0
    %2618 = vmatpush1.msra.mxu0 0.0
    %2619 = vmatprep.subr.mxu0 0.0
    %2620 = vmatpush1.msra.mxu0 0.0
    %2621 = vmatprep.subr.mxu0 0.0
    %2622 = vmatpush1.msra.mxu0 0.0
    %2623 = vmatprep.subr.mxu0 0.0
    %2624 = vmatpush1.msra.mxu0 0.0
    %2625 = vmatprep.subr.mxu0 0.0
    %2626 = vmatpush1.msra.mxu0 0.0
    %2627 = vmatprep.subr.mxu0 0.0
    %2628 = vmatpush1.msra.mxu0 0.0
    %2629 = vmatprep.subr.mxu0 0.0
    %2630 = vmatpush1.msra.mxu0 0.0
    %2631 = vmatprep.subr.mxu0 0.0
    %2632 = vmatpush1.msra.mxu0 0.0
    %2633 = vmatprep.subr.mxu0 0.0
    %2634 = vmatpush1.msra.mxu0 0.0
    %2635 = vmatprep.subr.mxu0 0.0
    %2636 = vmatpush1.msra.mxu0 0.0
    %2637 = vmatprep.subr.mxu0 0.0
    %2638 = vmatpush1.msra.mxu0 0.0
    %2639 = vmatprep.mubr.f32.mxu0 0.0
    %2640 = vmatmul.mubr.f32.gmra.mrb[0].mxu0 %v2289
    %v2641 = vpop.f32.mrb[0].mxu0
    %v2642 = vadd.f32 %v508, %v2641
    %v2643 = vpop.f32.mrb[0].mxu0
    %2644 = vdwg.mxu0
    %v2645 = vadd.f32 %v2358, %v2431
    %v2646 = vxor.u32 %v2645, 2147483648
    %v2647 = vmul.f32 %v2646, 1.442695
    %v2648 = vpow.pop %v2647
    %v2649 = vadd.f32 %v2648, 1.0
    %v2650 = vrcp.pop %v2649
    %v2651 = vmul.f32 1.0, %v2650
    %v2652 = vadd.f32 %v2360, %v2500
    %v2653 = vxor.u32 %v2652, 2147483648
    %v2654 = vmul.f32 %v2653, 1.442695
    %v2655 = vpow.pop %v2654
    %v2656 = vadd.f32 %v2655, 1.0
    %v2657 = vrcp.pop %v2656
    %v2658 = vmul.f32 1.0, %v2657
    %v2659 = vmul.f32 %v2651, %v2502
    %v2660 = vadd.f32 %v2429, %v2659
    %v2661 = vtanh.pop %v2660
    %v2662 = vsub.f32 1.0, %v2658
    %v2663 = vmul.f32 %v2662, %v2661
    %v2664 = vmul.f32 %v2658, %v2087
    %v2665 = vadd.f32 %v2663, %v2664
    %v2667 = vsel %vm924, %v2665, 0
    %2669 = vmatprep.subr.mxu0 %v90
    %2670 = vmatpush1.msra.mxu0 %v89
    %2671 = vmatprep.subr.mxu0 %v93
    %2672 = vmatpush1.msra.mxu0 %v92
    %2673 = vmatprep.subr.mxu0 %v933
    %2674 = vmatpush1.msra.mxu0 %v930
    %2675 = vmatprep.subr.mxu0 0.0
    %2676 = vmatpush1.msra.mxu0 0.0
    %2677 = vmatprep.subr.mxu0 0.0
    %2678 = vmatpush1.msra.mxu0 0.0
    %2679 = vmatprep.subr.mxu0 0.0
    %2680 = vmatpush1.msra.mxu0 0.0
    %2681 = vmatprep.subr.mxu0 0.0
    %2682 = vmatpush1.msra.mxu0 0.0
    %2683 = vmatprep.subr.mxu0 0.0
    %2684 = vmatpush1.msra.mxu0 0.0
    %2685 = vmatprep.subr.mxu0 0.0
    %2686 = vmatpush1.msra.mxu0 0.0
    %2687 = vmatprep.subr.mxu0 0.0
    %2688 = vmatpush1.msra.mxu0 0.0
    %2689 = vmatprep.subr.mxu0 0.0
    %2690 = vmatpush1.msra.mxu0 0.0
    %2691 = vmatprep.subr.mxu0 0.0
    %2692 = vmatpush1.msra.mxu0 0.0
    %2693 = vmatprep.subr.mxu0 0.0
    %2694 = vmatpush1.msra.mxu0 0.0
    %2695 = vmatprep.subr.mxu0 0.0
    %2696 = vmatpush1.msra.mxu0 0.0
    %2697 = vmatprep.subr.mxu0 0.0
    %2698 = vmatpush1.msra.mxu0 0.0
    %2699 = vmatprep.subr.mxu0 0.0
    %2700 = vmatpush1.msra.mxu0 0.0
    %2701 = vmatprep.subr.mxu0 0.0
    %2702 = vmatpush1.msra.mxu0 0.0
    %2703 = vmatprep.subr.mxu0 0.0
    %2704 = vmatpush1.msra.mxu0 0.0
    %2705 = vmatprep.subr.mxu0 0.0
    %2706 = vmatpush1.msra.mxu0 0.0
    %2707 = vmatprep.subr.mxu0 0.0
    %2708 = vmatpush1.msra.mxu0 0.0
    %2709 = vmatprep.subr.mxu0 0.0
    %2710 = vmatpush1.msra.mxu0 0.0
    %2711 = vmatprep.subr.mxu0 0.0
    %2712 = vmatpush1.msra.mxu0 0.0
    %2713 = vmatprep.subr.mxu0 0.0
    %2714 = vmatpush1.msra.mxu0 0.0
    %2715 = vmatprep.subr.mxu0 0.0
    %2716 = vmatpush1.msra.mxu0 0.0
    %2717 = vmatprep.subr.mxu0 0.0
    %2718 = vmatpush1.msra.mxu0 0.0
    %2719 = vmatprep.subr.mxu0 0.0
    %2720 = vmatpush1.msra.mxu0 0.0
    %2721 = vmatprep.subr.mxu0 0.0
    %2722 = vmatpush1.msra.mxu0 0.0
    %2723 = vmatprep.subr.mxu0 0.0
    %2724 = vmatpush1.msra.mxu0 0.0
    %2725 = vmatprep.subr.mxu0 0.0
    %2726 = vmatpush1.msra.mxu0 0.0
    %2727 = vmatprep.subr.mxu0 0.0
    %2728 = vmatpush1.msra.mxu0 0.0
    %2729 = vmatprep.subr.mxu0 0.0
    %2730 = vmatpush1.msra.mxu0 0.0
    %2731 = vmatprep.subr.mxu0 0.0
    %2732 = vmatpush1.msra.mxu0 0.0
    %2733 = vmatprep.mubr.f32.mxu0 0.0
    %2734 = vmatmul.mubr.f32.gmra.mrb[0].mxu0 %v2667
    %v2735 = vpop.f32.mrb[0].mxu0
    %v2736 = vadd.f32 0.0, %v2735
    %v2737 = vpop.f32.mrb[0].mxu0
    %v2738 = vadd.f32 0.0, %v2737
    %2739 = vdwg.mxu0
    %2740 = vmatprep.subr.mxu0 0.0
    %2741 = vmatpush1.msra.mxu0 %v91
    %2742 = vmatprep.subr.mxu0 0.0
    %2743 = vmatpush1.msra.mxu0 %v94
    %2744 = vmatprep.subr.mxu0 0.0
    %2745 = vmatpush1.msra.mxu0 %v936
    %2746 = vmatprep.subr.mxu0 0.0
    %2747 = vmatpush1.msra.mxu0 0.0
    %2748 = vmatprep.subr.mxu0 0.0
    %2749 = vmatpush1.msra.mxu0 0.0
    %2750 = vmatprep.subr.mxu0 0.0
    %2751 = vmatpush1.msra.mxu0 0.0
    %2752 = vmatprep.subr.mxu0 0.0
    %2753 = vmatpush1.msra.mxu0 0.0
    %2754 = vmatprep.subr.mxu0 0.0
    %2755 = vmatpush1.msra.mxu0 0.0
    %2756 = vmatprep.subr.mxu0 0.0
    %2757 = vmatpush1.msra.mxu0 0.0
    %2758 = vmatprep.subr.mxu0 0.0
    %2759 = vmatpush1.msra.mxu0 0.0
    %2760 = vmatprep.subr.mxu0 0.0
    %2761 = vmatpush1.msra.mxu0 0.0
    %2762 = vmatprep.subr.mxu0 0.0
    %2763 = vmatpush1.msra.mxu0 0.0
    %2764 = vmatprep.subr.mxu0 0.0
    %2765 = vmatpush1.msra.mxu0 0.0
    %2766 = vmatprep.subr.mxu0 0.0
    %2767 = vmatpush1.msra.mxu0 0.0
    %2768 = vmatprep.subr.mxu0 0.0
    %2769 = vmatpush1.msra.mxu0 0.0
    %2770 = vmatprep.subr.mxu0 0.0
    %2771 = vmatpush1.msra.mxu0 0.0
    %2772 = vmatprep.subr.mxu0 0.0
    %2773 = vmatpush1.msra.mxu0 0.0
    %2774 = vmatprep.subr.mxu0 0.0
    %2775 = vmatpush1.msra.mxu0 0.0
    %2776 = vmatprep.subr.mxu0 0.0
    %2777 = vmatpush1.msra.mxu0 0.0
    %2778 = vmatprep.subr.mxu0 0.0
    %2779 = vmatpush1.msra.mxu0 0.0
    %2780 = vmatprep.subr.mxu0 0.0
    %2781 = vmatpush1.msra.mxu0 0.0
    %2782 = vmatprep.subr.mxu0 0.0
    %2783 = vmatpush1.msra.mxu0 0.0
    %2784 = vmatprep.subr.mxu0 0.0
    %2785 = vmatpush1.msra.mxu0 0.0
    %2786 = vmatprep.subr.mxu0 0.0
    %2787 = vmatpush1.msra.mxu0 0.0
    %2788 = vmatprep.subr.mxu0 0.0
    %2789 = vmatpush1.msra.mxu0 0.0
    %2790 = vmatprep.subr.mxu0 0.0
    %2791 = vmatpush1.msra.mxu0 0.0
    %2792 = vmatprep.subr.mxu0 0.0
    %2793 = vmatpush1.msra.mxu0 0.0
    %2794 = vmatprep.subr.mxu0 0.0
    %2795 = vmatpush1.msra.mxu0 0.0
    %2796 = vmatprep.subr.mxu0 0.0
    %2797 = vmatpush1.msra.mxu0 0.0
    %2798 = vmatprep.subr.mxu0 0.0
    %2799 = vmatpush1.msra.mxu0 0.0
    %2800 = vmatprep.subr.mxu0 0.0
    %2801 = vmatpush1.msra.mxu0 0.0
    %2802 = vmatprep.subr.mxu0 0.0
    %2803 = vmatpush1.msra.mxu0 0.0
    %2804 = vmatprep.mubr.f32.mxu0 0.0
    %2805 = vmatmul.mubr.f32.gmra.mrb[0].mxu0 %v2667
    %v2806 = vpop.f32.mrb[0].mxu0
    %v2807 = vadd.f32 0.0, %v2806
    %v2808 = vpop.f32.mrb[0].mxu0
    %2809 = vdwg.mxu0
    %v2810 = vadd.f32 %v2571, %v2736
    %v2811 = vadd.f32 %v2573, %v2738
    %v2812 = vadd.f32 %v2642, %v2807
    %v2813 = vsel %vm515, %v2810, -inf
    %2814 = vmax.xlane.f32.xlu0 %v2813
    %v2815 = vpop.xlane.xlu0 %2814
    %v2816 = vsub.f32 %v2810, %v2815
    %v2817 = vmul.f32 %v2816, 1.442695
    %v2818 = vpow.pop %v2817
    %v2819 = vsel %vm515, %v2818, 0.0
    %2820 = vadd.xlane.f32.xlu0 %v2819
    %v2821 = vpop.xlane.xlu0 %2820
    %v2822 = vrcp.pop %v2821
    %v2823 = vmul.f32 %v2818, %v2822
    %s2824 = scalar_lea.vmem %s7, 24
    %2825 = vst.msk [vmem:[%s2824] sm:$0xff] %vm515, %v2823
    %s2826 = scalar_lea.vmem %s8, 24
    %2827 = vst.msk [vmem:[%s2826] sm:$0xff] %vm1094, %v2811
    %v2828 = vmul.f32 %v2812, 1.442695
    %v2829 = vpow.pop %v2828
    %v2830 = vadd.f32 %v2829, 1e-15
    %s2831 = scalar_lea.vmem %s9, 24
    %2832 = vst.msk [vmem:[%s2831] sm:$0xff] %vm1094, %v2830
    %2834 = vrot.lane.b32.xlu0 %v2810, 1
    %v2835 = vpop.permute.xlu0 %2834
    %vm2837 = vcmp.gt.f32.partialorder %v2810, %v2835
    %v2838 = vsel %vm2837, 1, 0
    %vm2839 = vcmp.eq.s32.totalorder %v2838, 1
    %v2840 = vsel %vm2839, 1, 0
    %2841 = vset.pattern.permute.xlu0 1
    %2842 = vperm.xlu0 %2841, %v2840
    %v2843 = vpop.permute.xlu0 %2842
    %vm2844 = vcmp.eq.s32.totalorder %v2843, 1
    %2846 = vrot.lane.b32.xlu0 %v2811, 2
    %v2847 = vpop.permute.xlu0 %2846
    %v2849 = vsel %vm2844, %v2811, %v2847
    %s2850 = sld [smem:[#allocation3 + $0x3]]
    %p2851 = scmp.gt.s32.totalorder %s2850, 0
    %s2852 = scalar_lea.vmem %s3, 24
    %v2853 = vld [vmem:[%s2852] sm:$0xff]
    %s2854 = scalar_select %p2851, 1, 0
    %v2855 = vstv %s2854
    %vm2856 = vcmp.eq.s32.totalorder %v2855, 1
    %2858 = vrot.lane.b32.xlu0 %v2849, 126
    %v2859 = vpop.permute.xlu0 %2858
    %v2861 = vsel %vm2856, %v2853, %v2859
    %2862 = vrot.lane.b32.xlu0 %v2665, 2
    %v2863 = vpop.permute.xlu0 %2862
    %v2865 = vsel %vm515, %v2861, %v2863
    %v2867 = vsel %vm517, %v2865, 0
    %2869 = vmatprep.subr.mxu0 %v63
    %2870 = vmatpush1.msra.mxu0 %v62
    %2871 = vmatprep.subr.mxu0 %v72
    %2872 = vmatpush1.msra.mxu0 %v71
    %2873 = vmatprep.subr.mxu0 %v526
    %2874 = vmatpush1.msra.mxu0 %v523
    %2875 = vmatprep.subr.mxu0 0.0
    %2876 = vmatpush1.msra.mxu0 0.0
    %2877 = vmatprep.subr.mxu0 0.0
    %2878 = vmatpush1.msra.mxu0 0.0
    %2879 = vmatprep.subr.mxu0 0.0
    %2880 = vmatpush1.msra.mxu0 0.0
    %2881 = vmatprep.subr.mxu0 0.0
    %2882 = vmatpush1.msra.mxu0 0.0
    %2883 = vmatprep.subr.mxu0 0.0
    %2884 = vmatpush1.msra.mxu0 0.0
    %2885 = vmatprep.subr.mxu0 0.0
    %2886 = vmatpush1.msra.mxu0 0.0
    %2887 = vmatprep.subr.mxu0 0.0
    %2888 = vmatpush1.msra.mxu0 0.0
    %2889 = vmatprep.subr.mxu0 0.0
    %2890 = vmatpush1.msra.mxu0 0.0
    %2891 = vmatprep.subr.mxu0 0.0
    %2892 = vmatpush1.msra.mxu0 0.0
    %2893 = vmatprep.subr.mxu0 0.0
    %2894 = vmatpush1.msra.mxu0 0.0
    %2895 = vmatprep.subr.mxu0 0.0
    %2896 = vmatpush1.msra.mxu0 0.0
    %2897 = vmatprep.subr.mxu0 0.0
    %2898 = vmatpush1.msra.mxu0 0.0
    %2899 = vmatprep.subr.mxu0 0.0
    %2900 = vmatpush1.msra.mxu0 0.0
    %2901 = vmatprep.subr.mxu0 0.0
    %2902 = vmatpush1.msra.mxu0 0.0
    %2903 = vmatprep.subr.mxu0 0.0
    %2904 = vmatpush1.msra.mxu0 0.0
    %2905 = vmatprep.subr.mxu0 0.0
    %2906 = vmatpush1.msra.mxu0 0.0
    %2907 = vmatprep.subr.mxu0 0.0
    %2908 = vmatpush1.msra.mxu0 0.0
    %2909 = vmatprep.subr.mxu0 0.0
    %2910 = vmatpush1.msra.mxu0 0.0
    %2911 = vmatprep.subr.mxu0 0.0
    %2912 = vmatpush1.msra.mxu0 0.0
    %2913 = vmatprep.subr.mxu0 0.0
    %2914 = vmatpush1.msra.mxu0 0.0
    %2915 = vmatprep.subr.mxu0 0.0
    %2916 = vmatpush1.msra.mxu0 0.0
    %2917 = vmatprep.subr.mxu0 0.0
    %2918 = vmatpush1.msra.mxu0 0.0
    %2919 = vmatprep.subr.mxu0 0.0
    %2920 = vmatpush1.msra.mxu0 0.0
    %2921 = vmatprep.subr.mxu0 0.0
    %2922 = vmatpush1.msra.mxu0 0.0
    %2923 = vmatprep.subr.mxu0 0.0
    %2924 = vmatpush1.msra.mxu0 0.0
    %2925 = vmatprep.subr.mxu0 0.0
    %2926 = vmatpush1.msra.mxu0 0.0
    %2927 = vmatprep.subr.mxu0 0.0
    %2928 = vmatpush1.msra.mxu0 0.0
    %2929 = vmatprep.subr.mxu0 0.0
    %2930 = vmatpush1.msra.mxu0 0.0
    %2931 = vmatprep.subr.mxu0 0.0
    %2932 = vmatpush1.msra.mxu0 0.0
    %2933 = vmatprep.mubr.f32.mxu0 0.0
    %2934 = vmatmul.mubr.f32.gmra.mrb[0].mxu0 %v2867
    %v2935 = vpop.f32.mrb[0].mxu0
    %v2936 = vadd.f32 %v224, %v2935
    %v2937 = vpop.f32.mrb[0].mxu0
    %v2938 = vadd.f32 %v226, %v2937
    %2939 = vdwg.mxu0
    %2940 = vmatprep.subr.mxu0 %v65
    %2941 = vmatpush1.msra.mxu0 %v64
    %2942 = vmatprep.subr.mxu0 %v74
    %2943 = vmatpush1.msra.mxu0 %v73
    %2944 = vmatprep.subr.mxu0 %v532
    %2945 = vmatpush1.msra.mxu0 %v529
    %2946 = vmatprep.subr.mxu0 0.0
    %2947 = vmatpush1.msra.mxu0 0.0
    %2948 = vmatprep.subr.mxu0 0.0
    %2949 = vmatpush1.msra.mxu0 0.0
    %2950 = vmatprep.subr.mxu0 0.0
    %2951 = vmatpush1.msra.mxu0 0.0
    %2952 = vmatprep.subr.mxu0 0.0
    %2953 = vmatpush1.msra.mxu0 0.0
    %2954 = vmatprep.subr.mxu0 0.0
    %2955 = vmatpush1.msra.mxu0 0.0
    %2956 = vmatprep.subr.mxu0 0.0
    %2957 = vmatpush1.msra.mxu0 0.0
    %2958 = vmatprep.subr.mxu0 0.0
    %2959 = vmatpush1.msra.mxu0 0.0
    %2960 = vmatprep.subr.mxu0 0.0
    %2961 = vmatpush1.msra.mxu0 0.0
    %2962 = vmatprep.subr.mxu0 0.0
    %2963 = vmatpush1.msra.mxu0 0.0
    %2964 = vmatprep.subr.mxu0 0.0
    %2965 = vmatpush1.msra.mxu0 0.0
    %2966 = vmatprep.subr.mxu0 0.0
    %2967 = vmatpush1.msra.mxu0 0.0
    %2968 = vmatprep.subr.mxu0 0.0
    %2969 = vmatpush1.msra.mxu0 0.0
    %2970 = vmatprep.subr.mxu0 0.0
    %2971 = vmatpush1.msra.mxu0 0.0
    %2972 = vmatprep.subr.mxu0 0.0
    %2973 = vmatpush1.msra.mxu0 0.0
    %2974 = vmatprep.subr.mxu0 0.0
    %2975 = vmatpush1.msra.mxu0 0.0
    %2976 = vmatprep.subr.mxu0 0.0
    %2977 = vmatpush1.msra.mxu0 0.0
    %2978 = vmatprep.subr.mxu0 0.0
    %2979 = vmatpush1.msra.mxu0 0.0
    %2980 = vmatprep.subr.mxu0 0.0
    %2981 = vmatpush1.msra.mxu0 0.0
    %2982 = vmatprep.subr.mxu0 0.0
    %2983 = vmatpush1.msra.mxu0 0.0
    %2984 = vmatprep.subr.mxu0 0.0
    %2985 = vmatpush1.msra.mxu0 0.0
    %2986 = vmatprep.subr.mxu0 0.0
    %2987 = vmatpush1.msra.mxu0 0.0
    %2988 = vmatprep.subr.mxu0 0.0
    %2989 = vmatpush1.msra.mxu0 0.0
    %2990 = vmatprep.subr.mxu0 0.0
    %2991 = vmatpush1.msra.mxu0 0.0
    %2992 = vmatprep.subr.mxu0 0.0
    %2993 = vmatpush1.msra.mxu0 0.0
    %2994 = vmatprep.subr.mxu0 0.0
    %2995 = vmatpush1.msra.mxu0 0.0
    %2996 = vmatprep.subr.mxu0 0.0
    %2997 = vmatpush1.msra.mxu0 0.0
    %2998 = vmatprep.subr.mxu0 0.0
    %2999 = vmatpush1.msra.mxu0 0.0
    %3000 = vmatprep.subr.mxu0 0.0
    %3001 = vmatpush1.msra.mxu0 0.0
    %3002 = vmatprep.subr.mxu0 0.0
    %3003 = vmatpush1.msra.mxu0 0.0
    %3004 = vmatprep.mubr.f32.mxu0 0.0
    %3005 = vmatmul.mubr.f32.gmra.mrb[0].mxu0 %v2867
    %v3006 = vpop.f32.mrb[0].mxu0
    %v3007 = vadd.f32 %v295, %v3006
    %v3008 = vpop.f32.mrb[0].mxu0
    %v3009 = vadd.f32 %v297, %v3008
    %3010 = vdwg.mxu0
    %3011 = vmatprep.subr.mxu0 %v67
    %3012 = vmatpush1.msra.mxu0 %v66
    %3013 = vmatprep.subr.mxu0 %v76
    %3014 = vmatpush1.msra.mxu0 %v75
    %3015 = vmatprep.subr.mxu0 %v538
    %3016 = vmatpush1.msra.mxu0 %v535
    %3017 = vmatprep.subr.mxu0 0.0
    %3018 = vmatpush1.msra.mxu0 0.0
    %3019 = vmatprep.subr.mxu0 0.0
    %3020 = vmatpush1.msra.mxu0 0.0
    %3021 = vmatprep.subr.mxu0 0.0
    %3022 = vmatpush1.msra.mxu0 0.0
    %3023 = vmatprep.subr.mxu0 0.0
    %3024 = vmatpush1.msra.mxu0 0.0
    %3025 = vmatprep.subr.mxu0 0.0
    %3026 = vmatpush1.msra.mxu0 0.0
    %3027 = vmatprep.subr.mxu0 0.0
    %3028 = vmatpush1.msra.mxu0 0.0
    %3029 = vmatprep.subr.mxu0 0.0
    %3030 = vmatpush1.msra.mxu0 0.0
    %3031 = vmatprep.subr.mxu0 0.0
    %3032 = vmatpush1.msra.mxu0 0.0
    %3033 = vmatprep.subr.mxu0 0.0
    %3034 = vmatpush1.msra.mxu0 0.0
    %3035 = vmatprep.subr.mxu0 0.0
    %3036 = vmatpush1.msra.mxu0 0.0
    %3037 = vmatprep.subr.mxu0 0.0
    %3038 = vmatpush1.msra.mxu0 0.0
    %3039 = vmatprep.subr.mxu0 0.0
    %3040 = vmatpush1.msra.mxu0 0.0
    %3041 = vmatprep.subr.mxu0 0.0
    %3042 = vmatpush1.msra.mxu0 0.0
    %3043 = vmatprep.subr.mxu0 0.0
    %3044 = vmatpush1.msra.mxu0 0.0
    %3045 = vmatprep.subr.mxu0 0.0
    %3046 = vmatpush1.msra.mxu0 0.0
    %3047 = vmatprep.subr.mxu0 0.0
    %3048 = vmatpush1.msra.mxu0 0.0
    %3049 = vmatprep.subr.mxu0 0.0
    %3050 = vmatpush1.msra.mxu0 0.0
    %3051 = vmatprep.subr.mxu0 0.0
    %3052 = vmatpush1.msra.mxu0 0.0
    %3053 = vmatprep.subr.mxu0 0.0
    %3054 = vmatpush1.msra.mxu0 0.0
    %3055 = vmatprep.subr.mxu0 0.0
    %3056 = vmatpush1.msra.mxu0 0.0
    %3057 = vmatprep.subr.mxu0 0.0
    %3058 = vmatpush1.msra.mxu0 0.0
    %3059 = vmatprep.subr.mxu0 0.0
    %3060 = vmatpush1.msra.mxu0 0.0
    %3061 = vmatprep.subr.mxu0 0.0
    %3062 = vmatpush1.msra.mxu0 0.0
    %3063 = vmatprep.subr.mxu0 0.0
    %3064 = vmatpush1.msra.mxu0 0.0
    %3065 = vmatprep.subr.mxu0 0.0
    %3066 = vmatpush1.msra.mxu0 0.0
    %3067 = vmatprep.subr.mxu0 0.0
    %3068 = vmatpush1.msra.mxu0 0.0
    %3069 = vmatprep.subr.mxu0 0.0
    %3070 = vmatpush1.msra.mxu0 0.0
    %3071 = vmatprep.subr.mxu0 0.0
    %3072 = vmatpush1.msra.mxu0 0.0
    %3073 = vmatprep.subr.mxu0 0.0
    %3074 = vmatpush1.msra.mxu0 0.0
    %3075 = vmatprep.mubr.f32.mxu0 0.0
    %3076 = vmatmul.mubr.f32.gmra.mrb[0].mxu0 %v2867
    %v3077 = vpop.f32.mrb[0].mxu0
    %v3078 = vadd.f32 %v366, %v3077
    %v3079 = vpop.f32.mrb[0].mxu0
    %v3080 = vadd.f32 %v368, %v3079
    %3081 = vdwg.mxu0
    %3082 = vmatprep.subr.mxu0 %v69
    %3083 = vmatpush1.msra.mxu0 %v68
    %3084 = vmatprep.subr.mxu0 %v78
    %3085 = vmatpush1.msra.mxu0 %v77
    %3086 = vmatprep.subr.mxu0 %v544
    %3087 = vmatpush1.msra.mxu0 %v541
    %3088 = vmatprep.subr.mxu0 0.0
    %3089 = vmatpush1.msra.mxu0 0.0
    %3090 = vmatprep.subr.mxu0 0.0
    %3091 = vmatpush1.msra.mxu0 0.0
    %3092 = vmatprep.subr.mxu0 0.0
    %3093 = vmatpush1.msra.mxu0 0.0
    %3094 = vmatprep.subr.mxu0 0.0
    %3095 = vmatpush1.msra.mxu0 0.0
    %3096 = vmatprep.subr.mxu0 0.0
    %3097 = vmatpush1.msra.mxu0 0.0
    %3098 = vmatprep.subr.mxu0 0.0
    %3099 = vmatpush1.msra.mxu0 0.0
    %3100 = vmatprep.subr.mxu0 0.0
    %3101 = vmatpush1.msra.mxu0 0.0
    %3102 = vmatprep.subr.mxu0 0.0
    %3103 = vmatpush1.msra.mxu0 0.0
    %3104 = vmatprep.subr.mxu0 0.0
    %3105 = vmatpush1.msra.mxu0 0.0
    %3106 = vmatprep.subr.mxu0 0.0
    %3107 = vmatpush1.msra.mxu0 0.0
    %3108 = vmatprep.subr.mxu0 0.0
    %3109 = vmatpush1.msra.mxu0 0.0
    %3110 = vmatprep.subr.mxu0 0.0
    %3111 = vmatpush1.msra.mxu0 0.0
    %3112 = vmatprep.subr.mxu0 0.0
    %3113 = vmatpush1.msra.mxu0 0.0
    %3114 = vmatprep.subr.mxu0 0.0
    %3115 = vmatpush1.msra.mxu0 0.0
    %3116 = vmatprep.subr.mxu0 0.0
    %3117 = vmatpush1.msra.mxu0 0.0
    %3118 = vmatprep.subr.mxu0 0.0
    %3119 = vmatpush1.msra.mxu0 0.0
    %3120 = vmatprep.subr.mxu0 0.0
    %3121 = vmatpush1.msra.mxu0 0.0
    %3122 = vmatprep.subr.mxu0 0.0
    %3123 = vmatpush1.msra.mxu0 0.0
    %3124 = vmatprep.subr.mxu0 0.0
    %3125 = vmatpush1.msra.mxu0 0.0
    %3126 = vmatprep.subr.mxu0 0.0
    %3127 = vmatpush1.msra.mxu0 0.0
    %3128 = vmatprep.subr.mxu0 0.0
    %3129 = vmatpush1.msra.mxu0 0.0
    %3130 = vmatprep.subr.mxu0 0.0
    %3131 = vmatpush1.msra.mxu0 0.0
    %3132 = vmatprep.subr.mxu0 0.0
    %3133 = vmatpush1.msra.mxu0 0.0
    %3134 = vmatprep.subr.mxu0 0.0
    %3135 = vmatpush1.msra.mxu0 0.0
    %3136 = vmatprep.subr.mxu0 0.0
    %3137 = vmatpush1.msra.mxu0 0.0
    %3138 = vmatprep.subr.mxu0 0.0
    %3139 = vmatpush1.msra.mxu0 0.0
    %3140 = vmatprep.subr.mxu0 0.0
    %3141 = vmatpush1.msra.mxu0 0.0
    %3142 = vmatprep.subr.mxu0 0.0
    %3143 = vmatpush1.msra.mxu0 0.0
    %3144 = vmatprep.subr.mxu0 0.0
    %3145 = vmatpush1.msra.mxu0 0.0
    %3146 = vmatprep.mubr.f32.mxu0 0.0
    %3147 = vmatmul.mubr.f32.gmra.mrb[0].mxu0 %v2867
    %v3148 = vpop.f32.mrb[0].mxu0
    %v3149 = vadd.f32 %v437, %v3148
    %v3150 = vpop.f32.mrb[0].mxu0
    %v3151 = vadd.f32 %v439, %v3150
    %3152 = vdwg.mxu0
    %3153 = vmatprep.subr.mxu0 0.0
    %3154 = vmatpush1.msra.mxu0 %v70
    %3155 = vmatprep.subr.mxu0 0.0
    %3156 = vmatpush1.msra.mxu0 %v79
    %3157 = vmatprep.subr.mxu0 0.0
    %3158 = vmatpush1.msra.mxu0 %v547
    %3159 = vmatprep.subr.mxu0 0.0
    %3160 = vmatpush1.msra.mxu0 0.0
    %3161 = vmatprep.subr.mxu0 0.0
    %3162 = vmatpush1.msra.mxu0 0.0
    %3163 = vmatprep.subr.mxu0 0.0
    %3164 = vmatpush1.msra.mxu0 0.0
    %3165 = vmatprep.subr.mxu0 0.0
    %3166 = vmatpush1.msra.mxu0 0.0
    %3167 = vmatprep.subr.mxu0 0.0
    %3168 = vmatpush1.msra.mxu0 0.0
    %3169 = vmatprep.subr.mxu0 0.0
    %3170 = vmatpush1.msra.mxu0 0.0
    %3171 = vmatprep.subr.mxu0 0.0
    %3172 = vmatpush1.msra.mxu0 0.0
    %3173 = vmatprep.subr.mxu0 0.0
    %3174 = vmatpush1.msra.mxu0 0.0
    %3175 = vmatprep.subr.mxu0 0.0
    %3176 = vmatpush1.msra.mxu0 0.0
    %3177 = vmatprep.subr.mxu0 0.0
    %3178 = vmatpush1.msra.mxu0 0.0
    %3179 = vmatprep.subr.mxu0 0.0
    %3180 = vmatpush1.msra.mxu0 0.0
    %3181 = vmatprep.subr.mxu0 0.0
    %3182 = vmatpush1.msra.mxu0 0.0
    %3183 = vmatprep.subr.mxu0 0.0
    %3184 = vmatpush1.msra.mxu0 0.0
    %3185 = vmatprep.subr.mxu0 0.0
    %3186 = vmatpush1.msra.mxu0 0.0
    %3187 = vmatprep.subr.mxu0 0.0
    %3188 = vmatpush1.msra.mxu0 0.0
    %3189 = vmatprep.subr.mxu0 0.0
    %3190 = vmatpush1.msra.mxu0 0.0
    %3191 = vmatprep.subr.mxu0 0.0
    %3192 = vmatpush1.msra.mxu0 0.0
    %3193 = vmatprep.subr.mxu0 0.0
    %3194 = vmatpush1.msra.mxu0 0.0
    %3195 = vmatprep.subr.mxu0 0.0
    %3196 = vmatpush1.msra.mxu0 0.0
    %3197 = vmatprep.subr.mxu0 0.0
    %3198 = vmatpush1.msra.mxu0 0.0
    %3199 = vmatprep.subr.mxu0 0.0
    %3200 = vmatpush1.msra.mxu0 0.0
    %3201 = vmatprep.subr.mxu0 0.0
    %3202 = vmatpush1.msra.mxu0 0.0
    %3203 = vmatprep.subr.mxu0 0.0
    %3204 = vmatpush1.msra.mxu0 0.0
    %3205 = vmatprep.subr.mxu0 0.0
    %3206 = vmatpush1.msra.mxu0 0.0
    %3207 = vmatprep.subr.mxu0 0.0
    %3208 = vmatpush1.msra.mxu0 0.0
    %3209 = vmatprep.subr.mxu0 0.0
    %3210 = vmatpush1.msra.mxu0 0.0
    %3211 = vmatprep.subr.mxu0 0.0
    %3212 = vmatpush1.msra.mxu0 0.0
    %3213 = vmatprep.subr.mxu0 0.0
    %3214 = vmatpush1.msra.mxu0 0.0
    %3215 = vmatprep.subr.mxu0 0.0
    %3216 = vmatpush1.msra.mxu0 0.0
    %3217 = vmatprep.mubr.f32.mxu0 0.0
    %3218 = vmatmul.mubr.f32.gmra.mrb[0].mxu0 %v2867
    %v3219 = vpop.f32.mrb[0].mxu0
    %v3220 = vadd.f32 %v508, %v3219
    %v3221 = vpop.f32.mrb[0].mxu0
    %3222 = vdwg.mxu0
    %v3223 = vadd.f32 %v2936, %v3009
    %v3224 = vxor.u32 %v3223, 2147483648
    %v3225 = vmul.f32 %v3224, 1.442695
    %v3226 = vpow.pop %v3225
    %v3227 = vadd.f32 %v3226, 1.0
    %v3228 = vrcp.pop %v3227
    %v3229 = vmul.f32 1.0, %v3228
    %v3230 = vadd.f32 %v2938, %v3078
    %v3231 = vxor.u32 %v3230, 2147483648
    %v3232 = vmul.f32 %v3231, 1.442695
    %v3233 = vpow.pop %v3232
    %v3234 = vadd.f32 %v3233, 1.0
    %v3235 = vrcp.pop %v3234
    %v3236 = vmul.f32 1.0, %v3235
    %v3237 = vmul.f32 %v3229, %v3080
    %v3238 = vadd.f32 %v3007, %v3237
    %v3239 = vtanh.pop %v3238
    %v3240 = vsub.f32 1.0, %v3236
    %v3241 = vmul.f32 %v3240, %v3239
    %v3242 = vmul.f32 %v3236, %v2665
    %v3243 = vadd.f32 %v3241, %v3242
    %v3245 = vsel %vm924, %v3243, 0
    %3247 = vmatprep.subr.mxu0 %v90
    %3248 = vmatpush1.msra.mxu0 %v89
    %3249 = vmatprep.subr.mxu0 %v93
    %3250 = vmatpush1.msra.mxu0 %v92
    %3251 = vmatprep.subr.mxu0 %v933
    %3252 = vmatpush1.msra.mxu0 %v930
    %3253 = vmatprep.subr.mxu0 0.0
    %3254 = vmatpush1.msra.mxu0 0.0
    %3255 = vmatprep.subr.mxu0 0.0
    %3256 = vmatpush1.msra.mxu0 0.0
    %3257 = vmatprep.subr.mxu0 0.0
    %3258 = vmatpush1.msra.mxu0 0.0
    %3259 = vmatprep.subr.mxu0 0.0
    %3260 = vmatpush1.msra.mxu0 0.0
    %3261 = vmatprep.subr.mxu0 0.0
    %3262 = vmatpush1.msra.mxu0 0.0
    %3263 = vmatprep.subr.mxu0 0.0
    %3264 = vmatpush1.msra.mxu0 0.0
    %3265 = vmatprep.subr.mxu0 0.0
    %3266 = vmatpush1.msra.mxu0 0.0
    %3267 = vmatprep.subr.mxu0 0.0
    %3268 = vmatpush1.msra.mxu0 0.0
    %3269 = vmatprep.subr.mxu0 0.0
    %3270 = vmatpush1.msra.mxu0 0.0
    %3271 = vmatprep.subr.mxu0 0.0
    %3272 = vmatpush1.msra.mxu0 0.0
    %3273 = vmatprep.subr.mxu0 0.0
    %3274 = vmatpush1.msra.mxu0 0.0
    %3275 = vmatprep.subr.mxu0 0.0
    %3276 = vmatpush1.msra.mxu0 0.0
    %3277 = vmatprep.subr.mxu0 0.0
    %3278 = vmatpush1.msra.mxu0 0.0
    %3279 = vmatprep.subr.mxu0 0.0
    %3280 = vmatpush1.msra.mxu0 0.0
    %3281 = vmatprep.subr.mxu0 0.0
    %3282 = vmatpush1.msra.mxu0 0.0
    %3283 = vmatprep.subr.mxu0 0.0
    %3284 = vmatpush1.msra.mxu0 0.0
    %3285 = vmatprep.subr.mxu0 0.0
    %3286 = vmatpush1.msra.mxu0 0.0
    %3287 = vmatprep.subr.mxu0 0.0
    %3288 = vmatpush1.msra.mxu0 0.0
    %3289 = vmatprep.subr.mxu0 0.0
    %3290 = vmatpush1.msra.mxu0 0.0
    %3291 = vmatprep.subr.mxu0 0.0
    %3292 = vmatpush1.msra.mxu0 0.0
    %3293 = vmatprep.subr.mxu0 0.0
    %3294 = vmatpush1.msra.mxu0 0.0
    %3295 = vmatprep.subr.mxu0 0.0
    %3296 = vmatpush1.msra.mxu0 0.0
    %3297 = vmatprep.subr.mxu0 0.0
    %3298 = vmatpush1.msra.mxu0 0.0
    %3299 = vmatprep.subr.mxu0 0.0
    %3300 = vmatpush1.msra.mxu0 0.0
    %3301 = vmatprep.subr.mxu0 0.0
    %3302 = vmatpush1.msra.mxu0 0.0
    %3303 = vmatprep.subr.mxu0 0.0
    %3304 = vmatpush1.msra.mxu0 0.0
    %3305 = vmatprep.subr.mxu0 0.0
    %3306 = vmatpush1.msra.mxu0 0.0
    %3307 = vmatprep.subr.mxu0 0.0
    %3308 = vmatpush1.msra.mxu0 0.0
    %3309 = vmatprep.subr.mxu0 0.0
    %3310 = vmatpush1.msra.mxu0 0.0
    %3311 = vmatprep.mubr.f32.mxu0 0.0
    %3312 = vmatmul.mubr.f32.gmra.mrb[0].mxu0 %v3245
    %v3313 = vpop.f32.mrb[0].mxu0
    %v3314 = vadd.f32 0.0, %v3313
    %v3315 = vpop.f32.mrb[0].mxu0
    %v3316 = vadd.f32 0.0, %v3315
    %3317 = vdwg.mxu0
    %3318 = vmatprep.subr.mxu0 0.0
    %3319 = vmatpush1.msra.mxu0 %v91
    %3320 = vmatprep.subr.mxu0 0.0
    %3321 = vmatpush1.msra.mxu0 %v94
    %3322 = vmatprep.subr.mxu0 0.0
    %3323 = vmatpush1.msra.mxu0 %v936
    %3324 = vmatprep.subr.mxu0 0.0
    %3325 = vmatpush1.msra.mxu0 0.0
    %3326 = vmatprep.subr.mxu0 0.0
    %3327 = vmatpush1.msra.mxu0 0.0
    %3328 = vmatprep.subr.mxu0 0.0
    %3329 = vmatpush1.msra.mxu0 0.0
    %3330 = vmatprep.subr.mxu0 0.0
    %3331 = vmatpush1.msra.mxu0 0.0
    %3332 = vmatprep.subr.mxu0 0.0
    %3333 = vmatpush1.msra.mxu0 0.0
    %3334 = vmatprep.subr.mxu0 0.0
    %3335 = vmatpush1.msra.mxu0 0.0
    %3336 = vmatprep.subr.mxu0 0.0
    %3337 = vmatpush1.msra.mxu0 0.0
    %3338 = vmatprep.subr.mxu0 0.0
    %3339 = vmatpush1.msra.mxu0 0.0
    %3340 = vmatprep.subr.mxu0 0.0
    %3341 = vmatpush1.msra.mxu0 0.0
    %3342 = vmatprep.subr.mxu0 0.0
    %3343 = vmatpush1.msra.mxu0 0.0
    %3344 = vmatprep.subr.mxu0 0.0
    %3345 = vmatpush1.msra.mxu0 0.0
    %3346 = vmatprep.subr.mxu0 0.0
    %3347 = vmatpush1.msra.mxu0 0.0
    %3348 = vmatprep.subr.mxu0 0.0
    %3349 = vmatpush1.msra.mxu0 0.0
    %3350 = vmatprep.subr.mxu0 0.0
    %3351 = vmatpush1.msra.mxu0 0.0
    %3352 = vmatprep.subr.mxu0 0.0
    %3353 = vmatpush1.msra.mxu0 0.0
    %3354 = vmatprep.subr.mxu0 0.0
    %3355 = vmatpush1.msra.mxu0 0.0
    %3356 = vmatprep.subr.mxu0 0.0
    %3357 = vmatpush1.msra.mxu0 0.0
    %3358 = vmatprep.subr.mxu0 0.0
    %3359 = vmatpush1.msra.mxu0 0.0
    %3360 = vmatprep.subr.mxu0 0.0
    %3361 = vmatpush1.msra.mxu0 0.0
    %3362 = vmatprep.subr.mxu0 0.0
    %3363 = vmatpush1.msra.mxu0 0.0
    %3364 = vmatprep.subr.mxu0 0.0
    %3365 = vmatpush1.msra.mxu0 0.0
    %3366 = vmatprep.subr.mxu0 0.0
    %3367 = vmatpush1.msra.mxu0 0.0
    %3368 = vmatprep.subr.mxu0 0.0
    %3369 = vmatpush1.msra.mxu0 0.0
    %3370 = vmatprep.subr.mxu0 0.0
    %3371 = vmatpush1.msra.mxu0 0.0
    %3372 = vmatprep.subr.mxu0 0.0
    %3373 = vmatpush1.msra.mxu0 0.0
    %3374 = vmatprep.subr.mxu0 0.0
    %3375 = vmatpush1.msra.mxu0 0.0
    %3376 = vmatprep.subr.mxu0 0.0
    %3377 = vmatpush1.msra.mxu0 0.0
    %3378 = vmatprep.subr.mxu0 0.0
    %3379 = vmatpush1.msra.mxu0 0.0
    %3380 = vmatprep.subr.mxu0 0.0
    %3381 = vmatpush1.msra.mxu0 0.0
    %3382 = vmatprep.mubr.f32.mxu0 0.0
    %3383 = vmatmul.mubr.f32.gmra.mrb[0].mxu0 %v3245
    %v3384 = vpop.f32.mrb[0].mxu0
    %v3385 = vadd.f32 0.0, %v3384
    %v3386 = vpop.f32.mrb[0].mxu0
    %3387 = vdwg.mxu0
    %v3388 = vadd.f32 %v3149, %v3314
    %v3389 = vadd.f32 %v3151, %v3316
    %v3390 = vadd.f32 %v3220, %v3385
    %v3391 = vsel %vm515, %v3388, -inf
    %3392 = vmax.xlane.f32.xlu0 %v3391
    %v3393 = vpop.xlane.xlu0 %3392
    %v3394 = vsub.f32 %v3388, %v3393
    %v3395 = vmul.f32 %v3394, 1.442695
    %v3396 = vpow.pop %v3395
    %v3397 = vsel %vm515, %v3396, 0.0
    %3398 = vadd.xlane.f32.xlu0 %v3397
    %v3399 = vpop.xlane.xlu0 %3398
    %v3400 = vrcp.pop %v3399
    %v3401 = vmul.f32 %v3396, %v3400
    %s3402 = scalar_lea.vmem %s7, 32
    %3403 = vst.msk [vmem:[%s3402] sm:$0xff] %vm515, %v3401
    %s3404 = scalar_lea.vmem %s8, 32
    %3405 = vst.msk [vmem:[%s3404] sm:$0xff] %vm1094, %v3389
    %v3406 = vmul.f32 %v3390, 1.442695
    %v3407 = vpow.pop %v3406
    %v3408 = vadd.f32 %v3407, 1e-15
    %s3409 = scalar_lea.vmem %s9, 32
    %3410 = vst.msk [vmem:[%s3409] sm:$0xff] %vm1094, %v3408
    %3412 = vrot.lane.b32.xlu0 %v3388, 1
    %v3413 = vpop.permute.xlu0 %3412
    %vm3415 = vcmp.gt.f32.partialorder %v3388, %v3413
    %v3416 = vsel %vm3415, 1, 0
    %vm3417 = vcmp.eq.s32.totalorder %v3416, 1
    %v3418 = vsel %vm3417, 1, 0
    %3419 = vset.pattern.permute.xlu0 1
    %3420 = vperm.xlu0 %3419, %v3418
    %v3421 = vpop.permute.xlu0 %3420
    %vm3422 = vcmp.eq.s32.totalorder %v3421, 1
    %3424 = vrot.lane.b32.xlu0 %v3389, 2
    %v3425 = vpop.permute.xlu0 %3424
    %v3427 = vsel %vm3422, %v3389, %v3425
    %s3428 = sld [smem:[#allocation3 + $0x4]]
    %p3429 = scmp.gt.s32.totalorder %s3428, 0
    %s3430 = scalar_lea.vmem %s3, 32
    %v3431 = vld [vmem:[%s3430] sm:$0xff]
    %s3432 = scalar_select %p3429, 1, 0
    %v3433 = vstv %s3432
    %vm3434 = vcmp.eq.s32.totalorder %v3433, 1
    %3436 = vrot.lane.b32.xlu0 %v3427, 126
    %v3437 = vpop.permute.xlu0 %3436
    %v3439 = vsel %vm3434, %v3431, %v3437
    %3440 = vrot.lane.b32.xlu0 %v3243, 2
    %v3441 = vpop.permute.xlu0 %3440
    %v3443 = vsel %vm515, %v3439, %v3441
    %v3445 = vsel %vm517, %v3443, 0
    %3447 = vmatprep.subr.mxu0 %v63
    %3448 = vmatpush1.msra.mxu0 %v62
    %3449 = vmatprep.subr.mxu0 %v72
    %3450 = vmatpush1.msra.mxu0 %v71
    %3451 = vmatprep.subr.mxu0 %v526
    %3452 = vmatpush1.msra.mxu0 %v523
    %3453 = vmatprep.subr.mxu0 0.0
    %3454 = vmatpush1.msra.mxu0 0.0
    %3455 = vmatprep.subr.mxu0 0.0
    %3456 = vmatpush1.msra.mxu0 0.0
    %3457 = vmatprep.subr.mxu0 0.0
    %3458 = vmatpush1.msra.mxu0 0.0
    %3459 = vmatprep.subr.mxu0 0.0
    %3460 = vmatpush1.msra.mxu0 0.0
    %3461 = vmatprep.subr.mxu0 0.0
    %3462 = vmatpush1.msra.mxu0 0.0
    %3463 = vmatprep.subr.mxu0 0.0
    %3464 = vmatpush1.msra.mxu0 0.0
    %3465 = vmatprep.subr.mxu0 0.0
    %3466 = vmatpush1.msra.mxu0 0.0
    %3467 = vmatprep.subr.mxu0 0.0
    %3468 = vmatpush1.msra.mxu0 0.0
    %3469 = vmatprep.subr.mxu0 0.0
    %3470 = vmatpush1.msra.mxu0 0.0
    %3471 = vmatprep.subr.mxu0 0.0
    %3472 = vmatpush1.msra.mxu0 0.0
    %3473 = vmatprep.subr.mxu0 0.0
    %3474 = vmatpush1.msra.mxu0 0.0
    %3475 = vmatprep.subr.mxu0 0.0
    %3476 = vmatpush1.msra.mxu0 0.0
    %3477 = vmatprep.subr.mxu0 0.0
    %3478 = vmatpush1.msra.mxu0 0.0
    %3479 = vmatprep.subr.mxu0 0.0
    %3480 = vmatpush1.msra.mxu0 0.0
    %3481 = vmatprep.subr.mxu0 0.0
    %3482 = vmatpush1.msra.mxu0 0.0
    %3483 = vmatprep.subr.mxu0 0.0
    %3484 = vmatpush1.msra.mxu0 0.0
    %3485 = vmatprep.subr.mxu0 0.0
    %3486 = vmatpush1.msra.mxu0 0.0
    %3487 = vmatprep.subr.mxu0 0.0
    %3488 = vmatpush1.msra.mxu0 0.0
    %3489 = vmatprep.subr.mxu0 0.0
    %3490 = vmatpush1.msra.mxu0 0.0
    %3491 = vmatprep.subr.mxu0 0.0
    %3492 = vmatpush1.msra.mxu0 0.0
    %3493 = vmatprep.subr.mxu0 0.0
    %3494 = vmatpush1.msra.mxu0 0.0
    %3495 = vmatprep.subr.mxu0 0.0
    %3496 = vmatpush1.msra.mxu0 0.0
    %3497 = vmatprep.subr.mxu0 0.0
    %3498 = vmatpush1.msra.mxu0 0.0
    %3499 = vmatprep.subr.mxu0 0.0
    %3500 = vmatpush1.msra.mxu0 0.0
    %3501 = vmatprep.subr.mxu0 0.0
    %3502 = vmatpush1.msra.mxu0 0.0
    %3503 = vmatprep.subr.mxu0 0.0
    %3504 = vmatpush1.msra.mxu0 0.0
    %3505 = vmatprep.subr.mxu0 0.0
    %3506 = vmatpush1.msra.mxu0 0.0
    %3507 = vmatprep.subr.mxu0 0.0
    %3508 = vmatpush1.msra.mxu0 0.0
    %3509 = vmatprep.subr.mxu0 0.0
    %3510 = vmatpush1.msra.mxu0 0.0
    %3511 = vmatprep.mubr.f32.mxu0 0.0
    %3512 = vmatmul.mubr.f32.gmra.mrb[0].mxu0 %v3445
    %v3513 = vpop.f32.mrb[0].mxu0
    %v3514 = vadd.f32 %v224, %v3513
    %v3515 = vpop.f32.mrb[0].mxu0
    %v3516 = vadd.f32 %v226, %v3515
    %3517 = vdwg.mxu0
    %3518 = vmatprep.subr.mxu0 %v65
    %3519 = vmatpush1.msra.mxu0 %v64
    %3520 = vmatprep.subr.mxu0 %v74
    %3521 = vmatpush1.msra.mxu0 %v73
    %3522 = vmatprep.subr.mxu0 %v532
    %3523 = vmatpush1.msra.mxu0 %v529
    %3524 = vmatprep.subr.mxu0 0.0
    %3525 = vmatpush1.msra.mxu0 0.0
    %3526 = vmatprep.subr.mxu0 0.0
    %3527 = vmatpush1.msra.mxu0 0.0
    %3528 = vmatprep.subr.mxu0 0.0
    %3529 = vmatpush1.msra.mxu0 0.0
    %3530 = vmatprep.subr.mxu0 0.0
    %3531 = vmatpush1.msra.mxu0 0.0
    %3532 = vmatprep.subr.mxu0 0.0
    %3533 = vmatpush1.msra.mxu0 0.0
    %3534 = vmatprep.subr.mxu0 0.0
    %3535 = vmatpush1.msra.mxu0 0.0
    %3536 = vmatprep.subr.mxu0 0.0
    %3537 = vmatpush1.msra.mxu0 0.0
    %3538 = vmatprep.subr.mxu0 0.0
    %3539 = vmatpush1.msra.mxu0 0.0
    %3540 = vmatprep.subr.mxu0 0.0
    %3541 = vmatpush1.msra.mxu0 0.0
    %3542 = vmatprep.subr.mxu0 0.0
    %3543 = vmatpush1.msra.mxu0 0.0
    %3544 = vmatprep.subr.mxu0 0.0
    %3545 = vmatpush1.msra.mxu0 0.0
    %3546 = vmatprep.subr.mxu0 0.0
    %3547 = vmatpush1.msra.mxu0 0.0
    %3548 = vmatprep.subr.mxu0 0.0
    %3549 = vmatpush1.msra.mxu0 0.0
    %3550 = vmatprep.subr.mxu0 0.0
    %3551 = vmatpush1.msra.mxu0 0.0
    %3552 = vmatprep.subr.mxu0 0.0
    %3553 = vmatpush1.msra.mxu0 0.0
    %3554 = vmatprep.subr.mxu0 0.0
    %3555 = vmatpush1.msra.mxu0 0.0
    %3556 = vmatprep.subr.mxu0 0.0
    %3557 = vmatpush1.msra.mxu0 0.0
    %3558 = vmatprep.subr.mxu0 0.0
    %3559 = vmatpush1.msra.mxu0 0.0
    %3560 = vmatprep.subr.mxu0 0.0
    %3561 = vmatpush1.msra.mxu0 0.0
    %3562 = vmatprep.subr.mxu0 0.0
    %3563 = vmatpush1.msra.mxu0 0.0
    %3564 = vmatprep.subr.mxu0 0.0
    %3565 = vmatpush1.msra.mxu0 0.0
    %3566 = vmatprep.subr.mxu0 0.0
    %3567 = vmatpush1.msra.mxu0 0.0
    %3568 = vmatprep.subr.mxu0 0.0
    %3569 = vmatpush1.msra.mxu0 0.0
    %3570 = vmatprep.subr.mxu0 0.0
    %3571 = vmatpush1.msra.mxu0 0.0
    %3572 = vmatprep.subr.mxu0 0.0
    %3573 = vmatpush1.msra.mxu0 0.0
    %3574 = vmatprep.subr.mxu0 0.0
    %3575 = vmatpush1.msra.mxu0 0.0
    %3576 = vmatprep.subr.mxu0 0.0
    %3577 = vmatpush1.msra.mxu0 0.0
    %3578 = vmatprep.subr.mxu0 0.0
    %3579 = vmatpush1.msra.mxu0 0.0
    %3580 = vmatprep.subr.mxu0 0.0
    %3581 = vmatpush1.msra.mxu0 0.0
    %3582 = vmatprep.mubr.f32.mxu0 0.0
    %3583 = vmatmul.mubr.f32.gmra.mrb[0].mxu0 %v3445
    %v3584 = vpop.f32.mrb[0].mxu0
    %v3585 = vadd.f32 %v295, %v3584
    %v3586 = vpop.f32.mrb[0].mxu0
    %v3587 = vadd.f32 %v297, %v3586
    %3588 = vdwg.mxu0
    %3589 = vmatprep.subr.mxu0 %v67
    %3590 = vmatpush1.msra.mxu0 %v66
    %3591 = vmatprep.subr.mxu0 %v76
    %3592 = vmatpush1.msra.mxu0 %v75
    %3593 = vmatprep.subr.mxu0 %v538
    %3594 = vmatpush1.msra.mxu0 %v535
    %3595 = vmatprep.subr.mxu0 0.0
    %3596 = vmatpush1.msra.mxu0 0.0
    %3597 = vmatprep.subr.mxu0 0.0
    %3598 = vmatpush1.msra.mxu0 0.0
    %3599 = vmatprep.subr.mxu0 0.0
    %3600 = vmatpush1.msra.mxu0 0.0
    %3601 = vmatprep.subr.mxu0 0.0
    %3602 = vmatpush1.msra.mxu0 0.0
    %3603 = vmatprep.subr.mxu0 0.0
    %3604 = vmatpush1.msra.mxu0 0.0
    %3605 = vmatprep.subr.mxu0 0.0
    %3606 = vmatpush1.msra.mxu0 0.0
    %3607 = vmatprep.subr.mxu0 0.0
    %3608 = vmatpush1.msra.mxu0 0.0
    %3609 = vmatprep.subr.mxu0 0.0
    %3610 = vmatpush1.msra.mxu0 0.0
    %3611 = vmatprep.subr.mxu0 0.0
    %3612 = vmatpush1.msra.mxu0 0.0
    %3613 = vmatprep.subr.mxu0 0.0
    %3614 = vmatpush1.msra.mxu0 0.0
    %3615 = vmatprep.subr.mxu0 0.0
    %3616 = vmatpush1.msra.mxu0 0.0
    %3617 = vmatprep.subr.mxu0 0.0
    %3618 = vmatpush1.msra.mxu0 0.0
    %3619 = vmatprep.subr.mxu0 0.0
    %3620 = vmatpush1.msra.mxu0 0.0
    %3621 = vmatprep.subr.mxu0 0.0
    %3622 = vmatpush1.msra.mxu0 0.0
    %3623 = vmatprep.subr.mxu0 0.0
    %3624 = vmatpush1.msra.mxu0 0.0
    %3625 = vmatprep.subr.mxu0 0.0
    %3626 = vmatpush1.msra.mxu0 0.0
    %3627 = vmatprep.subr.mxu0 0.0
    %3628 = vmatpush1.msra.mxu0 0.0
    %3629 = vmatprep.subr.mxu0 0.0
    %3630 = vmatpush1.msra.mxu0 0.0
    %3631 = vmatprep.subr.mxu0 0.0
    %3632 = vmatpush1.msra.mxu0 0.0
    %3633 = vmatprep.subr.mxu0 0.0
    %3634 = vmatpush1.msra.mxu0 0.0
    %3635 = vmatprep.subr.mxu0 0.0
    %3636 = vmatpush1.msra.mxu0 0.0
    %3637 = vmatprep.subr.mxu0 0.0
    %3638 = vmatpush1.msra.mxu0 0.0
    %3639 = vmatprep.subr.mxu0 0.0
    %3640 = vmatpush1.msra.mxu0 0.0
    %3641 = vmatprep.subr.mxu0 0.0
    %3642 = vmatpush1.msra.mxu0 0.0
    %3643 = vmatprep.subr.mxu0 0.0
    %3644 = vmatpush1.msra.mxu0 0.0
    %3645 = vmatprep.subr.mxu0 0.0
    %3646 = vmatpush1.msra.mxu0 0.0
    %3647 = vmatprep.subr.mxu0 0.0
    %3648 = vmatpush1.msra.mxu0 0.0
    %3649 = vmatprep.subr.mxu0 0.0
    %3650 = vmatpush1.msra.mxu0 0.0
    %3651 = vmatprep.subr.mxu0 0.0
    %3652 = vmatpush1.msra.mxu0 0.0
    %3653 = vmatprep.mubr.f32.mxu0 0.0
    %3654 = vmatmul.mubr.f32.gmra.mrb[0].mxu0 %v3445
    %v3655 = vpop.f32.mrb[0].mxu0
    %v3656 = vadd.f32 %v366, %v3655
    %v3657 = vpop.f32.mrb[0].mxu0
    %v3658 = vadd.f32 %v368, %v3657
    %3659 = vdwg.mxu0
    %3660 = vmatprep.subr.mxu0 %v69
    %3661 = vmatpush1.msra.mxu0 %v68
    %3662 = vmatprep.subr.mxu0 %v78
    %3663 = vmatpush1.msra.mxu0 %v77
    %3664 = vmatprep.subr.mxu0 %v544
    %3665 = vmatpush1.msra.mxu0 %v541
    %3666 = vmatprep.subr.mxu0 0.0
    %3667 = vmatpush1.msra.mxu0 0.0
    %3668 = vmatprep.subr.mxu0 0.0
    %3669 = vmatpush1.msra.mxu0 0.0
    %3670 = vmatprep.subr.mxu0 0.0
    %3671 = vmatpush1.msra.mxu0 0.0
    %3672 = vmatprep.subr.mxu0 0.0
    %3673 = vmatpush1.msra.mxu0 0.0
    %3674 = vmatprep.subr.mxu0 0.0
    %3675 = vmatpush1.msra.mxu0 0.0
    %3676 = vmatprep.subr.mxu0 0.0
    %3677 = vmatpush1.msra.mxu0 0.0
    %3678 = vmatprep.subr.mxu0 0.0
    %3679 = vmatpush1.msra.mxu0 0.0
    %3680 = vmatprep.subr.mxu0 0.0
    %3681 = vmatpush1.msra.mxu0 0.0
    %3682 = vmatprep.subr.mxu0 0.0
    %3683 = vmatpush1.msra.mxu0 0.0
    %3684 = vmatprep.subr.mxu0 0.0
    %3685 = vmatpush1.msra.mxu0 0.0
    %3686 = vmatprep.subr.mxu0 0.0
    %3687 = vmatpush1.msra.mxu0 0.0
    %3688 = vmatprep.subr.mxu0 0.0
    %3689 = vmatpush1.msra.mxu0 0.0
    %3690 = vmatprep.subr.mxu0 0.0
    %3691 = vmatpush1.msra.mxu0 0.0
    %3692 = vmatprep.subr.mxu0 0.0
    %3693 = vmatpush1.msra.mxu0 0.0
    %3694 = vmatprep.subr.mxu0 0.0
    %3695 = vmatpush1.msra.mxu0 0.0
    %3696 = vmatprep.subr.mxu0 0.0
    %3697 = vmatpush1.msra.mxu0 0.0
    %3698 = vmatprep.subr.mxu0 0.0
    %3699 = vmatpush1.msra.mxu0 0.0
    %3700 = vmatprep.subr.mxu0 0.0
    %3701 = vmatpush1.msra.mxu0 0.0
    %3702 = vmatprep.subr.mxu0 0.0
    %3703 = vmatpush1.msra.mxu0 0.0
    %3704 = vmatprep.subr.mxu0 0.0
    %3705 = vmatpush1.msra.mxu0 0.0
    %3706 = vmatprep.subr.mxu0 0.0
    %3707 = vmatpush1.msra.mxu0 0.0
    %3708 = vmatprep.subr.mxu0 0.0
    %3709 = vmatpush1.msra.mxu0 0.0
    %3710 = vmatprep.subr.mxu0 0.0
    %3711 = vmatpush1.msra.mxu0 0.0
    %3712 = vmatprep.subr.mxu0 0.0
    %3713 = vmatpush1.msra.mxu0 0.0
    %3714 = vmatprep.subr.mxu0 0.0
    %3715 = vmatpush1.msra.mxu0 0.0
    %3716 = vmatprep.subr.mxu0 0.0
    %3717 = vmatpush1.msra.mxu0 0.0
    %3718 = vmatprep.subr.mxu0 0.0
    %3719 = vmatpush1.msra.mxu0 0.0
    %3720 = vmatprep.subr.mxu0 0.0
    %3721 = vmatpush1.msra.mxu0 0.0
    %3722 = vmatprep.subr.mxu0 0.0
    %3723 = vmatpush1.msra.mxu0 0.0
    %3724 = vmatprep.mubr.f32.mxu0 0.0
    %3725 = vmatmul.mubr.f32.gmra.mrb[0].mxu0 %v3445
    %v3726 = vpop.f32.mrb[0].mxu0
    %v3727 = vadd.f32 %v437, %v3726
    %v3728 = vpop.f32.mrb[0].mxu0
    %v3729 = vadd.f32 %v439, %v3728
    %3730 = vdwg.mxu0
    %3731 = vmatprep.subr.mxu0 0.0
    %3732 = vmatpush1.msra.mxu0 %v70
    %3733 = vmatprep.subr.mxu0 0.0
    %3734 = vmatpush1.msra.mxu0 %v79
    %3735 = vmatprep.subr.mxu0 0.0
    %3736 = vmatpush1.msra.mxu0 %v547
    %3737 = vmatprep.subr.mxu0 0.0
    %3738 = vmatpush1.msra.mxu0 0.0
    %3739 = vmatprep.subr.mxu0 0.0
    %3740 = vmatpush1.msra.mxu0 0.0
    %3741 = vmatprep.subr.mxu0 0.0
    %3742 = vmatpush1.msra.mxu0 0.0
    %3743 = vmatprep.subr.mxu0 0.0
    %3744 = vmatpush1.msra.mxu0 0.0
    %3745 = vmatprep.subr.mxu0 0.0
    %3746 = vmatpush1.msra.mxu0 0.0
    %3747 = vmatprep.subr.mxu0 0.0
    %3748 = vmatpush1.msra.mxu0 0.0
    %3749 = vmatprep.subr.mxu0 0.0
    %3750 = vmatpush1.msra.mxu0 0.0
    %3751 = vmatprep.subr.mxu0 0.0
    %3752 = vmatpush1.msra.mxu0 0.0
    %3753 = vmatprep.subr.mxu0 0.0
    %3754 = vmatpush1.msra.mxu0 0.0
    %3755 = vmatprep.subr.mxu0 0.0
    %3756 = vmatpush1.msra.mxu0 0.0
    %3757 = vmatprep.subr.mxu0 0.0
    %3758 = vmatpush1.msra.mxu0 0.0
    %3759 = vmatprep.subr.mxu0 0.0
    %3760 = vmatpush1.msra.mxu0 0.0
    %3761 = vmatprep.subr.mxu0 0.0
    %3762 = vmatpush1.msra.mxu0 0.0
    %3763 = vmatprep.subr.mxu0 0.0
    %3764 = vmatpush1.msra.mxu0 0.0
    %3765 = vmatprep.subr.mxu0 0.0
    %3766 = vmatpush1.msra.mxu0 0.0
    %3767 = vmatprep.subr.mxu0 0.0
    %3768 = vmatpush1.msra.mxu0 0.0
    %3769 = vmatprep.subr.mxu0 0.0
    %3770 = vmatpush1.msra.mxu0 0.0
    %3771 = vmatprep.subr.mxu0 0.0
    %3772 = vmatpush1.msra.mxu0 0.0
    %3773 = vmatprep.subr.mxu0 0.0
    %3774 = vmatpush1.msra.mxu0 0.0
    %3775 = vmatprep.subr.mxu0 0.0
    %3776 = vmatpush1.msra.mxu0 0.0
    %3777 = vmatprep.subr.mxu0 0.0
    %3778 = vmatpush1.msra.mxu0 0.0
    %3779 = vmatprep.subr.mxu0 0.0
    %3780 = vmatpush1.msra.mxu0 0.0
    %3781 = vmatprep.subr.mxu0 0.0
    %3782 = vmatpush1.msra.mxu0 0.0
    %3783 = vmatprep.subr.mxu0 0.0
    %3784 = vmatpush1.msra.mxu0 0.0
    %3785 = vmatprep.subr.mxu0 0.0
    %3786 = vmatpush1.msra.mxu0 0.0
    %3787 = vmatprep.subr.mxu0 0.0
    %3788 = vmatpush1.msra.mxu0 0.0
    %3789 = vmatprep.subr.mxu0 0.0
    %3790 = vmatpush1.msra.mxu0 0.0
    %3791 = vmatprep.subr.mxu0 0.0
    %3792 = vmatpush1.msra.mxu0 0.0
    %3793 = vmatprep.subr.mxu0 0.0
    %3794 = vmatpush1.msra.mxu0 0.0
    %3795 = vmatprep.mubr.f32.mxu0 0.0
    %3796 = vmatmul.mubr.f32.gmra.mrb[0].mxu0 %v3445
    %v3797 = vpop.f32.mrb[0].mxu0
    %v3798 = vadd.f32 %v508, %v3797
    %v3799 = vpop.f32.mrb[0].mxu0
    %3800 = vdwg.mxu0
    %v3801 = vadd.f32 %v3514, %v3587
    %v3802 = vxor.u32 %v3801, 2147483648
    %v3803 = vmul.f32 %v3802, 1.442695
    %v3804 = vpow.pop %v3803
    %v3805 = vadd.f32 %v3804, 1.0
    %v3806 = vrcp.pop %v3805
    %v3807 = vmul.f32 1.0, %v3806
    %v3808 = vadd.f32 %v3516, %v3656
    %v3809 = vxor.u32 %v3808, 2147483648
    %v3810 = vmul.f32 %v3809, 1.442695
    %v3811 = vpow.pop %v3810
    %v3812 = vadd.f32 %v3811, 1.0
    %v3813 = vrcp.pop %v3812
    %v3814 = vmul.f32 1.0, %v3813
    %v3815 = vmul.f32 %v3807, %v3658
    %v3816 = vadd.f32 %v3585, %v3815
    %v3817 = vtanh.pop %v3816
    %v3818 = vsub.f32 1.0, %v3814
    %v3819 = vmul.f32 %v3818, %v3817
    %v3820 = vmul.f32 %v3814, %v3243
    %v3821 = vadd.f32 %v3819, %v3820
    %v3823 = vsel %vm924, %v3821, 0
    %3825 = vmatprep.subr.mxu0 %v90
    %3826 = vmatpush1.msra.mxu0 %v89
    %3827 = vmatprep.subr.mxu0 %v93
    %3828 = vmatpush1.msra.mxu0 %v92
    %3829 = vmatprep.subr.mxu0 %v933
    %3830 = vmatpush1.msra.mxu0 %v930
    %3831 = vmatprep.subr.mxu0 0.0
    %3832 = vmatpush1.msra.mxu0 0.0
    %3833 = vmatprep.subr.mxu0 0.0
    %3834 = vmatpush1.msra.mxu0 0.0
    %3835 = vmatprep.subr.mxu0 0.0
    %3836 = vmatpush1.msra.mxu0 0.0
    %3837 = vmatprep.subr.mxu0 0.0
    %3838 = vmatpush1.msra.mxu0 0.0
    %3839 = vmatprep.subr.mxu0 0.0
    %3840 = vmatpush1.msra.mxu0 0.0
    %3841 = vmatprep.subr.mxu0 0.0
    %3842 = vmatpush1.msra.mxu0 0.0
    %3843 = vmatprep.subr.mxu0 0.0
    %3844 = vmatpush1.msra.mxu0 0.0
    %3845 = vmatprep.subr.mxu0 0.0
    %3846 = vmatpush1.msra.mxu0 0.0
    %3847 = vmatprep.subr.mxu0 0.0
    %3848 = vmatpush1.msra.mxu0 0.0
    %3849 = vmatprep.subr.mxu0 0.0
    %3850 = vmatpush1.msra.mxu0 0.0
    %3851 = vmatprep.subr.mxu0 0.0
    %3852 = vmatpush1.msra.mxu0 0.0
    %3853 = vmatprep.subr.mxu0 0.0
    %3854 = vmatpush1.msra.mxu0 0.0
    %3855 = vmatprep.subr.mxu0 0.0
    %3856 = vmatpush1.msra.mxu0 0.0
    %3857 = vmatprep.subr.mxu0 0.0
    %3858 = vmatpush1.msra.mxu0 0.0
    %3859 = vmatprep.subr.mxu0 0.0
    %3860 = vmatpush1.msra.mxu0 0.0
    %3861 = vmatprep.subr.mxu0 0.0
    %3862 = vmatpush1.msra.mxu0 0.0
    %3863 = vmatprep.subr.mxu0 0.0
    %3864 = vmatpush1.msra.mxu0 0.0
    %3865 = vmatprep.subr.mxu0 0.0
    %3866 = vmatpush1.msra.mxu0 0.0
    %3867 = vmatprep.subr.mxu0 0.0
    %3868 = vmatpush1.msra.mxu0 0.0
    %3869 = vmatprep.subr.mxu0 0.0
    %3870 = vmatpush1.msra.mxu0 0.0
    %3871 = vmatprep.subr.mxu0 0.0
    %3872 = vmatpush1.msra.mxu0 0.0
    %3873 = vmatprep.subr.mxu0 0.0
    %3874 = vmatpush1.msra.mxu0 0.0
    %3875 = vmatprep.subr.mxu0 0.0
    %3876 = vmatpush1.msra.mxu0 0.0
    %3877 = vmatprep.subr.mxu0 0.0
    %3878 = vmatpush1.msra.mxu0 0.0
    %3879 = vmatprep.subr.mxu0 0.0
    %3880 = vmatpush1.msra.mxu0 0.0
    %3881 = vmatprep.subr.mxu0 0.0
    %3882 = vmatpush1.msra.mxu0 0.0
    %3883 = vmatprep.subr.mxu0 0.0
    %3884 = vmatpush1.msra.mxu0 0.0
    %3885 = vmatprep.subr.mxu0 0.0
    %3886 = vmatpush1.msra.mxu0 0.0
    %3887 = vmatprep.subr.mxu0 0.0
    %3888 = vmatpush1.msra.mxu0 0.0
    %3889 = vmatprep.mubr.f32.mxu0 0.0
    %3890 = vmatmul.mubr.f32.gmra.mrb[0].mxu0 %v3823
    %v3891 = vpop.f32.mrb[0].mxu0
    %v3892 = vadd.f32 0.0, %v3891
    %v3893 = vpop.f32.mrb[0].mxu0
    %v3894 = vadd.f32 0.0, %v3893
    %3895 = vdwg.mxu0
    %3896 = vmatprep.subr.mxu0 0.0
    %3897 = vmatpush1.msra.mxu0 %v91
    %3898 = vmatprep.subr.mxu0 0.0
    %3899 = vmatpush1.msra.mxu0 %v94
    %3900 = vmatprep.subr.mxu0 0.0
    %3901 = vmatpush1.msra.mxu0 %v936
    %3902 = vmatprep.subr.mxu0 0.0
    %3903 = vmatpush1.msra.mxu0 0.0
    %3904 = vmatprep.subr.mxu0 0.0
    %3905 = vmatpush1.msra.mxu0 0.0
    %3906 = vmatprep.subr.mxu0 0.0
    %3907 = vmatpush1.msra.mxu0 0.0
    %3908 = vmatprep.subr.mxu0 0.0
    %3909 = vmatpush1.msra.mxu0 0.0
    %3910 = vmatprep.subr.mxu0 0.0
    %3911 = vmatpush1.msra.mxu0 0.0
    %3912 = vmatprep.subr.mxu0 0.0
    %3913 = vmatpush1.msra.mxu0 0.0
    %3914 = vmatprep.subr.mxu0 0.0
    %3915 = vmatpush1.msra.mxu0 0.0
    %3916 = vmatprep.subr.mxu0 0.0
    %3917 = vmatpush1.msra.mxu0 0.0
    %3918 = vmatprep.subr.mxu0 0.0
    %3919 = vmatpush1.msra.mxu0 0.0
    %3920 = vmatprep.subr.mxu0 0.0
    %3921 = vmatpush1.msra.mxu0 0.0
    %3922 = vmatprep.subr.mxu0 0.0
    %3923 = vmatpush1.msra.mxu0 0.0
    %3924 = vmatprep.subr.mxu0 0.0
    %3925 = vmatpush1.msra.mxu0 0.0
    %3926 = vmatprep.subr.mxu0 0.0
    %3927 = vmatpush1.msra.mxu0 0.0
    %3928 = vmatprep.subr.mxu0 0.0
    %3929 = vmatpush1.msra.mxu0 0.0
    %3930 = vmatprep.subr.mxu0 0.0
    %3931 = vmatpush1.msra.mxu0 0.0
    %3932 = vmatprep.subr.mxu0 0.0
    %3933 = vmatpush1.msra.mxu0 0.0
    %3934 = vmatprep.subr.mxu0 0.0
    %3935 = vmatpush1.msra.mxu0 0.0
    %3936 = vmatprep.subr.mxu0 0.0
    %3937 = vmatpush1.msra.mxu0 0.0
    %3938 = vmatprep.subr.mxu0 0.0
    %3939 = vmatpush1.msra.mxu0 0.0
    %3940 = vmatprep.subr.mxu0 0.0
    %3941 = vmatpush1.msra.mxu0 0.0
    %3942 = vmatprep.subr.mxu0 0.0
    %3943 = vmatpush1.msra.mxu0 0.0
    %3944 = vmatprep.subr.mxu0 0.0
    %3945 = vmatpush1.msra.mxu0 0.0
    %3946 = vmatprep.subr.mxu0 0.0
    %3947 = vmatpush1.msra.mxu0 0.0
    %3948 = vmatprep.subr.mxu0 0.0
    %3949 = vmatpush1.msra.mxu0 0.0
    %3950 = vmatprep.subr.mxu0 0.0
    %3951 = vmatpush1.msra.mxu0 0.0
    %3952 = vmatprep.subr.mxu0 0.0
    %3953 = vmatpush1.msra.mxu0 0.0
    %3954 = vmatprep.subr.mxu0 0.0
    %3955 = vmatpush1.msra.mxu0 0.0
    %3956 = vmatprep.subr.mxu0 0.0
    %3957 = vmatpush1.msra.mxu0 0.0
    %3958 = vmatprep.subr.mxu0 0.0
    %3959 = vmatpush1.msra.mxu0 0.0
    %3960 = vmatprep.mubr.f32.mxu0 0.0
    %3961 = vmatmul.mubr.f32.gmra.mrb[0].mxu0 %v3823
    %v3962 = vpop.f32.mrb[0].mxu0
    %v3963 = vadd.f32 0.0, %v3962
    %v3964 = vpop.f32.mrb[0].mxu0
    %3965 = vdwg.mxu0
    %v3966 = vadd.f32 %v3727, %v3892
    %v3967 = vadd.f32 %v3729, %v3894
    %v3968 = vadd.f32 %v3798, %v3963
    %v3969 = vsel %vm515, %v3966, -inf
    %3970 = vmax.xlane.f32.xlu0 %v3969
    %v3971 = vpop.xlane.xlu0 %3970
    %v3972 = vsub.f32 %v3966, %v3971
    %v3973 = vmul.f32 %v3972, 1.442695
    %v3974 = vpow.pop %v3973
    %v3975 = vsel %vm515, %v3974, 0.0
    %3976 = vadd.xlane.f32.xlu0 %v3975
    %v3977 = vpop.xlane.xlu0 %3976
    %v3978 = vrcp.pop %v3977
    %v3979 = vmul.f32 %v3974, %v3978
    %s3980 = scalar_lea.vmem %s7, 40
    %3981 = vst.msk [vmem:[%s3980] sm:$0xff] %vm515, %v3979
    %s3982 = scalar_lea.vmem %s8, 40
    %3983 = vst.msk [vmem:[%s3982] sm:$0xff] %vm1094, %v3967
    %v3984 = vmul.f32 %v3968, 1.442695
    %v3985 = vpow.pop %v3984
    %v3986 = vadd.f32 %v3985, 1e-15
    %s3987 = scalar_lea.vmem %s9, 40
    %3988 = vst.msk [vmem:[%s3987] sm:$0xff] %vm1094, %v3986
    %3990 = vrot.lane.b32.xlu0 %v3966, 1
    %v3991 = vpop.permute.xlu0 %3990
    %vm3993 = vcmp.gt.f32.partialorder %v3966, %v3991
    %v3994 = vsel %vm3993, 1, 0
    %vm3995 = vcmp.eq.s32.totalorder %v3994, 1
    %v3996 = vsel %vm3995, 1, 0
    %3997 = vset.pattern.permute.xlu0 1
    %3998 = vperm.xlu0 %3997, %v3996
    %v3999 = vpop.permute.xlu0 %3998
    %vm4000 = vcmp.eq.s32.totalorder %v3999, 1
    %4002 = vrot.lane.b32.xlu0 %v3967, 2
    %v4003 = vpop.permute.xlu0 %4002
    %v4005 = vsel %vm4000, %v3967, %v4003
    %s4006 = sld [smem:[#allocation3 + $0x5]]
    %p4007 = scmp.gt.s32.totalorder %s4006, 0
    %s4008 = scalar_lea.vmem %s3, 40
    %v4009 = vld [vmem:[%s4008] sm:$0xff]
    %s4010 = scalar_select %p4007, 1, 0
    %v4011 = vstv %s4010
    %vm4012 = vcmp.eq.s32.totalorder %v4011, 1
    %4014 = vrot.lane.b32.xlu0 %v4005, 126
    %v4015 = vpop.permute.xlu0 %4014
    %v4017 = vsel %vm4012, %v4009, %v4015
    %4018 = vrot.lane.b32.xlu0 %v3821, 2
    %v4019 = vpop.permute.xlu0 %4018
    %v4021 = vsel %vm515, %v4017, %v4019
    %v4023 = vsel %vm517, %v4021, 0
    %4025 = vmatprep.subr.mxu0 %v63
    %4026 = vmatpush1.msra.mxu0 %v62
    %4027 = vmatprep.subr.mxu0 %v72
    %4028 = vmatpush1.msra.mxu0 %v71
    %4029 = vmatprep.subr.mxu0 %v526
    %4030 = vmatpush1.msra.mxu0 %v523
    %4031 = vmatprep.subr.mxu0 0.0
    %4032 = vmatpush1.msra.mxu0 0.0
    %4033 = vmatprep.subr.mxu0 0.0
    %4034 = vmatpush1.msra.mxu0 0.0
    %4035 = vmatprep.subr.mxu0 0.0
    %4036 = vmatpush1.msra.mxu0 0.0
    %4037 = vmatprep.subr.mxu0 0.0
    %4038 = vmatpush1.msra.mxu0 0.0
    %4039 = vmatprep.subr.mxu0 0.0
    %4040 = vmatpush1.msra.mxu0 0.0
    %4041 = vmatprep.subr.mxu0 0.0
    %4042 = vmatpush1.msra.mxu0 0.0
    %4043 = vmatprep.subr.mxu0 0.0
    %4044 = vmatpush1.msra.mxu0 0.0
    %4045 = vmatprep.subr.mxu0 0.0
    %4046 = vmatpush1.msra.mxu0 0.0
    %4047 = vmatprep.subr.mxu0 0.0
    %4048 = vmatpush1.msra.mxu0 0.0
    %4049 = vmatprep.subr.mxu0 0.0
    %4050 = vmatpush1.msra.mxu0 0.0
    %4051 = vmatprep.subr.mxu0 0.0
    %4052 = vmatpush1.msra.mxu0 0.0
    %4053 = vmatprep.subr.mxu0 0.0
    %4054 = vmatpush1.msra.mxu0 0.0
    %4055 = vmatprep.subr.mxu0 0.0
    %4056 = vmatpush1.msra.mxu0 0.0
    %4057 = vmatprep.subr.mxu0 0.0
    %4058 = vmatpush1.msra.mxu0 0.0
    %4059 = vmatprep.subr.mxu0 0.0
    %4060 = vmatpush1.msra.mxu0 0.0
    %4061 = vmatprep.subr.mxu0 0.0
    %4062 = vmatpush1.msra.mxu0 0.0
    %4063 = vmatprep.subr.mxu0 0.0
    %4064 = vmatpush1.msra.mxu0 0.0
    %4065 = vmatprep.subr.mxu0 0.0
    %4066 = vmatpush1.msra.mxu0 0.0
    %4067 = vmatprep.subr.mxu0 0.0
    %4068 = vmatpush1.msra.mxu0 0.0
    %4069 = vmatprep.subr.mxu0 0.0
    %4070 = vmatpush1.msra.mxu0 0.0
    %4071 = vmatprep.subr.mxu0 0.0
    %4072 = vmatpush1.msra.mxu0 0.0
    %4073 = vmatprep.subr.mxu0 0.0
    %4074 = vmatpush1.msra.mxu0 0.0
    %4075 = vmatprep.subr.mxu0 0.0
    %4076 = vmatpush1.msra.mxu0 0.0
    %4077 = vmatprep.subr.mxu0 0.0
    %4078 = vmatpush1.msra.mxu0 0.0
    %4079 = vmatprep.subr.mxu0 0.0
    %4080 = vmatpush1.msra.mxu0 0.0
    %4081 = vmatprep.subr.mxu0 0.0
    %4082 = vmatpush1.msra.mxu0 0.0
    %4083 = vmatprep.subr.mxu0 0.0
    %4084 = vmatpush1.msra.mxu0 0.0
    %4085 = vmatprep.subr.mxu0 0.0
    %4086 = vmatpush1.msra.mxu0 0.0
    %4087 = vmatprep.subr.mxu0 0.0
    %4088 = vmatpush1.msra.mxu0 0.0
    %4089 = vmatprep.mubr.f32.mxu0 0.0
    %4090 = vmatmul.mubr.f32.gmra.mrb[0].mxu0 %v4023
    %v4091 = vpop.f32.mrb[0].mxu0
    %v4092 = vadd.f32 %v224, %v4091
    %v4093 = vpop.f32.mrb[0].mxu0
    %v4094 = vadd.f32 %v226, %v4093
    %4095 = vdwg.mxu0
    %4096 = vmatprep.subr.mxu0 %v65
    %4097 = vmatpush1.msra.mxu0 %v64
    %4098 = vmatprep.subr.mxu0 %v74
    %4099 = vmatpush1.msra.mxu0 %v73
    %4100 = vmatprep.subr.mxu0 %v532
    %4101 = vmatpush1.msra.mxu0 %v529
    %4102 = vmatprep.subr.mxu0 0.0
    %4103 = vmatpush1.msra.mxu0 0.0
    %4104 = vmatprep.subr.mxu0 0.0
    %4105 = vmatpush1.msra.mxu0 0.0
    %4106 = vmatprep.subr.mxu0 0.0
    %4107 = vmatpush1.msra.mxu0 0.0
    %4108 = vmatprep.subr.mxu0 0.0
    %4109 = vmatpush1.msra.mxu0 0.0
    %4110 = vmatprep.subr.mxu0 0.0
    %4111 = vmatpush1.msra.mxu0 0.0
    %4112 = vmatprep.subr.mxu0 0.0
    %4113 = vmatpush1.msra.mxu0 0.0
    %4114 = vmatprep.subr.mxu0 0.0
    %4115 = vmatpush1.msra.mxu0 0.0
    %4116 = vmatprep.subr.mxu0 0.0
    %4117 = vmatpush1.msra.mxu0 0.0
    %4118 = vmatprep.subr.mxu0 0.0
    %4119 = vmatpush1.msra.mxu0 0.0
    %4120 = vmatprep.subr.mxu0 0.0
    %4121 = vmatpush1.msra.mxu0 0.0
    %4122 = vmatprep.subr.mxu0 0.0
    %4123 = vmatpush1.msra.mxu0 0.0
    %4124 = vmatprep.subr.mxu0 0.0
    %4125 = vmatpush1.msra.mxu0 0.0
    %4126 = vmatprep.subr.mxu0 0.0
    %4127 = vmatpush1.msra.mxu0 0.0
    %4128 = vmatprep.subr.mxu0 0.0
    %4129 = vmatpush1.msra.mxu0 0.0
    %4130 = vmatprep.subr.mxu0 0.0
    %4131 = vmatpush1.msra.mxu0 0.0
    %4132 = vmatprep.subr.mxu0 0.0
    %4133 = vmatpush1.msra.mxu0 0.0
    %4134 = vmatprep.subr.mxu0 0.0
    %4135 = vmatpush1.msra.mxu0 0.0
    %4136 = vmatprep.subr.mxu0 0.0
    %4137 = vmatpush1.msra.mxu0 0.0
    %4138 = vmatprep.subr.mxu0 0.0
    %4139 = vmatpush1.msra.mxu0 0.0
    %4140 = vmatprep.subr.mxu0 0.0
    %4141 = vmatpush1.msra.mxu0 0.0
    %4142 = vmatprep.subr.mxu0 0.0
    %4143 = vmatpush1.msra.mxu0 0.0
    %4144 = vmatprep.subr.mxu0 0.0
    %4145 = vmatpush1.msra.mxu0 0.0
    %4146 = vmatprep.subr.mxu0 0.0
    %4147 = vmatpush1.msra.mxu0 0.0
    %4148 = vmatprep.subr.mxu0 0.0
    %4149 = vmatpush1.msra.mxu0 0.0
    %4150 = vmatprep.subr.mxu0 0.0
    %4151 = vmatpush1.msra.mxu0 0.0
    %4152 = vmatprep.subr.mxu0 0.0
    %4153 = vmatpush1.msra.mxu0 0.0
    %4154 = vmatprep.subr.mxu0 0.0
    %4155 = vmatpush1.msra.mxu0 0.0
    %4156 = vmatprep.subr.mxu0 0.0
    %4157 = vmatpush1.msra.mxu0 0.0
    %4158 = vmatprep.subr.mxu0 0.0
    %4159 = vmatpush1.msra.mxu0 0.0
    %4160 = vmatprep.mubr.f32.mxu0 0.0
    %4161 = vmatmul.mubr.f32.gmra.mrb[0].mxu0 %v4023
    %v4162 = vpop.f32.mrb[0].mxu0
    %v4163 = vadd.f32 %v295, %v4162
    %v4164 = vpop.f32.mrb[0].mxu0
    %v4165 = vadd.f32 %v297, %v4164
    %4166 = vdwg.mxu0
    %4167 = vmatprep.subr.mxu0 %v67
    %4168 = vmatpush1.msra.mxu0 %v66
    %4169 = vmatprep.subr.mxu0 %v76
    %4170 = vmatpush1.msra.mxu0 %v75
    %4171 = vmatprep.subr.mxu0 %v538
    %4172 = vmatpush1.msra.mxu0 %v535
    %4173 = vmatprep.subr.mxu0 0.0
    %4174 = vmatpush1.msra.mxu0 0.0
    %4175 = vmatprep.subr.mxu0 0.0
    %4176 = vmatpush1.msra.mxu0 0.0
    %4177 = vmatprep.subr.mxu0 0.0
    %4178 = vmatpush1.msra.mxu0 0.0
    %4179 = vmatprep.subr.mxu0 0.0
    %4180 = vmatpush1.msra.mxu0 0.0
    %4181 = vmatprep.subr.mxu0 0.0
    %4182 = vmatpush1.msra.mxu0 0.0
    %4183 = vmatprep.subr.mxu0 0.0
    %4184 = vmatpush1.msra.mxu0 0.0
    %4185 = vmatprep.subr.mxu0 0.0
    %4186 = vmatpush1.msra.mxu0 0.0
    %4187 = vmatprep.subr.mxu0 0.0
    %4188 = vmatpush1.msra.mxu0 0.0
    %4189 = vmatprep.subr.mxu0 0.0
    %4190 = vmatpush1.msra.mxu0 0.0
    %4191 = vmatprep.subr.mxu0 0.0
    %4192 = vmatpush1.msra.mxu0 0.0
    %4193 = vmatprep.subr.mxu0 0.0
    %4194 = vmatpush1.msra.mxu0 0.0
    %4195 = vmatprep.subr.mxu0 0.0
    %4196 = vmatpush1.msra.mxu0 0.0
    %4197 = vmatprep.subr.mxu0 0.0
    %4198 = vmatpush1.msra.mxu0 0.0
    %4199 = vmatprep.subr.mxu0 0.0
    %4200 = vmatpush1.msra.mxu0 0.0
    %4201 = vmatprep.subr.mxu0 0.0
    %4202 = vmatpush1.msra.mxu0 0.0
    %4203 = vmatprep.subr.mxu0 0.0
    %4204 = vmatpush1.msra.mxu0 0.0
    %4205 = vmatprep.subr.mxu0 0.0
    %4206 = vmatpush1.msra.mxu0 0.0
    %4207 = vmatprep.subr.mxu0 0.0
    %4208 = vmatpush1.msra.mxu0 0.0
    %4209 = vmatprep.subr.mxu0 0.0
    %4210 = vmatpush1.msra.mxu0 0.0
    %4211 = vmatprep.subr.mxu0 0.0
    %4212 = vmatpush1.msra.mxu0 0.0
    %4213 = vmatprep.subr.mxu0 0.0
    %4214 = vmatpush1.msra.mxu0 0.0
    %4215 = vmatprep.subr.mxu0 0.0
    %4216 = vmatpush1.msra.mxu0 0.0
    %4217 = vmatprep.subr.mxu0 0.0
    %4218 = vmatpush1.msra.mxu0 0.0
    %4219 = vmatprep.subr.mxu0 0.0
    %4220 = vmatpush1.msra.mxu0 0.0
    %4221 = vmatprep.subr.mxu0 0.0
    %4222 = vmatpush1.msra.mxu0 0.0
    %4223 = vmatprep.subr.mxu0 0.0
    %4224 = vmatpush1.msra.mxu0 0.0
    %4225 = vmatprep.subr.mxu0 0.0
    %4226 = vmatpush1.msra.mxu0 0.0
    %4227 = vmatprep.subr.mxu0 0.0
    %4228 = vmatpush1.msra.mxu0 0.0
    %4229 = vmatprep.subr.mxu0 0.0
    %4230 = vmatpush1.msra.mxu0 0.0
    %4231 = vmatprep.mubr.f32.mxu0 0.0
    %4232 = vmatmul.mubr.f32.gmra.mrb[0].mxu0 %v4023
    %v4233 = vpop.f32.mrb[0].mxu0
    %v4234 = vadd.f32 %v366, %v4233
    %v4235 = vpop.f32.mrb[0].mxu0
    %v4236 = vadd.f32 %v368, %v4235
    %4237 = vdwg.mxu0
    %4238 = vmatprep.subr.mxu0 %v69
    %4239 = vmatpush1.msra.mxu0 %v68
    %4240 = vmatprep.subr.mxu0 %v78
    %4241 = vmatpush1.msra.mxu0 %v77
    %4242 = vmatprep.subr.mxu0 %v544
    %4243 = vmatpush1.msra.mxu0 %v541
    %4244 = vmatprep.subr.mxu0 0.0
    %4245 = vmatpush1.msra.mxu0 0.0
    %4246 = vmatprep.subr.mxu0 0.0
    %4247 = vmatpush1.msra.mxu0 0.0
    %4248 = vmatprep.subr.mxu0 0.0
    %4249 = vmatpush1.msra.mxu0 0.0
    %4250 = vmatprep.subr.mxu0 0.0
    %4251 = vmatpush1.msra.mxu0 0.0
    %4252 = vmatprep.subr.mxu0 0.0
    %4253 = vmatpush1.msra.mxu0 0.0
    %4254 = vmatprep.subr.mxu0 0.0
    %4255 = vmatpush1.msra.mxu0 0.0
    %4256 = vmatprep.subr.mxu0 0.0
    %4257 = vmatpush1.msra.mxu0 0.0
    %4258 = vmatprep.subr.mxu0 0.0
    %4259 = vmatpush1.msra.mxu0 0.0
    %4260 = vmatprep.subr.mxu0 0.0
    %4261 = vmatpush1.msra.mxu0 0.0
    %4262 = vmatprep.subr.mxu0 0.0
    %4263 = vmatpush1.msra.mxu0 0.0
    %4264 = vmatprep.subr.mxu0 0.0
    %4265 = vmatpush1.msra.mxu0 0.0
    %4266 = vmatprep.subr.mxu0 0.0
    %4267 = vmatpush1.msra.mxu0 0.0
    %4268 = vmatprep.subr.mxu0 0.0
    %4269 = vmatpush1.msra.mxu0 0.0
    %4270 = vmatprep.subr.mxu0 0.0
    %4271 = vmatpush1.msra.mxu0 0.0
    %4272 = vmatprep.subr.mxu0 0.0
    %4273 = vmatpush1.msra.mxu0 0.0
    %4274 = vmatprep.subr.mxu0 0.0
    %4275 = vmatpush1.msra.mxu0 0.0
    %4276 = vmatprep.subr.mxu0 0.0
    %4277 = vmatpush1.msra.mxu0 0.0
    %4278 = vmatprep.subr.mxu0 0.0
    %4279 = vmatpush1.msra.mxu0 0.0
    %4280 = vmatprep.subr.mxu0 0.0
    %4281 = vmatpush1.msra.mxu0 0.0
    %4282 = vmatprep.subr.mxu0 0.0
    %4283 = vmatpush1.msra.mxu0 0.0
    %4284 = vmatprep.subr.mxu0 0.0
    %4285 = vmatpush1.msra.mxu0 0.0
    %4286 = vmatprep.subr.mxu0 0.0
    %4287 = vmatpush1.msra.mxu0 0.0
    %4288 = vmatprep.subr.mxu0 0.0
    %4289 = vmatpush1.msra.mxu0 0.0
    %4290 = vmatprep.subr.mxu0 0.0
    %4291 = vmatpush1.msra.mxu0 0.0
    %4292 = vmatprep.subr.mxu0 0.0
    %4293 = vmatpush1.msra.mxu0 0.0
    %4294 = vmatprep.subr.mxu0 0.0
    %4295 = vmatpush1.msra.mxu0 0.0
    %4296 = vmatprep.subr.mxu0 0.0
    %4297 = vmatpush1.msra.mxu0 0.0
    %4298 = vmatprep.subr.mxu0 0.0
    %4299 = vmatpush1.msra.mxu0 0.0
    %4300 = vmatprep.subr.mxu0 0.0
    %4301 = vmatpush1.msra.mxu0 0.0
    %4302 = vmatprep.mubr.f32.mxu0 0.0
    %4303 = vmatmul.mubr.f32.gmra.mrb[0].mxu0 %v4023
    %v4304 = vpop.f32.mrb[0].mxu0
    %v4305 = vadd.f32 %v437, %v4304
    %v4306 = vpop.f32.mrb[0].mxu0
    %v4307 = vadd.f32 %v439, %v4306
    %4308 = vdwg.mxu0
    %4309 = vmatprep.subr.mxu0 0.0
    %4310 = vmatpush1.msra.mxu0 %v70
    %4311 = vmatprep.subr.mxu0 0.0
    %4312 = vmatpush1.msra.mxu0 %v79
    %4313 = vmatprep.subr.mxu0 0.0
    %4314 = vmatpush1.msra.mxu0 %v547
    %4315 = vmatprep.subr.mxu0 0.0
    %4316 = vmatpush1.msra.mxu0 0.0
    %4317 = vmatprep.subr.mxu0 0.0
    %4318 = vmatpush1.msra.mxu0 0.0
    %4319 = vmatprep.subr.mxu0 0.0
    %4320 = vmatpush1.msra.mxu0 0.0
    %4321 = vmatprep.subr.mxu0 0.0
    %4322 = vmatpush1.msra.mxu0 0.0
    %4323 = vmatprep.subr.mxu0 0.0
    %4324 = vmatpush1.msra.mxu0 0.0
    %4325 = vmatprep.subr.mxu0 0.0
    %4326 = vmatpush1.msra.mxu0 0.0
    %4327 = vmatprep.subr.mxu0 0.0
    %4328 = vmatpush1.msra.mxu0 0.0
    %4329 = vmatprep.subr.mxu0 0.0
    %4330 = vmatpush1.msra.mxu0 0.0
    %4331 = vmatprep.subr.mxu0 0.0
    %4332 = vmatpush1.msra.mxu0 0.0
    %4333 = vmatprep.subr.mxu0 0.0
    %4334 = vmatpush1.msra.mxu0 0.0
    %4335 = vmatprep.subr.mxu0 0.0
    %4336 = vmatpush1.msra.mxu0 0.0
    %4337 = vmatprep.subr.mxu0 0.0
    %4338 = vmatpush1.msra.mxu0 0.0
    %4339 = vmatprep.subr.mxu0 0.0
    %4340 = vmatpush1.msra.mxu0 0.0
    %4341 = vmatprep.subr.mxu0 0.0
    %4342 = vmatpush1.msra.mxu0 0.0
    %4343 = vmatprep.subr.mxu0 0.0
    %4344 = vmatpush1.msra.mxu0 0.0
    %4345 = vmatprep.subr.mxu0 0.0
    %4346 = vmatpush1.msra.mxu0 0.0
    %4347 = vmatprep.subr.mxu0 0.0
    %4348 = vmatpush1.msra.mxu0 0.0
    %4349 = vmatprep.subr.mxu0 0.0
    %4350 = vmatpush1.msra.mxu0 0.0
    %4351 = vmatprep.subr.mxu0 0.0
    %4352 = vmatpush1.msra.mxu0 0.0
    %4353 = vmatprep.subr.mxu0 0.0
    %4354 = vmatpush1.msra.mxu0 0.0
    %4355 = vmatprep.subr.mxu0 0.0
    %4356 = vmatpush1.msra.mxu0 0.0
    %4357 = vmatprep.subr.mxu0 0.0
    %4358 = vmatpush1.msra.mxu0 0.0
    %4359 = vmatprep.subr.mxu0 0.0
    %4360 = vmatpush1.msra.mxu0 0.0
    %4361 = vmatprep.subr.mxu0 0.0
    %4362 = vmatpush1.msra.mxu0 0.0
    %4363 = vmatprep.subr.mxu0 0.0
    %4364 = vmatpush1.msra.mxu0 0.0
    %4365 = vmatprep.subr.mxu0 0.0
    %4366 = vmatpush1.msra.mxu0 0.0
    %4367 = vmatprep.subr.mxu0 0.0
    %4368 = vmatpush1.msra.mxu0 0.0
    %4369 = vmatprep.subr.mxu0 0.0
    %4370 = vmatpush1.msra.mxu0 0.0
    %4371 = vmatprep.subr.mxu0 0.0
    %4372 = vmatpush1.msra.mxu0 0.0
    %4373 = vmatprep.mubr.f32.mxu0 0.0
    %4374 = vmatmul.mubr.f32.gmra.mrb[0].mxu0 %v4023
    %v4375 = vpop.f32.mrb[0].mxu0
    %v4376 = vadd.f32 %v508, %v4375
    %v4377 = vpop.f32.mrb[0].mxu0
    %4378 = vdwg.mxu0
    %v4379 = vadd.f32 %v4092, %v4165
    %v4380 = vxor.u32 %v4379, 2147483648
    %v4381 = vmul.f32 %v4380, 1.442695
    %v4382 = vpow.pop %v4381
    %v4383 = vadd.f32 %v4382, 1.0
    %v4384 = vrcp.pop %v4383
    %v4385 = vmul.f32 1.0, %v4384
    %v4386 = vadd.f32 %v4094, %v4234
    %v4387 = vxor.u32 %v4386, 2147483648
    %v4388 = vmul.f32 %v4387, 1.442695
    %v4389 = vpow.pop %v4388
    %v4390 = vadd.f32 %v4389, 1.0
    %v4391 = vrcp.pop %v4390
    %v4392 = vmul.f32 1.0, %v4391
    %v4393 = vmul.f32 %v4385, %v4236
    %v4394 = vadd.f32 %v4163, %v4393
    %v4395 = vtanh.pop %v4394
    %v4396 = vsub.f32 1.0, %v4392
    %v4397 = vmul.f32 %v4396, %v4395
    %v4398 = vmul.f32 %v4392, %v3821
    %v4399 = vadd.f32 %v4397, %v4398
    %v4401 = vsel %vm924, %v4399, 0
    %4403 = vmatprep.subr.mxu0 %v90
    %4404 = vmatpush1.msra.mxu0 %v89
    %4405 = vmatprep.subr.mxu0 %v93
    %4406 = vmatpush1.msra.mxu0 %v92
    %4407 = vmatprep.subr.mxu0 %v933
    %4408 = vmatpush1.msra.mxu0 %v930
    %4409 = vmatprep.subr.mxu0 0.0
    %4410 = vmatpush1.msra.mxu0 0.0
    %4411 = vmatprep.subr.mxu0 0.0
    %4412 = vmatpush1.msra.mxu0 0.0
    %4413 = vmatprep.subr.mxu0 0.0
    %4414 = vmatpush1.msra.mxu0 0.0
    %4415 = vmatprep.subr.mxu0 0.0
    %4416 = vmatpush1.msra.mxu0 0.0
    %4417 = vmatprep.subr.mxu0 0.0
    %4418 = vmatpush1.msra.mxu0 0.0
    %4419 = vmatprep.subr.mxu0 0.0
    %4420 = vmatpush1.msra.mxu0 0.0
    %4421 = vmatprep.subr.mxu0 0.0
    %4422 = vmatpush1.msra.mxu0 0.0
    %4423 = vmatprep.subr.mxu0 0.0
    %4424 = vmatpush1.msra.mxu0 0.0
    %4425 = vmatprep.subr.mxu0 0.0
    %4426 = vmatpush1.msra.mxu0 0.0
    %4427 = vmatprep.subr.mxu0 0.0
    %4428 = vmatpush1.msra.mxu0 0.0
    %4429 = vmatprep.subr.mxu0 0.0
    %4430 = vmatpush1.msra.mxu0 0.0
    %4431 = vmatprep.subr.mxu0 0.0
    %4432 = vmatpush1.msra.mxu0 0.0
    %4433 = vmatprep.subr.mxu0 0.0
    %4434 = vmatpush1.msra.mxu0 0.0
    %4435 = vmatprep.subr.mxu0 0.0
    %4436 = vmatpush1.msra.mxu0 0.0
    %4437 = vmatprep.subr.mxu0 0.0
    %4438 = vmatpush1.msra.mxu0 0.0
    %4439 = vmatprep.subr.mxu0 0.0
    %4440 = vmatpush1.msra.mxu0 0.0
    %4441 = vmatprep.subr.mxu0 0.0
    %4442 = vmatpush1.msra.mxu0 0.0
    %4443 = vmatprep.subr.mxu0 0.0
    %4444 = vmatpush1.msra.mxu0 0.0
    %4445 = vmatprep.subr.mxu0 0.0
    %4446 = vmatpush1.msra.mxu0 0.0
    %4447 = vmatprep.subr.mxu0 0.0
    %4448 = vmatpush1.msra.mxu0 0.0
    %4449 = vmatprep.subr.mxu0 0.0
    %4450 = vmatpush1.msra.mxu0 0.0
    %4451 = vmatprep.subr.mxu0 0.0
    %4452 = vmatpush1.msra.mxu0 0.0
    %4453 = vmatprep.subr.mxu0 0.0
    %4454 = vmatpush1.msra.mxu0 0.0
    %4455 = vmatprep.subr.mxu0 0.0
    %4456 = vmatpush1.msra.mxu0 0.0
    %4457 = vmatprep.subr.mxu0 0.0
    %4458 = vmatpush1.msra.mxu0 0.0
    %4459 = vmatprep.subr.mxu0 0.0
    %4460 = vmatpush1.msra.mxu0 0.0
    %4461 = vmatprep.subr.mxu0 0.0
    %4462 = vmatpush1.msra.mxu0 0.0
    %4463 = vmatprep.subr.mxu0 0.0
    %4464 = vmatpush1.msra.mxu0 0.0
    %4465 = vmatprep.subr.mxu0 0.0
    %4466 = vmatpush1.msra.mxu0 0.0
    %4467 = vmatprep.mubr.f32.mxu0 0.0
    %4468 = vmatmul.mubr.f32.gmra.mrb[0].mxu0 %v4401
    %v4469 = vpop.f32.mrb[0].mxu0
    %v4470 = vadd.f32 0.0, %v4469
    %v4471 = vpop.f32.mrb[0].mxu0
    %v4472 = vadd.f32 0.0, %v4471
    %4473 = vdwg.mxu0
    %4474 = vmatprep.subr.mxu0 0.0
    %4475 = vmatpush1.msra.mxu0 %v91
    %4476 = vmatprep.subr.mxu0 0.0
    %4477 = vmatpush1.msra.mxu0 %v94
    %4478 = vmatprep.subr.mxu0 0.0
    %4479 = vmatpush1.msra.mxu0 %v936
    %4480 = vmatprep.subr.mxu0 0.0
    %4481 = vmatpush1.msra.mxu0 0.0
    %4482 = vmatprep.subr.mxu0 0.0
    %4483 = vmatpush1.msra.mxu0 0.0
    %4484 = vmatprep.subr.mxu0 0.0
    %4485 = vmatpush1.msra.mxu0 0.0
    %4486 = vmatprep.subr.mxu0 0.0
    %4487 = vmatpush1.msra.mxu0 0.0
    %4488 = vmatprep.subr.mxu0 0.0
    %4489 = vmatpush1.msra.mxu0 0.0
    %4490 = vmatprep.subr.mxu0 0.0
    %4491 = vmatpush1.msra.mxu0 0.0
    %4492 = vmatprep.subr.mxu0 0.0
    %4493 = vmatpush1.msra.mxu0 0.0
    %4494 = vmatprep.subr.mxu0 0.0
    %4495 = vmatpush1.msra.mxu0 0.0
    %4496 = vmatprep.subr.mxu0 0.0
    %4497 = vmatpush1.msra.mxu0 0.0
    %4498 = vmatprep.subr.mxu0 0.0
    %4499 = vmatpush1.msra.mxu0 0.0
    %4500 = vmatprep.subr.mxu0 0.0
    %4501 = vmatpush1.msra.mxu0 0.0
    %4502 = vmatprep.subr.mxu0 0.0
    %4503 = vmatpush1.msra.mxu0 0.0
    %4504 = vmatprep.subr.mxu0 0.0
    %4505 = vmatpush1.msra.mxu0 0.0
    %4506 = vmatprep.subr.mxu0 0.0
    %4507 = vmatpush1.msra.mxu0 0.0
    %4508 = vmatprep.subr.mxu0 0.0
    %4509 = vmatpush1.msra.mxu0 0.0
    %4510 = vmatprep.subr.mxu0 0.0
    %4511 = vmatpush1.msra.mxu0 0.0
    %4512 = vmatprep.subr.mxu0 0.0
    %4513 = vmatpush1.msra.mxu0 0.0
    %4514 = vmatprep.subr.mxu0 0.0
    %4515 = vmatpush1.msra.mxu0 0.0
    %4516 = vmatprep.subr.mxu0 0.0
    %4517 = vmatpush1.msra.mxu0 0.0
    %4518 = vmatprep.subr.mxu0 0.0
    %4519 = vmatpush1.msra.mxu0 0.0
    %4520 = vmatprep.subr.mxu0 0.0
    %4521 = vmatpush1.msra.mxu0 0.0
    %4522 = vmatprep.subr.mxu0 0.0
    %4523 = vmatpush1.msra.mxu0 0.0
    %4524 = vmatprep.subr.mxu0 0.0
    %4525 = vmatpush1.msra.mxu0 0.0
    %4526 = vmatprep.subr.mxu0 0.0
    %4527 = vmatpush1.msra.mxu0 0.0
    %4528 = vmatprep.subr.mxu0 0.0
    %4529 = vmatpush1.msra.mxu0 0.0
    %4530 = vmatprep.subr.mxu0 0.0
    %4531 = vmatpush1.msra.mxu0 0.0
    %4532 = vmatprep.subr.mxu0 0.0
    %4533 = vmatpush1.msra.mxu0 0.0
    %4534 = vmatprep.subr.mxu0 0.0
    %4535 = vmatpush1.msra.mxu0 0.0
    %4536 = vmatprep.subr.mxu0 0.0
    %4537 = vmatpush1.msra.mxu0 0.0
    %4538 = vmatprep.mubr.f32.mxu0 0.0
    %4539 = vmatmul.mubr.f32.gmra.mrb[0].mxu0 %v4401
    %v4540 = vpop.f32.mrb[0].mxu0
    %v4541 = vadd.f32 0.0, %v4540
    %v4542 = vpop.f32.mrb[0].mxu0
    %4543 = vdwg.mxu0
    %v4544 = vadd.f32 %v4305, %v4470
    %v4545 = vadd.f32 %v4307, %v4472
    %v4546 = vadd.f32 %v4376, %v4541
    %v4547 = vsel %vm515, %v4544, -inf
    %4548 = vmax.xlane.f32.xlu0 %v4547
    %v4549 = vpop.xlane.xlu0 %4548
    %v4550 = vsub.f32 %v4544, %v4549
    %v4551 = vmul.f32 %v4550, 1.442695
    %v4552 = vpow.pop %v4551
    %v4553 = vsel %vm515, %v4552, 0.0
    %4554 = vadd.xlane.f32.xlu0 %v4553
    %v4555 = vpop.xlane.xlu0 %4554
    %v4556 = vrcp.pop %v4555
    %v4557 = vmul.f32 %v4552, %v4556
    %s4558 = scalar_lea.vmem %s7, 48
    %4559 = vst.msk [vmem:[%s4558] sm:$0xff] %vm515, %v4557
    %s4560 = scalar_lea.vmem %s8, 48
    %4561 = vst.msk [vmem:[%s4560] sm:$0xff] %vm1094, %v4545
    %v4562 = vmul.f32 %v4546, 1.442695
    %v4563 = vpow.pop %v4562
    %v4564 = vadd.f32 %v4563, 1e-15
    %s4565 = scalar_lea.vmem %s9, 48
    %4566 = vst.msk [vmem:[%s4565] sm:$0xff] %vm1094, %v4564
    %4568 = vrot.lane.b32.xlu0 %v4544, 1
    %v4569 = vpop.permute.xlu0 %4568
    %vm4571 = vcmp.gt.f32.partialorder %v4544, %v4569
    %v4572 = vsel %vm4571, 1, 0
    %vm4573 = vcmp.eq.s32.totalorder %v4572, 1
    %v4574 = vsel %vm4573, 1, 0
    %4575 = vset.pattern.permute.xlu0 1
    %4576 = vperm.xlu0 %4575, %v4574
    %v4577 = vpop.permute.xlu0 %4576
    %vm4578 = vcmp.eq.s32.totalorder %v4577, 1
    %4580 = vrot.lane.b32.xlu0 %v4545, 2
    %v4581 = vpop.permute.xlu0 %4580
    %v4583 = vsel %vm4578, %v4545, %v4581
    %s4584 = sld [smem:[#allocation3 + $0x6]]
    %p4585 = scmp.gt.s32.totalorder %s4584, 0
    %s4586 = scalar_lea.vmem %s3, 48
    %v4587 = vld [vmem:[%s4586] sm:$0xff]
    %s4588 = scalar_select %p4585, 1, 0
    %v4589 = vstv %s4588
    %vm4590 = vcmp.eq.s32.totalorder %v4589, 1
    %4592 = vrot.lane.b32.xlu0 %v4583, 126
    %v4593 = vpop.permute.xlu0 %4592
    %v4595 = vsel %vm4590, %v4587, %v4593
    %4596 = vrot.lane.b32.xlu0 %v4399, 2
    %v4597 = vpop.permute.xlu0 %4596
    %v4599 = vsel %vm515, %v4595, %v4597
    %v4601 = vsel %vm517, %v4599, 0
    %4603 = vmatprep.subr.mxu0 %v63
    %4604 = vmatpush1.msra.mxu0 %v62
    %4605 = vmatprep.subr.mxu0 %v72
    %4606 = vmatpush1.msra.mxu0 %v71
    %4607 = vmatprep.subr.mxu0 %v526
    %4608 = vmatpush1.msra.mxu0 %v523
    %4609 = vmatprep.subr.mxu0 0.0
    %4610 = vmatpush1.msra.mxu0 0.0
    %4611 = vmatprep.subr.mxu0 0.0
    %4612 = vmatpush1.msra.mxu0 0.0
    %4613 = vmatprep.subr.mxu0 0.0
    %4614 = vmatpush1.msra.mxu0 0.0
    %4615 = vmatprep.subr.mxu0 0.0
    %4616 = vmatpush1.msra.mxu0 0.0
    %4617 = vmatprep.subr.mxu0 0.0
    %4618 = vmatpush1.msra.mxu0 0.0
    %4619 = vmatprep.subr.mxu0 0.0
    %4620 = vmatpush1.msra.mxu0 0.0
    %4621 = vmatprep.subr.mxu0 0.0
    %4622 = vmatpush1.msra.mxu0 0.0
    %4623 = vmatprep.subr.mxu0 0.0
    %4624 = vmatpush1.msra.mxu0 0.0
    %4625 = vmatprep.subr.mxu0 0.0
    %4626 = vmatpush1.msra.mxu0 0.0
    %4627 = vmatprep.subr.mxu0 0.0
    %4628 = vmatpush1.msra.mxu0 0.0
    %4629 = vmatprep.subr.mxu0 0.0
    %4630 = vmatpush1.msra.mxu0 0.0
    %4631 = vmatprep.subr.mxu0 0.0
    %4632 = vmatpush1.msra.mxu0 0.0
    %4633 = vmatprep.subr.mxu0 0.0
    %4634 = vmatpush1.msra.mxu0 0.0
    %4635 = vmatprep.subr.mxu0 0.0
    %4636 = vmatpush1.msra.mxu0 0.0
    %4637 = vmatprep.subr.mxu0 0.0
    %4638 = vmatpush1.msra.mxu0 0.0
    %4639 = vmatprep.subr.mxu0 0.0
    %4640 = vmatpush1.msra.mxu0 0.0
    %4641 = vmatprep.subr.mxu0 0.0
    %4642 = vmatpush1.msra.mxu0 0.0
    %4643 = vmatprep.subr.mxu0 0.0
    %4644 = vmatpush1.msra.mxu0 0.0
    %4645 = vmatprep.subr.mxu0 0.0
    %4646 = vmatpush1.msra.mxu0 0.0
    %4647 = vmatprep.subr.mxu0 0.0
    %4648 = vmatpush1.msra.mxu0 0.0
    %4649 = vmatprep.subr.mxu0 0.0
    %4650 = vmatpush1.msra.mxu0 0.0
    %4651 = vmatprep.subr.mxu0 0.0
    %4652 = vmatpush1.msra.mxu0 0.0
    %4653 = vmatprep.subr.mxu0 0.0
    %4654 = vmatpush1.msra.mxu0 0.0
    %4655 = vmatprep.subr.mxu0 0.0
    %4656 = vmatpush1.msra.mxu0 0.0
    %4657 = vmatprep.subr.mxu0 0.0
    %4658 = vmatpush1.msra.mxu0 0.0
    %4659 = vmatprep.subr.mxu0 0.0
    %4660 = vmatpush1.msra.mxu0 0.0
    %4661 = vmatprep.subr.mxu0 0.0
    %4662 = vmatpush1.msra.mxu0 0.0
    %4663 = vmatprep.subr.mxu0 0.0
    %4664 = vmatpush1.msra.mxu0 0.0
    %4665 = vmatprep.subr.mxu0 0.0
    %4666 = vmatpush1.msra.mxu0 0.0
    %4667 = vmatprep.mubr.f32.mxu0 0.0
    %4668 = vmatmul.mubr.f32.gmra.mrb[0].mxu0 %v4601
    %v4669 = vpop.f32.mrb[0].mxu0
    %v4670 = vadd.f32 %v224, %v4669
    %v4671 = vpop.f32.mrb[0].mxu0
    %v4672 = vadd.f32 %v226, %v4671
    %4673 = vdwg.mxu0
    %4674 = vmatprep.subr.mxu0 %v65
    %4675 = vmatpush1.msra.mxu0 %v64
    %4676 = vmatprep.subr.mxu0 %v74
    %4677 = vmatpush1.msra.mxu0 %v73
    %4678 = vmatprep.subr.mxu0 %v532
    %4679 = vmatpush1.msra.mxu0 %v529
    %4680 = vmatprep.subr.mxu0 0.0
    %4681 = vmatpush1.msra.mxu0 0.0
    %4682 = vmatprep.subr.mxu0 0.0
    %4683 = vmatpush1.msra.mxu0 0.0
    %4684 = vmatprep.subr.mxu0 0.0
    %4685 = vmatpush1.msra.mxu0 0.0
    %4686 = vmatprep.subr.mxu0 0.0
    %4687 = vmatpush1.msra.mxu0 0.0
    %4688 = vmatprep.subr.mxu0 0.0
    %4689 = vmatpush1.msra.mxu0 0.0
    %4690 = vmatprep.subr.mxu0 0.0
    %4691 = vmatpush1.msra.mxu0 0.0
    %4692 = vmatprep.subr.mxu0 0.0
    %4693 = vmatpush1.msra.mxu0 0.0
    %4694 = vmatprep.subr.mxu0 0.0
    %4695 = vmatpush1.msra.mxu0 0.0
    %4696 = vmatprep.subr.mxu0 0.0
    %4697 = vmatpush1.msra.mxu0 0.0
    %4698 = vmatprep.subr.mxu0 0.0
    %4699 = vmatpush1.msra.mxu0 0.0
    %4700 = vmatprep.subr.mxu0 0.0
    %4701 = vmatpush1.msra.mxu0 0.0
    %4702 = vmatprep.subr.mxu0 0.0
    %4703 = vmatpush1.msra.mxu0 0.0
    %4704 = vmatprep.subr.mxu0 0.0
    %4705 = vmatpush1.msra.mxu0 0.0
    %4706 = vmatprep.subr.mxu0 0.0
    %4707 = vmatpush1.msra.mxu0 0.0
    %4708 = vmatprep.subr.mxu0 0.0
    %4709 = vmatpush1.msra.mxu0 0.0
    %4710 = vmatprep.subr.mxu0 0.0
    %4711 = vmatpush1.msra.mxu0 0.0
    %4712 = vmatprep.subr.mxu0 0.0
    %4713 = vmatpush1.msra.mxu0 0.0
    %4714 = vmatprep.subr.mxu0 0.0
    %4715 = vmatpush1.msra.mxu0 0.0
    %4716 = vmatprep.subr.mxu0 0.0
    %4717 = vmatpush1.msra.mxu0 0.0
    %4718 = vmatprep.subr.mxu0 0.0
    %4719 = vmatpush1.msra.mxu0 0.0
    %4720 = vmatprep.subr.mxu0 0.0
    %4721 = vmatpush1.msra.mxu0 0.0
    %4722 = vmatprep.subr.mxu0 0.0
    %4723 = vmatpush1.msra.mxu0 0.0
    %4724 = vmatprep.subr.mxu0 0.0
    %4725 = vmatpush1.msra.mxu0 0.0
    %4726 = vmatprep.subr.mxu0 0.0
    %4727 = vmatpush1.msra.mxu0 0.0
    %4728 = vmatprep.subr.mxu0 0.0
    %4729 = vmatpush1.msra.mxu0 0.0
    %4730 = vmatprep.subr.mxu0 0.0
    %4731 = vmatpush1.msra.mxu0 0.0
    %4732 = vmatprep.subr.mxu0 0.0
    %4733 = vmatpush1.msra.mxu0 0.0
    %4734 = vmatprep.subr.mxu0 0.0
    %4735 = vmatpush1.msra.mxu0 0.0
    %4736 = vmatprep.subr.mxu0 0.0
    %4737 = vmatpush1.msra.mxu0 0.0
    %4738 = vmatprep.mubr.f32.mxu0 0.0
    %4739 = vmatmul.mubr.f32.gmra.mrb[0].mxu0 %v4601
    %v4740 = vpop.f32.mrb[0].mxu0
    %v4741 = vadd.f32 %v295, %v4740
    %v4742 = vpop.f32.mrb[0].mxu0
    %v4743 = vadd.f32 %v297, %v4742
    %4744 = vdwg.mxu0
    %4745 = vmatprep.subr.mxu0 %v67
    %4746 = vmatpush1.msra.mxu0 %v66
    %4747 = vmatprep.subr.mxu0 %v76
    %4748 = vmatpush1.msra.mxu0 %v75
    %4749 = vmatprep.subr.mxu0 %v538
    %4750 = vmatpush1.msra.mxu0 %v535
    %4751 = vmatprep.subr.mxu0 0.0
    %4752 = vmatpush1.msra.mxu0 0.0
    %4753 = vmatprep.subr.mxu0 0.0
    %4754 = vmatpush1.msra.mxu0 0.0
    %4755 = vmatprep.subr.mxu0 0.0
    %4756 = vmatpush1.msra.mxu0 0.0
    %4757 = vmatprep.subr.mxu0 0.0
    %4758 = vmatpush1.msra.mxu0 0.0
    %4759 = vmatprep.subr.mxu0 0.0
    %4760 = vmatpush1.msra.mxu0 0.0
    %4761 = vmatprep.subr.mxu0 0.0
    %4762 = vmatpush1.msra.mxu0 0.0
    %4763 = vmatprep.subr.mxu0 0.0
    %4764 = vmatpush1.msra.mxu0 0.0
    %4765 = vmatprep.subr.mxu0 0.0
    %4766 = vmatpush1.msra.mxu0 0.0
    %4767 = vmatprep.subr.mxu0 0.0
    %4768 = vmatpush1.msra.mxu0 0.0
    %4769 = vmatprep.subr.mxu0 0.0
    %4770 = vmatpush1.msra.mxu0 0.0
    %4771 = vmatprep.subr.mxu0 0.0
    %4772 = vmatpush1.msra.mxu0 0.0
    %4773 = vmatprep.subr.mxu0 0.0
    %4774 = vmatpush1.msra.mxu0 0.0
    %4775 = vmatprep.subr.mxu0 0.0
    %4776 = vmatpush1.msra.mxu0 0.0
    %4777 = vmatprep.subr.mxu0 0.0
    %4778 = vmatpush1.msra.mxu0 0.0
    %4779 = vmatprep.subr.mxu0 0.0
    %4780 = vmatpush1.msra.mxu0 0.0
    %4781 = vmatprep.subr.mxu0 0.0
    %4782 = vmatpush1.msra.mxu0 0.0
    %4783 = vmatprep.subr.mxu0 0.0
    %4784 = vmatpush1.msra.mxu0 0.0
    %4785 = vmatprep.subr.mxu0 0.0
    %4786 = vmatpush1.msra.mxu0 0.0
    %4787 = vmatprep.subr.mxu0 0.0
    %4788 = vmatpush1.msra.mxu0 0.0
    %4789 = vmatprep.subr.mxu0 0.0
    %4790 = vmatpush1.msra.mxu0 0.0
    %4791 = vmatprep.subr.mxu0 0.0
    %4792 = vmatpush1.msra.mxu0 0.0
    %4793 = vmatprep.subr.mxu0 0.0
    %4794 = vmatpush1.msra.mxu0 0.0
    %4795 = vmatprep.subr.mxu0 0.0
    %4796 = vmatpush1.msra.mxu0 0.0
    %4797 = vmatprep.subr.mxu0 0.0
    %4798 = vmatpush1.msra.mxu0 0.0
    %4799 = vmatprep.subr.mxu0 0.0
    %4800 = vmatpush1.msra.mxu0 0.0
    %4801 = vmatprep.subr.mxu0 0.0
    %4802 = vmatpush1.msra.mxu0 0.0
    %4803 = vmatprep.subr.mxu0 0.0
    %4804 = vmatpush1.msra.mxu0 0.0
    %4805 = vmatprep.subr.mxu0 0.0
    %4806 = vmatpush1.msra.mxu0 0.0
    %4807 = vmatprep.subr.mxu0 0.0
    %4808 = vmatpush1.msra.mxu0 0.0
    %4809 = vmatprep.mubr.f32.mxu0 0.0
    %4810 = vmatmul.mubr.f32.gmra.mrb[0].mxu0 %v4601
    %v4811 = vpop.f32.mrb[0].mxu0
    %v4812 = vadd.f32 %v366, %v4811
    %v4813 = vpop.f32.mrb[0].mxu0
    %v4814 = vadd.f32 %v368, %v4813
    %4815 = vdwg.mxu0
    %4816 = vmatprep.subr.mxu0 %v69
    %4817 = vmatpush1.msra.mxu0 %v68
    %4818 = vmatprep.subr.mxu0 %v78
    %4819 = vmatpush1.msra.mxu0 %v77
    %4820 = vmatprep.subr.mxu0 %v544
    %4821 = vmatpush1.msra.mxu0 %v541
    %4822 = vmatprep.subr.mxu0 0.0
    %4823 = vmatpush1.msra.mxu0 0.0
    %4824 = vmatprep.subr.mxu0 0.0
    %4825 = vmatpush1.msra.mxu0 0.0
    %4826 = vmatprep.subr.mxu0 0.0
    %4827 = vmatpush1.msra.mxu0 0.0
    %4828 = vmatprep.subr.mxu0 0.0
    %4829 = vmatpush1.msra.mxu0 0.0
    %4830 = vmatprep.subr.mxu0 0.0
    %4831 = vmatpush1.msra.mxu0 0.0
    %4832 = vmatprep.subr.mxu0 0.0
    %4833 = vmatpush1.msra.mxu0 0.0
    %4834 = vmatprep.subr.mxu0 0.0
    %4835 = vmatpush1.msra.mxu0 0.0
    %4836 = vmatprep.subr.mxu0 0.0
    %4837 = vmatpush1.msra.mxu0 0.0
    %4838 = vmatprep.subr.mxu0 0.0
    %4839 = vmatpush1.msra.mxu0 0.0
    %4840 = vmatprep.subr.mxu0 0.0
    %4841 = vmatpush1.msra.mxu0 0.0
    %4842 = vmatprep.subr.mxu0 0.0
    %4843 = vmatpush1.msra.mxu0 0.0
    %4844 = vmatprep.subr.mxu0 0.0
    %4845 = vmatpush1.msra.mxu0 0.0
    %4846 = vmatprep.subr.mxu0 0.0
    %4847 = vmatpush1.msra.mxu0 0.0
    %4848 = vmatprep.subr.mxu0 0.0
    %4849 = vmatpush1.msra.mxu0 0.0
    %4850 = vmatprep.subr.mxu0 0.0
    %4851 = vmatpush1.msra.mxu0 0.0
    %4852 = vmatprep.subr.mxu0 0.0
    %4853 = vmatpush1.msra.mxu0 0.0
    %4854 = vmatprep.subr.mxu0 0.0
    %4855 = vmatpush1.msra.mxu0 0.0
    %4856 = vmatprep.subr.mxu0 0.0
    %4857 = vmatpush1.msra.mxu0 0.0
    %4858 = vmatprep.subr.mxu0 0.0
    %4859 = vmatpush1.msra.mxu0 0.0
    %4860 = vmatprep.subr.mxu0 0.0
    %4861 = vmatpush1.msra.mxu0 0.0
    %4862 = vmatprep.subr.mxu0 0.0
    %4863 = vmatpush1.msra.mxu0 0.0
    %4864 = vmatprep.subr.mxu0 0.0
    %4865 = vmatpush1.msra.mxu0 0.0
    %4866 = vmatprep.subr.mxu0 0.0
    %4867 = vmatpush1.msra.mxu0 0.0
    %4868 = vmatprep.subr.mxu0 0.0
    %4869 = vmatpush1.msra.mxu0 0.0
    %4870 = vmatprep.subr.mxu0 0.0
    %4871 = vmatpush1.msra.mxu0 0.0
    %4872 = vmatprep.subr.mxu0 0.0
    %4873 = vmatpush1.msra.mxu0 0.0
    %4874 = vmatprep.subr.mxu0 0.0
    %4875 = vmatpush1.msra.mxu0 0.0
    %4876 = vmatprep.subr.mxu0 0.0
    %4877 = vmatpush1.msra.mxu0 0.0
    %4878 = vmatprep.subr.mxu0 0.0
    %4879 = vmatpush1.msra.mxu0 0.0
    %4880 = vmatprep.mubr.f32.mxu0 0.0
    %4881 = vmatmul.mubr.f32.gmra.mrb[0].mxu0 %v4601
    %v4882 = vpop.f32.mrb[0].mxu0
    %v4883 = vadd.f32 %v437, %v4882
    %v4884 = vpop.f32.mrb[0].mxu0
    %v4885 = vadd.f32 %v439, %v4884
    %4886 = vdwg.mxu0
    %4887 = vmatprep.subr.mxu0 0.0
    %4888 = vmatpush1.msra.mxu0 %v70
    %4889 = vmatprep.subr.mxu0 0.0
    %4890 = vmatpush1.msra.mxu0 %v79
    %4891 = vmatprep.subr.mxu0 0.0
    %4892 = vmatpush1.msra.mxu0 %v547
    %4893 = vmatprep.subr.mxu0 0.0
    %4894 = vmatpush1.msra.mxu0 0.0
    %4895 = vmatprep.subr.mxu0 0.0
    %4896 = vmatpush1.msra.mxu0 0.0
    %4897 = vmatprep.subr.mxu0 0.0
    %4898 = vmatpush1.msra.mxu0 0.0
    %4899 = vmatprep.subr.mxu0 0.0
    %4900 = vmatpush1.msra.mxu0 0.0
    %4901 = vmatprep.subr.mxu0 0.0
    %4902 = vmatpush1.msra.mxu0 0.0
    %4903 = vmatprep.subr.mxu0 0.0
    %4904 = vmatpush1.msra.mxu0 0.0
    %4905 = vmatprep.subr.mxu0 0.0
    %4906 = vmatpush1.msra.mxu0 0.0
    %4907 = vmatprep.subr.mxu0 0.0
    %4908 = vmatpush1.msra.mxu0 0.0
    %4909 = vmatprep.subr.mxu0 0.0
    %4910 = vmatpush1.msra.mxu0 0.0
    %4911 = vmatprep.subr.mxu0 0.0
    %4912 = vmatpush1.msra.mxu0 0.0
    %4913 = vmatprep.subr.mxu0 0.0
    %4914 = vmatpush1.msra.mxu0 0.0
    %4915 = vmatprep.subr.mxu0 0.0
    %4916 = vmatpush1.msra.mxu0 0.0
    %4917 = vmatprep.subr.mxu0 0.0
    %4918 = vmatpush1.msra.mxu0 0.0
    %4919 = vmatprep.subr.mxu0 0.0
    %4920 = vmatpush1.msra.mxu0 0.0
    %4921 = vmatprep.subr.mxu0 0.0
    %4922 = vmatpush1.msra.mxu0 0.0
    %4923 = vmatprep.subr.mxu0 0.0
    %4924 = vmatpush1.msra.mxu0 0.0
    %4925 = vmatprep.subr.mxu0 0.0
    %4926 = vmatpush1.msra.mxu0 0.0
    %4927 = vmatprep.subr.mxu0 0.0
    %4928 = vmatpush1.msra.mxu0 0.0
    %4929 = vmatprep.subr.mxu0 0.0
    %4930 = vmatpush1.msra.mxu0 0.0
    %4931 = vmatprep.subr.mxu0 0.0
    %4932 = vmatpush1.msra.mxu0 0.0
    %4933 = vmatprep.subr.mxu0 0.0
    %4934 = vmatpush1.msra.mxu0 0.0
    %4935 = vmatprep.subr.mxu0 0.0
    %4936 = vmatpush1.msra.mxu0 0.0
    %4937 = vmatprep.subr.mxu0 0.0
    %4938 = vmatpush1.msra.mxu0 0.0
    %4939 = vmatprep.subr.mxu0 0.0
    %4940 = vmatpush1.msra.mxu0 0.0
    %4941 = vmatprep.subr.mxu0 0.0
    %4942 = vmatpush1.msra.mxu0 0.0
    %4943 = vmatprep.subr.mxu0 0.0
    %4944 = vmatpush1.msra.mxu0 0.0
    %4945 = vmatprep.subr.mxu0 0.0
    %4946 = vmatpush1.msra.mxu0 0.0
    %4947 = vmatprep.subr.mxu0 0.0
    %4948 = vmatpush1.msra.mxu0 0.0
    %4949 = vmatprep.subr.mxu0 0.0
    %4950 = vmatpush1.msra.mxu0 0.0
    %4951 = vmatprep.mubr.f32.mxu0 0.0
    %4952 = vmatmul.mubr.f32.gmra.mrb[0].mxu0 %v4601
    %v4953 = vpop.f32.mrb[0].mxu0
    %v4954 = vadd.f32 %v508, %v4953
    %v4955 = vpop.f32.mrb[0].mxu0
    %4956 = vdwg.mxu0
    %v4957 = vadd.f32 %v4670, %v4743
    %v4958 = vxor.u32 %v4957, 2147483648
    %v4959 = vmul.f32 %v4958, 1.442695
    %v4960 = vpow.pop %v4959
    %v4961 = vadd.f32 %v4960, 1.0
    %v4962 = vrcp.pop %v4961
    %v4963 = vmul.f32 1.0, %v4962
    %v4964 = vadd.f32 %v4672, %v4812
    %v4965 = vxor.u32 %v4964, 2147483648
    %v4966 = vmul.f32 %v4965, 1.442695
    %v4967 = vpow.pop %v4966
    %v4968 = vadd.f32 %v4967, 1.0
    %v4969 = vrcp.pop %v4968
    %v4970 = vmul.f32 1.0, %v4969
    %v4971 = vmul.f32 %v4963, %v4814
    %v4972 = vadd.f32 %v4741, %v4971
    %v4973 = vtanh.pop %v4972
    %v4974 = vsub.f32 1.0, %v4970
    %v4975 = vmul.f32 %v4974, %v4973
    %v4976 = vmul.f32 %v4970, %v4399
    %v4977 = vadd.f32 %v4975, %v4976
    %v4979 = vsel %vm924, %v4977, 0
    %4981 = vmatprep.subr.mxu0 %v90
    %4982 = vmatpush1.msra.mxu0 %v89
    %4983 = vmatprep.subr.mxu0 %v93
    %4984 = vmatpush1.msra.mxu0 %v92
    %4985 = vmatprep.subr.mxu0 %v933
    %4986 = vmatpush1.msra.mxu0 %v930
    %4987 = vmatprep.subr.mxu0 0.0
    %4988 = vmatpush1.msra.mxu0 0.0
    %4989 = vmatprep.subr.mxu0 0.0
    %4990 = vmatpush1.msra.mxu0 0.0
    %4991 = vmatprep.subr.mxu0 0.0
    %4992 = vmatpush1.msra.mxu0 0.0
    %4993 = vmatprep.subr.mxu0 0.0
    %4994 = vmatpush1.msra.mxu0 0.0
    %4995 = vmatprep.subr.mxu0 0.0
    %4996 = vmatpush1.msra.mxu0 0.0
    %4997 = vmatprep.subr.mxu0 0.0
    %4998 = vmatpush1.msra.mxu0 0.0
    %4999 = vmatprep.subr.mxu0 0.0
    %5000 = vmatpush1.msra.mxu0 0.0
    %5001 = vmatprep.subr.mxu0 0.0
    %5002 = vmatpush1.msra.mxu0 0.0
    %5003 = vmatprep.subr.mxu0 0.0
    %5004 = vmatpush1.msra.mxu0 0.0
    %5005 = vmatprep.subr.mxu0 0.0
    %5006 = vmatpush1.msra.mxu0 0.0
    %5007 = vmatprep.subr.mxu0 0.0
    %5008 = vmatpush1.msra.mxu0 0.0
    %5009 = vmatprep.subr.mxu0 0.0
    %5010 = vmatpush1.msra.mxu0 0.0
    %5011 = vmatprep.subr.mxu0 0.0
    %5012 = vmatpush1.msra.mxu0 0.0
    %5013 = vmatprep.subr.mxu0 0.0
    %5014 = vmatpush1.msra.mxu0 0.0
    %5015 = vmatprep.subr.mxu0 0.0
    %5016 = vmatpush1.msra.mxu0 0.0
    %5017 = vmatprep.subr.mxu0 0.0
    %5018 = vmatpush1.msra.mxu0 0.0
    %5019 = vmatprep.subr.mxu0 0.0
    %5020 = vmatpush1.msra.mxu0 0.0
    %5021 = vmatprep.subr.mxu0 0.0
    %5022 = vmatpush1.msra.mxu0 0.0
    %5023 = vmatprep.subr.mxu0 0.0
    %5024 = vmatpush1.msra.mxu0 0.0
    %5025 = vmatprep.subr.mxu0 0.0
    %5026 = vmatpush1.msra.mxu0 0.0
    %5027 = vmatprep.subr.mxu0 0.0
    %5028 = vmatpush1.msra.mxu0 0.0
    %5029 = vmatprep.subr.mxu0 0.0
    %5030 = vmatpush1.msra.mxu0 0.0
    %5031 = vmatprep.subr.mxu0 0.0
    %5032 = vmatpush1.msra.mxu0 0.0
    %5033 = vmatprep.subr.mxu0 0.0
    %5034 = vmatpush1.msra.mxu0 0.0
    %5035 = vmatprep.subr.mxu0 0.0
    %5036 = vmatpush1.msra.mxu0 0.0
    %5037 = vmatprep.subr.mxu0 0.0
    %5038 = vmatpush1.msra.mxu0 0.0
    %5039 = vmatprep.subr.mxu0 0.0
    %5040 = vmatpush1.msra.mxu0 0.0
    %5041 = vmatprep.subr.mxu0 0.0
    %5042 = vmatpush1.msra.mxu0 0.0
    %5043 = vmatprep.subr.mxu0 0.0
    %5044 = vmatpush1.msra.mxu0 0.0
    %5045 = vmatprep.mubr.f32.mxu0 0.0
    %5046 = vmatmul.mubr.f32.gmra.mrb[0].mxu0 %v4979
    %v5047 = vpop.f32.mrb[0].mxu0
    %v5048 = vadd.f32 0.0, %v5047
    %v5049 = vpop.f32.mrb[0].mxu0
    %v5050 = vadd.f32 0.0, %v5049
    %5051 = vdwg.mxu0
    %5052 = vmatprep.subr.mxu0 0.0
    %5053 = vmatpush1.msra.mxu0 %v91
    %5054 = vmatprep.subr.mxu0 0.0
    %5055 = vmatpush1.msra.mxu0 %v94
    %5056 = vmatprep.subr.mxu0 0.0
    %5057 = vmatpush1.msra.mxu0 %v936
    %5058 = vmatprep.subr.mxu0 0.0
    %5059 = vmatpush1.msra.mxu0 0.0
    %5060 = vmatprep.subr.mxu0 0.0
    %5061 = vmatpush1.msra.mxu0 0.0
    %5062 = vmatprep.subr.mxu0 0.0
    %5063 = vmatpush1.msra.mxu0 0.0
    %5064 = vmatprep.subr.mxu0 0.0
    %5065 = vmatpush1.msra.mxu0 0.0
    %5066 = vmatprep.subr.mxu0 0.0
    %5067 = vmatpush1.msra.mxu0 0.0
    %5068 = vmatprep.subr.mxu0 0.0
    %5069 = vmatpush1.msra.mxu0 0.0
    %5070 = vmatprep.subr.mxu0 0.0
    %5071 = vmatpush1.msra.mxu0 0.0
    %5072 = vmatprep.subr.mxu0 0.0
    %5073 = vmatpush1.msra.mxu0 0.0
    %5074 = vmatprep.subr.mxu0 0.0
    %5075 = vmatpush1.msra.mxu0 0.0
    %5076 = vmatprep.subr.mxu0 0.0
    %5077 = vmatpush1.msra.mxu0 0.0
    %5078 = vmatprep.subr.mxu0 0.0
    %5079 = vmatpush1.msra.mxu0 0.0
    %5080 = vmatprep.subr.mxu0 0.0
    %5081 = vmatpush1.msra.mxu0 0.0
    %5082 = vmatprep.subr.mxu0 0.0
    %5083 = vmatpush1.msra.mxu0 0.0
    %5084 = vmatprep.subr.mxu0 0.0
    %5085 = vmatpush1.msra.mxu0 0.0
    %5086 = vmatprep.subr.mxu0 0.0
    %5087 = vmatpush1.msra.mxu0 0.0
    %5088 = vmatprep.subr.mxu0 0.0
    %5089 = vmatpush1.msra.mxu0 0.0
    %5090 = vmatprep.subr.mxu0 0.0
    %5091 = vmatpush1.msra.mxu0 0.0
    %5092 = vmatprep.subr.mxu0 0.0
    %5093 = vmatpush1.msra.mxu0 0.0
    %5094 = vmatprep.subr.mxu0 0.0
    %5095 = vmatpush1.msra.mxu0 0.0
    %5096 = vmatprep.subr.mxu0 0.0
    %5097 = vmatpush1.msra.mxu0 0.0
    %5098 = vmatprep.subr.mxu0 0.0
    %5099 = vmatpush1.msra.mxu0 0.0
    %5100 = vmatprep.subr.mxu0 0.0
    %5101 = vmatpush1.msra.mxu0 0.0
    %5102 = vmatprep.subr.mxu0 0.0
    %5103 = vmatpush1.msra.mxu0 0.0
    %5104 = vmatprep.subr.mxu0 0.0
    %5105 = vmatpush1.msra.mxu0 0.0
    %5106 = vmatprep.subr.mxu0 0.0
    %5107 = vmatpush1.msra.mxu0 0.0
    %5108 = vmatprep.subr.mxu0 0.0
    %5109 = vmatpush1.msra.mxu0 0.0
    %5110 = vmatprep.subr.mxu0 0.0
    %5111 = vmatpush1.msra.mxu0 0.0
    %5112 = vmatprep.subr.mxu0 0.0
    %5113 = vmatpush1.msra.mxu0 0.0
    %5114 = vmatprep.subr.mxu0 0.0
    %5115 = vmatpush1.msra.mxu0 0.0
    %5116 = vmatprep.mubr.f32.mxu0 0.0
    %5117 = vmatmul.mubr.f32.gmra.mrb[0].mxu0 %v4979
    %v5118 = vpop.f32.mrb[0].mxu0
    %v5119 = vadd.f32 0.0, %v5118
    %v5120 = vpop.f32.mrb[0].mxu0
    %5121 = vdwg.mxu0
    %v5122 = vadd.f32 %v4883, %v5048
    %v5123 = vadd.f32 %v4885, %v5050
    %v5124 = vadd.f32 %v4954, %v5119
    %v5125 = vsel %vm515, %v5122, -inf
    %5126 = vmax.xlane.f32.xlu0 %v5125
    %v5127 = vpop.xlane.xlu0 %5126
    %v5128 = vsub.f32 %v5122, %v5127
    %v5129 = vmul.f32 %v5128, 1.442695
    %v5130 = vpow.pop %v5129
    %v5131 = vsel %vm515, %v5130, 0.0
    %5132 = vadd.xlane.f32.xlu0 %v5131
    %v5133 = vpop.xlane.xlu0 %5132
    %v5134 = vrcp.pop %v5133
    %v5135 = vmul.f32 %v5130, %v5134
    %s5136 = scalar_lea.vmem %s7, 56
    %5137 = vst.msk [vmem:[%s5136] sm:$0xff] %vm515, %v5135
    %s5138 = scalar_lea.vmem %s8, 56
    %5139 = vst.msk [vmem:[%s5138] sm:$0xff] %vm1094, %v5123
    %v5140 = vmul.f32 %v5124, 1.442695
    %v5141 = vpow.pop %v5140
    %v5142 = vadd.f32 %v5141, 1e-15
    %s5143 = scalar_lea.vmem %s9, 56
    %5144 = vst.msk [vmem:[%s5143] sm:$0xff] %vm1094, %v5142
    // Predicated region
    $region34: #{tpu_custom_call.1} parent=1 // pred_check
      _
    $region35: #{tpu_custom_call.1} parent=1 // pred_check_branch
      %5146 = sbr.rel (0) target = $region37
    $region36: #{tpu_custom_call.1} parent=1 // pred_region
      _
    $region37: #{tpu_custom_call.1} parent=1 // pred_fallthru
      _
    // Predicated region
    $region38: #{tpu_custom_call.1} parent=1 // pred_check
      _
    $region39: #{tpu_custom_call.1} parent=1 // pred_check_branch
      %5148 = sbr.rel (0) target = $region41
    $region40: #{tpu_custom_call.1} parent=1 // pred_region
      _
    $region41: #{tpu_custom_call.1} parent=1 // pred_fallthru
      _
    // Predicated region
    $region42: #{tpu_custom_call.1} parent=1 // pred_check
      _
    $region43: #{tpu_custom_call.1} parent=1 // pred_check_branch
      %5150 = sbr.rel (0) target = $region45
    $region44: #{tpu_custom_call.1} parent=1 // pred_region
      _
    $region45: #{tpu_custom_call.1} parent=1 // pred_fallthru
      _
    // Predicated region
    $region46: #{tpu_custom_call.1} parent=1 // pred_check
      _
    $region47: #{tpu_custom_call.1} parent=1 // pred_check_branch
      %5152 = sbr.rel (0) target = $region49
    $region48: #{tpu_custom_call.1} parent=1 // pred_region
      _
    $region49: #{tpu_custom_call.1} parent=1 // pred_fallthru
      _
    // Predicated region
    $region50: #{tpu_custom_call.1} parent=1 // pred_check
      _
    $region51: #{tpu_custom_call.1} parent=1 // pred_check_branch
      %5154 = sbr.rel (0) target = $region53
    $region52: #{tpu_custom_call.1} parent=1 // pred_region
      _
    $region53: #{tpu_custom_call.1} parent=1 // pred_fallthru
      _
    // Predicated region
    $region54: #{tpu_custom_call.1} parent=1 // pred_check
      _
    $region55: #{tpu_custom_call.1} parent=1 // pred_check_branch
      %5156 = sbr.rel (0) target = $region57
    $region56: #{tpu_custom_call.1} parent=1 // pred_region
      _
    $region57: #{tpu_custom_call.1} parent=1 // pred_fallthru
      _
    %5157 = vsyncpa [#allocation5], 1
    %5158 = vsyncpa [#allocation7], 1

</llo_original>
